<compile_context>
chip_gen: v7x
topology: tpu7x:2x2x1
jax: 0.10.0
libtpu: 0.0.40
codegen_flags: <defaults>
</compile_context>

<pallas_src>
import functools

import jax
import jax.numpy as jnp
from jax.experimental import pallas as pl
from jax.experimental.pallas import tpu as pltpu


def basic_block_kernel(x_ref, w1_ref, b1_ref, w2_ref, b2_ref, out_ref,
                       *, ht, H, W):
    """One (batch, H-tile) step of the fused BasicBlock.

    x_ref:   (H+4, W+4, Cp)  bf16, zero-padded by 2 in H/W, channel-padded
    w1_ref:  (9*Cp, Cp)      bf16, im2col conv1 weights with BN1 scale folded
    b1_ref:  (1, Cp)         f32, folded BN1 bias
    w2_ref:  (9*Cp, Cp)      bf16, im2col conv2 weights with BN2 scale folded
    b2_ref:  (1, Cp)         f32, folded BN2 bias
    out_ref: (ht, W, Cp)     f32 output tile
    """
    h = pl.program_id(1)
    h0 = pl.multiple_of(h * ht, ht)            # first output row of this tile

    # Input window with the 2-row halo needed by two stacked 3x3 convs.
    x_win = x_ref[pl.ds(h0, ht + 4)]           # (ht+4, W+4, Cp) bf16

    # ---- conv1 (+ folded BN1 scale) on the extended (ht+2, W+2) region ----
    # im2col: concatenate the 9 taps along the lane dim -> one big MXU matmul
    # with contraction K = 9*Cp.
    taps1 = [x_win[dy:dy + ht + 2, dx:dx + W + 2, :]
             for dy in range(3) for dx in range(3)]
    cat1 = jnp.concatenate(taps1, axis=-1)     # (ht+2, W+2, 9*Cp) bf16
    mid = jnp.einsum('hwk,ko->hwo', cat1, w1_ref[...],
                     preferred_element_type=jnp.float32)
    mid = jnp.maximum(mid + b1_ref[...], 0.0)  # bias + ReLU in f32

    # Zero the ring that corresponds to conv2's zero padding (rows/cols that
    # fall outside the real image) instead of re-padding into a scratch.
    row = jax.lax.broadcasted_iota(jnp.int32, (ht + 2, W + 2, 1), 0) + (h0 - 1)
    col = jax.lax.broadcasted_iota(jnp.int32, (ht + 2, W + 2, 1), 1) - 1
    valid = (row >= 0) & (row < H) & (col >= 0) & (col < W)
    mid = jnp.where(valid, mid, 0.0).astype(jnp.bfloat16)

    # ---- conv2 (+ folded BN2 scale) on the (ht, W) output tile ----
    taps2 = [mid[dy:dy + ht, dx:dx + W, :]
             for dy in range(3) for dx in range(3)]
    cat2 = jnp.concatenate(taps2, axis=-1)     # (ht, W, 9*Cp) bf16
    out = jnp.einsum('hwk,ko->hwo', cat2, w2_ref[...],
                     preferred_element_type=jnp.float32)
    out = out + b2_ref[...]

    # ---- residual add + ReLU (identity = interior of the input window) ----
    identity = x_win[2:2 + ht, 2:2 + W, :].astype(jnp.float32)
    out_ref[...] = jnp.maximum(out + identity, 0.0)


def basic_block_forward(x_nchw, w1_oihw, w2_oihw, bn1, bn2,
                        eps=1e-5, tile_h=8):
    """NCHW wrapper around the NHWC Pallas kernel. Returns NCHW f32 output."""
    g1, beta1, m1, v1 = bn1
    g2, beta2, m2, v2 = bn2

    # Fold BN (eval mode) into per-channel scale & bias.
    s1 = g1 / jnp.sqrt(v1 + eps)
    bb1 = beta1 - m1 * s1
    s2 = g2 / jnp.sqrt(v2 + eps)
    bb2 = beta2 - m2 * s2

    N, C, H, W = x_nchw.shape
    Cout = w1_oihw.shape[0]
    assert Cout == C, "identity residual requires inplanes == planes"

    LANE = 128
    Cp = ((C + LANE - 1) // LANE) * LANE       # lane-dense channel padding

    # H tile that divides H (keeps BlockSpecs exact; no partial tiles).
    ht = max(1, min(tile_h, H))
    while H % ht:
        ht -= 1

    # NHWC, bf16 activations, 2-pixel spatial halo pad, channel pad to Cp.
    x = jnp.transpose(x_nchw, (0, 2, 3, 1)).astype(jnp.bfloat16)
    x = jnp.pad(x, ((0, 0), (2, 2), (2, 2), (0, Cp - C)))

    def prep_w(w_oihw, scale):
        # Fold per-output-channel BN scale into conv weights (conv is linear),
        # convert OIHW -> HWIO, pad channels, flatten to im2col matrix.
        w = w_oihw * scale[:, None, None, None]
        w = jnp.transpose(w, (2, 3, 1, 0))                     # HWIO
        w = jnp.pad(w, ((0, 0), (0, 0), (0, Cp - C), (0, Cp - C)))
        return w.reshape(9 * Cp, Cp).astype(jnp.bfloat16)

    w1m = prep_w(w1_oihw.astype(jnp.float32), s1)
    w2m = prep_w(w2_oihw.astype(jnp.float32), s2)
    b1p = jnp.pad(bb1, (0, Cp - C)).reshape(1, Cp).astype(jnp.float32)
    b2p = jnp.pad(bb2, (0, Cp - C)).reshape(1, Cp).astype(jnp.float32)

    grid = (N, H // ht)
    kernel = functools.partial(basic_block_kernel, ht=ht, H=H, W=W)

    out_nhwc = pl.pallas_call(
        kernel,
        out_shape=jax.ShapeDtypeStruct((N, H, W, Cp), jnp.float32),
        grid=grid,
        in_specs=[
            # Per-batch padded image, resident across the H-tile axis.
            pl.BlockSpec((None, H + 4, W + 4, Cp), lambda n, h: (n, 0, 0, 0)),
            # Weights / biases: constant index map -> loaded once, resident.
            pl.BlockSpec((9 * Cp, Cp), lambda n, h: (0, 0)),
            pl.BlockSpec((1, Cp), lambda n, h: (0, 0)),
            pl.BlockSpec((9 * Cp, Cp), lambda n, h: (0, 0)),
            pl.BlockSpec((1, Cp), lambda n, h: (0, 0)),
        ],
        out_specs=pl.BlockSpec((None, ht, W, Cp), lambda n, h: (n, h, 0, 0)),
        compiler_params=pltpu.CompilerParams(
            dimension_semantics=("parallel", "arbitrary"),
            vmem_limit_bytes=48 * 1024 * 1024,   # under v7x's 64 MiB VMEM
        ),
    )(x, w1m, b1p, w2m, b2p)

    out_nhwc = out_nhwc[..., :C]                 # drop channel padding
    # TODO(synk): in a full network, keep NHWC end-to-end and drop this
    # per-block NCHW<->NHWC transpose (kept here for PyTorch API parity).
    return jnp.transpose(out_nhwc, (0, 3, 1, 2))


def _reference_forward(x_nchw, w1_oihw, w2_oihw, bn1, bn2, eps=1e-5):
    """Pure-JAX f32 reference (NCHW, eval-mode BN), matches the PyTorch module."""
    g1, beta1, m1, v1 = bn1
    g2, beta2, m2, v2 = bn2
    s1 = g1 / jnp.sqrt(v1 + eps); b1 = beta1 - m1 * s1
    s2 = g2 / jnp.sqrt(v2 + eps); b2 = beta2 - m2 * s2

    def conv(x, w):
        return jax.lax.conv_general_dilated(
            x, w, window_strides=(1, 1), padding=((1, 1), (1, 1)),
            dimension_numbers=('NCHW', 'OIHW', 'NCHW'))

    out = conv(x_nchw, w1_oihw)
    out = out * s1[None, :, None, None] + b1[None, :, None, None]
    out = jnp.maximum(out, 0.0)
    out = conv(out, w2_oihw)
    out = out * s2[None, :, None, None] + b2[None, :, None, None]
    return jnp.maximum(out + x_nchw, 0.0)


if __name__ == "__main__":
    # Small shapes consistent with BasicBlock(inplanes=4, planes=4, stride=1).
    N, C, H, W = 2, 4, 16, 16
    key = jax.random.PRNGKey(0)
    kx, kw1, kw2 = jax.random.split(key, 3)

    x = jax.random.normal(kx, (N, C, H, W), jnp.float32)
    w1 = 0.1 * jax.random.normal(kw1, (C, C, 3, 3), jnp.float32)   # conv1 OIHW
    w2 = 0.1 * jax.random.normal(kw2, (C, C, 3, 3), jnp.float32)   # conv2 OIHW

    # Deterministic, non-trivial BatchNorm params (gamma, beta, mean, var).
    ar = jnp.arange(C, dtype=jnp.float32)
    bn1 = (1.0 + 0.1 * ar, 0.05 * ar, 0.02 * ar, 1.0 + 0.2 * ar)
    bn2 = (1.0 - 0.05 * ar, -0.03 * ar, -0.01 * ar, 1.0 + 0.1 * ar)

    out = basic_block_forward(x, w1, w2, bn1, bn2)
    out = jax.block_until_ready(out)

    ref = _reference_forward(x, w1, w2, bn1, bn2)
    assert out.shape == (N, C, H, W)
    # bf16 matmul inputs + bf16 residual path -> relaxed tolerance vs f32 ref.
    assert jnp.allclose(out, ref, atol=5e-2, rtol=5e-2), "mismatch vs reference"

    print("KERNEL_OK")
</pallas_src>

<mosaic_0001>
module attributes {stable_mosaic.version = 11 : i64} {
  func.func @basic_block_kernel(%arg0: i32, %arg1: i32, %arg2: memref<1x20x20x128xbf16, #tpu.memory_space<vmem>>, %arg3: memref<1152x128xbf16, #tpu.memory_space<vmem>>, %arg4: memref<1x128xf32, #tpu.memory_space<vmem>>, %arg5: memref<1152x128xbf16, #tpu.memory_space<vmem>>, %arg6: memref<1x128xf32, #tpu.memory_space<vmem>>, %arg7: memref<1x8x16x128xf32, #tpu.memory_space<vmem>>) attributes {dimension_semantics = [#tpu.dimension_semantics<parallel>, #tpu.dimension_semantics<arbitrary>], iteration_bounds = array<i64: 2, 2>, scalar_prefetch = 0 : i64, scratch_operands = 0 : i64, tpu.core_type = #tpu.core_type<tc>, window_params = [{transform_indices = @transform_0, window_bounds = array<i64: 1, 20, 20, 128>}, {pipeline_mode = #tpu.pipeline_mode<synchronous>, transform_indices = @transform_1, window_bounds = array<i64: 1152, 128>}, {pipeline_mode = #tpu.pipeline_mode<synchronous>, transform_indices = @transform_2, window_bounds = array<i64: 1, 128>}, {pipeline_mode = #tpu.pipeline_mode<synchronous>, transform_indices = @transform_3, window_bounds = array<i64: 1152, 128>}, {pipeline_mode = #tpu.pipeline_mode<synchronous>, transform_indices = @transform_4, window_bounds = array<i64: 1, 128>}, {transform_indices = @transform_5, window_bounds = array<i64: 1, 8, 16, 128>}]} {
    %c8_i32 = arith.constant 8 : i32
    %0 = arith.muli %arg1, %c8_i32 : i32
    %1 = tpu.assume_multiple %0, 8 : i32
    %c0 = arith.constant 0 : index
    %2 = arith.index_cast %1 : i32 to index
    %c0_0 = arith.constant 0 : index
    %c0_1 = arith.constant 0 : index
    %3 = vector.load %arg2[%c0, %2, %c0_0, %c0_1] : memref<1x20x20x128xbf16, #tpu.memory_space<vmem>>, vector<1x12x20x128xbf16>
    %4 = vector.shape_cast %3 : vector<1x12x20x128xbf16> to vector<12x20x128xbf16>
    %5 = vector.extract_strided_slice %4 {offsets = [0, 0, 0], sizes = [10, 18, 128], strides = [1, 1, 1]} : vector<12x20x128xbf16> to vector<10x18x128xbf16>
    %6 = vector.extract_strided_slice %4 {offsets = [0, 1, 0], sizes = [10, 18, 128], strides = [1, 1, 1]} : vector<12x20x128xbf16> to vector<10x18x128xbf16>
    %7 = vector.extract_strided_slice %4 {offsets = [0, 2, 0], sizes = [10, 18, 128], strides = [1, 1, 1]} : vector<12x20x128xbf16> to vector<10x18x128xbf16>
    %8 = vector.extract_strided_slice %4 {offsets = [1, 0, 0], sizes = [10, 18, 128], strides = [1, 1, 1]} : vector<12x20x128xbf16> to vector<10x18x128xbf16>
    %9 = vector.extract_strided_slice %4 {offsets = [1, 1, 0], sizes = [10, 18, 128], strides = [1, 1, 1]} : vector<12x20x128xbf16> to vector<10x18x128xbf16>
    %10 = vector.extract_strided_slice %4 {offsets = [1, 2, 0], sizes = [10, 18, 128], strides = [1, 1, 1]} : vector<12x20x128xbf16> to vector<10x18x128xbf16>
    %11 = vector.extract_strided_slice %4 {offsets = [2, 0, 0], sizes = [10, 18, 128], strides = [1, 1, 1]} : vector<12x20x128xbf16> to vector<10x18x128xbf16>
    %12 = vector.extract_strided_slice %4 {offsets = [2, 1, 0], sizes = [10, 18, 128], strides = [1, 1, 1]} : vector<12x20x128xbf16> to vector<10x18x128xbf16>
    %13 = vector.extract_strided_slice %4 {offsets = [2, 2, 0], sizes = [10, 18, 128], strides = [1, 1, 1]} : vector<12x20x128xbf16> to vector<10x18x128xbf16>
    %14 = tpu.concatenate %5, %6, %7, %8, %9, %10, %11, %12, %13 in 2 : vector<10x18x128xbf16>, vector<10x18x128xbf16>, vector<10x18x128xbf16>, vector<10x18x128xbf16>, vector<10x18x128xbf16>, vector<10x18x128xbf16>, vector<10x18x128xbf16>, vector<10x18x128xbf16>, vector<10x18x128xbf16> -> vector<10x18x1152xbf16>
    %c0_2 = arith.constant 0 : index
    %c0_3 = arith.constant 0 : index
    %15 = vector.load %arg3[%c0_2, %c0_3] : memref<1152x128xbf16, #tpu.memory_space<vmem>>, vector<1152x128xbf16>
    "tpu.trace_start"() <{level = 10 : i32, message = "hwk,ko->hwo"}> : () -> ()
    %cst = arith.constant dense<0.000000e+00> : vector<10x18x128xf32>
    %16 = tpu.matmul %14, %15, %cst {dimension_numbers = #tpu.dot_dimension_numbers<[2], [0], [0, 1], [1], [0, 0, 0, 1, 1, 1], [], []>} : vector<10x18x1152xbf16>, vector<1152x128xbf16>, vector<10x18x128xf32> -> vector<10x18x128xf32>
    "tpu.trace_stop"() : () -> ()
    %c0_4 = arith.constant 0 : index
    %c0_5 = arith.constant 0 : index
    %17 = vector.load %arg4[%c0_4, %c0_5] : memref<1x128xf32, #tpu.memory_space<vmem>>, vector<1x128xf32>
    %18 = vector.shape_cast %17 : vector<1x128xf32> to vector<1x1x128xf32>
    %19 = vector.broadcast %18 : vector<1x1x128xf32> to vector<10x18x128xf32>
    %20 = arith.addf %16, %19 : vector<10x18x128xf32>
    %cst_6 = arith.constant 0.000000e+00 : f32
    %21 = vector.broadcast %cst_6 : f32 to vector<10x18x128xf32>
    %22 = arith.maximumf %20, %21 : vector<10x18x128xf32>
    %23 = tpu.iota {dimensions = array<i32: 0>} : vector<10x18x1xi32>
    %c1_i32 = arith.constant 1 : i32
    %24 = arith.subi %1, %c1_i32 : i32
    %25 = vector.broadcast %24 : i32 to vector<10x18x1xi32>
    %26 = arith.addi %23, %25 : vector<10x18x1xi32>
    %27 = tpu.iota {dimensions = array<i32: 1>} : vector<10x18x1xi32>
    %c1_i32_7 = arith.constant 1 : i32
    %28 = vector.broadcast %c1_i32_7 : i32 to vector<10x18x1xi32>
    %29 = arith.subi %27, %28 : vector<10x18x1xi32>
    %c0_i32 = arith.constant 0 : i32
    %30 = vector.broadcast %c0_i32 : i32 to vector<10x18x1xi32>
    %31 = arith.cmpi sge, %26, %30 : vector<10x18x1xi32>
    %c16_i32 = arith.constant 16 : i32
    %32 = vector.broadcast %c16_i32 : i32 to vector<10x18x1xi32>
    %33 = arith.cmpi slt, %26, %32 : vector<10x18x1xi32>
    %34 = arith.andi %31, %33 : vector<10x18x1xi1>
    %c0_i32_8 = arith.constant 0 : i32
    %35 = vector.broadcast %c0_i32_8 : i32 to vector<10x18x1xi32>
    %36 = arith.cmpi sge, %29, %35 : vector<10x18x1xi32>
    %37 = arith.andi %34, %36 : vector<10x18x1xi1>
    %c16_i32_9 = arith.constant 16 : i32
    %38 = vector.broadcast %c16_i32_9 : i32 to vector<10x18x1xi32>
    %39 = arith.cmpi slt, %29, %38 : vector<10x18x1xi32>
    %40 = arith.andi %37, %39 : vector<10x18x1xi1>
    %cst_10 = arith.constant 0.000000e+00 : f32
    %41 = vector.shape_cast %40 : vector<10x18x1xi1> to vector<10x18x1xi1>
    %42 = vector.broadcast %41 : vector<10x18x1xi1> to vector<10x18x128xi1>
    %43 = vector.broadcast %cst_10 : f32 to vector<10x18x128xf32>
    %44 = arith.select %42, %22, %43 : vector<10x18x128xi1>, vector<10x18x128xf32>
    %45 = arith.truncf %44 : vector<10x18x128xf32> to vector<10x18x128xbf16>
    %46 = vector.extract_strided_slice %45 {offsets = [0, 0, 0], sizes = [8, 16, 128], strides = [1, 1, 1]} : vector<10x18x128xbf16> to vector<8x16x128xbf16>
    %47 = vector.extract_strided_slice %45 {offsets = [0, 1, 0], sizes = [8, 16, 128], strides = [1, 1, 1]} : vector<10x18x128xbf16> to vector<8x16x128xbf16>
    %48 = vector.extract_strided_slice %45 {offsets = [0, 2, 0], sizes = [8, 16, 128], strides = [1, 1, 1]} : vector<10x18x128xbf16> to vector<8x16x128xbf16>
    %49 = vector.extract_strided_slice %45 {offsets = [1, 0, 0], sizes = [8, 16, 128], strides = [1, 1, 1]} : vector<10x18x128xbf16> to vector<8x16x128xbf16>
    %50 = vector.extract_strided_slice %45 {offsets = [1, 1, 0], sizes = [8, 16, 128], strides = [1, 1, 1]} : vector<10x18x128xbf16> to vector<8x16x128xbf16>
    %51 = vector.extract_strided_slice %45 {offsets = [1, 2, 0], sizes = [8, 16, 128], strides = [1, 1, 1]} : vector<10x18x128xbf16> to vector<8x16x128xbf16>
    %52 = vector.extract_strided_slice %45 {offsets = [2, 0, 0], sizes = [8, 16, 128], strides = [1, 1, 1]} : vector<10x18x128xbf16> to vector<8x16x128xbf16>
    %53 = vector.extract_strided_slice %45 {offsets = [2, 1, 0], sizes = [8, 16, 128], strides = [1, 1, 1]} : vector<10x18x128xbf16> to vector<8x16x128xbf16>
    %54 = vector.extract_strided_slice %45 {offsets = [2, 2, 0], sizes = [8, 16, 128], strides = [1, 1, 1]} : vector<10x18x128xbf16> to vector<8x16x128xbf16>
    %55 = tpu.concatenate %46, %47, %48, %49, %50, %51, %52, %53, %54 in 2 : vector<8x16x128xbf16>, vector<8x16x128xbf16>, vector<8x16x128xbf16>, vector<8x16x128xbf16>, vector<8x16x128xbf16>, vector<8x16x128xbf16>, vector<8x16x128xbf16>, vector<8x16x128xbf16>, vector<8x16x128xbf16> -> vector<8x16x1152xbf16>
    %c0_11 = arith.constant 0 : index
    %c0_12 = arith.constant 0 : index
    %56 = vector.load %arg5[%c0_11, %c0_12] : memref<1152x128xbf16, #tpu.memory_space<vmem>>, vector<1152x128xbf16>
    "tpu.trace_start"() <{level = 10 : i32, message = "hwk,ko->hwo"}> : () -> ()
    %cst_13 = arith.constant dense<0.000000e+00> : vector<8x16x128xf32>
    %57 = tpu.matmul %55, %56, %cst_13 {dimension_numbers = #tpu.dot_dimension_numbers<[2], [0], [0, 1], [1], [0, 0, 0, 1, 1, 1], [], []>} : vector<8x16x1152xbf16>, vector<1152x128xbf16>, vector<8x16x128xf32> -> vector<8x16x128xf32>
    "tpu.trace_stop"() : () -> ()
    %c0_14 = arith.constant 0 : index
    %c0_15 = arith.constant 0 : index
    %58 = vector.load %arg6[%c0_14, %c0_15] : memref<1x128xf32, #tpu.memory_space<vmem>>, vector<1x128xf32>
    %59 = vector.shape_cast %58 : vector<1x128xf32> to vector<1x1x128xf32>
    %60 = vector.broadcast %59 : vector<1x1x128xf32> to vector<8x16x128xf32>
    %61 = arith.addf %57, %60 : vector<8x16x128xf32>
    %62 = vector.extract_strided_slice %4 {offsets = [2, 2, 0], sizes = [8, 16, 128], strides = [1, 1, 1]} : vector<12x20x128xbf16> to vector<8x16x128xbf16>
    %63 = arith.extf %62 : vector<8x16x128xbf16> to vector<8x16x128xf32>
    %64 = arith.addf %61, %63 : vector<8x16x128xf32>
    %cst_16 = arith.constant 0.000000e+00 : f32
    %65 = vector.broadcast %cst_16 : f32 to vector<8x16x128xf32>
    %66 = arith.maximumf %64, %65 : vector<8x16x128xf32>
    %c0_17 = arith.constant 0 : index
    %c0_18 = arith.constant 0 : index
    %c0_19 = arith.constant 0 : index
    %c0_20 = arith.constant 0 : index
    %67 = vector.load %arg7[%c0_17, %c0_18, %c0_19, %c0_20] : memref<1x8x16x128xf32, #tpu.memory_space<vmem>>, vector<1x8x16x128xf32>
    %68 = vector.shape_cast %67 : vector<1x8x16x128xf32> to vector<8x16x128xf32>
    %69 = vector.shape_cast %66 : vector<8x16x128xf32> to vector<1x8x16x128xf32>
    tpu.vector_store %arg7[%c0_17, %c0_18, %c0_19, %c0_20], %69 {strides = array<i32>} : memref<1x8x16x128xf32, #tpu.memory_space<vmem>>, vector<1x8x16x128xf32>,
    return
  }
  func.func @transform_0(%arg0: i32, %arg1: i32) -> (i32, i32, i32, i32) {
    %c0_i32 = arith.constant 0 : i32
    %c0_i32_0 = arith.constant 0 : i32
    %c0_i32_1 = arith.constant 0 : i32
    %c0_i32_2 = arith.constant 0 : i32
    return %arg0, %c0_i32, %c0_i32_0, %c0_i32_1 : i32, i32, i32, i32
  }
  func.func @transform_1(%arg0: i32, %arg1: i32) -> (i32, i32) {
    %c0_i32 = arith.constant 0 : i32
    %c0_i32_0 = arith.constant 0 : i32
    %c0_i32_1 = arith.constant 0 : i32
    return %c0_i32, %c0_i32_0 : i32, i32
  }
  func.func @transform_2(%arg0: i32, %arg1: i32) -> (i32, i32) {
    %c0_i32 = arith.constant 0 : i32
    %c0_i32_0 = arith.constant 0 : i32
    %c0_i32_1 = arith.constant 0 : i32
    return %c0_i32, %c0_i32_0 : i32, i32
  }
  func.func @transform_3(%arg0: i32, %arg1: i32) -> (i32, i32) {
    %c0_i32 = arith.constant 0 : i32
    %c0_i32_0 = arith.constant 0 : i32
    %c0_i32_1 = arith.constant 0 : i32
    return %c0_i32, %c0_i32_0 : i32, i32
  }
  func.func @transform_4(%arg0: i32, %arg1: i32) -> (i32, i32) {
    %c0_i32 = arith.constant 0 : i32
    %c0_i32_0 = arith.constant 0 : i32
    %c0_i32_1 = arith.constant 0 : i32
    return %c0_i32, %c0_i32_0 : i32, i32
  }
  func.func @transform_5(%arg0: i32, %arg1: i32) -> (i32, i32, i32, i32) {
    %c0_i32 = arith.constant 0 : i32
    %c0_i32_0 = arith.constant 0 : i32
    %c0_i32_1 = arith.constant 0 : i32
    return %arg0, %arg1, %c0_i32, %c0_i32_0 : i32, i32, i32, i32
  }
}

</mosaic_0001>

<llo_original>
// kernel: tpu_custom_call.1
$region0: #{tpu_custom_call.1}
  #allocation0 [shape = 'u32[]', space=smem, size = 0x4, offset = 0x4, fixed_abs, tag = 'smem constant byte address 0x4 - core index']
  #allocation1 [shape = 'u32[144,128]{1,0:T(1,128)}', space=vmem, size = 0x12000, scoped, tag = 'internal scratch']
  %s0 = inlined_call_operand.vmem [shape: bf16[2,20,20,128], index: 0, kind: input, shape index: {}]
  %s1 = inlined_call_operand.vmem [shape: bf16[1152,128], index: 1, kind: input, shape index: {}]
  %s2 = inlined_call_operand.vmem [shape: f32[1,128], index: 2, kind: input, shape index: {}]
  %s3 = inlined_call_operand.hbm [shape: bf16[1152,128], index: 3, kind: input, shape index: {}]
  %s4 = inlined_call_operand.vmem [shape: f32[1,128], index: 4, kind: input, shape index: {}]
  %s5 = inlined_call_operand.hbm [shape: f32[2,16,16,128], index: 5, kind: output, shape index: {}]
  %s6 = sld [smem:[#allocation0]]
  $region57: #{tpu_custom_call.1} parent=0
    _
  %s8 = ssub.s32 1, %s6
  %s9 = scalar_select 0, %s8, %s6
  $region1: #{tpu_custom_call.1} parent=0
    #allocation2 [shape = 'u8[294912]{0}', space=vmem, size = 0x48000, scoped, tag = 'input window, operand 3, single buffered']
    #allocation3 [shape = 's32[2]{0}', space=sflag, size = 0x8, scoped, tag = 'scoped memory for tpu_custom_call.1']
    #allocation4 [shape = 's32[2]{0}', space=sflag, size = 0x8, scoped, tag = 'scoped memory for tpu_custom_call.1']
    #allocation5 [shape = 'u8[131072]{0}', space=vmem, size = 0x20000, scoped, tag = 'output window, operand 0']
    %10 = vsyncpa [#allocation3], 0
    %11 = vsyncpa [#allocation4], 0
    %s12 = scalar_lea.sflag [#allocation4], 1
    %13 = vsyncpa %s12, 0
    loop: start=0, step=1, limit=6
    $region2: #{tpu_custom_call.1} parent=1 // loop_pre_header
      _
    $region3: #{tpu_custom_call.1} parent=1 // loop_header
      %s15 = sphi 0, %s19
      %p16 = scmp.ge.s32.totalorder %s15, 6
      %s22 = sphi 0, %s34
      %s23 = sphi 0, %s30
      %s24 = sphi 0, %s22
      %s25 = sphi 0, %s23
      %s26 = sphi 0, %s24
      %s27 = sphi 0, %s25
      %s37 = sphi 0, %s39
      %s40 = sphi 0, %s37
      %s41 = sphi 0, %s40
      %s57 = sphi 0, %s41
      %s61 = sphi 0, %s61
      %s63 = sphi 0, %s61
      %s64 = sphi 0, %s63
      %s78 = sphi 0, %s64
      %s82 = sphi 0, %s82
      %s84 = sphi 0, %s82
      %s85 = sphi 0, %s84
      %s99 = sphi 0, %s85
      %s103 = sphi 0, %s103
      %s105 = sphi 0, %s103
      %s106 = sphi 0, %s105
      %s120 = sphi 0, %s106
      %s124 = sphi 0, %s124
      %s126 = sphi 0, %s124
      %s127 = sphi 0, %s126
      %s141 = sphi 0, %s127
      %s149 = sphi 0, %s151
      %s152 = sphi 0, %s149
      %s153 = sphi 0, %s152
      %s169 = sphi 0, %s153
    $region4: #{tpu_custom_call.1} parent=1 // loop_header_branch
      %18 = sbr.rel (%p16) target = $region8
    $region5: #{tpu_custom_call.1} parent=1 // loop_body
      %s20 = ssub.s32 %s15, 1
      %s21 = ssub.s32 %s15, 2
      %s28 = sadd.s32 1, %s23
      %p29 = scmp.ge.s32.totalorder %s28, 2
      %s30 = scalar_select %p29, 0, %s28
      %s31 = sadd.s32 1, %s22
      %s32 = scalar_select %p29, %s31, %s22
      %p33 = scmp.ge.s32.totalorder %s32, 2
      %s34 = scalar_select %p33, 0, %s32
      %s35 = ssub.s32 %s22, %s34
      %p36 = scmp.eq.s32.totalorder %s35, 0
      %s38 = sadd.s32 %s37, 1
      %s39 = scalar_select %p36, %s37, %s38
      %p42 = pneg %p36
      %p43 = scmp.eq.s32.totalorder %s15, 3
      %p44 = por %p42, %p43
      %p45 = scmp.ne.s32.totalorder %s37, %s40
      %p46 = scmp.eq.s32.totalorder %s15, 0
      %p47 = por %p45, %p46
      %p48 = scmp.ne.s32.totalorder %s37, %s40
      %p49 = scmp.eq.s32.totalorder %s20, 3
      %p50 = por %p48, %p49
      %p51 = scmp.ne.s32.totalorder %s40, %s41
      %p52 = scmp.eq.s32.totalorder %s20, 0
      %p53 = por %p51, %p52
      %p54 = scmp.ne.s32.totalorder %s40, %s41
      %p55 = scmp.eq.s32.totalorder %s21, 3
      %p56 = por %p54, %p55
      %p58 = scmp.ne.s32.totalorder %s41, %s57
      %p59 = scmp.eq.s32.totalorder %s21, 0
      %p60 = por %p58, %p59
      %s62 = sadd.s32 %s61, 1
      %p65 = scmp.eq.s32.totalorder %s15, 3
      %p66 = scmp.ne.s32.totalorder %s61, %s63
      %p67 = scmp.eq.s32.totalorder %s15, 0
      %p68 = por %p66, %p67
      %p69 = scmp.ne.s32.totalorder %s61, %s63
      %p70 = scmp.eq.s32.totalorder %s20, 3
      %p71 = por %p69, %p70
      %p72 = scmp.ne.s32.totalorder %s63, %s64
      %p73 = scmp.eq.s32.totalorder %s20, 0
      %p74 = por %p72, %p73
      %p75 = scmp.ne.s32.totalorder %s63, %s64
      %p76 = scmp.eq.s32.totalorder %s21, 3
      %p77 = por %p75, %p76
      %p79 = scmp.ne.s32.totalorder %s64, %s78
      %p80 = scmp.eq.s32.totalorder %s21, 0
      %p81 = por %p79, %p80
      %s83 = sadd.s32 %s82, 1
      %p86 = scmp.eq.s32.totalorder %s15, 3
      %p87 = scmp.ne.s32.totalorder %s82, %s84
      %p88 = scmp.eq.s32.totalorder %s15, 0
      %p89 = por %p87, %p88
      %p90 = scmp.ne.s32.totalorder %s82, %s84
      %p91 = scmp.eq.s32.totalorder %s20, 3
      %p92 = por %p90, %p91
      %p93 = scmp.ne.s32.totalorder %s84, %s85
      %p94 = scmp.eq.s32.totalorder %s20, 0
      %p95 = por %p93, %p94
      %p96 = scmp.ne.s32.totalorder %s84, %s85
      %p97 = scmp.eq.s32.totalorder %s21, 3
      %p98 = por %p96, %p97
      %p100 = scmp.ne.s32.totalorder %s85, %s99
      %p101 = scmp.eq.s32.totalorder %s21, 0
      %p102 = por %p100, %p101
      %s104 = sadd.s32 %s103, 1
      %p107 = scmp.eq.s32.totalorder %s15, 3
      %p108 = scmp.ne.s32.totalorder %s103, %s105
      %p109 = scmp.eq.s32.totalorder %s15, 0
      %p110 = por %p108, %p109
      %p111 = scmp.ne.s32.totalorder %s103, %s105
      %p112 = scmp.eq.s32.totalorder %s20, 3
      %p113 = por %p111, %p112
      %p114 = scmp.ne.s32.totalorder %s105, %s106
      %p115 = scmp.eq.s32.totalorder %s20, 0
      %p116 = por %p114, %p115
      %p117 = scmp.ne.s32.totalorder %s105, %s106
      %p118 = scmp.eq.s32.totalorder %s21, 3
      %p119 = por %p117, %p118
      %p121 = scmp.ne.s32.totalorder %s106, %s120
      %p122 = scmp.eq.s32.totalorder %s21, 0
      %p123 = por %p121, %p122
      %s125 = sadd.s32 %s124, 1
      %p128 = scmp.eq.s32.totalorder %s15, 3
      %p129 = scmp.ne.s32.totalorder %s124, %s126
      %p130 = scmp.eq.s32.totalorder %s15, 0
      %p131 = por %p129, %p130
      %p132 = scmp.ne.s32.totalorder %s124, %s126
      %p133 = scmp.eq.s32.totalorder %s20, 3
      %p134 = por %p132, %p133
      %p135 = scmp.ne.s32.totalorder %s126, %s127
      %p136 = scmp.eq.s32.totalorder %s20, 0
      %p137 = por %p135, %p136
      %p138 = scmp.ne.s32.totalorder %s126, %s127
      %p139 = scmp.eq.s32.totalorder %s21, 3
      %p140 = por %p138, %p139
      %p142 = scmp.ne.s32.totalorder %s127, %s141
      %p143 = scmp.eq.s32.totalorder %s21, 0
      %p144 = por %p142, %p143
      %s145 = ssub.s32 %s22, %s34
      %s146 = ssub.s32 %s23, %s30
      %s147 = sor.u32 %s145, %s146
      %p148 = scmp.eq.s32.totalorder %s147, 0
      %s150 = sadd.s32 %s149, 1
      %s151 = scalar_select %p148, %s149, %s150
      %p154 = pneg %p148
      %p155 = scmp.eq.s32.totalorder %s15, 3
      %p156 = por %p154, %p155
      %p157 = scmp.ne.s32.totalorder %s149, %s152
      %p158 = scmp.eq.s32.totalorder %s15, 0
      %p159 = por %p157, %p158
      %p160 = scmp.ne.s32.totalorder %s149, %s152
      %p161 = scmp.eq.s32.totalorder %s20, 3
      %p162 = por %p160, %p161
      %p163 = scmp.ne.s32.totalorder %s152, %s153
      %p164 = scmp.eq.s32.totalorder %s20, 0
      %p165 = por %p163, %p164
      %p166 = scmp.ne.s32.totalorder %s152, %s153
      %p167 = scmp.eq.s32.totalorder %s21, 3
      %p168 = por %p166, %p167
      %p170 = scmp.ne.s32.totalorder %s153, %s169
      %p171 = scmp.eq.s32.totalorder %s21, 0
      %p172 = por %p170, %p171
      %p173 = scmp.le.s32.totalorder 1, %s15
      %p174 = scmp.lt.s32.totalorder %s15, 5
      %p175 = pnand %p173, %p174
      %p176 = pneg %p175
      // Predicated region
      $region9: #{tpu_custom_call.1} parent=5 // pred_check
        _
      $region10: #{tpu_custom_call.1} parent=5 // pred_check_branch
        %178 = sbr.rel (%p175) target = $region12
      $region11: #{tpu_custom_call.1} parent=5 // pred_region
        %s179 = ssub.s32 %s15, 1
        // Predicated region
        $region13: #{tpu_custom_call.1} parent=11 // pred_check
          %p180 = pneg %p74
        $region14: #{tpu_custom_call.1} parent=11 // pred_check_branch
          %182 = sbr.rel (%p180) target = $region16
        $region15: #{tpu_custom_call.1} parent=11 // pred_region
          _
        $region16: #{tpu_custom_call.1} parent=11 // pred_fallthru
          _
        // Predicated region
        $region17: #{tpu_custom_call.1} parent=11 // pred_check
          %p183 = pneg %p95
        $region18: #{tpu_custom_call.1} parent=11 // pred_check_branch
          %185 = sbr.rel (%p183) target = $region20
        $region19: #{tpu_custom_call.1} parent=11 // pred_region
          _
        $region20: #{tpu_custom_call.1} parent=11 // pred_fallthru
          _
        // Predicated region
        $region21: #{tpu_custom_call.1} parent=11 // pred_check
          %p186 = pneg %p116
        $region22: #{tpu_custom_call.1} parent=11 // pred_check_branch
          %188 = sbr.rel (%p186) target = $region24
        $region23: #{tpu_custom_call.1} parent=11 // pred_region
          %s190 = ssub.s32 9216, 9216
          %191 = vsyncadd [#allocation3], %s190
          %s192 = sshll.u32 [#allocation2], 4
          %s193 = int_to_ptr.vmem [resolvable:$true] %s192
          %198 = dma.hbm_to_vmem [thread:$0]  %s3, 9216, %s193, [#allocation3], 64, 64, 4
        $region24: #{tpu_custom_call.1} parent=11 // pred_fallthru
          _
        // Predicated region
        $region25: #{tpu_custom_call.1} parent=11 // pred_check
          %p199 = pneg %p137
        $region26: #{tpu_custom_call.1} parent=11 // pred_check_branch
          %201 = sbr.rel (%p199) target = $region28
        $region27: #{tpu_custom_call.1} parent=11 // pred_region
          _
        $region28: #{tpu_custom_call.1} parent=11 // pred_fallthru
          _
      $region12: #{tpu_custom_call.1} parent=5 // pred_fallthru
        _
      %p202 = scmp.lt.s32.totalorder %s15, 4
      // Predicated region
      $region29: #{tpu_custom_call.1} parent=5 // pred_check
        %p203 = pneg %p202
      $region30: #{tpu_custom_call.1} parent=5 // pred_check_branch
        %205 = sbr.rel (%p203) target = $region32
      $region31: #{tpu_custom_call.1} parent=5 // pred_region
        // Predicated region
        $region33: #{tpu_custom_call.1} parent=31 // pred_check
          %p206 = pneg %p47
        $region34: #{tpu_custom_call.1} parent=31 // pred_check_branch
          %208 = sbr.rel (%p206) target = $region36
        $region35: #{tpu_custom_call.1} parent=31 // pred_region
          %p209 = scmp.lt.s32.totalorder %s22, 1
          %s210 = scalar_select %p209, %s22, 1
          %s211 = smul.addr %s210, 60
          %s212 = smul.addr %s211, 4
          %s213 = scalar_lea.vmem %s0, %s212
        $region36: #{tpu_custom_call.1} parent=31 // pred_fallthru
          _
      $region32: #{tpu_custom_call.1} parent=5 // pred_fallthru
        _
      %p214 = scmp.le.s32.totalorder 1, %s15
      %p215 = scmp.lt.s32.totalorder %s15, 5
      %p216 = pnand %p214, %p215
      %p217 = pneg %p216
      // Predicated region
      $region37: #{tpu_custom_call.1} parent=5 // pred_check
        _
      $region38: #{tpu_custom_call.1} parent=5 // pred_check_branch
        %219 = sbr.rel (%p216) target = $region40
      $region39: #{tpu_custom_call.1} parent=5 // pred_region
        %s220 = ssub.s32 %s15, 1
        // Predicated region
        $region41: #{tpu_custom_call.1} parent=39 // pred_check
          %p221 = pneg %p116
        $region42: #{tpu_custom_call.1} parent=39 // pred_check_branch
          %223 = sbr.rel (%p221) target = $region44
        $region43: #{tpu_custom_call.1} parent=39 // pred_region
          %224 = dma.done [#allocation3], 9216
        $region44: #{tpu_custom_call.1} parent=39 // pred_fallthru
          _
        %p225 = scmp.lt.s32.totalorder %s24, 1
        %s226 = scalar_select %p225, %s24, 1
        %s227 = smul.addr %s226, 60
        %s228 = smul.addr %s227, 4
        %s229 = scalar_lea.vmem %s0, %s228
        %p230 = pneg %p53
        %p231 = pneg %p50
        %p232 = pneg %p74
        %p233 = pneg %p71
        %p234 = pneg %p95
        %p235 = pneg %p92
        %p236 = pneg %p116
        %p237 = pneg %p113
        %p238 = pneg %p137
        %p239 = pneg %p134
        %p240 = pneg %p165
        %p241 = pneg %p162
        %s242 = sand.u32 %s152, 1
        %s243 = scalar_lea.sflag [#allocation4], %s242
        %s244 = sand.u32 %s152, 1
        %s245 = smul.addr %s244, 128
        %s246 = scalar_lea.vmem [#allocation5], %s245
        %p247 = scmp.lt.s32.totalorder %s24, 1
        %s248 = scalar_select %p247, %s24, 1
        %s249 = smul.addr %s248, 60
        %s250 = smul.addr %s249, 4
        %s251 = scalar_lea.vmem %s0, %s250
        %s252 = smul.u32 8, %s25
        %s254 = smul.u32 %s25, 8
        %s255 = smul.u32 %s254, 3
        %s256 = smul.addr %s255, 4
        %s257 = scalar_lea.vmem %s251, %s256
        %v258 = vld [vmem:[%s257] sm:$0xf]
        %v259 = vld [vmem:[%s257 + $0x4] sm:$0xf]
        %v260 = vld [vmem:[%s257 + $0x8] sm:$0x3]
        %v261 = vld [vmem:[%s257 + $0xc] sm:$0xf]
        %v262 = vld [vmem:[%s257 + $0x10] sm:$0xf]
        %v263 = vld [vmem:[%s257 + $0x14] sm:$0x3]
        %v264 = vld [vmem:[%s257 + $0x18] sm:$0xf]
        %v265 = vld [vmem:[%s257 + $0x1c] sm:$0xf]
        %v266 = vld [vmem:[%s257 + $0x20] sm:$0x3]
        %v267 = vld [vmem:[%s257 + $0x24] sm:$0xf]
        %v268 = vld [vmem:[%s257 + $0x28] sm:$0xf]
        %v269 = vld [vmem:[%s257 + $0x2c] sm:$0x3]
        %v270 = vld [vmem:[%s257 + $0x30] sm:$0xf]
        %v271 = vld [vmem:[%s257 + $0x34] sm:$0xf]
        %v272 = vld [vmem:[%s257 + $0x38] sm:$0x3]
        %v273 = vld [vmem:[%s257 + $0x3c] sm:$0xf]
        %v274 = vld [vmem:[%s257 + $0x40] sm:$0xf]
        %v275 = vld [vmem:[%s257 + $0x44] sm:$0x3]
        %v276 = vld [vmem:[%s257 + $0x48] sm:$0xf]
        %v277 = vld [vmem:[%s257 + $0x4c] sm:$0xf]
        %v278 = vld [vmem:[%s257 + $0x50] sm:$0x3]
        %v279 = vld [vmem:[%s257 + $0x54] sm:$0xf]
        %v280 = vld [vmem:[%s257 + $0x58] sm:$0xf]
        %v281 = vld [vmem:[%s257 + $0x5c] sm:$0x3]
        %v282 = vld [vmem:[%s257 + $0x60] sm:$0xf]
        %v283 = vld [vmem:[%s257 + $0x64] sm:$0xf]
        %v284 = vld [vmem:[%s257 + $0x68] sm:$0x3]
        %v285 = vld [vmem:[%s257 + $0x6c] sm:$0xf]
        %v286 = vld [vmem:[%s257 + $0x70] sm:$0xf]
        %v287 = vld [vmem:[%s257 + $0x74] sm:$0x3]
        %v288 = vld [vmem:[%s257 + $0x78] sm:$0xf]
        %v289 = vld [vmem:[%s257 + $0x7c] sm:$0xf]
        %v290 = vld [vmem:[%s257 + $0x80] sm:$0x3]
        %v291 = vld [vmem:[%s257 + $0x84] sm:$0xf]
        %v292 = vld [vmem:[%s257 + $0x88] sm:$0xf]
        %v293 = vld [vmem:[%s257 + $0x8c] sm:$0x3]
        %v324 = vunpack.c.l.b16 %v258
        %v325 = vunpack.c.l.b16 %v259
        %v326 = vunpack.c.l.b16 %v260
        %v327 = vunpack.c.l.b16 %v261
        %v328 = vunpack.c.l.b16 %v262
        %v329 = vunpack.c.l.b16 %v263
        %v330 = vunpack.c.l.b16 %v264
        %v331 = vunpack.c.l.b16 %v265
        %v332 = vunpack.c.l.b16 %v266
        %v333 = vunpack.c.l.b16 %v267
        %v334 = vunpack.c.l.b16 %v268
        %v335 = vunpack.c.l.b16 %v269
        %v336 = vunpack.c.l.b16 %v270
        %v337 = vunpack.c.l.b16 %v271
        %v338 = vunpack.c.l.b16 %v272
        %v339 = vunpack.c.l.b16 %v273
        %v340 = vunpack.c.l.b16 %v274
        %v341 = vunpack.c.l.b16 %v275
        %v342 = vunpack.c.l.b16 %v276
        %v343 = vunpack.c.l.b16 %v277
        %v344 = vunpack.c.l.b16 %v278
        %v345 = vunpack.c.l.b16 %v279
        %v346 = vunpack.c.l.b16 %v280
        %v347 = vunpack.c.l.b16 %v281
        %v348 = vunpack.c.l.b16 %v282
        %v349 = vunpack.c.l.b16 %v283
        %v350 = vunpack.c.l.b16 %v284
        %v351 = vunpack.c.l.b16 %v285
        %v352 = vunpack.c.l.b16 %v286
        %v353 = vunpack.c.l.b16 %v287
        %v354 = vpack.c.b16 %v325, %v324
        %v355 = vpack.c.b16 %v326, %v326
        %v356 = vpack.c.b16 %v328, %v327
        %v357 = vpack.c.b16 %v329, %v329
        %v358 = vpack.c.b16 %v331, %v330
        %v359 = vpack.c.b16 %v332, %v332
        %v360 = vpack.c.b16 %v334, %v333
        %v361 = vpack.c.b16 %v335, %v335
        %v362 = vpack.c.b16 %v337, %v336
        %v363 = vpack.c.b16 %v338, %v338
        %v364 = vpack.c.b16 %v340, %v339
        %v365 = vpack.c.b16 %v341, %v341
        %v366 = vpack.c.b16 %v343, %v342
        %v367 = vpack.c.b16 %v344, %v344
        %v368 = vpack.c.b16 %v346, %v345
        %v369 = vpack.c.b16 %v347, %v347
        %v370 = vpack.c.b16 %v349, %v348
        %v371 = vpack.c.b16 %v350, %v350
        %v372 = vpack.c.b16 %v352, %v351
        %v373 = vpack.c.b16 %v353, %v353
        %vm374 = vsmask.f32 7424
        %v376 = vshrl.u32 %v354, 16
        %v378 = vshll.u32 %v354, 16
        %v380 = vrot.slane %v378, 1
        %v381 = vor.u32 %v376, %v380
        %v383 = vshll.u32 %v355, 16
        %v385 = vrot.slane %v383, 1
        %v386 = vsel %vm374, %v381, %v385
        %v387 = vshrl.u32 %v355, 16
        %v389 = vor.u32 %v387, %v385
        %v391 = vshrl.u32 %v356, 16
        %v393 = vshll.u32 %v356, 16
        %v395 = vrot.slane %v393, 1
        %v396 = vor.u32 %v391, %v395
        %v398 = vshll.u32 %v357, 16
        %v400 = vrot.slane %v398, 1
        %v401 = vsel %vm374, %v396, %v400
        %v402 = vshrl.u32 %v357, 16
        %v404 = vor.u32 %v402, %v400
        %v406 = vshrl.u32 %v358, 16
        %v408 = vshll.u32 %v358, 16
        %v410 = vrot.slane %v408, 1
        %v411 = vor.u32 %v406, %v410
        %v413 = vshll.u32 %v359, 16
        %v415 = vrot.slane %v413, 1
        %v416 = vsel %vm374, %v411, %v415
        %v417 = vshrl.u32 %v359, 16
        %v419 = vor.u32 %v417, %v415
        %v421 = vshrl.u32 %v360, 16
        %v423 = vshll.u32 %v360, 16
        %v425 = vrot.slane %v423, 1
        %v426 = vor.u32 %v421, %v425
        %v428 = vshll.u32 %v361, 16
        %v430 = vrot.slane %v428, 1
        %v431 = vsel %vm374, %v426, %v430
        %v432 = vshrl.u32 %v361, 16
        %v434 = vor.u32 %v432, %v430
        %v436 = vshrl.u32 %v362, 16
        %v438 = vshll.u32 %v362, 16
        %v440 = vrot.slane %v438, 1
        %v441 = vor.u32 %v436, %v440
        %v443 = vshll.u32 %v363, 16
        %v445 = vrot.slane %v443, 1
        %v446 = vsel %vm374, %v441, %v445
        %v447 = vshrl.u32 %v363, 16
        %v449 = vor.u32 %v447, %v445
        %v451 = vshrl.u32 %v364, 16
        %v453 = vshll.u32 %v364, 16
        %v455 = vrot.slane %v453, 1
        %v456 = vor.u32 %v451, %v455
        %v458 = vshll.u32 %v365, 16
        %v460 = vrot.slane %v458, 1
        %v461 = vsel %vm374, %v456, %v460
        %v462 = vshrl.u32 %v365, 16
        %v464 = vor.u32 %v462, %v460
        %v466 = vshrl.u32 %v366, 16
        %v468 = vshll.u32 %v366, 16
        %v470 = vrot.slane %v468, 1
        %v471 = vor.u32 %v466, %v470
        %v473 = vshll.u32 %v367, 16
        %v475 = vrot.slane %v473, 1
        %v476 = vsel %vm374, %v471, %v475
        %v477 = vshrl.u32 %v367, 16
        %v479 = vor.u32 %v477, %v475
        %v481 = vshrl.u32 %v368, 16
        %v483 = vshll.u32 %v368, 16
        %v485 = vrot.slane %v483, 1
        %v486 = vor.u32 %v481, %v485
        %v488 = vshll.u32 %v369, 16
        %v490 = vrot.slane %v488, 1
        %v491 = vsel %vm374, %v486, %v490
        %v492 = vshrl.u32 %v369, 16
        %v494 = vor.u32 %v492, %v490
        %v496 = vshrl.u32 %v370, 16
        %v498 = vshll.u32 %v370, 16
        %v500 = vrot.slane %v498, 1
        %v501 = vor.u32 %v496, %v500
        %v503 = vshll.u32 %v371, 16
        %v505 = vrot.slane %v503, 1
        %v506 = vsel %vm374, %v501, %v505
        %v507 = vshrl.u32 %v371, 16
        %v509 = vor.u32 %v507, %v505
        %v511 = vshrl.u32 %v372, 16
        %v513 = vshll.u32 %v372, 16
        %v515 = vrot.slane %v513, 1
        %v516 = vor.u32 %v511, %v515
        %v518 = vshll.u32 %v373, 16
        %v520 = vrot.slane %v518, 1
        %v521 = vsel %vm374, %v516, %v520
        %v522 = vshrl.u32 %v373, 16
        %v524 = vor.u32 %v522, %v520
        %vm525 = vcmask 1046528
        %v526 = vrot.slane %v354, 1
        %v527 = vrot.slane %v355, 1
        %v528 = vsel %vm525, %v526, %v527
        %v529 = vrot.slane %v356, 1
        %v530 = vrot.slane %v357, 1
        %v531 = vsel %vm525, %v529, %v530
        %v532 = vrot.slane %v358, 1
        %v533 = vrot.slane %v359, 1
        %v534 = vsel %vm525, %v532, %v533
        %v535 = vrot.slane %v360, 1
        %v536 = vrot.slane %v361, 1
        %v537 = vsel %vm525, %v535, %v536
        %v538 = vrot.slane %v362, 1
        %v539 = vrot.slane %v363, 1
        %v540 = vsel %vm525, %v538, %v539
        %v541 = vrot.slane %v364, 1
        %v542 = vrot.slane %v365, 1
        %v543 = vsel %vm525, %v541, %v542
        %v544 = vrot.slane %v366, 1
        %v545 = vrot.slane %v367, 1
        %v546 = vsel %vm525, %v544, %v545
        %v547 = vrot.slane %v368, 1
        %v548 = vrot.slane %v369, 1
        %v549 = vsel %vm525, %v547, %v548
        %v550 = vrot.slane %v370, 1
        %v551 = vrot.slane %v371, 1
        %v552 = vsel %vm525, %v550, %v551
        %v553 = vrot.slane %v372, 1
        %v554 = vrot.slane %v373, 1
        %v555 = vsel %vm525, %v553, %v554
        %v559 = vunpack.c.l.b16 %v288
        %v560 = vunpack.c.l.b16 %v289
        %v561 = vunpack.c.l.b16 %v290
        %v562 = vpack.c.b16 %v560, %v559
        %v563 = vpack.c.b16 %v561, %v561
        %v565 = vshrl.u32 %v562, 16
        %v567 = vshll.u32 %v562, 16
        %v569 = vrot.slane %v567, 1
        %v570 = vor.u32 %v565, %v569
        %v572 = vshll.u32 %v563, 16
        %v574 = vrot.slane %v572, 1
        %v575 = vsel %vm374, %v570, %v574
        %v576 = vshrl.u32 %v563, 16
        %v578 = vor.u32 %v576, %v574
        %v579 = vrot.slane %v562, 1
        %v580 = vrot.slane %v563, 1
        %v581 = vsel %vm525, %v579, %v580
        %v585 = vunpack.c.l.b16 %v291
        %v586 = vunpack.c.l.b16 %v292
        %v587 = vunpack.c.l.b16 %v293
        %v588 = vpack.c.b16 %v586, %v585
        %v589 = vpack.c.b16 %v587, %v587
        %v591 = vshrl.u32 %v588, 16
        %v593 = vshll.u32 %v588, 16
        %v595 = vrot.slane %v593, 1
        %v596 = vor.u32 %v591, %v595
        %v598 = vshll.u32 %v589, 16
        %v600 = vrot.slane %v598, 1
        %v601 = vsel %vm374, %v596, %v600
        %v602 = vshrl.u32 %v589, 16
        %v604 = vor.u32 %v602, %v600
        %v605 = vrot.slane %v588, 1
        %v606 = vrot.slane %v589, 1
        %v607 = vsel %vm525, %v605, %v606
        %v608 = vld [vmem:[%s1] sm:$0xf]
        %v609 = vld [vmem:[%s1 + $0x4] sm:$0xf]
        %v610 = vld [vmem:[%s1 + $0x8] sm:$0xf]
        %v611 = vld [vmem:[%s1 + $0xc] sm:$0xf]
        %v612 = vld [vmem:[%s1 + $0x10] sm:$0xf]
        %v613 = vld [vmem:[%s1 + $0x14] sm:$0xf]
        %v614 = vld [vmem:[%s1 + $0x18] sm:$0xf]
        %v615 = vld [vmem:[%s1 + $0x1c] sm:$0xf]
        %v616 = vld [vmem:[%s1 + $0x20] sm:$0xf]
        %v617 = vld [vmem:[%s1 + $0x24] sm:$0xf]
        %v618 = vld [vmem:[%s1 + $0x28] sm:$0xf]
        %v619 = vld [vmem:[%s1 + $0x2c] sm:$0xf]
        %v620 = vld [vmem:[%s1 + $0x30] sm:$0xf]
        %v621 = vld [vmem:[%s1 + $0x34] sm:$0xf]
        %v622 = vld [vmem:[%s1 + $0x38] sm:$0xf]
        %v623 = vld [vmem:[%s1 + $0x3c] sm:$0xf]
        %v624 = vld [vmem:[%s1 + $0x40] sm:$0xf]
        %v625 = vld [vmem:[%s1 + $0x44] sm:$0xf]
        %v626 = vld [vmem:[%s1 + $0x48] sm:$0xf]
        %v627 = vld [vmem:[%s1 + $0x4c] sm:$0xf]
        %v628 = vld [vmem:[%s1 + $0x50] sm:$0xf]
        %v629 = vld [vmem:[%s1 + $0x54] sm:$0xf]
        %v630 = vld [vmem:[%s1 + $0x58] sm:$0xf]
        %v631 = vld [vmem:[%s1 + $0x5c] sm:$0xf]
        %v632 = vld [vmem:[%s1 + $0x60] sm:$0xf]
        %v633 = vld [vmem:[%s1 + $0x64] sm:$0xf]
        %v634 = vld [vmem:[%s1 + $0x68] sm:$0xf]
        %v635 = vld [vmem:[%s1 + $0x6c] sm:$0xf]
        %v636 = vld [vmem:[%s1 + $0x70] sm:$0xf]
        %v637 = vld [vmem:[%s1 + $0x74] sm:$0xf]
        %v638 = vld [vmem:[%s1 + $0x78] sm:$0xf]
        %v639 = vld [vmem:[%s1 + $0x7c] sm:$0xf]
        %v640 = vld [vmem:[%s1 + $0x80] sm:$0xf]
        %v641 = vld [vmem:[%s1 + $0x84] sm:$0xf]
        %v642 = vld [vmem:[%s1 + $0x88] sm:$0xf]
        %v643 = vld [vmem:[%s1 + $0x8c] sm:$0xf]
        %v644 = vld [vmem:[%s1 + $0x90] sm:$0xf]
        %v645 = vld [vmem:[%s1 + $0x94] sm:$0xf]
        %v646 = vld [vmem:[%s1 + $0x98] sm:$0xf]
        %v647 = vld [vmem:[%s1 + $0x9c] sm:$0xf]
        %v648 = vld [vmem:[%s1 + $0xa0] sm:$0xf]
        %v649 = vld [vmem:[%s1 + $0xa4] sm:$0xf]
        %v650 = vld [vmem:[%s1 + $0xa8] sm:$0xf]
        %v651 = vld [vmem:[%s1 + $0xac] sm:$0xf]
        %v652 = vld [vmem:[%s1 + $0xb0] sm:$0xf]
        %v653 = vld [vmem:[%s1 + $0xb4] sm:$0xf]
        %v654 = vld [vmem:[%s1 + $0xb8] sm:$0xf]
        %v655 = vld [vmem:[%s1 + $0xbc] sm:$0xf]
        %v656 = vld [vmem:[%s1 + $0xc0] sm:$0xf]
        %v657 = vld [vmem:[%s1 + $0xc4] sm:$0xf]
        %v658 = vld [vmem:[%s1 + $0xc8] sm:$0xf]
        %v659 = vld [vmem:[%s1 + $0xcc] sm:$0xf]
        %v660 = vld [vmem:[%s1 + $0xd0] sm:$0xf]
        %v661 = vld [vmem:[%s1 + $0xd4] sm:$0xf]
        %v662 = vld [vmem:[%s1 + $0xd8] sm:$0xf]
        %v663 = vld [vmem:[%s1 + $0xdc] sm:$0xf]
        %v664 = vld [vmem:[%s1 + $0xe0] sm:$0xf]
        %v665 = vld [vmem:[%s1 + $0xe4] sm:$0xf]
        %v666 = vld [vmem:[%s1 + $0xe8] sm:$0xf]
        %v667 = vld [vmem:[%s1 + $0xec] sm:$0xf]
        %v668 = vld [vmem:[%s1 + $0xf0] sm:$0xf]
        %v669 = vld [vmem:[%s1 + $0xf4] sm:$0xf]
        %v670 = vld [vmem:[%s1 + $0xf8] sm:$0xf]
        %v671 = vld [vmem:[%s1 + $0xfc] sm:$0xf]
        %v672 = vld [vmem:[%s1 + $0x100] sm:$0xf]
        %v673 = vld [vmem:[%s1 + $0x104] sm:$0xf]
        %v674 = vld [vmem:[%s1 + $0x108] sm:$0xf]
        %v675 = vld [vmem:[%s1 + $0x10c] sm:$0xf]
        %v676 = vld [vmem:[%s1 + $0x110] sm:$0xf]
        %v677 = vld [vmem:[%s1 + $0x114] sm:$0xf]
        %v678 = vld [vmem:[%s1 + $0x118] sm:$0xf]
        %v679 = vld [vmem:[%s1 + $0x11c] sm:$0xf]
        %v680 = vld [vmem:[%s1 + $0x120] sm:$0xf]
        %v681 = vld [vmem:[%s1 + $0x124] sm:$0xf]
        %v682 = vld [vmem:[%s1 + $0x128] sm:$0xf]
        %v683 = vld [vmem:[%s1 + $0x12c] sm:$0xf]
        %v684 = vld [vmem:[%s1 + $0x130] sm:$0xf]
        %v685 = vld [vmem:[%s1 + $0x134] sm:$0xf]
        %v686 = vld [vmem:[%s1 + $0x138] sm:$0xf]
        %v687 = vld [vmem:[%s1 + $0x13c] sm:$0xf]
        %v688 = vld [vmem:[%s1 + $0x140] sm:$0xf]
        %v689 = vld [vmem:[%s1 + $0x144] sm:$0xf]
        %v690 = vld [vmem:[%s1 + $0x148] sm:$0xf]
        %v691 = vld [vmem:[%s1 + $0x14c] sm:$0xf]
        %v692 = vld [vmem:[%s1 + $0x150] sm:$0xf]
        %v693 = vld [vmem:[%s1 + $0x154] sm:$0xf]
        %v694 = vld [vmem:[%s1 + $0x158] sm:$0xf]
        %v695 = vld [vmem:[%s1 + $0x15c] sm:$0xf]
        %v696 = vld [vmem:[%s1 + $0x160] sm:$0xf]
        %v697 = vld [vmem:[%s1 + $0x164] sm:$0xf]
        %v698 = vld [vmem:[%s1 + $0x168] sm:$0xf]
        %v699 = vld [vmem:[%s1 + $0x16c] sm:$0xf]
        %v700 = vld [vmem:[%s1 + $0x170] sm:$0xf]
        %v701 = vld [vmem:[%s1 + $0x174] sm:$0xf]
        %v702 = vld [vmem:[%s1 + $0x178] sm:$0xf]
        %v703 = vld [vmem:[%s1 + $0x17c] sm:$0xf]
        %v704 = vld [vmem:[%s1 + $0x180] sm:$0xf]
        %v705 = vld [vmem:[%s1 + $0x184] sm:$0xf]
        %v706 = vld [vmem:[%s1 + $0x188] sm:$0xf]
        %v707 = vld [vmem:[%s1 + $0x18c] sm:$0xf]
        %v708 = vld [vmem:[%s1 + $0x190] sm:$0xf]
        %v709 = vld [vmem:[%s1 + $0x194] sm:$0xf]
        %v710 = vld [vmem:[%s1 + $0x198] sm:$0xf]
        %v711 = vld [vmem:[%s1 + $0x19c] sm:$0xf]
        %v712 = vld [vmem:[%s1 + $0x1a0] sm:$0xf]
        %v713 = vld [vmem:[%s1 + $0x1a4] sm:$0xf]
        %v714 = vld [vmem:[%s1 + $0x1a8] sm:$0xf]
        %v715 = vld [vmem:[%s1 + $0x1ac] sm:$0xf]
        %v716 = vld [vmem:[%s1 + $0x1b0] sm:$0xf]
        %v717 = vld [vmem:[%s1 + $0x1b4] sm:$0xf]
        %v718 = vld [vmem:[%s1 + $0x1b8] sm:$0xf]
        %v719 = vld [vmem:[%s1 + $0x1bc] sm:$0xf]
        %v720 = vld [vmem:[%s1 + $0x1c0] sm:$0xf]
        %v721 = vld [vmem:[%s1 + $0x1c4] sm:$0xf]
        %v722 = vld [vmem:[%s1 + $0x1c8] sm:$0xf]
        %v723 = vld [vmem:[%s1 + $0x1cc] sm:$0xf]
        %v724 = vld [vmem:[%s1 + $0x1d0] sm:$0xf]
        %v725 = vld [vmem:[%s1 + $0x1d4] sm:$0xf]
        %v726 = vld [vmem:[%s1 + $0x1d8] sm:$0xf]
        %v727 = vld [vmem:[%s1 + $0x1dc] sm:$0xf]
        %v728 = vld [vmem:[%s1 + $0x1e0] sm:$0xf]
        %v729 = vld [vmem:[%s1 + $0x1e4] sm:$0xf]
        %v730 = vld [vmem:[%s1 + $0x1e8] sm:$0xf]
        %v731 = vld [vmem:[%s1 + $0x1ec] sm:$0xf]
        %v732 = vld [vmem:[%s1 + $0x1f0] sm:$0xf]
        %v733 = vld [vmem:[%s1 + $0x1f4] sm:$0xf]
        %v734 = vld [vmem:[%s1 + $0x1f8] sm:$0xf]
        %v735 = vld [vmem:[%s1 + $0x1fc] sm:$0xf]
        %v736 = vld [vmem:[%s1 + $0x200] sm:$0xf]
        %v737 = vld [vmem:[%s1 + $0x204] sm:$0xf]
        %v738 = vld [vmem:[%s1 + $0x208] sm:$0xf]
        %v739 = vld [vmem:[%s1 + $0x20c] sm:$0xf]
        %v740 = vld [vmem:[%s1 + $0x210] sm:$0xf]
        %v741 = vld [vmem:[%s1 + $0x214] sm:$0xf]
        %v742 = vld [vmem:[%s1 + $0x218] sm:$0xf]
        %v743 = vld [vmem:[%s1 + $0x21c] sm:$0xf]
        %v744 = vld [vmem:[%s1 + $0x220] sm:$0xf]
        %v745 = vld [vmem:[%s1 + $0x224] sm:$0xf]
        %v746 = vld [vmem:[%s1 + $0x228] sm:$0xf]
        %v747 = vld [vmem:[%s1 + $0x22c] sm:$0xf]
        %v748 = vld [vmem:[%s1 + $0x230] sm:$0xf]
        %v749 = vld [vmem:[%s1 + $0x234] sm:$0xf]
        %v750 = vld [vmem:[%s1 + $0x238] sm:$0xf]
        %v751 = vld [vmem:[%s1 + $0x23c] sm:$0xf]
        %v752 = vld [vmem:[%s2] sm:$0x1]
        %v754 = vlaneseq
        %v755 = vshrl.u32 %v754, 7
        %v756 = vsub.s32 0, %v755
        %v757 = vrot.slane %v752, %v756
        %v758 = vcombine.low %v354, %v386
        %v759 = vcombine.high %v354, %v386
        %v760 = vcombine.low %v528, %v356
        %v761 = vcombine.high %v528, %v356
        %v762 = vcombine.low %v401, %v531
        %v763 = vcombine.high %v401, %v531
        %v764 = vcombine.low %v358, %v416
        %v765 = vcombine.high %v358, %v416
        %v767 = vunpack.c.l.s4 1966171168
        %v768 = vunpack.c.0.s8 %v767
        %v769 = vlaneseq
        %v770 = vshrl.u32 %v769, 7
        %v771 = vsub.s32 %v768, %v770
        %v772 = vrot.slane %v758, %v771
        %v774 = vunpack.c.l.s4 1966171168
        %v775 = vunpack.c.0.s8 %v774
        %v776 = vlaneseq
        %v777 = vshrl.u32 %v776, 7
        %v778 = vsub.s32 %v775, %v777
        %v779 = vrot.slane %v759, %v778
        %v781 = vunpack.c.l.s4 1966171168
        %v782 = vunpack.c.0.s8 %v781
        %v783 = vlaneseq
        %v784 = vshrl.u32 %v783, 7
        %v785 = vsub.s32 %v782, %v784
        %v786 = vrot.slane %v760, %v785
        %v788 = vunpack.c.l.s4 1966171168
        %v789 = vunpack.c.0.s8 %v788
        %v790 = vlaneseq
        %v791 = vshrl.u32 %v790, 7
        %v792 = vsub.s32 %v789, %v791
        %v793 = vrot.slane %v761, %v792
        %v795 = vunpack.c.l.s4 1966171168
        %v796 = vunpack.c.0.s8 %v795
        %v797 = vlaneseq
        %v798 = vshrl.u32 %v797, 7
        %v799 = vsub.s32 %v796, %v798
        %v800 = vrot.slane %v762, %v799
        %v802 = vunpack.c.l.s4 1966171168
        %v803 = vunpack.c.0.s8 %v802
        %v804 = vlaneseq
        %v805 = vshrl.u32 %v804, 7
        %v806 = vsub.s32 %v803, %v805
        %v807 = vrot.slane %v763, %v806
        %v809 = vunpack.c.l.s4 1966171168
        %v810 = vunpack.c.0.s8 %v809
        %v811 = vlaneseq
        %v812 = vshrl.u32 %v811, 7
        %v813 = vsub.s32 %v810, %v812
        %v814 = vrot.slane %v764, %v813
        %v816 = vunpack.c.l.s4 1966171168
        %v817 = vunpack.c.0.s8 %v816
        %v818 = vlaneseq
        %v819 = vshrl.u32 %v818, 7
        %v820 = vsub.s32 %v817, %v819
        %v821 = vrot.slane %v765, %v820
        %v822 = vcombine.low %v772, %v786
        %v823 = vcombine.high %v772, %v786
        %v824 = vcombine.low %v779, %v793
        %v825 = vcombine.high %v779, %v793
        %v826 = vcombine.low %v800, %v814
        %v827 = vcombine.high %v800, %v814
        %v828 = vcombine.low %v807, %v821
        %v829 = vcombine.high %v807, %v821
        %v831 = vunpack.c.l.s4 1966171168
        %v832 = vunpack.c.0.s8 %v831
        %v833 = vlaneseq
        %v834 = vshrl.u32 %v833, 7
        %v835 = vsub.s32 %v832, %v834
        %v836 = vrot.slane %v822, %v835
        %v838 = vunpack.c.l.s4 1966171168
        %v839 = vunpack.c.0.s8 %v838
        %v840 = vlaneseq
        %v841 = vshrl.u32 %v840, 7
        %v842 = vsub.s32 %v839, %v841
        %v843 = vrot.slane %v824, %v842
        %v845 = vunpack.c.l.s4 1966171168
        %v846 = vunpack.c.0.s8 %v845
        %v847 = vlaneseq
        %v848 = vshrl.u32 %v847, 7
        %v849 = vsub.s32 %v846, %v848
        %v850 = vrot.slane %v823, %v849
        %v852 = vunpack.c.l.s4 1966171168
        %v853 = vunpack.c.0.s8 %v852
        %v854 = vlaneseq
        %v855 = vshrl.u32 %v854, 7
        %v856 = vsub.s32 %v853, %v855
        %v857 = vrot.slane %v825, %v856
        %v859 = vunpack.c.l.s4 1966171168
        %v860 = vunpack.c.0.s8 %v859
        %v861 = vlaneseq
        %v862 = vshrl.u32 %v861, 7
        %v863 = vsub.s32 %v860, %v862
        %v864 = vrot.slane %v826, %v863
        %v866 = vunpack.c.l.s4 1966171168
        %v867 = vunpack.c.0.s8 %v866
        %v868 = vlaneseq
        %v869 = vshrl.u32 %v868, 7
        %v870 = vsub.s32 %v867, %v869
        %v871 = vrot.slane %v828, %v870
        %v873 = vunpack.c.l.s4 1966171168
        %v874 = vunpack.c.0.s8 %v873
        %v875 = vlaneseq
        %v876 = vshrl.u32 %v875, 7
        %v877 = vsub.s32 %v874, %v876
        %v878 = vrot.slane %v827, %v877
        %v880 = vunpack.c.l.s4 1966171168
        %v881 = vunpack.c.0.s8 %v880
        %v882 = vlaneseq
        %v883 = vshrl.u32 %v882, 7
        %v884 = vsub.s32 %v881, %v883
        %v885 = vrot.slane %v829, %v884
        %v886 = vcombine.low %v836, %v864
        %v887 = vcombine.high %v836, %v864
        %v888 = vcombine.low %v843, %v871
        %v889 = vcombine.high %v843, %v871
        %v890 = vcombine.low %v850, %v878
        %v891 = vcombine.high %v850, %v878
        %v892 = vcombine.low %v857, %v885
        %v893 = vcombine.high %v857, %v885
        %v894 = vcombine.high %v534, %v534
        %v896 = vunpack.c.l.s4 1966171168
        %v897 = vunpack.c.0.s8 %v896
        %v898 = vlaneseq
        %v899 = vshrl.u32 %v898, 7
        %v900 = vsub.s32 %v897, %v899
        %v901 = vrot.slane %v534, %v900
        %v903 = vunpack.c.l.s4 1966171168
        %v904 = vunpack.c.0.s8 %v903
        %v905 = vlaneseq
        %v906 = vshrl.u32 %v905, 7
        %v907 = vsub.s32 %v904, %v906
        %v908 = vrot.slane %v894, %v907
        %v909 = vcombine.high %v901, %v901
        %v910 = vcombine.high %v908, %v908
        %v912 = vunpack.c.l.s4 1966171168
        %v913 = vunpack.c.0.s8 %v912
        %v914 = vlaneseq
        %v915 = vshrl.u32 %v914, 7
        %v916 = vsub.s32 %v913, %v915
        %v917 = vrot.slane %v901, %v916
        %v919 = vunpack.c.l.s4 1966171168
        %v920 = vunpack.c.0.s8 %v919
        %v921 = vlaneseq
        %v922 = vshrl.u32 %v921, 7
        %v923 = vsub.s32 %v920, %v922
        %v924 = vrot.slane %v908, %v923
        %v926 = vunpack.c.l.s4 1966171168
        %v927 = vunpack.c.0.s8 %v926
        %v928 = vlaneseq
        %v929 = vshrl.u32 %v928, 7
        %v930 = vsub.s32 %v927, %v929
        %v931 = vrot.slane %v909, %v930
        %v933 = vunpack.c.l.s4 1966171168
        %v934 = vunpack.c.0.s8 %v933
        %v935 = vlaneseq
        %v936 = vshrl.u32 %v935, 7
        %v937 = vsub.s32 %v934, %v936
        %v938 = vrot.slane %v910, %v937
        %v939 = vcombine.high %v917, %v917
        %v940 = vcombine.high %v924, %v924
        %v941 = vcombine.high %v931, %v931
        %v942 = vcombine.high %v938, %v938
        %v943 = vcombine.low %v355, %v389
        %v944 = vcombine.low %v527, %v357
        %v945 = vcombine.low %v404, %v530
        %v946 = vcombine.low %v359, %v419
        %v948 = vunpack.c.l.s4 1966171168
        %v949 = vunpack.c.0.s8 %v948
        %v950 = vlaneseq
        %v951 = vshrl.u32 %v950, 7
        %v952 = vsub.s32 %v949, %v951
        %v953 = vrot.slane %v943, %v952
        %v955 = vunpack.c.l.s4 1966171168
        %v956 = vunpack.c.0.s8 %v955
        %v957 = vlaneseq
        %v958 = vshrl.u32 %v957, 7
        %v959 = vsub.s32 %v956, %v958
        %v960 = vrot.slane %v944, %v959
        %v962 = vunpack.c.l.s4 1966171168
        %v963 = vunpack.c.0.s8 %v962
        %v964 = vlaneseq
        %v965 = vshrl.u32 %v964, 7
        %v966 = vsub.s32 %v963, %v965
        %v967 = vrot.slane %v945, %v966
        %v969 = vunpack.c.l.s4 1966171168
        %v970 = vunpack.c.0.s8 %v969
        %v971 = vlaneseq
        %v972 = vshrl.u32 %v971, 7
        %v973 = vsub.s32 %v970, %v972
        %v974 = vrot.slane %v946, %v973
        %v975 = vcombine.low %v953, %v960
        %v976 = vcombine.low %v967, %v974
        %v978 = vunpack.c.l.s4 1966171168
        %v979 = vunpack.c.0.s8 %v978
        %v980 = vlaneseq
        %v981 = vshrl.u32 %v980, 7
        %v982 = vsub.s32 %v979, %v981
        %v983 = vrot.slane %v975, %v982
        %v985 = vunpack.c.l.s4 1966171168
        %v986 = vunpack.c.0.s8 %v985
        %v987 = vlaneseq
        %v988 = vshrl.u32 %v987, 7
        %v989 = vsub.s32 %v986, %v988
        %v990 = vrot.slane %v976, %v989
        %v991 = vcombine.low %v983, %v990
        %v993 = vunpack.c.l.s4 1966171168
        %v994 = vunpack.c.0.s8 %v993
        %v995 = vlaneseq
        %v996 = vshrl.u32 %v995, 7
        %v997 = vsub.s32 %v994, %v996
        %v998 = vrot.slane %v533, %v997
        %v1000 = vunpack.c.l.s4 1966171168
        %v1001 = vunpack.c.0.s8 %v1000
        %v1002 = vlaneseq
        %v1003 = vshrl.u32 %v1002, 7
        %v1004 = vsub.s32 %v1001, %v1003
        %v1005 = vrot.slane %v998, %v1004
        %v1006 = vcombine.low %v356, %v401
        %v1007 = vcombine.high %v356, %v401
        %v1008 = vcombine.low %v531, %v358
        %v1009 = vcombine.high %v531, %v358
        %v1010 = vcombine.low %v416, %v534
        %v1011 = vcombine.high %v416, %v534
        %v1012 = vcombine.low %v360, %v431
        %v1013 = vcombine.high %v360, %v431
        %v1015 = vunpack.c.l.s4 1966171168
        %v1016 = vunpack.c.0.s8 %v1015
        %v1017 = vlaneseq
        %v1018 = vshrl.u32 %v1017, 7
        %v1019 = vsub.s32 %v1016, %v1018
        %v1020 = vrot.slane %v1006, %v1019
        %v1022 = vunpack.c.l.s4 1966171168
        %v1023 = vunpack.c.0.s8 %v1022
        %v1024 = vlaneseq
        %v1025 = vshrl.u32 %v1024, 7
        %v1026 = vsub.s32 %v1023, %v1025
        %v1027 = vrot.slane %v1007, %v1026
        %v1029 = vunpack.c.l.s4 1966171168
        %v1030 = vunpack.c.0.s8 %v1029
        %v1031 = vlaneseq
        %v1032 = vshrl.u32 %v1031, 7
        %v1033 = vsub.s32 %v1030, %v1032
        %v1034 = vrot.slane %v1008, %v1033
        %v1036 = vunpack.c.l.s4 1966171168
        %v1037 = vunpack.c.0.s8 %v1036
        %v1038 = vlaneseq
        %v1039 = vshrl.u32 %v1038, 7
        %v1040 = vsub.s32 %v1037, %v1039
        %v1041 = vrot.slane %v1009, %v1040
        %v1043 = vunpack.c.l.s4 1966171168
        %v1044 = vunpack.c.0.s8 %v1043
        %v1045 = vlaneseq
        %v1046 = vshrl.u32 %v1045, 7
        %v1047 = vsub.s32 %v1044, %v1046
        %v1048 = vrot.slane %v1010, %v1047
        %v1050 = vunpack.c.l.s4 1966171168
        %v1051 = vunpack.c.0.s8 %v1050
        %v1052 = vlaneseq
        %v1053 = vshrl.u32 %v1052, 7
        %v1054 = vsub.s32 %v1051, %v1053
        %v1055 = vrot.slane %v1011, %v1054
        %v1057 = vunpack.c.l.s4 1966171168
        %v1058 = vunpack.c.0.s8 %v1057
        %v1059 = vlaneseq
        %v1060 = vshrl.u32 %v1059, 7
        %v1061 = vsub.s32 %v1058, %v1060
        %v1062 = vrot.slane %v1012, %v1061
        %v1064 = vunpack.c.l.s4 1966171168
        %v1065 = vunpack.c.0.s8 %v1064
        %v1066 = vlaneseq
        %v1067 = vshrl.u32 %v1066, 7
        %v1068 = vsub.s32 %v1065, %v1067
        %v1069 = vrot.slane %v1013, %v1068
        %v1070 = vcombine.low %v1020, %v1034
        %v1071 = vcombine.high %v1020, %v1034
        %v1072 = vcombine.low %v1027, %v1041
        %v1073 = vcombine.high %v1027, %v1041
        %v1074 = vcombine.low %v1048, %v1062
        %v1075 = vcombine.high %v1048, %v1062
        %v1076 = vcombine.low %v1055, %v1069
        %v1077 = vcombine.high %v1055, %v1069
        %v1079 = vunpack.c.l.s4 1966171168
        %v1080 = vunpack.c.0.s8 %v1079
        %v1081 = vlaneseq
        %v1082 = vshrl.u32 %v1081, 7
        %v1083 = vsub.s32 %v1080, %v1082
        %v1084 = vrot.slane %v1070, %v1083
        %v1086 = vunpack.c.l.s4 1966171168
        %v1087 = vunpack.c.0.s8 %v1086
        %v1088 = vlaneseq
        %v1089 = vshrl.u32 %v1088, 7
        %v1090 = vsub.s32 %v1087, %v1089
        %v1091 = vrot.slane %v1072, %v1090
        %v1093 = vunpack.c.l.s4 1966171168
        %v1094 = vunpack.c.0.s8 %v1093
        %v1095 = vlaneseq
        %v1096 = vshrl.u32 %v1095, 7
        %v1097 = vsub.s32 %v1094, %v1096
        %v1098 = vrot.slane %v1071, %v1097
        %v1100 = vunpack.c.l.s4 1966171168
        %v1101 = vunpack.c.0.s8 %v1100
        %v1102 = vlaneseq
        %v1103 = vshrl.u32 %v1102, 7
        %v1104 = vsub.s32 %v1101, %v1103
        %v1105 = vrot.slane %v1073, %v1104
        %v1107 = vunpack.c.l.s4 1966171168
        %v1108 = vunpack.c.0.s8 %v1107
        %v1109 = vlaneseq
        %v1110 = vshrl.u32 %v1109, 7
        %v1111 = vsub.s32 %v1108, %v1110
        %v1112 = vrot.slane %v1074, %v1111
        %v1114 = vunpack.c.l.s4 1966171168
        %v1115 = vunpack.c.0.s8 %v1114
        %v1116 = vlaneseq
        %v1117 = vshrl.u32 %v1116, 7
        %v1118 = vsub.s32 %v1115, %v1117
        %v1119 = vrot.slane %v1076, %v1118
        %v1121 = vunpack.c.l.s4 1966171168
        %v1122 = vunpack.c.0.s8 %v1121
        %v1123 = vlaneseq
        %v1124 = vshrl.u32 %v1123, 7
        %v1125 = vsub.s32 %v1122, %v1124
        %v1126 = vrot.slane %v1075, %v1125
        %v1128 = vunpack.c.l.s4 1966171168
        %v1129 = vunpack.c.0.s8 %v1128
        %v1130 = vlaneseq
        %v1131 = vshrl.u32 %v1130, 7
        %v1132 = vsub.s32 %v1129, %v1131
        %v1133 = vrot.slane %v1077, %v1132
        %v1134 = vcombine.low %v1084, %v1112
        %v1135 = vcombine.high %v1084, %v1112
        %v1136 = vcombine.low %v1091, %v1119
        %v1137 = vcombine.high %v1091, %v1119
        %v1138 = vcombine.low %v1098, %v1126
        %v1139 = vcombine.high %v1098, %v1126
        %v1140 = vcombine.low %v1105, %v1133
        %v1141 = vcombine.high %v1105, %v1133
        %v1142 = vcombine.high %v537, %v537
        %v1144 = vunpack.c.l.s4 1966171168
        %v1145 = vunpack.c.0.s8 %v1144
        %v1146 = vlaneseq
        %v1147 = vshrl.u32 %v1146, 7
        %v1148 = vsub.s32 %v1145, %v1147
        %v1149 = vrot.slane %v537, %v1148
        %v1151 = vunpack.c.l.s4 1966171168
        %v1152 = vunpack.c.0.s8 %v1151
        %v1153 = vlaneseq
        %v1154 = vshrl.u32 %v1153, 7
        %v1155 = vsub.s32 %v1152, %v1154
        %v1156 = vrot.slane %v1142, %v1155
        %v1157 = vcombine.high %v1149, %v1149
        %v1158 = vcombine.high %v1156, %v1156
        %v1160 = vunpack.c.l.s4 1966171168
        %v1161 = vunpack.c.0.s8 %v1160
        %v1162 = vlaneseq
        %v1163 = vshrl.u32 %v1162, 7
        %v1164 = vsub.s32 %v1161, %v1163
        %v1165 = vrot.slane %v1149, %v1164
        %v1167 = vunpack.c.l.s4 1966171168
        %v1168 = vunpack.c.0.s8 %v1167
        %v1169 = vlaneseq
        %v1170 = vshrl.u32 %v1169, 7
        %v1171 = vsub.s32 %v1168, %v1170
        %v1172 = vrot.slane %v1156, %v1171
        %v1174 = vunpack.c.l.s4 1966171168
        %v1175 = vunpack.c.0.s8 %v1174
        %v1176 = vlaneseq
        %v1177 = vshrl.u32 %v1176, 7
        %v1178 = vsub.s32 %v1175, %v1177
        %v1179 = vrot.slane %v1157, %v1178
        %v1181 = vunpack.c.l.s4 1966171168
        %v1182 = vunpack.c.0.s8 %v1181
        %v1183 = vlaneseq
        %v1184 = vshrl.u32 %v1183, 7
        %v1185 = vsub.s32 %v1182, %v1184
        %v1186 = vrot.slane %v1158, %v1185
        %v1187 = vcombine.high %v1165, %v1165
        %v1188 = vcombine.high %v1172, %v1172
        %v1189 = vcombine.high %v1179, %v1179
        %v1190 = vcombine.high %v1186, %v1186
        %v1191 = vcombine.low %v357, %v404
        %v1192 = vcombine.low %v530, %v359
        %v1193 = vcombine.low %v419, %v533
        %v1194 = vcombine.low %v361, %v434
        %v1196 = vunpack.c.l.s4 1966171168
        %v1197 = vunpack.c.0.s8 %v1196
        %v1198 = vlaneseq
        %v1199 = vshrl.u32 %v1198, 7
        %v1200 = vsub.s32 %v1197, %v1199
        %v1201 = vrot.slane %v1191, %v1200
        %v1203 = vunpack.c.l.s4 1966171168
        %v1204 = vunpack.c.0.s8 %v1203
        %v1205 = vlaneseq
        %v1206 = vshrl.u32 %v1205, 7
        %v1207 = vsub.s32 %v1204, %v1206
        %v1208 = vrot.slane %v1192, %v1207
        %v1210 = vunpack.c.l.s4 1966171168
        %v1211 = vunpack.c.0.s8 %v1210
        %v1212 = vlaneseq
        %v1213 = vshrl.u32 %v1212, 7
        %v1214 = vsub.s32 %v1211, %v1213
        %v1215 = vrot.slane %v1193, %v1214
        %v1217 = vunpack.c.l.s4 1966171168
        %v1218 = vunpack.c.0.s8 %v1217
        %v1219 = vlaneseq
        %v1220 = vshrl.u32 %v1219, 7
        %v1221 = vsub.s32 %v1218, %v1220
        %v1222 = vrot.slane %v1194, %v1221
        %v1223 = vcombine.low %v1201, %v1208
        %v1224 = vcombine.low %v1215, %v1222
        %v1226 = vunpack.c.l.s4 1966171168
        %v1227 = vunpack.c.0.s8 %v1226
        %v1228 = vlaneseq
        %v1229 = vshrl.u32 %v1228, 7
        %v1230 = vsub.s32 %v1227, %v1229
        %v1231 = vrot.slane %v1223, %v1230
        %v1233 = vunpack.c.l.s4 1966171168
        %v1234 = vunpack.c.0.s8 %v1233
        %v1235 = vlaneseq
        %v1236 = vshrl.u32 %v1235, 7
        %v1237 = vsub.s32 %v1234, %v1236
        %v1238 = vrot.slane %v1224, %v1237
        %v1239 = vcombine.low %v1231, %v1238
        %v1241 = vunpack.c.l.s4 1966171168
        %v1242 = vunpack.c.0.s8 %v1241
        %v1243 = vlaneseq
        %v1244 = vshrl.u32 %v1243, 7
        %v1245 = vsub.s32 %v1242, %v1244
        %v1246 = vrot.slane %v536, %v1245
        %v1248 = vunpack.c.l.s4 1966171168
        %v1249 = vunpack.c.0.s8 %v1248
        %v1250 = vlaneseq
        %v1251 = vshrl.u32 %v1250, 7
        %v1252 = vsub.s32 %v1249, %v1251
        %v1253 = vrot.slane %v1246, %v1252
        %v1254 = vcombine.low %v534, %v360
        %v1255 = vcombine.high %v534, %v360
        %v1256 = vcombine.low %v431, %v537
        %v1257 = vcombine.high %v431, %v537
        %v1258 = vcombine.low %v362, %v446
        %v1259 = vcombine.high %v362, %v446
        %v1261 = vunpack.c.l.s4 1966171168
        %v1262 = vunpack.c.0.s8 %v1261
        %v1263 = vlaneseq
        %v1264 = vshrl.u32 %v1263, 7
        %v1265 = vsub.s32 %v1262, %v1264
        %v1266 = vrot.slane %v1254, %v1265
        %v1268 = vunpack.c.l.s4 1966171168
        %v1269 = vunpack.c.0.s8 %v1268
        %v1270 = vlaneseq
        %v1271 = vshrl.u32 %v1270, 7
        %v1272 = vsub.s32 %v1269, %v1271
        %v1273 = vrot.slane %v1255, %v1272
        %v1275 = vunpack.c.l.s4 1966171168
        %v1276 = vunpack.c.0.s8 %v1275
        %v1277 = vlaneseq
        %v1278 = vshrl.u32 %v1277, 7
        %v1279 = vsub.s32 %v1276, %v1278
        %v1280 = vrot.slane %v1256, %v1279
        %v1282 = vunpack.c.l.s4 1966171168
        %v1283 = vunpack.c.0.s8 %v1282
        %v1284 = vlaneseq
        %v1285 = vshrl.u32 %v1284, 7
        %v1286 = vsub.s32 %v1283, %v1285
        %v1287 = vrot.slane %v1257, %v1286
        %v1289 = vunpack.c.l.s4 1966171168
        %v1290 = vunpack.c.0.s8 %v1289
        %v1291 = vlaneseq
        %v1292 = vshrl.u32 %v1291, 7
        %v1293 = vsub.s32 %v1290, %v1292
        %v1294 = vrot.slane %v1258, %v1293
        %v1296 = vunpack.c.l.s4 1966171168
        %v1297 = vunpack.c.0.s8 %v1296
        %v1298 = vlaneseq
        %v1299 = vshrl.u32 %v1298, 7
        %v1300 = vsub.s32 %v1297, %v1299
        %v1301 = vrot.slane %v1259, %v1300
        %v1302 = vcombine.low %v814, %v1266
        %v1303 = vcombine.high %v814, %v1266
        %v1304 = vcombine.low %v821, %v1273
        %v1305 = vcombine.high %v821, %v1273
        %v1306 = vcombine.low %v1280, %v1294
        %v1307 = vcombine.high %v1280, %v1294
        %v1308 = vcombine.low %v1287, %v1301
        %v1309 = vcombine.high %v1287, %v1301
        %v1311 = vunpack.c.l.s4 1966171168
        %v1312 = vunpack.c.0.s8 %v1311
        %v1313 = vlaneseq
        %v1314 = vshrl.u32 %v1313, 7
        %v1315 = vsub.s32 %v1312, %v1314
        %v1316 = vrot.slane %v1302, %v1315
        %v1318 = vunpack.c.l.s4 1966171168
        %v1319 = vunpack.c.0.s8 %v1318
        %v1320 = vlaneseq
        %v1321 = vshrl.u32 %v1320, 7
        %v1322 = vsub.s32 %v1319, %v1321
        %v1323 = vrot.slane %v1304, %v1322
        %v1325 = vunpack.c.l.s4 1966171168
        %v1326 = vunpack.c.0.s8 %v1325
        %v1327 = vlaneseq
        %v1328 = vshrl.u32 %v1327, 7
        %v1329 = vsub.s32 %v1326, %v1328
        %v1330 = vrot.slane %v1303, %v1329
        %v1332 = vunpack.c.l.s4 1966171168
        %v1333 = vunpack.c.0.s8 %v1332
        %v1334 = vlaneseq
        %v1335 = vshrl.u32 %v1334, 7
        %v1336 = vsub.s32 %v1333, %v1335
        %v1337 = vrot.slane %v1305, %v1336
        %v1339 = vunpack.c.l.s4 1966171168
        %v1340 = vunpack.c.0.s8 %v1339
        %v1341 = vlaneseq
        %v1342 = vshrl.u32 %v1341, 7
        %v1343 = vsub.s32 %v1340, %v1342
        %v1344 = vrot.slane %v1306, %v1343
        %v1346 = vunpack.c.l.s4 1966171168
        %v1347 = vunpack.c.0.s8 %v1346
        %v1348 = vlaneseq
        %v1349 = vshrl.u32 %v1348, 7
        %v1350 = vsub.s32 %v1347, %v1349
        %v1351 = vrot.slane %v1308, %v1350
        %v1353 = vunpack.c.l.s4 1966171168
        %v1354 = vunpack.c.0.s8 %v1353
        %v1355 = vlaneseq
        %v1356 = vshrl.u32 %v1355, 7
        %v1357 = vsub.s32 %v1354, %v1356
        %v1358 = vrot.slane %v1307, %v1357
        %v1360 = vunpack.c.l.s4 1966171168
        %v1361 = vunpack.c.0.s8 %v1360
        %v1362 = vlaneseq
        %v1363 = vshrl.u32 %v1362, 7
        %v1364 = vsub.s32 %v1361, %v1363
        %v1365 = vrot.slane %v1309, %v1364
        %v1366 = vcombine.low %v1316, %v1344
        %v1367 = vcombine.high %v1316, %v1344
        %v1368 = vcombine.low %v1323, %v1351
        %v1369 = vcombine.high %v1323, %v1351
        %v1370 = vcombine.low %v1330, %v1358
        %v1371 = vcombine.high %v1330, %v1358
        %v1372 = vcombine.low %v1337, %v1365
        %v1373 = vcombine.high %v1337, %v1365
        %v1374 = vcombine.high %v540, %v540
        %v1376 = vunpack.c.l.s4 1966171168
        %v1377 = vunpack.c.0.s8 %v1376
        %v1378 = vlaneseq
        %v1379 = vshrl.u32 %v1378, 7
        %v1380 = vsub.s32 %v1377, %v1379
        %v1381 = vrot.slane %v540, %v1380
        %v1383 = vunpack.c.l.s4 1966171168
        %v1384 = vunpack.c.0.s8 %v1383
        %v1385 = vlaneseq
        %v1386 = vshrl.u32 %v1385, 7
        %v1387 = vsub.s32 %v1384, %v1386
        %v1388 = vrot.slane %v1374, %v1387
        %v1389 = vcombine.high %v1381, %v1381
        %v1390 = vcombine.high %v1388, %v1388
        %v1392 = vunpack.c.l.s4 1966171168
        %v1393 = vunpack.c.0.s8 %v1392
        %v1394 = vlaneseq
        %v1395 = vshrl.u32 %v1394, 7
        %v1396 = vsub.s32 %v1393, %v1395
        %v1397 = vrot.slane %v1381, %v1396
        %v1399 = vunpack.c.l.s4 1966171168
        %v1400 = vunpack.c.0.s8 %v1399
        %v1401 = vlaneseq
        %v1402 = vshrl.u32 %v1401, 7
        %v1403 = vsub.s32 %v1400, %v1402
        %v1404 = vrot.slane %v1388, %v1403
        %v1406 = vunpack.c.l.s4 1966171168
        %v1407 = vunpack.c.0.s8 %v1406
        %v1408 = vlaneseq
        %v1409 = vshrl.u32 %v1408, 7
        %v1410 = vsub.s32 %v1407, %v1409
        %v1411 = vrot.slane %v1389, %v1410
        %v1413 = vunpack.c.l.s4 1966171168
        %v1414 = vunpack.c.0.s8 %v1413
        %v1415 = vlaneseq
        %v1416 = vshrl.u32 %v1415, 7
        %v1417 = vsub.s32 %v1414, %v1416
        %v1418 = vrot.slane %v1390, %v1417
        %v1419 = vcombine.high %v1397, %v1397
        %v1420 = vcombine.high %v1404, %v1404
        %v1421 = vcombine.high %v1411, %v1411
        %v1422 = vcombine.high %v1418, %v1418
        %v1423 = vcombine.low %v533, %v361
        %v1424 = vcombine.low %v434, %v536
        %v1425 = vcombine.low %v363, %v449
        %v1427 = vunpack.c.l.s4 1966171168
        %v1428 = vunpack.c.0.s8 %v1427
        %v1429 = vlaneseq
        %v1430 = vshrl.u32 %v1429, 7
        %v1431 = vsub.s32 %v1428, %v1430
        %v1432 = vrot.slane %v1423, %v1431
        %v1434 = vunpack.c.l.s4 1966171168
        %v1435 = vunpack.c.0.s8 %v1434
        %v1436 = vlaneseq
        %v1437 = vshrl.u32 %v1436, 7
        %v1438 = vsub.s32 %v1435, %v1437
        %v1439 = vrot.slane %v1424, %v1438
        %v1441 = vunpack.c.l.s4 1966171168
        %v1442 = vunpack.c.0.s8 %v1441
        %v1443 = vlaneseq
        %v1444 = vshrl.u32 %v1443, 7
        %v1445 = vsub.s32 %v1442, %v1444
        %v1446 = vrot.slane %v1425, %v1445
        %v1447 = vcombine.low %v974, %v1432
        %v1448 = vcombine.low %v1439, %v1446
        %v1450 = vunpack.c.l.s4 1966171168
        %v1451 = vunpack.c.0.s8 %v1450
        %v1452 = vlaneseq
        %v1453 = vshrl.u32 %v1452, 7
        %v1454 = vsub.s32 %v1451, %v1453
        %v1455 = vrot.slane %v1447, %v1454
        %v1457 = vunpack.c.l.s4 1966171168
        %v1458 = vunpack.c.0.s8 %v1457
        %v1459 = vlaneseq
        %v1460 = vshrl.u32 %v1459, 7
        %v1461 = vsub.s32 %v1458, %v1460
        %v1462 = vrot.slane %v1448, %v1461
        %v1463 = vcombine.low %v1455, %v1462
        %v1465 = vunpack.c.l.s4 1966171168
        %v1466 = vunpack.c.0.s8 %v1465
        %v1467 = vlaneseq
        %v1468 = vshrl.u32 %v1467, 7
        %v1469 = vsub.s32 %v1466, %v1468
        %v1470 = vrot.slane %v539, %v1469
        %v1472 = vunpack.c.l.s4 1966171168
        %v1473 = vunpack.c.0.s8 %v1472
        %v1474 = vlaneseq
        %v1475 = vshrl.u32 %v1474, 7
        %v1476 = vsub.s32 %v1473, %v1475
        %v1477 = vrot.slane %v1470, %v1476
        %v1478 = vcombine.low %v537, %v362
        %v1479 = vcombine.high %v537, %v362
        %v1480 = vcombine.low %v446, %v540
        %v1481 = vcombine.high %v446, %v540
        %v1482 = vcombine.low %v364, %v461
        %v1483 = vcombine.high %v364, %v461
        %v1485 = vunpack.c.l.s4 1966171168
        %v1486 = vunpack.c.0.s8 %v1485
        %v1487 = vlaneseq
        %v1488 = vshrl.u32 %v1487, 7
        %v1489 = vsub.s32 %v1486, %v1488
        %v1490 = vrot.slane %v1478, %v1489
        %v1492 = vunpack.c.l.s4 1966171168
        %v1493 = vunpack.c.0.s8 %v1492
        %v1494 = vlaneseq
        %v1495 = vshrl.u32 %v1494, 7
        %v1496 = vsub.s32 %v1493, %v1495
        %v1497 = vrot.slane %v1479, %v1496
        %v1499 = vunpack.c.l.s4 1966171168
        %v1500 = vunpack.c.0.s8 %v1499
        %v1501 = vlaneseq
        %v1502 = vshrl.u32 %v1501, 7
        %v1503 = vsub.s32 %v1500, %v1502
        %v1504 = vrot.slane %v1480, %v1503
        %v1506 = vunpack.c.l.s4 1966171168
        %v1507 = vunpack.c.0.s8 %v1506
        %v1508 = vlaneseq
        %v1509 = vshrl.u32 %v1508, 7
        %v1510 = vsub.s32 %v1507, %v1509
        %v1511 = vrot.slane %v1481, %v1510
        %v1513 = vunpack.c.l.s4 1966171168
        %v1514 = vunpack.c.0.s8 %v1513
        %v1515 = vlaneseq
        %v1516 = vshrl.u32 %v1515, 7
        %v1517 = vsub.s32 %v1514, %v1516
        %v1518 = vrot.slane %v1482, %v1517
        %v1520 = vunpack.c.l.s4 1966171168
        %v1521 = vunpack.c.0.s8 %v1520
        %v1522 = vlaneseq
        %v1523 = vshrl.u32 %v1522, 7
        %v1524 = vsub.s32 %v1521, %v1523
        %v1525 = vrot.slane %v1483, %v1524
        %v1526 = vcombine.low %v1062, %v1490
        %v1527 = vcombine.high %v1062, %v1490
        %v1528 = vcombine.low %v1069, %v1497
        %v1529 = vcombine.high %v1069, %v1497
        %v1530 = vcombine.low %v1504, %v1518
        %v1531 = vcombine.high %v1504, %v1518
        %v1532 = vcombine.low %v1511, %v1525
        %v1533 = vcombine.high %v1511, %v1525
        %v1535 = vunpack.c.l.s4 1966171168
        %v1536 = vunpack.c.0.s8 %v1535
        %v1537 = vlaneseq
        %v1538 = vshrl.u32 %v1537, 7
        %v1539 = vsub.s32 %v1536, %v1538
        %v1540 = vrot.slane %v1526, %v1539
        %v1542 = vunpack.c.l.s4 1966171168
        %v1543 = vunpack.c.0.s8 %v1542
        %v1544 = vlaneseq
        %v1545 = vshrl.u32 %v1544, 7
        %v1546 = vsub.s32 %v1543, %v1545
        %v1547 = vrot.slane %v1528, %v1546
        %v1549 = vunpack.c.l.s4 1966171168
        %v1550 = vunpack.c.0.s8 %v1549
        %v1551 = vlaneseq
        %v1552 = vshrl.u32 %v1551, 7
        %v1553 = vsub.s32 %v1550, %v1552
        %v1554 = vrot.slane %v1527, %v1553
        %v1556 = vunpack.c.l.s4 1966171168
        %v1557 = vunpack.c.0.s8 %v1556
        %v1558 = vlaneseq
        %v1559 = vshrl.u32 %v1558, 7
        %v1560 = vsub.s32 %v1557, %v1559
        %v1561 = vrot.slane %v1529, %v1560
        %v1563 = vunpack.c.l.s4 1966171168
        %v1564 = vunpack.c.0.s8 %v1563
        %v1565 = vlaneseq
        %v1566 = vshrl.u32 %v1565, 7
        %v1567 = vsub.s32 %v1564, %v1566
        %v1568 = vrot.slane %v1530, %v1567
        %v1570 = vunpack.c.l.s4 1966171168
        %v1571 = vunpack.c.0.s8 %v1570
        %v1572 = vlaneseq
        %v1573 = vshrl.u32 %v1572, 7
        %v1574 = vsub.s32 %v1571, %v1573
        %v1575 = vrot.slane %v1532, %v1574
        %v1577 = vunpack.c.l.s4 1966171168
        %v1578 = vunpack.c.0.s8 %v1577
        %v1579 = vlaneseq
        %v1580 = vshrl.u32 %v1579, 7
        %v1581 = vsub.s32 %v1578, %v1580
        %v1582 = vrot.slane %v1531, %v1581
        %v1584 = vunpack.c.l.s4 1966171168
        %v1585 = vunpack.c.0.s8 %v1584
        %v1586 = vlaneseq
        %v1587 = vshrl.u32 %v1586, 7
        %v1588 = vsub.s32 %v1585, %v1587
        %v1589 = vrot.slane %v1533, %v1588
        %v1590 = vcombine.low %v1540, %v1568
        %v1591 = vcombine.high %v1540, %v1568
        %v1592 = vcombine.low %v1547, %v1575
        %v1593 = vcombine.high %v1547, %v1575
        %v1594 = vcombine.low %v1554, %v1582
        %v1595 = vcombine.high %v1554, %v1582
        %v1596 = vcombine.low %v1561, %v1589
        %v1597 = vcombine.high %v1561, %v1589
        %v1598 = vcombine.high %v543, %v543
        %v1600 = vunpack.c.l.s4 1966171168
        %v1601 = vunpack.c.0.s8 %v1600
        %v1602 = vlaneseq
        %v1603 = vshrl.u32 %v1602, 7
        %v1604 = vsub.s32 %v1601, %v1603
        %v1605 = vrot.slane %v543, %v1604
        %v1607 = vunpack.c.l.s4 1966171168
        %v1608 = vunpack.c.0.s8 %v1607
        %v1609 = vlaneseq
        %v1610 = vshrl.u32 %v1609, 7
        %v1611 = vsub.s32 %v1608, %v1610
        %v1612 = vrot.slane %v1598, %v1611
        %v1613 = vcombine.high %v1605, %v1605
        %v1614 = vcombine.high %v1612, %v1612
        %v1616 = vunpack.c.l.s4 1966171168
        %v1617 = vunpack.c.0.s8 %v1616
        %v1618 = vlaneseq
        %v1619 = vshrl.u32 %v1618, 7
        %v1620 = vsub.s32 %v1617, %v1619
        %v1621 = vrot.slane %v1605, %v1620
        %v1623 = vunpack.c.l.s4 1966171168
        %v1624 = vunpack.c.0.s8 %v1623
        %v1625 = vlaneseq
        %v1626 = vshrl.u32 %v1625, 7
        %v1627 = vsub.s32 %v1624, %v1626
        %v1628 = vrot.slane %v1612, %v1627
        %v1630 = vunpack.c.l.s4 1966171168
        %v1631 = vunpack.c.0.s8 %v1630
        %v1632 = vlaneseq
        %v1633 = vshrl.u32 %v1632, 7
        %v1634 = vsub.s32 %v1631, %v1633
        %v1635 = vrot.slane %v1613, %v1634
        %v1637 = vunpack.c.l.s4 1966171168
        %v1638 = vunpack.c.0.s8 %v1637
        %v1639 = vlaneseq
        %v1640 = vshrl.u32 %v1639, 7
        %v1641 = vsub.s32 %v1638, %v1640
        %v1642 = vrot.slane %v1614, %v1641
        %v1643 = vcombine.high %v1621, %v1621
        %v1644 = vcombine.high %v1628, %v1628
        %v1645 = vcombine.high %v1635, %v1635
        %v1646 = vcombine.high %v1642, %v1642
        %v1647 = vcombine.low %v536, %v363
        %v1648 = vcombine.low %v449, %v539
        %v1649 = vcombine.low %v365, %v464
        %v1651 = vunpack.c.l.s4 1966171168
        %v1652 = vunpack.c.0.s8 %v1651
        %v1653 = vlaneseq
        %v1654 = vshrl.u32 %v1653, 7
        %v1655 = vsub.s32 %v1652, %v1654
        %v1656 = vrot.slane %v1647, %v1655
        %v1658 = vunpack.c.l.s4 1966171168
        %v1659 = vunpack.c.0.s8 %v1658
        %v1660 = vlaneseq
        %v1661 = vshrl.u32 %v1660, 7
        %v1662 = vsub.s32 %v1659, %v1661
        %v1663 = vrot.slane %v1648, %v1662
        %v1665 = vunpack.c.l.s4 1966171168
        %v1666 = vunpack.c.0.s8 %v1665
        %v1667 = vlaneseq
        %v1668 = vshrl.u32 %v1667, 7
        %v1669 = vsub.s32 %v1666, %v1668
        %v1670 = vrot.slane %v1649, %v1669
        %v1671 = vcombine.low %v1222, %v1656
        %v1672 = vcombine.low %v1663, %v1670
        %v1674 = vunpack.c.l.s4 1966171168
        %v1675 = vunpack.c.0.s8 %v1674
        %v1676 = vlaneseq
        %v1677 = vshrl.u32 %v1676, 7
        %v1678 = vsub.s32 %v1675, %v1677
        %v1679 = vrot.slane %v1671, %v1678
        %v1681 = vunpack.c.l.s4 1966171168
        %v1682 = vunpack.c.0.s8 %v1681
        %v1683 = vlaneseq
        %v1684 = vshrl.u32 %v1683, 7
        %v1685 = vsub.s32 %v1682, %v1684
        %v1686 = vrot.slane %v1672, %v1685
        %v1687 = vcombine.low %v1679, %v1686
        %v1689 = vunpack.c.l.s4 1966171168
        %v1690 = vunpack.c.0.s8 %v1689
        %v1691 = vlaneseq
        %v1692 = vshrl.u32 %v1691, 7
        %v1693 = vsub.s32 %v1690, %v1692
        %v1694 = vrot.slane %v542, %v1693
        %v1696 = vunpack.c.l.s4 1966171168
        %v1697 = vunpack.c.0.s8 %v1696
        %v1698 = vlaneseq
        %v1699 = vshrl.u32 %v1698, 7
        %v1700 = vsub.s32 %v1697, %v1699
        %v1701 = vrot.slane %v1694, %v1700
        %v1702 = vcombine.low %v540, %v364
        %v1703 = vcombine.high %v540, %v364
        %v1704 = vcombine.low %v461, %v543
        %v1705 = vcombine.high %v461, %v543
        %v1706 = vcombine.low %v366, %v476
        %v1707 = vcombine.high %v366, %v476
        %v1709 = vunpack.c.l.s4 1966171168
        %v1710 = vunpack.c.0.s8 %v1709
        %v1711 = vlaneseq
        %v1712 = vshrl.u32 %v1711, 7
        %v1713 = vsub.s32 %v1710, %v1712
        %v1714 = vrot.slane %v1702, %v1713
        %v1716 = vunpack.c.l.s4 1966171168
        %v1717 = vunpack.c.0.s8 %v1716
        %v1718 = vlaneseq
        %v1719 = vshrl.u32 %v1718, 7
        %v1720 = vsub.s32 %v1717, %v1719
        %v1721 = vrot.slane %v1703, %v1720
        %v1723 = vunpack.c.l.s4 1966171168
        %v1724 = vunpack.c.0.s8 %v1723
        %v1725 = vlaneseq
        %v1726 = vshrl.u32 %v1725, 7
        %v1727 = vsub.s32 %v1724, %v1726
        %v1728 = vrot.slane %v1704, %v1727
        %v1730 = vunpack.c.l.s4 1966171168
        %v1731 = vunpack.c.0.s8 %v1730
        %v1732 = vlaneseq
        %v1733 = vshrl.u32 %v1732, 7
        %v1734 = vsub.s32 %v1731, %v1733
        %v1735 = vrot.slane %v1705, %v1734
        %v1737 = vunpack.c.l.s4 1966171168
        %v1738 = vunpack.c.0.s8 %v1737
        %v1739 = vlaneseq
        %v1740 = vshrl.u32 %v1739, 7
        %v1741 = vsub.s32 %v1738, %v1740
        %v1742 = vrot.slane %v1706, %v1741
        %v1744 = vunpack.c.l.s4 1966171168
        %v1745 = vunpack.c.0.s8 %v1744
        %v1746 = vlaneseq
        %v1747 = vshrl.u32 %v1746, 7
        %v1748 = vsub.s32 %v1745, %v1747
        %v1749 = vrot.slane %v1707, %v1748
        %v1750 = vcombine.low %v1294, %v1714
        %v1751 = vcombine.high %v1294, %v1714
        %v1752 = vcombine.low %v1301, %v1721
        %v1753 = vcombine.high %v1301, %v1721
        %v1754 = vcombine.low %v1728, %v1742
        %v1755 = vcombine.high %v1728, %v1742
        %v1756 = vcombine.low %v1735, %v1749
        %v1757 = vcombine.high %v1735, %v1749
        %v1759 = vunpack.c.l.s4 1966171168
        %v1760 = vunpack.c.0.s8 %v1759
        %v1761 = vlaneseq
        %v1762 = vshrl.u32 %v1761, 7
        %v1763 = vsub.s32 %v1760, %v1762
        %v1764 = vrot.slane %v1750, %v1763
        %v1766 = vunpack.c.l.s4 1966171168
        %v1767 = vunpack.c.0.s8 %v1766
        %v1768 = vlaneseq
        %v1769 = vshrl.u32 %v1768, 7
        %v1770 = vsub.s32 %v1767, %v1769
        %v1771 = vrot.slane %v1752, %v1770
        %v1773 = vunpack.c.l.s4 1966171168
        %v1774 = vunpack.c.0.s8 %v1773
        %v1775 = vlaneseq
        %v1776 = vshrl.u32 %v1775, 7
        %v1777 = vsub.s32 %v1774, %v1776
        %v1778 = vrot.slane %v1751, %v1777
        %v1780 = vunpack.c.l.s4 1966171168
        %v1781 = vunpack.c.0.s8 %v1780
        %v1782 = vlaneseq
        %v1783 = vshrl.u32 %v1782, 7
        %v1784 = vsub.s32 %v1781, %v1783
        %v1785 = vrot.slane %v1753, %v1784
        %v1787 = vunpack.c.l.s4 1966171168
        %v1788 = vunpack.c.0.s8 %v1787
        %v1789 = vlaneseq
        %v1790 = vshrl.u32 %v1789, 7
        %v1791 = vsub.s32 %v1788, %v1790
        %v1792 = vrot.slane %v1754, %v1791
        %v1794 = vunpack.c.l.s4 1966171168
        %v1795 = vunpack.c.0.s8 %v1794
        %v1796 = vlaneseq
        %v1797 = vshrl.u32 %v1796, 7
        %v1798 = vsub.s32 %v1795, %v1797
        %v1799 = vrot.slane %v1756, %v1798
        %v1801 = vunpack.c.l.s4 1966171168
        %v1802 = vunpack.c.0.s8 %v1801
        %v1803 = vlaneseq
        %v1804 = vshrl.u32 %v1803, 7
        %v1805 = vsub.s32 %v1802, %v1804
        %v1806 = vrot.slane %v1755, %v1805
        %v1808 = vunpack.c.l.s4 1966171168
        %v1809 = vunpack.c.0.s8 %v1808
        %v1810 = vlaneseq
        %v1811 = vshrl.u32 %v1810, 7
        %v1812 = vsub.s32 %v1809, %v1811
        %v1813 = vrot.slane %v1757, %v1812
        %v1814 = vcombine.low %v1764, %v1792
        %v1815 = vcombine.high %v1764, %v1792
        %v1816 = vcombine.low %v1771, %v1799
        %v1817 = vcombine.high %v1771, %v1799
        %v1818 = vcombine.low %v1778, %v1806
        %v1819 = vcombine.high %v1778, %v1806
        %v1820 = vcombine.low %v1785, %v1813
        %v1821 = vcombine.high %v1785, %v1813
        %v1822 = vcombine.high %v546, %v546
        %v1824 = vunpack.c.l.s4 1966171168
        %v1825 = vunpack.c.0.s8 %v1824
        %v1826 = vlaneseq
        %v1827 = vshrl.u32 %v1826, 7
        %v1828 = vsub.s32 %v1825, %v1827
        %v1829 = vrot.slane %v546, %v1828
        %v1831 = vunpack.c.l.s4 1966171168
        %v1832 = vunpack.c.0.s8 %v1831
        %v1833 = vlaneseq
        %v1834 = vshrl.u32 %v1833, 7
        %v1835 = vsub.s32 %v1832, %v1834
        %v1836 = vrot.slane %v1822, %v1835
        %v1837 = vcombine.high %v1829, %v1829
        %v1838 = vcombine.high %v1836, %v1836
        %v1840 = vunpack.c.l.s4 1966171168
        %v1841 = vunpack.c.0.s8 %v1840
        %v1842 = vlaneseq
        %v1843 = vshrl.u32 %v1842, 7
        %v1844 = vsub.s32 %v1841, %v1843
        %v1845 = vrot.slane %v1829, %v1844
        %v1847 = vunpack.c.l.s4 1966171168
        %v1848 = vunpack.c.0.s8 %v1847
        %v1849 = vlaneseq
        %v1850 = vshrl.u32 %v1849, 7
        %v1851 = vsub.s32 %v1848, %v1850
        %v1852 = vrot.slane %v1836, %v1851
        %v1854 = vunpack.c.l.s4 1966171168
        %v1855 = vunpack.c.0.s8 %v1854
        %v1856 = vlaneseq
        %v1857 = vshrl.u32 %v1856, 7
        %v1858 = vsub.s32 %v1855, %v1857
        %v1859 = vrot.slane %v1837, %v1858
        %v1861 = vunpack.c.l.s4 1966171168
        %v1862 = vunpack.c.0.s8 %v1861
        %v1863 = vlaneseq
        %v1864 = vshrl.u32 %v1863, 7
        %v1865 = vsub.s32 %v1862, %v1864
        %v1866 = vrot.slane %v1838, %v1865
        %v1867 = vcombine.high %v1845, %v1845
        %v1868 = vcombine.high %v1852, %v1852
        %v1869 = vcombine.high %v1859, %v1859
        %v1870 = vcombine.high %v1866, %v1866
        %v1871 = vcombine.low %v539, %v365
        %v1872 = vcombine.low %v464, %v542
        %v1873 = vcombine.low %v367, %v479
        %v1875 = vunpack.c.l.s4 1966171168
        %v1876 = vunpack.c.0.s8 %v1875
        %v1877 = vlaneseq
        %v1878 = vshrl.u32 %v1877, 7
        %v1879 = vsub.s32 %v1876, %v1878
        %v1880 = vrot.slane %v1871, %v1879
        %v1882 = vunpack.c.l.s4 1966171168
        %v1883 = vunpack.c.0.s8 %v1882
        %v1884 = vlaneseq
        %v1885 = vshrl.u32 %v1884, 7
        %v1886 = vsub.s32 %v1883, %v1885
        %v1887 = vrot.slane %v1872, %v1886
        %v1889 = vunpack.c.l.s4 1966171168
        %v1890 = vunpack.c.0.s8 %v1889
        %v1891 = vlaneseq
        %v1892 = vshrl.u32 %v1891, 7
        %v1893 = vsub.s32 %v1890, %v1892
        %v1894 = vrot.slane %v1873, %v1893
        %v1895 = vcombine.low %v1446, %v1880
        %v1896 = vcombine.low %v1887, %v1894
        %v1898 = vunpack.c.l.s4 1966171168
        %v1899 = vunpack.c.0.s8 %v1898
        %v1900 = vlaneseq
        %v1901 = vshrl.u32 %v1900, 7
        %v1902 = vsub.s32 %v1899, %v1901
        %v1903 = vrot.slane %v1895, %v1902
        %v1905 = vunpack.c.l.s4 1966171168
        %v1906 = vunpack.c.0.s8 %v1905
        %v1907 = vlaneseq
        %v1908 = vshrl.u32 %v1907, 7
        %v1909 = vsub.s32 %v1906, %v1908
        %v1910 = vrot.slane %v1896, %v1909
        %v1911 = vcombine.low %v1903, %v1910
        %v1913 = vunpack.c.l.s4 1966171168
        %v1914 = vunpack.c.0.s8 %v1913
        %v1915 = vlaneseq
        %v1916 = vshrl.u32 %v1915, 7
        %v1917 = vsub.s32 %v1914, %v1916
        %v1918 = vrot.slane %v545, %v1917
        %v1920 = vunpack.c.l.s4 1966171168
        %v1921 = vunpack.c.0.s8 %v1920
        %v1922 = vlaneseq
        %v1923 = vshrl.u32 %v1922, 7
        %v1924 = vsub.s32 %v1921, %v1923
        %v1925 = vrot.slane %v1918, %v1924
        %v1926 = vcombine.low %v543, %v366
        %v1927 = vcombine.high %v543, %v366
        %v1928 = vcombine.low %v476, %v546
        %v1929 = vcombine.high %v476, %v546
        %v1930 = vcombine.low %v368, %v491
        %v1931 = vcombine.high %v368, %v491
        %v1933 = vunpack.c.l.s4 1966171168
        %v1934 = vunpack.c.0.s8 %v1933
        %v1935 = vlaneseq
        %v1936 = vshrl.u32 %v1935, 7
        %v1937 = vsub.s32 %v1934, %v1936
        %v1938 = vrot.slane %v1926, %v1937
        %v1940 = vunpack.c.l.s4 1966171168
        %v1941 = vunpack.c.0.s8 %v1940
        %v1942 = vlaneseq
        %v1943 = vshrl.u32 %v1942, 7
        %v1944 = vsub.s32 %v1941, %v1943
        %v1945 = vrot.slane %v1927, %v1944
        %v1947 = vunpack.c.l.s4 1966171168
        %v1948 = vunpack.c.0.s8 %v1947
        %v1949 = vlaneseq
        %v1950 = vshrl.u32 %v1949, 7
        %v1951 = vsub.s32 %v1948, %v1950
        %v1952 = vrot.slane %v1928, %v1951
        %v1954 = vunpack.c.l.s4 1966171168
        %v1955 = vunpack.c.0.s8 %v1954
        %v1956 = vlaneseq
        %v1957 = vshrl.u32 %v1956, 7
        %v1958 = vsub.s32 %v1955, %v1957
        %v1959 = vrot.slane %v1929, %v1958
        %v1961 = vunpack.c.l.s4 1966171168
        %v1962 = vunpack.c.0.s8 %v1961
        %v1963 = vlaneseq
        %v1964 = vshrl.u32 %v1963, 7
        %v1965 = vsub.s32 %v1962, %v1964
        %v1966 = vrot.slane %v1930, %v1965
        %v1968 = vunpack.c.l.s4 1966171168
        %v1969 = vunpack.c.0.s8 %v1968
        %v1970 = vlaneseq
        %v1971 = vshrl.u32 %v1970, 7
        %v1972 = vsub.s32 %v1969, %v1971
        %v1973 = vrot.slane %v1931, %v1972
        %v1974 = vcombine.low %v1518, %v1938
        %v1975 = vcombine.high %v1518, %v1938
        %v1976 = vcombine.low %v1525, %v1945
        %v1977 = vcombine.high %v1525, %v1945
        %v1978 = vcombine.low %v1952, %v1966
        %v1979 = vcombine.high %v1952, %v1966
        %v1980 = vcombine.low %v1959, %v1973
        %v1981 = vcombine.high %v1959, %v1973
        %v1983 = vunpack.c.l.s4 1966171168
        %v1984 = vunpack.c.0.s8 %v1983
        %v1985 = vlaneseq
        %v1986 = vshrl.u32 %v1985, 7
        %v1987 = vsub.s32 %v1984, %v1986
        %v1988 = vrot.slane %v1974, %v1987
        %v1990 = vunpack.c.l.s4 1966171168
        %v1991 = vunpack.c.0.s8 %v1990
        %v1992 = vlaneseq
        %v1993 = vshrl.u32 %v1992, 7
        %v1994 = vsub.s32 %v1991, %v1993
        %v1995 = vrot.slane %v1976, %v1994
        %v1997 = vunpack.c.l.s4 1966171168
        %v1998 = vunpack.c.0.s8 %v1997
        %v1999 = vlaneseq
        %v2000 = vshrl.u32 %v1999, 7
        %v2001 = vsub.s32 %v1998, %v2000
        %v2002 = vrot.slane %v1975, %v2001
        %v2004 = vunpack.c.l.s4 1966171168
        %v2005 = vunpack.c.0.s8 %v2004
        %v2006 = vlaneseq
        %v2007 = vshrl.u32 %v2006, 7
        %v2008 = vsub.s32 %v2005, %v2007
        %v2009 = vrot.slane %v1977, %v2008
        %v2011 = vunpack.c.l.s4 1966171168
        %v2012 = vunpack.c.0.s8 %v2011
        %v2013 = vlaneseq
        %v2014 = vshrl.u32 %v2013, 7
        %v2015 = vsub.s32 %v2012, %v2014
        %v2016 = vrot.slane %v1978, %v2015
        %v2018 = vunpack.c.l.s4 1966171168
        %v2019 = vunpack.c.0.s8 %v2018
        %v2020 = vlaneseq
        %v2021 = vshrl.u32 %v2020, 7
        %v2022 = vsub.s32 %v2019, %v2021
        %v2023 = vrot.slane %v1980, %v2022
        %v2025 = vunpack.c.l.s4 1966171168
        %v2026 = vunpack.c.0.s8 %v2025
        %v2027 = vlaneseq
        %v2028 = vshrl.u32 %v2027, 7
        %v2029 = vsub.s32 %v2026, %v2028
        %v2030 = vrot.slane %v1979, %v2029
        %v2032 = vunpack.c.l.s4 1966171168
        %v2033 = vunpack.c.0.s8 %v2032
        %v2034 = vlaneseq
        %v2035 = vshrl.u32 %v2034, 7
        %v2036 = vsub.s32 %v2033, %v2035
        %v2037 = vrot.slane %v1981, %v2036
        %v2038 = vcombine.low %v1988, %v2016
        %v2039 = vcombine.high %v1988, %v2016
        %v2040 = vcombine.low %v1995, %v2023
        %v2041 = vcombine.high %v1995, %v2023
        %v2042 = vcombine.low %v2002, %v2030
        %v2043 = vcombine.high %v2002, %v2030
        %v2044 = vcombine.low %v2009, %v2037
        %v2045 = vcombine.high %v2009, %v2037
        %v2046 = vcombine.high %v549, %v549
        %v2048 = vunpack.c.l.s4 1966171168
        %v2049 = vunpack.c.0.s8 %v2048
        %v2050 = vlaneseq
        %v2051 = vshrl.u32 %v2050, 7
        %v2052 = vsub.s32 %v2049, %v2051
        %v2053 = vrot.slane %v549, %v2052
        %v2055 = vunpack.c.l.s4 1966171168
        %v2056 = vunpack.c.0.s8 %v2055
        %v2057 = vlaneseq
        %v2058 = vshrl.u32 %v2057, 7
        %v2059 = vsub.s32 %v2056, %v2058
        %v2060 = vrot.slane %v2046, %v2059
        %v2061 = vcombine.high %v2053, %v2053
        %v2062 = vcombine.high %v2060, %v2060
        %v2064 = vunpack.c.l.s4 1966171168
        %v2065 = vunpack.c.0.s8 %v2064
        %v2066 = vlaneseq
        %v2067 = vshrl.u32 %v2066, 7
        %v2068 = vsub.s32 %v2065, %v2067
        %v2069 = vrot.slane %v2053, %v2068
        %v2071 = vunpack.c.l.s4 1966171168
        %v2072 = vunpack.c.0.s8 %v2071
        %v2073 = vlaneseq
        %v2074 = vshrl.u32 %v2073, 7
        %v2075 = vsub.s32 %v2072, %v2074
        %v2076 = vrot.slane %v2060, %v2075
        %v2078 = vunpack.c.l.s4 1966171168
        %v2079 = vunpack.c.0.s8 %v2078
        %v2080 = vlaneseq
        %v2081 = vshrl.u32 %v2080, 7
        %v2082 = vsub.s32 %v2079, %v2081
        %v2083 = vrot.slane %v2061, %v2082
        %v2085 = vunpack.c.l.s4 1966171168
        %v2086 = vunpack.c.0.s8 %v2085
        %v2087 = vlaneseq
        %v2088 = vshrl.u32 %v2087, 7
        %v2089 = vsub.s32 %v2086, %v2088
        %v2090 = vrot.slane %v2062, %v2089
        %v2091 = vcombine.high %v2069, %v2069
        %v2092 = vcombine.high %v2076, %v2076
        %v2093 = vcombine.high %v2083, %v2083
        %v2094 = vcombine.high %v2090, %v2090
        %v2095 = vcombine.low %v542, %v367
        %v2096 = vcombine.low %v479, %v545
        %v2097 = vcombine.low %v369, %v494
        %v2099 = vunpack.c.l.s4 1966171168
        %v2100 = vunpack.c.0.s8 %v2099
        %v2101 = vlaneseq
        %v2102 = vshrl.u32 %v2101, 7
        %v2103 = vsub.s32 %v2100, %v2102
        %v2104 = vrot.slane %v2095, %v2103
        %v2106 = vunpack.c.l.s4 1966171168
        %v2107 = vunpack.c.0.s8 %v2106
        %v2108 = vlaneseq
        %v2109 = vshrl.u32 %v2108, 7
        %v2110 = vsub.s32 %v2107, %v2109
        %v2111 = vrot.slane %v2096, %v2110
        %v2113 = vunpack.c.l.s4 1966171168
        %v2114 = vunpack.c.0.s8 %v2113
        %v2115 = vlaneseq
        %v2116 = vshrl.u32 %v2115, 7
        %v2117 = vsub.s32 %v2114, %v2116
        %v2118 = vrot.slane %v2097, %v2117
        %v2119 = vcombine.low %v1670, %v2104
        %v2120 = vcombine.low %v2111, %v2118
        %v2122 = vunpack.c.l.s4 1966171168
        %v2123 = vunpack.c.0.s8 %v2122
        %v2124 = vlaneseq
        %v2125 = vshrl.u32 %v2124, 7
        %v2126 = vsub.s32 %v2123, %v2125
        %v2127 = vrot.slane %v2119, %v2126
        %v2129 = vunpack.c.l.s4 1966171168
        %v2130 = vunpack.c.0.s8 %v2129
        %v2131 = vlaneseq
        %v2132 = vshrl.u32 %v2131, 7
        %v2133 = vsub.s32 %v2130, %v2132
        %v2134 = vrot.slane %v2120, %v2133
        %v2135 = vcombine.low %v2127, %v2134
        %v2137 = vunpack.c.l.s4 1966171168
        %v2138 = vunpack.c.0.s8 %v2137
        %v2139 = vlaneseq
        %v2140 = vshrl.u32 %v2139, 7
        %v2141 = vsub.s32 %v2138, %v2140
        %v2142 = vrot.slane %v548, %v2141
        %v2144 = vunpack.c.l.s4 1966171168
        %v2145 = vunpack.c.0.s8 %v2144
        %v2146 = vlaneseq
        %v2147 = vshrl.u32 %v2146, 7
        %v2148 = vsub.s32 %v2145, %v2147
        %v2149 = vrot.slane %v2142, %v2148
        %v2150 = vcombine.low %v546, %v368
        %v2151 = vcombine.high %v546, %v368
        %v2152 = vcombine.low %v491, %v549
        %v2153 = vcombine.high %v491, %v549
        %v2154 = vcombine.low %v370, %v506
        %v2155 = vcombine.high %v370, %v506
        %v2157 = vunpack.c.l.s4 1966171168
        %v2158 = vunpack.c.0.s8 %v2157
        %v2159 = vlaneseq
        %v2160 = vshrl.u32 %v2159, 7
        %v2161 = vsub.s32 %v2158, %v2160
        %v2162 = vrot.slane %v2150, %v2161
        %v2164 = vunpack.c.l.s4 1966171168
        %v2165 = vunpack.c.0.s8 %v2164
        %v2166 = vlaneseq
        %v2167 = vshrl.u32 %v2166, 7
        %v2168 = vsub.s32 %v2165, %v2167
        %v2169 = vrot.slane %v2151, %v2168
        %v2171 = vunpack.c.l.s4 1966171168
        %v2172 = vunpack.c.0.s8 %v2171
        %v2173 = vlaneseq
        %v2174 = vshrl.u32 %v2173, 7
        %v2175 = vsub.s32 %v2172, %v2174
        %v2176 = vrot.slane %v2152, %v2175
        %v2178 = vunpack.c.l.s4 1966171168
        %v2179 = vunpack.c.0.s8 %v2178
        %v2180 = vlaneseq
        %v2181 = vshrl.u32 %v2180, 7
        %v2182 = vsub.s32 %v2179, %v2181
        %v2183 = vrot.slane %v2153, %v2182
        %v2185 = vunpack.c.l.s4 1966171168
        %v2186 = vunpack.c.0.s8 %v2185
        %v2187 = vlaneseq
        %v2188 = vshrl.u32 %v2187, 7
        %v2189 = vsub.s32 %v2186, %v2188
        %v2190 = vrot.slane %v2154, %v2189
        %v2192 = vunpack.c.l.s4 1966171168
        %v2193 = vunpack.c.0.s8 %v2192
        %v2194 = vlaneseq
        %v2195 = vshrl.u32 %v2194, 7
        %v2196 = vsub.s32 %v2193, %v2195
        %v2197 = vrot.slane %v2155, %v2196
        %v2198 = vcombine.low %v1742, %v2162
        %v2199 = vcombine.high %v1742, %v2162
        %v2200 = vcombine.low %v1749, %v2169
        %v2201 = vcombine.high %v1749, %v2169
        %v2202 = vcombine.low %v2176, %v2190
        %v2203 = vcombine.high %v2176, %v2190
        %v2204 = vcombine.low %v2183, %v2197
        %v2205 = vcombine.high %v2183, %v2197
        %v2207 = vunpack.c.l.s4 1966171168
        %v2208 = vunpack.c.0.s8 %v2207
        %v2209 = vlaneseq
        %v2210 = vshrl.u32 %v2209, 7
        %v2211 = vsub.s32 %v2208, %v2210
        %v2212 = vrot.slane %v2198, %v2211
        %v2214 = vunpack.c.l.s4 1966171168
        %v2215 = vunpack.c.0.s8 %v2214
        %v2216 = vlaneseq
        %v2217 = vshrl.u32 %v2216, 7
        %v2218 = vsub.s32 %v2215, %v2217
        %v2219 = vrot.slane %v2200, %v2218
        %v2221 = vunpack.c.l.s4 1966171168
        %v2222 = vunpack.c.0.s8 %v2221
        %v2223 = vlaneseq
        %v2224 = vshrl.u32 %v2223, 7
        %v2225 = vsub.s32 %v2222, %v2224
        %v2226 = vrot.slane %v2199, %v2225
        %v2228 = vunpack.c.l.s4 1966171168
        %v2229 = vunpack.c.0.s8 %v2228
        %v2230 = vlaneseq
        %v2231 = vshrl.u32 %v2230, 7
        %v2232 = vsub.s32 %v2229, %v2231
        %v2233 = vrot.slane %v2201, %v2232
        %v2235 = vunpack.c.l.s4 1966171168
        %v2236 = vunpack.c.0.s8 %v2235
        %v2237 = vlaneseq
        %v2238 = vshrl.u32 %v2237, 7
        %v2239 = vsub.s32 %v2236, %v2238
        %v2240 = vrot.slane %v2202, %v2239
        %v2242 = vunpack.c.l.s4 1966171168
        %v2243 = vunpack.c.0.s8 %v2242
        %v2244 = vlaneseq
        %v2245 = vshrl.u32 %v2244, 7
        %v2246 = vsub.s32 %v2243, %v2245
        %v2247 = vrot.slane %v2204, %v2246
        %v2249 = vunpack.c.l.s4 1966171168
        %v2250 = vunpack.c.0.s8 %v2249
        %v2251 = vlaneseq
        %v2252 = vshrl.u32 %v2251, 7
        %v2253 = vsub.s32 %v2250, %v2252
        %v2254 = vrot.slane %v2203, %v2253
        %v2256 = vunpack.c.l.s4 1966171168
        %v2257 = vunpack.c.0.s8 %v2256
        %v2258 = vlaneseq
        %v2259 = vshrl.u32 %v2258, 7
        %v2260 = vsub.s32 %v2257, %v2259
        %v2261 = vrot.slane %v2205, %v2260
        %v2262 = vcombine.low %v2212, %v2240
        %v2263 = vcombine.high %v2212, %v2240
        %v2264 = vcombine.low %v2219, %v2247
        %v2265 = vcombine.high %v2219, %v2247
        %v2266 = vcombine.low %v2226, %v2254
        %v2267 = vcombine.high %v2226, %v2254
        %v2268 = vcombine.low %v2233, %v2261
        %v2269 = vcombine.high %v2233, %v2261
        %v2270 = vcombine.high %v552, %v552
        %v2272 = vunpack.c.l.s4 1966171168
        %v2273 = vunpack.c.0.s8 %v2272
        %v2274 = vlaneseq
        %v2275 = vshrl.u32 %v2274, 7
        %v2276 = vsub.s32 %v2273, %v2275
        %v2277 = vrot.slane %v552, %v2276
        %v2279 = vunpack.c.l.s4 1966171168
        %v2280 = vunpack.c.0.s8 %v2279
        %v2281 = vlaneseq
        %v2282 = vshrl.u32 %v2281, 7
        %v2283 = vsub.s32 %v2280, %v2282
        %v2284 = vrot.slane %v2270, %v2283
        %v2285 = vcombine.high %v2277, %v2277
        %v2286 = vcombine.high %v2284, %v2284
        %v2288 = vunpack.c.l.s4 1966171168
        %v2289 = vunpack.c.0.s8 %v2288
        %v2290 = vlaneseq
        %v2291 = vshrl.u32 %v2290, 7
        %v2292 = vsub.s32 %v2289, %v2291
        %v2293 = vrot.slane %v2277, %v2292
        %v2295 = vunpack.c.l.s4 1966171168
        %v2296 = vunpack.c.0.s8 %v2295
        %v2297 = vlaneseq
        %v2298 = vshrl.u32 %v2297, 7
        %v2299 = vsub.s32 %v2296, %v2298
        %v2300 = vrot.slane %v2284, %v2299
        %v2302 = vunpack.c.l.s4 1966171168
        %v2303 = vunpack.c.0.s8 %v2302
        %v2304 = vlaneseq
        %v2305 = vshrl.u32 %v2304, 7
        %v2306 = vsub.s32 %v2303, %v2305
        %v2307 = vrot.slane %v2285, %v2306
        %v2309 = vunpack.c.l.s4 1966171168
        %v2310 = vunpack.c.0.s8 %v2309
        %v2311 = vlaneseq
        %v2312 = vshrl.u32 %v2311, 7
        %v2313 = vsub.s32 %v2310, %v2312
        %v2314 = vrot.slane %v2286, %v2313
        %v2315 = vcombine.high %v2293, %v2293
        %v2316 = vcombine.high %v2300, %v2300
        %v2317 = vcombine.high %v2307, %v2307
        %v2318 = vcombine.high %v2314, %v2314
        %v2319 = vcombine.low %v545, %v369
        %v2320 = vcombine.low %v494, %v548
        %v2321 = vcombine.low %v371, %v509
        %v2323 = vunpack.c.l.s4 1966171168
        %v2324 = vunpack.c.0.s8 %v2323
        %v2325 = vlaneseq
        %v2326 = vshrl.u32 %v2325, 7
        %v2327 = vsub.s32 %v2324, %v2326
        %v2328 = vrot.slane %v2319, %v2327
        %v2330 = vunpack.c.l.s4 1966171168
        %v2331 = vunpack.c.0.s8 %v2330
        %v2332 = vlaneseq
        %v2333 = vshrl.u32 %v2332, 7
        %v2334 = vsub.s32 %v2331, %v2333
        %v2335 = vrot.slane %v2320, %v2334
        %v2337 = vunpack.c.l.s4 1966171168
        %v2338 = vunpack.c.0.s8 %v2337
        %v2339 = vlaneseq
        %v2340 = vshrl.u32 %v2339, 7
        %v2341 = vsub.s32 %v2338, %v2340
        %v2342 = vrot.slane %v2321, %v2341
        %v2343 = vcombine.low %v1894, %v2328
        %v2344 = vcombine.low %v2335, %v2342
        %v2346 = vunpack.c.l.s4 1966171168
        %v2347 = vunpack.c.0.s8 %v2346
        %v2348 = vlaneseq
        %v2349 = vshrl.u32 %v2348, 7
        %v2350 = vsub.s32 %v2347, %v2349
        %v2351 = vrot.slane %v2343, %v2350
        %v2353 = vunpack.c.l.s4 1966171168
        %v2354 = vunpack.c.0.s8 %v2353
        %v2355 = vlaneseq
        %v2356 = vshrl.u32 %v2355, 7
        %v2357 = vsub.s32 %v2354, %v2356
        %v2358 = vrot.slane %v2344, %v2357
        %v2359 = vcombine.low %v2351, %v2358
        %v2361 = vunpack.c.l.s4 1966171168
        %v2362 = vunpack.c.0.s8 %v2361
        %v2363 = vlaneseq
        %v2364 = vshrl.u32 %v2363, 7
        %v2365 = vsub.s32 %v2362, %v2364
        %v2366 = vrot.slane %v551, %v2365
        %v2368 = vunpack.c.l.s4 1966171168
        %v2369 = vunpack.c.0.s8 %v2368
        %v2370 = vlaneseq
        %v2371 = vshrl.u32 %v2370, 7
        %v2372 = vsub.s32 %v2369, %v2371
        %v2373 = vrot.slane %v2366, %v2372
        %v2374 = vcombine.low %v549, %v370
        %v2375 = vcombine.high %v549, %v370
        %v2376 = vcombine.low %v506, %v552
        %v2377 = vcombine.high %v506, %v552
        %v2378 = vcombine.low %v372, %v521
        %v2379 = vcombine.high %v372, %v521
        %v2381 = vunpack.c.l.s4 1966171168
        %v2382 = vunpack.c.0.s8 %v2381
        %v2383 = vlaneseq
        %v2384 = vshrl.u32 %v2383, 7
        %v2385 = vsub.s32 %v2382, %v2384
        %v2386 = vrot.slane %v2374, %v2385
        %v2388 = vunpack.c.l.s4 1966171168
        %v2389 = vunpack.c.0.s8 %v2388
        %v2390 = vlaneseq
        %v2391 = vshrl.u32 %v2390, 7
        %v2392 = vsub.s32 %v2389, %v2391
        %v2393 = vrot.slane %v2375, %v2392
        %v2395 = vunpack.c.l.s4 1966171168
        %v2396 = vunpack.c.0.s8 %v2395
        %v2397 = vlaneseq
        %v2398 = vshrl.u32 %v2397, 7
        %v2399 = vsub.s32 %v2396, %v2398
        %v2400 = vrot.slane %v2376, %v2399
        %v2402 = vunpack.c.l.s4 1966171168
        %v2403 = vunpack.c.0.s8 %v2402
        %v2404 = vlaneseq
        %v2405 = vshrl.u32 %v2404, 7
        %v2406 = vsub.s32 %v2403, %v2405
        %v2407 = vrot.slane %v2377, %v2406
        %v2409 = vunpack.c.l.s4 1966171168
        %v2410 = vunpack.c.0.s8 %v2409
        %v2411 = vlaneseq
        %v2412 = vshrl.u32 %v2411, 7
        %v2413 = vsub.s32 %v2410, %v2412
        %v2414 = vrot.slane %v2378, %v2413
        %v2416 = vunpack.c.l.s4 1966171168
        %v2417 = vunpack.c.0.s8 %v2416
        %v2418 = vlaneseq
        %v2419 = vshrl.u32 %v2418, 7
        %v2420 = vsub.s32 %v2417, %v2419
        %v2421 = vrot.slane %v2379, %v2420
        %v2422 = vcombine.low %v1966, %v2386
        %v2423 = vcombine.high %v1966, %v2386
        %v2424 = vcombine.low %v1973, %v2393
        %v2425 = vcombine.high %v1973, %v2393
        %v2426 = vcombine.low %v2400, %v2414
        %v2427 = vcombine.high %v2400, %v2414
        %v2428 = vcombine.low %v2407, %v2421
        %v2429 = vcombine.high %v2407, %v2421
        %v2431 = vunpack.c.l.s4 1966171168
        %v2432 = vunpack.c.0.s8 %v2431
        %v2433 = vlaneseq
        %v2434 = vshrl.u32 %v2433, 7
        %v2435 = vsub.s32 %v2432, %v2434
        %v2436 = vrot.slane %v2422, %v2435
        %v2438 = vunpack.c.l.s4 1966171168
        %v2439 = vunpack.c.0.s8 %v2438
        %v2440 = vlaneseq
        %v2441 = vshrl.u32 %v2440, 7
        %v2442 = vsub.s32 %v2439, %v2441
        %v2443 = vrot.slane %v2424, %v2442
        %v2445 = vunpack.c.l.s4 1966171168
        %v2446 = vunpack.c.0.s8 %v2445
        %v2447 = vlaneseq
        %v2448 = vshrl.u32 %v2447, 7
        %v2449 = vsub.s32 %v2446, %v2448
        %v2450 = vrot.slane %v2423, %v2449
        %v2452 = vunpack.c.l.s4 1966171168
        %v2453 = vunpack.c.0.s8 %v2452
        %v2454 = vlaneseq
        %v2455 = vshrl.u32 %v2454, 7
        %v2456 = vsub.s32 %v2453, %v2455
        %v2457 = vrot.slane %v2425, %v2456
        %v2459 = vunpack.c.l.s4 1966171168
        %v2460 = vunpack.c.0.s8 %v2459
        %v2461 = vlaneseq
        %v2462 = vshrl.u32 %v2461, 7
        %v2463 = vsub.s32 %v2460, %v2462
        %v2464 = vrot.slane %v2426, %v2463
        %v2466 = vunpack.c.l.s4 1966171168
        %v2467 = vunpack.c.0.s8 %v2466
        %v2468 = vlaneseq
        %v2469 = vshrl.u32 %v2468, 7
        %v2470 = vsub.s32 %v2467, %v2469
        %v2471 = vrot.slane %v2428, %v2470
        %v2473 = vunpack.c.l.s4 1966171168
        %v2474 = vunpack.c.0.s8 %v2473
        %v2475 = vlaneseq
        %v2476 = vshrl.u32 %v2475, 7
        %v2477 = vsub.s32 %v2474, %v2476
        %v2478 = vrot.slane %v2427, %v2477
        %v2480 = vunpack.c.l.s4 1966171168
        %v2481 = vunpack.c.0.s8 %v2480
        %v2482 = vlaneseq
        %v2483 = vshrl.u32 %v2482, 7
        %v2484 = vsub.s32 %v2481, %v2483
        %v2485 = vrot.slane %v2429, %v2484
        %v2486 = vcombine.low %v2436, %v2464
        %v2487 = vcombine.high %v2436, %v2464
        %v2488 = vcombine.low %v2443, %v2471
        %v2489 = vcombine.high %v2443, %v2471
        %v2490 = vcombine.low %v2450, %v2478
        %v2491 = vcombine.high %v2450, %v2478
        %v2492 = vcombine.low %v2457, %v2485
        %v2493 = vcombine.high %v2457, %v2485
        %v2494 = vcombine.high %v555, %v555
        %v2496 = vunpack.c.l.s4 1966171168
        %v2497 = vunpack.c.0.s8 %v2496
        %v2498 = vlaneseq
        %v2499 = vshrl.u32 %v2498, 7
        %v2500 = vsub.s32 %v2497, %v2499
        %v2501 = vrot.slane %v555, %v2500
        %v2503 = vunpack.c.l.s4 1966171168
        %v2504 = vunpack.c.0.s8 %v2503
        %v2505 = vlaneseq
        %v2506 = vshrl.u32 %v2505, 7
        %v2507 = vsub.s32 %v2504, %v2506
        %v2508 = vrot.slane %v2494, %v2507
        %v2509 = vcombine.high %v2501, %v2501
        %v2510 = vcombine.high %v2508, %v2508
        %v2512 = vunpack.c.l.s4 1966171168
        %v2513 = vunpack.c.0.s8 %v2512
        %v2514 = vlaneseq
        %v2515 = vshrl.u32 %v2514, 7
        %v2516 = vsub.s32 %v2513, %v2515
        %v2517 = vrot.slane %v2501, %v2516
        %v2519 = vunpack.c.l.s4 1966171168
        %v2520 = vunpack.c.0.s8 %v2519
        %v2521 = vlaneseq
        %v2522 = vshrl.u32 %v2521, 7
        %v2523 = vsub.s32 %v2520, %v2522
        %v2524 = vrot.slane %v2508, %v2523
        %v2526 = vunpack.c.l.s4 1966171168
        %v2527 = vunpack.c.0.s8 %v2526
        %v2528 = vlaneseq
        %v2529 = vshrl.u32 %v2528, 7
        %v2530 = vsub.s32 %v2527, %v2529
        %v2531 = vrot.slane %v2509, %v2530
        %v2533 = vunpack.c.l.s4 1966171168
        %v2534 = vunpack.c.0.s8 %v2533
        %v2535 = vlaneseq
        %v2536 = vshrl.u32 %v2535, 7
        %v2537 = vsub.s32 %v2534, %v2536
        %v2538 = vrot.slane %v2510, %v2537
        %v2539 = vcombine.high %v2517, %v2517
        %v2540 = vcombine.high %v2524, %v2524
        %v2541 = vcombine.high %v2531, %v2531
        %v2542 = vcombine.high %v2538, %v2538
        %v2543 = vcombine.low %v548, %v371
        %v2544 = vcombine.low %v509, %v551
        %v2545 = vcombine.low %v373, %v524
        %v2547 = vunpack.c.l.s4 1966171168
        %v2548 = vunpack.c.0.s8 %v2547
        %v2549 = vlaneseq
        %v2550 = vshrl.u32 %v2549, 7
        %v2551 = vsub.s32 %v2548, %v2550
        %v2552 = vrot.slane %v2543, %v2551
        %v2554 = vunpack.c.l.s4 1966171168
        %v2555 = vunpack.c.0.s8 %v2554
        %v2556 = vlaneseq
        %v2557 = vshrl.u32 %v2556, 7
        %v2558 = vsub.s32 %v2555, %v2557
        %v2559 = vrot.slane %v2544, %v2558
        %v2561 = vunpack.c.l.s4 1966171168
        %v2562 = vunpack.c.0.s8 %v2561
        %v2563 = vlaneseq
        %v2564 = vshrl.u32 %v2563, 7
        %v2565 = vsub.s32 %v2562, %v2564
        %v2566 = vrot.slane %v2545, %v2565
        %v2567 = vcombine.low %v2118, %v2552
        %v2568 = vcombine.low %v2559, %v2566
        %v2570 = vunpack.c.l.s4 1966171168
        %v2571 = vunpack.c.0.s8 %v2570
        %v2572 = vlaneseq
        %v2573 = vshrl.u32 %v2572, 7
        %v2574 = vsub.s32 %v2571, %v2573
        %v2575 = vrot.slane %v2567, %v2574
        %v2577 = vunpack.c.l.s4 1966171168
        %v2578 = vunpack.c.0.s8 %v2577
        %v2579 = vlaneseq
        %v2580 = vshrl.u32 %v2579, 7
        %v2581 = vsub.s32 %v2578, %v2580
        %v2582 = vrot.slane %v2568, %v2581
        %v2583 = vcombine.low %v2575, %v2582
        %v2585 = vunpack.c.l.s4 1966171168
        %v2586 = vunpack.c.0.s8 %v2585
        %v2587 = vlaneseq
        %v2588 = vshrl.u32 %v2587, 7
        %v2589 = vsub.s32 %v2586, %v2588
        %v2590 = vrot.slane %v554, %v2589
        %v2592 = vunpack.c.l.s4 1966171168
        %v2593 = vunpack.c.0.s8 %v2592
        %v2594 = vlaneseq
        %v2595 = vshrl.u32 %v2594, 7
        %v2596 = vsub.s32 %v2593, %v2595
        %v2597 = vrot.slane %v2590, %v2596
        %v2598 = vcombine.low %v552, %v372
        %v2599 = vcombine.high %v552, %v372
        %v2600 = vcombine.low %v521, %v555
        %v2601 = vcombine.high %v521, %v555
        %v2602 = vcombine.low %v562, %v575
        %v2603 = vcombine.high %v562, %v575
        %v2605 = vunpack.c.l.s4 1966171168
        %v2606 = vunpack.c.0.s8 %v2605
        %v2607 = vlaneseq
        %v2608 = vshrl.u32 %v2607, 7
        %v2609 = vsub.s32 %v2606, %v2608
        %v2610 = vrot.slane %v2598, %v2609
        %v2612 = vunpack.c.l.s4 1966171168
        %v2613 = vunpack.c.0.s8 %v2612
        %v2614 = vlaneseq
        %v2615 = vshrl.u32 %v2614, 7
        %v2616 = vsub.s32 %v2613, %v2615
        %v2617 = vrot.slane %v2599, %v2616
        %v2619 = vunpack.c.l.s4 1966171168
        %v2620 = vunpack.c.0.s8 %v2619
        %v2621 = vlaneseq
        %v2622 = vshrl.u32 %v2621, 7
        %v2623 = vsub.s32 %v2620, %v2622
        %v2624 = vrot.slane %v2600, %v2623
        %v2626 = vunpack.c.l.s4 1966171168
        %v2627 = vunpack.c.0.s8 %v2626
        %v2628 = vlaneseq
        %v2629 = vshrl.u32 %v2628, 7
        %v2630 = vsub.s32 %v2627, %v2629
        %v2631 = vrot.slane %v2601, %v2630
        %v2633 = vunpack.c.l.s4 1966171168
        %v2634 = vunpack.c.0.s8 %v2633
        %v2635 = vlaneseq
        %v2636 = vshrl.u32 %v2635, 7
        %v2637 = vsub.s32 %v2634, %v2636
        %v2638 = vrot.slane %v2602, %v2637
        %v2640 = vunpack.c.l.s4 1966171168
        %v2641 = vunpack.c.0.s8 %v2640
        %v2642 = vlaneseq
        %v2643 = vshrl.u32 %v2642, 7
        %v2644 = vsub.s32 %v2641, %v2643
        %v2645 = vrot.slane %v2603, %v2644
        %v2646 = vcombine.low %v2190, %v2610
        %v2647 = vcombine.high %v2190, %v2610
        %v2648 = vcombine.low %v2197, %v2617
        %v2649 = vcombine.high %v2197, %v2617
        %v2650 = vcombine.low %v2624, %v2638
        %v2651 = vcombine.high %v2624, %v2638
        %v2652 = vcombine.low %v2631, %v2645
        %v2653 = vcombine.high %v2631, %v2645
        %v2655 = vunpack.c.l.s4 1966171168
        %v2656 = vunpack.c.0.s8 %v2655
        %v2657 = vlaneseq
        %v2658 = vshrl.u32 %v2657, 7
        %v2659 = vsub.s32 %v2656, %v2658
        %v2660 = vrot.slane %v2646, %v2659
        %v2662 = vunpack.c.l.s4 1966171168
        %v2663 = vunpack.c.0.s8 %v2662
        %v2664 = vlaneseq
        %v2665 = vshrl.u32 %v2664, 7
        %v2666 = vsub.s32 %v2663, %v2665
        %v2667 = vrot.slane %v2648, %v2666
        %v2669 = vunpack.c.l.s4 1966171168
        %v2670 = vunpack.c.0.s8 %v2669
        %v2671 = vlaneseq
        %v2672 = vshrl.u32 %v2671, 7
        %v2673 = vsub.s32 %v2670, %v2672
        %v2674 = vrot.slane %v2647, %v2673
        %v2676 = vunpack.c.l.s4 1966171168
        %v2677 = vunpack.c.0.s8 %v2676
        %v2678 = vlaneseq
        %v2679 = vshrl.u32 %v2678, 7
        %v2680 = vsub.s32 %v2677, %v2679
        %v2681 = vrot.slane %v2649, %v2680
        %v2683 = vunpack.c.l.s4 1966171168
        %v2684 = vunpack.c.0.s8 %v2683
        %v2685 = vlaneseq
        %v2686 = vshrl.u32 %v2685, 7
        %v2687 = vsub.s32 %v2684, %v2686
        %v2688 = vrot.slane %v2650, %v2687
        %v2690 = vunpack.c.l.s4 1966171168
        %v2691 = vunpack.c.0.s8 %v2690
        %v2692 = vlaneseq
        %v2693 = vshrl.u32 %v2692, 7
        %v2694 = vsub.s32 %v2691, %v2693
        %v2695 = vrot.slane %v2652, %v2694
        %v2697 = vunpack.c.l.s4 1966171168
        %v2698 = vunpack.c.0.s8 %v2697
        %v2699 = vlaneseq
        %v2700 = vshrl.u32 %v2699, 7
        %v2701 = vsub.s32 %v2698, %v2700
        %v2702 = vrot.slane %v2651, %v2701
        %v2704 = vunpack.c.l.s4 1966171168
        %v2705 = vunpack.c.0.s8 %v2704
        %v2706 = vlaneseq
        %v2707 = vshrl.u32 %v2706, 7
        %v2708 = vsub.s32 %v2705, %v2707
        %v2709 = vrot.slane %v2653, %v2708
        %v2710 = vcombine.low %v2660, %v2688
        %v2711 = vcombine.high %v2660, %v2688
        %v2712 = vcombine.low %v2667, %v2695
        %v2713 = vcombine.high %v2667, %v2695
        %v2714 = vcombine.low %v2674, %v2702
        %v2715 = vcombine.high %v2674, %v2702
        %v2716 = vcombine.low %v2681, %v2709
        %v2717 = vcombine.high %v2681, %v2709
        %v2718 = vcombine.high %v581, %v581
        %v2720 = vunpack.c.l.s4 1966171168
        %v2721 = vunpack.c.0.s8 %v2720
        %v2722 = vlaneseq
        %v2723 = vshrl.u32 %v2722, 7
        %v2724 = vsub.s32 %v2721, %v2723
        %v2725 = vrot.slane %v581, %v2724
        %v2727 = vunpack.c.l.s4 1966171168
        %v2728 = vunpack.c.0.s8 %v2727
        %v2729 = vlaneseq
        %v2730 = vshrl.u32 %v2729, 7
        %v2731 = vsub.s32 %v2728, %v2730
        %v2732 = vrot.slane %v2718, %v2731
        %v2733 = vcombine.high %v2725, %v2725
        %v2734 = vcombine.high %v2732, %v2732
        %v2736 = vunpack.c.l.s4 1966171168
        %v2737 = vunpack.c.0.s8 %v2736
        %v2738 = vlaneseq
        %v2739 = vshrl.u32 %v2738, 7
        %v2740 = vsub.s32 %v2737, %v2739
        %v2741 = vrot.slane %v2725, %v2740
        %v2743 = vunpack.c.l.s4 1966171168
        %v2744 = vunpack.c.0.s8 %v2743
        %v2745 = vlaneseq
        %v2746 = vshrl.u32 %v2745, 7
        %v2747 = vsub.s32 %v2744, %v2746
        %v2748 = vrot.slane %v2732, %v2747
        %v2750 = vunpack.c.l.s4 1966171168
        %v2751 = vunpack.c.0.s8 %v2750
        %v2752 = vlaneseq
        %v2753 = vshrl.u32 %v2752, 7
        %v2754 = vsub.s32 %v2751, %v2753
        %v2755 = vrot.slane %v2733, %v2754
        %v2757 = vunpack.c.l.s4 1966171168
        %v2758 = vunpack.c.0.s8 %v2757
        %v2759 = vlaneseq
        %v2760 = vshrl.u32 %v2759, 7
        %v2761 = vsub.s32 %v2758, %v2760
        %v2762 = vrot.slane %v2734, %v2761
        %v2763 = vcombine.high %v2741, %v2741
        %v2764 = vcombine.high %v2748, %v2748
        %v2765 = vcombine.high %v2755, %v2755
        %v2766 = vcombine.high %v2762, %v2762
        %v2767 = vcombine.low %v551, %v373
        %v2768 = vcombine.low %v524, %v554
        %v2769 = vcombine.low %v563, %v578
        %v2771 = vunpack.c.l.s4 1966171168
        %v2772 = vunpack.c.0.s8 %v2771
        %v2773 = vlaneseq
        %v2774 = vshrl.u32 %v2773, 7
        %v2775 = vsub.s32 %v2772, %v2774
        %v2776 = vrot.slane %v2767, %v2775
        %v2778 = vunpack.c.l.s4 1966171168
        %v2779 = vunpack.c.0.s8 %v2778
        %v2780 = vlaneseq
        %v2781 = vshrl.u32 %v2780, 7
        %v2782 = vsub.s32 %v2779, %v2781
        %v2783 = vrot.slane %v2768, %v2782
        %v2785 = vunpack.c.l.s4 1966171168
        %v2786 = vunpack.c.0.s8 %v2785
        %v2787 = vlaneseq
        %v2788 = vshrl.u32 %v2787, 7
        %v2789 = vsub.s32 %v2786, %v2788
        %v2790 = vrot.slane %v2769, %v2789
        %v2791 = vcombine.low %v2342, %v2776
        %v2792 = vcombine.low %v2783, %v2790
        %v2794 = vunpack.c.l.s4 1966171168
        %v2795 = vunpack.c.0.s8 %v2794
        %v2796 = vlaneseq
        %v2797 = vshrl.u32 %v2796, 7
        %v2798 = vsub.s32 %v2795, %v2797
        %v2799 = vrot.slane %v2791, %v2798
        %v2801 = vunpack.c.l.s4 1966171168
        %v2802 = vunpack.c.0.s8 %v2801
        %v2803 = vlaneseq
        %v2804 = vshrl.u32 %v2803, 7
        %v2805 = vsub.s32 %v2802, %v2804
        %v2806 = vrot.slane %v2792, %v2805
        %v2807 = vcombine.low %v2799, %v2806
        %v2809 = vunpack.c.l.s4 1966171168
        %v2810 = vunpack.c.0.s8 %v2809
        %v2811 = vlaneseq
        %v2812 = vshrl.u32 %v2811, 7
        %v2813 = vsub.s32 %v2810, %v2812
        %v2814 = vrot.slane %v580, %v2813
        %v2816 = vunpack.c.l.s4 1966171168
        %v2817 = vunpack.c.0.s8 %v2816
        %v2818 = vlaneseq
        %v2819 = vshrl.u32 %v2818, 7
        %v2820 = vsub.s32 %v2817, %v2819
        %v2821 = vrot.slane %v2814, %v2820
        %v2822 = vcombine.low %v555, %v562
        %v2823 = vcombine.high %v555, %v562
        %v2824 = vcombine.low %v575, %v581
        %v2825 = vcombine.high %v575, %v581
        %v2826 = vcombine.low %v588, %v601
        %v2827 = vcombine.high %v588, %v601
        %v2829 = vunpack.c.l.s4 1966171168
        %v2830 = vunpack.c.0.s8 %v2829
        %v2831 = vlaneseq
        %v2832 = vshrl.u32 %v2831, 7
        %v2833 = vsub.s32 %v2830, %v2832
        %v2834 = vrot.slane %v2822, %v2833
        %v2836 = vunpack.c.l.s4 1966171168
        %v2837 = vunpack.c.0.s8 %v2836
        %v2838 = vlaneseq
        %v2839 = vshrl.u32 %v2838, 7
        %v2840 = vsub.s32 %v2837, %v2839
        %v2841 = vrot.slane %v2823, %v2840
        %v2843 = vunpack.c.l.s4 1966171168
        %v2844 = vunpack.c.0.s8 %v2843
        %v2845 = vlaneseq
        %v2846 = vshrl.u32 %v2845, 7
        %v2847 = vsub.s32 %v2844, %v2846
        %v2848 = vrot.slane %v2824, %v2847
        %v2850 = vunpack.c.l.s4 1966171168
        %v2851 = vunpack.c.0.s8 %v2850
        %v2852 = vlaneseq
        %v2853 = vshrl.u32 %v2852, 7
        %v2854 = vsub.s32 %v2851, %v2853
        %v2855 = vrot.slane %v2825, %v2854
        %v2857 = vunpack.c.l.s4 1966171168
        %v2858 = vunpack.c.0.s8 %v2857
        %v2859 = vlaneseq
        %v2860 = vshrl.u32 %v2859, 7
        %v2861 = vsub.s32 %v2858, %v2860
        %v2862 = vrot.slane %v2826, %v2861
        %v2864 = vunpack.c.l.s4 1966171168
        %v2865 = vunpack.c.0.s8 %v2864
        %v2866 = vlaneseq
        %v2867 = vshrl.u32 %v2866, 7
        %v2868 = vsub.s32 %v2865, %v2867
        %v2869 = vrot.slane %v2827, %v2868
        %v2870 = vcombine.low %v2414, %v2834
        %v2871 = vcombine.high %v2414, %v2834
        %v2872 = vcombine.low %v2421, %v2841
        %v2873 = vcombine.high %v2421, %v2841
        %v2874 = vcombine.low %v2848, %v2862
        %v2875 = vcombine.high %v2848, %v2862
        %v2876 = vcombine.low %v2855, %v2869
        %v2877 = vcombine.high %v2855, %v2869
        %v2879 = vunpack.c.l.s4 1966171168
        %v2880 = vunpack.c.0.s8 %v2879
        %v2881 = vlaneseq
        %v2882 = vshrl.u32 %v2881, 7
        %v2883 = vsub.s32 %v2880, %v2882
        %v2884 = vrot.slane %v2870, %v2883
        %v2886 = vunpack.c.l.s4 1966171168
        %v2887 = vunpack.c.0.s8 %v2886
        %v2888 = vlaneseq
        %v2889 = vshrl.u32 %v2888, 7
        %v2890 = vsub.s32 %v2887, %v2889
        %v2891 = vrot.slane %v2872, %v2890
        %v2893 = vunpack.c.l.s4 1966171168
        %v2894 = vunpack.c.0.s8 %v2893
        %v2895 = vlaneseq
        %v2896 = vshrl.u32 %v2895, 7
        %v2897 = vsub.s32 %v2894, %v2896
        %v2898 = vrot.slane %v2871, %v2897
        %v2900 = vunpack.c.l.s4 1966171168
        %v2901 = vunpack.c.0.s8 %v2900
        %v2902 = vlaneseq
        %v2903 = vshrl.u32 %v2902, 7
        %v2904 = vsub.s32 %v2901, %v2903
        %v2905 = vrot.slane %v2873, %v2904
        %v2907 = vunpack.c.l.s4 1966171168
        %v2908 = vunpack.c.0.s8 %v2907
        %v2909 = vlaneseq
        %v2910 = vshrl.u32 %v2909, 7
        %v2911 = vsub.s32 %v2908, %v2910
        %v2912 = vrot.slane %v2874, %v2911
        %v2914 = vunpack.c.l.s4 1966171168
        %v2915 = vunpack.c.0.s8 %v2914
        %v2916 = vlaneseq
        %v2917 = vshrl.u32 %v2916, 7
        %v2918 = vsub.s32 %v2915, %v2917
        %v2919 = vrot.slane %v2876, %v2918
        %v2921 = vunpack.c.l.s4 1966171168
        %v2922 = vunpack.c.0.s8 %v2921
        %v2923 = vlaneseq
        %v2924 = vshrl.u32 %v2923, 7
        %v2925 = vsub.s32 %v2922, %v2924
        %v2926 = vrot.slane %v2875, %v2925
        %v2928 = vunpack.c.l.s4 1966171168
        %v2929 = vunpack.c.0.s8 %v2928
        %v2930 = vlaneseq
        %v2931 = vshrl.u32 %v2930, 7
        %v2932 = vsub.s32 %v2929, %v2931
        %v2933 = vrot.slane %v2877, %v2932
        %v2934 = vcombine.low %v2884, %v2912
        %v2935 = vcombine.high %v2884, %v2912
        %v2936 = vcombine.low %v2891, %v2919
        %v2937 = vcombine.high %v2891, %v2919
        %v2938 = vcombine.low %v2898, %v2926
        %v2939 = vcombine.high %v2898, %v2926
        %v2940 = vcombine.low %v2905, %v2933
        %v2941 = vcombine.high %v2905, %v2933
        %v2942 = vcombine.high %v607, %v607
        %v2944 = vunpack.c.l.s4 1966171168
        %v2945 = vunpack.c.0.s8 %v2944
        %v2946 = vlaneseq
        %v2947 = vshrl.u32 %v2946, 7
        %v2948 = vsub.s32 %v2945, %v2947
        %v2949 = vrot.slane %v607, %v2948
        %v2951 = vunpack.c.l.s4 1966171168
        %v2952 = vunpack.c.0.s8 %v2951
        %v2953 = vlaneseq
        %v2954 = vshrl.u32 %v2953, 7
        %v2955 = vsub.s32 %v2952, %v2954
        %v2956 = vrot.slane %v2942, %v2955
        %v2957 = vcombine.high %v2949, %v2949
        %v2958 = vcombine.high %v2956, %v2956
        %v2960 = vunpack.c.l.s4 1966171168
        %v2961 = vunpack.c.0.s8 %v2960
        %v2962 = vlaneseq
        %v2963 = vshrl.u32 %v2962, 7
        %v2964 = vsub.s32 %v2961, %v2963
        %v2965 = vrot.slane %v2949, %v2964
        %v2967 = vunpack.c.l.s4 1966171168
        %v2968 = vunpack.c.0.s8 %v2967
        %v2969 = vlaneseq
        %v2970 = vshrl.u32 %v2969, 7
        %v2971 = vsub.s32 %v2968, %v2970
        %v2972 = vrot.slane %v2956, %v2971
        %v2974 = vunpack.c.l.s4 1966171168
        %v2975 = vunpack.c.0.s8 %v2974
        %v2976 = vlaneseq
        %v2977 = vshrl.u32 %v2976, 7
        %v2978 = vsub.s32 %v2975, %v2977
        %v2979 = vrot.slane %v2957, %v2978
        %v2981 = vunpack.c.l.s4 1966171168
        %v2982 = vunpack.c.0.s8 %v2981
        %v2983 = vlaneseq
        %v2984 = vshrl.u32 %v2983, 7
        %v2985 = vsub.s32 %v2982, %v2984
        %v2986 = vrot.slane %v2958, %v2985
        %v2987 = vcombine.high %v2965, %v2965
        %v2988 = vcombine.high %v2972, %v2972
        %v2989 = vcombine.high %v2979, %v2979
        %v2990 = vcombine.high %v2986, %v2986
        %v2991 = vcombine.low %v554, %v563
        %v2992 = vcombine.low %v578, %v580
        %v2993 = vcombine.low %v589, %v604
        %v2995 = vunpack.c.l.s4 1966171168
        %v2996 = vunpack.c.0.s8 %v2995
        %v2997 = vlaneseq
        %v2998 = vshrl.u32 %v2997, 7
        %v2999 = vsub.s32 %v2996, %v2998
        %v3000 = vrot.slane %v2991, %v2999
        %v3002 = vunpack.c.l.s4 1966171168
        %v3003 = vunpack.c.0.s8 %v3002
        %v3004 = vlaneseq
        %v3005 = vshrl.u32 %v3004, 7
        %v3006 = vsub.s32 %v3003, %v3005
        %v3007 = vrot.slane %v2992, %v3006
        %v3009 = vunpack.c.l.s4 1966171168
        %v3010 = vunpack.c.0.s8 %v3009
        %v3011 = vlaneseq
        %v3012 = vshrl.u32 %v3011, 7
        %v3013 = vsub.s32 %v3010, %v3012
        %v3014 = vrot.slane %v2993, %v3013
        %v3015 = vcombine.low %v2566, %v3000
        %v3016 = vcombine.low %v3007, %v3014
        %v3018 = vunpack.c.l.s4 1966171168
        %v3019 = vunpack.c.0.s8 %v3018
        %v3020 = vlaneseq
        %v3021 = vshrl.u32 %v3020, 7
        %v3022 = vsub.s32 %v3019, %v3021
        %v3023 = vrot.slane %v3015, %v3022
        %v3025 = vunpack.c.l.s4 1966171168
        %v3026 = vunpack.c.0.s8 %v3025
        %v3027 = vlaneseq
        %v3028 = vshrl.u32 %v3027, 7
        %v3029 = vsub.s32 %v3026, %v3028
        %v3030 = vrot.slane %v3016, %v3029
        %v3031 = vcombine.low %v3023, %v3030
        %v3033 = vunpack.c.l.s4 1966171168
        %v3034 = vunpack.c.0.s8 %v3033
        %v3035 = vlaneseq
        %v3036 = vshrl.u32 %v3035, 7
        %v3037 = vsub.s32 %v3034, %v3036
        %v3038 = vrot.slane %v606, %v3037
        %v3040 = vunpack.c.l.s4 1966171168
        %v3041 = vunpack.c.0.s8 %v3040
        %v3042 = vlaneseq
        %v3043 = vshrl.u32 %v3042, 7
        %v3044 = vsub.s32 %v3041, %v3043
        %v3045 = vrot.slane %v3038, %v3044
        %v3046 = vcombine.high %v757, %v757
        %v3048 = vunpack.c.l.s4 1983009808
        %v3049 = vunpack.c.0.s8 %v3048
        %v3050 = vlaneseq
        %v3051 = vshrl.u32 %v3050, 7
        %v3052 = vsub.s32 %v3049, %v3051
        %v3053 = vrot.slane %v757, %v3052
        %v3055 = vunpack.c.l.s4 1983009808
        %v3056 = vunpack.c.0.s8 %v3055
        %v3057 = vlaneseq
        %v3058 = vshrl.u32 %v3057, 7
        %v3059 = vsub.s32 %v3056, %v3058
        %v3060 = vrot.slane %v3046, %v3059
        %v3061 = vcombine.high %v3053, %v3053
        %v3062 = vcombine.high %v3060, %v3060
        %v3063 = vcombine.low %v886, %v890
        %v3064 = vcombine.high %v886, %v890
        %v3065 = vcombine.low %v887, %v891
        %v3066 = vcombine.high %v887, %v891
        %v3067 = vcombine.low %v888, %v892
        %v3068 = vcombine.high %v888, %v892
        %v3069 = vcombine.low %v889, %v893
        %v3070 = vcombine.high %v889, %v893
        %v3072 = vunpack.c.l.s4 1966171168
        %v3073 = vunpack.c.0.s8 %v3072
        %v3074 = vlaneseq
        %v3075 = vshrl.u32 %v3074, 7
        %v3076 = vsub.s32 %v3073, %v3075
        %v3077 = vrot.slane %v3063, %v3076
        %v3079 = vunpack.c.l.s4 1966171168
        %v3080 = vunpack.c.0.s8 %v3079
        %v3081 = vlaneseq
        %v3082 = vshrl.u32 %v3081, 7
        %v3083 = vsub.s32 %v3080, %v3082
        %v3084 = vrot.slane %v3064, %v3083
        %v3086 = vunpack.c.l.s4 1966171168
        %v3087 = vunpack.c.0.s8 %v3086
        %v3088 = vlaneseq
        %v3089 = vshrl.u32 %v3088, 7
        %v3090 = vsub.s32 %v3087, %v3089
        %v3091 = vrot.slane %v3065, %v3090
        %v3093 = vunpack.c.l.s4 1966171168
        %v3094 = vunpack.c.0.s8 %v3093
        %v3095 = vlaneseq
        %v3096 = vshrl.u32 %v3095, 7
        %v3097 = vsub.s32 %v3094, %v3096
        %v3098 = vrot.slane %v3066, %v3097
        %v3100 = vunpack.c.l.s4 1966171168
        %v3101 = vunpack.c.0.s8 %v3100
        %v3102 = vlaneseq
        %v3103 = vshrl.u32 %v3102, 7
        %v3104 = vsub.s32 %v3101, %v3103
        %v3105 = vrot.slane %v3067, %v3104
        %v3107 = vunpack.c.l.s4 1966171168
        %v3108 = vunpack.c.0.s8 %v3107
        %v3109 = vlaneseq
        %v3110 = vshrl.u32 %v3109, 7
        %v3111 = vsub.s32 %v3108, %v3110
        %v3112 = vrot.slane %v3068, %v3111
        %v3114 = vunpack.c.l.s4 1966171168
        %v3115 = vunpack.c.0.s8 %v3114
        %v3116 = vlaneseq
        %v3117 = vshrl.u32 %v3116, 7
        %v3118 = vsub.s32 %v3115, %v3117
        %v3119 = vrot.slane %v3069, %v3118
        %v3121 = vunpack.c.l.s4 1966171168
        %v3122 = vunpack.c.0.s8 %v3121
        %v3123 = vlaneseq
        %v3124 = vshrl.u32 %v3123, 7
        %v3125 = vsub.s32 %v3122, %v3124
        %v3126 = vrot.slane %v3070, %v3125
        %v3127 = vcombine.low %v3077, %v3091
        %v3128 = vcombine.high %v3077, %v3091
        %v3129 = vcombine.low %v3084, %v3098
        %v3130 = vcombine.high %v3084, %v3098
        %v3131 = vcombine.low %v3105, %v3119
        %v3132 = vcombine.high %v3105, %v3119
        %v3133 = vcombine.low %v3112, %v3126
        %v3134 = vcombine.high %v3112, %v3126
        %v3136 = vunpack.c.l.s4 1966171168
        %v3137 = vunpack.c.0.s8 %v3136
        %v3138 = vlaneseq
        %v3139 = vshrl.u32 %v3138, 7
        %v3140 = vsub.s32 %v3137, %v3139
        %v3141 = vrot.slane %v3127, %v3140
        %v3143 = vunpack.c.l.s4 1966171168
        %v3144 = vunpack.c.0.s8 %v3143
        %v3145 = vlaneseq
        %v3146 = vshrl.u32 %v3145, 7
        %v3147 = vsub.s32 %v3144, %v3146
        %v3148 = vrot.slane %v3129, %v3147
        %v3150 = vunpack.c.l.s4 1966171168
        %v3151 = vunpack.c.0.s8 %v3150
        %v3152 = vlaneseq
        %v3153 = vshrl.u32 %v3152, 7
        %v3154 = vsub.s32 %v3151, %v3153
        %v3155 = vrot.slane %v3128, %v3154
        %v3157 = vunpack.c.l.s4 1966171168
        %v3158 = vunpack.c.0.s8 %v3157
        %v3159 = vlaneseq
        %v3160 = vshrl.u32 %v3159, 7
        %v3161 = vsub.s32 %v3158, %v3160
        %v3162 = vrot.slane %v3130, %v3161
        %v3164 = vunpack.c.l.s4 1966171168
        %v3165 = vunpack.c.0.s8 %v3164
        %v3166 = vlaneseq
        %v3167 = vshrl.u32 %v3166, 7
        %v3168 = vsub.s32 %v3165, %v3167
        %v3169 = vrot.slane %v3131, %v3168
        %v3171 = vunpack.c.l.s4 1966171168
        %v3172 = vunpack.c.0.s8 %v3171
        %v3173 = vlaneseq
        %v3174 = vshrl.u32 %v3173, 7
        %v3175 = vsub.s32 %v3172, %v3174
        %v3176 = vrot.slane %v3133, %v3175
        %v3178 = vunpack.c.l.s4 1966171168
        %v3179 = vunpack.c.0.s8 %v3178
        %v3180 = vlaneseq
        %v3181 = vshrl.u32 %v3180, 7
        %v3182 = vsub.s32 %v3179, %v3181
        %v3183 = vrot.slane %v3132, %v3182
        %v3185 = vunpack.c.l.s4 1966171168
        %v3186 = vunpack.c.0.s8 %v3185
        %v3187 = vlaneseq
        %v3188 = vshrl.u32 %v3187, 7
        %v3189 = vsub.s32 %v3186, %v3188
        %v3190 = vrot.slane %v3134, %v3189
        %v3191 = vcombine.low %v3141, %v3169
        %v3192 = vcombine.high %v3141, %v3169
        %v3193 = vcombine.low %v3148, %v3176
        %v3194 = vcombine.high %v3148, %v3176
        %v3195 = vcombine.low %v3155, %v3183
        %v3196 = vcombine.high %v3155, %v3183
        %v3197 = vcombine.low %v3162, %v3190
        %v3198 = vcombine.high %v3162, %v3190
        %v3199 = vcombine.low %v917, %v931
        %v3200 = vcombine.low %v939, %v941
        %v3201 = vcombine.low %v924, %v938
        %v3202 = vcombine.low %v940, %v942
        %v3204 = vunpack.c.l.s4 1966171168
        %v3205 = vunpack.c.0.s8 %v3204
        %v3206 = vlaneseq
        %v3207 = vshrl.u32 %v3206, 7
        %v3208 = vsub.s32 %v3205, %v3207
        %v3209 = vrot.slane %v3199, %v3208
        %v3211 = vunpack.c.l.s4 1966171168
        %v3212 = vunpack.c.0.s8 %v3211
        %v3213 = vlaneseq
        %v3214 = vshrl.u32 %v3213, 7
        %v3215 = vsub.s32 %v3212, %v3214
        %v3216 = vrot.slane %v3200, %v3215
        %v3218 = vunpack.c.l.s4 1966171168
        %v3219 = vunpack.c.0.s8 %v3218
        %v3220 = vlaneseq
        %v3221 = vshrl.u32 %v3220, 7
        %v3222 = vsub.s32 %v3219, %v3221
        %v3223 = vrot.slane %v3201, %v3222
        %v3225 = vunpack.c.l.s4 1966171168
        %v3226 = vunpack.c.0.s8 %v3225
        %v3227 = vlaneseq
        %v3228 = vshrl.u32 %v3227, 7
        %v3229 = vsub.s32 %v3226, %v3228
        %v3230 = vrot.slane %v3202, %v3229
        %v3231 = vcombine.low %v3209, %v3216
        %v3232 = vcombine.low %v3223, %v3230
        %v3234 = vunpack.c.l.s4 1966171168
        %v3235 = vunpack.c.0.s8 %v3234
        %v3236 = vlaneseq
        %v3237 = vshrl.u32 %v3236, 7
        %v3238 = vsub.s32 %v3235, %v3237
        %v3239 = vrot.slane %v3231, %v3238
        %v3241 = vunpack.c.l.s4 1966171168
        %v3242 = vunpack.c.0.s8 %v3241
        %v3243 = vlaneseq
        %v3244 = vshrl.u32 %v3243, 7
        %v3245 = vsub.s32 %v3242, %v3244
        %v3246 = vrot.slane %v3232, %v3245
        %v3247 = vcombine.low %v3239, %v3246
        %v3248 = vcombine.low %v991, %v1134
        %v3249 = vcombine.high %v991, %v1134
        %v3250 = vcombine.low %v1138, %v1135
        %v3251 = vcombine.high %v1138, %v1135
        %v3252 = vcombine.low %v1139, %v1136
        %v3253 = vcombine.high %v1139, %v1136
        %v3254 = vcombine.low %v1140, %v1137
        %v3255 = vcombine.high %v1140, %v1137
        %v3257 = vunpack.c.l.s4 1966171168
        %v3258 = vunpack.c.0.s8 %v3257
        %v3259 = vlaneseq
        %v3260 = vshrl.u32 %v3259, 7
        %v3261 = vsub.s32 %v3258, %v3260
        %v3262 = vrot.slane %v3248, %v3261
        %v3264 = vunpack.c.l.s4 1966171168
        %v3265 = vunpack.c.0.s8 %v3264
        %v3266 = vlaneseq
        %v3267 = vshrl.u32 %v3266, 7
        %v3268 = vsub.s32 %v3265, %v3267
        %v3269 = vrot.slane %v3249, %v3268
        %v3271 = vunpack.c.l.s4 1966171168
        %v3272 = vunpack.c.0.s8 %v3271
        %v3273 = vlaneseq
        %v3274 = vshrl.u32 %v3273, 7
        %v3275 = vsub.s32 %v3272, %v3274
        %v3276 = vrot.slane %v3250, %v3275
        %v3278 = vunpack.c.l.s4 1966171168
        %v3279 = vunpack.c.0.s8 %v3278
        %v3280 = vlaneseq
        %v3281 = vshrl.u32 %v3280, 7
        %v3282 = vsub.s32 %v3279, %v3281
        %v3283 = vrot.slane %v3251, %v3282
        %v3285 = vunpack.c.l.s4 1966171168
        %v3286 = vunpack.c.0.s8 %v3285
        %v3287 = vlaneseq
        %v3288 = vshrl.u32 %v3287, 7
        %v3289 = vsub.s32 %v3286, %v3288
        %v3290 = vrot.slane %v3252, %v3289
        %v3292 = vunpack.c.l.s4 1966171168
        %v3293 = vunpack.c.0.s8 %v3292
        %v3294 = vlaneseq
        %v3295 = vshrl.u32 %v3294, 7
        %v3296 = vsub.s32 %v3293, %v3295
        %v3297 = vrot.slane %v3253, %v3296
        %v3299 = vunpack.c.l.s4 1966171168
        %v3300 = vunpack.c.0.s8 %v3299
        %v3301 = vlaneseq
        %v3302 = vshrl.u32 %v3301, 7
        %v3303 = vsub.s32 %v3300, %v3302
        %v3304 = vrot.slane %v3254, %v3303
        %v3306 = vunpack.c.l.s4 1966171168
        %v3307 = vunpack.c.0.s8 %v3306
        %v3308 = vlaneseq
        %v3309 = vshrl.u32 %v3308, 7
        %v3310 = vsub.s32 %v3307, %v3309
        %v3311 = vrot.slane %v3255, %v3310
        %v3312 = vcombine.low %v3262, %v3276
        %v3313 = vcombine.high %v3262, %v3276
        %v3314 = vcombine.low %v3269, %v3283
        %v3315 = vcombine.high %v3269, %v3283
        %v3316 = vcombine.low %v3290, %v3304
        %v3317 = vcombine.high %v3290, %v3304
        %v3318 = vcombine.low %v3297, %v3311
        %v3319 = vcombine.high %v3297, %v3311
        %v3321 = vunpack.c.l.s4 1966171168
        %v3322 = vunpack.c.0.s8 %v3321
        %v3323 = vlaneseq
        %v3324 = vshrl.u32 %v3323, 7
        %v3325 = vsub.s32 %v3322, %v3324
        %v3326 = vrot.slane %v3312, %v3325
        %v3328 = vunpack.c.l.s4 1966171168
        %v3329 = vunpack.c.0.s8 %v3328
        %v3330 = vlaneseq
        %v3331 = vshrl.u32 %v3330, 7
        %v3332 = vsub.s32 %v3329, %v3331
        %v3333 = vrot.slane %v3314, %v3332
        %v3335 = vunpack.c.l.s4 1966171168
        %v3336 = vunpack.c.0.s8 %v3335
        %v3337 = vlaneseq
        %v3338 = vshrl.u32 %v3337, 7
        %v3339 = vsub.s32 %v3336, %v3338
        %v3340 = vrot.slane %v3313, %v3339
        %v3342 = vunpack.c.l.s4 1966171168
        %v3343 = vunpack.c.0.s8 %v3342
        %v3344 = vlaneseq
        %v3345 = vshrl.u32 %v3344, 7
        %v3346 = vsub.s32 %v3343, %v3345
        %v3347 = vrot.slane %v3315, %v3346
        %v3349 = vunpack.c.l.s4 1966171168
        %v3350 = vunpack.c.0.s8 %v3349
        %v3351 = vlaneseq
        %v3352 = vshrl.u32 %v3351, 7
        %v3353 = vsub.s32 %v3350, %v3352
        %v3354 = vrot.slane %v3316, %v3353
        %v3356 = vunpack.c.l.s4 1966171168
        %v3357 = vunpack.c.0.s8 %v3356
        %v3358 = vlaneseq
        %v3359 = vshrl.u32 %v3358, 7
        %v3360 = vsub.s32 %v3357, %v3359
        %v3361 = vrot.slane %v3318, %v3360
        %v3363 = vunpack.c.l.s4 1966171168
        %v3364 = vunpack.c.0.s8 %v3363
        %v3365 = vlaneseq
        %v3366 = vshrl.u32 %v3365, 7
        %v3367 = vsub.s32 %v3364, %v3366
        %v3368 = vrot.slane %v3317, %v3367
        %v3370 = vunpack.c.l.s4 1966171168
        %v3371 = vunpack.c.0.s8 %v3370
        %v3372 = vlaneseq
        %v3373 = vshrl.u32 %v3372, 7
        %v3374 = vsub.s32 %v3371, %v3373
        %v3375 = vrot.slane %v3319, %v3374
        %v3376 = vcombine.low %v3326, %v3354
        %v3377 = vcombine.high %v3326, %v3354
        %v3378 = vcombine.low %v3333, %v3361
        %v3379 = vcombine.high %v3333, %v3361
        %v3380 = vcombine.low %v3340, %v3368
        %v3381 = vcombine.high %v3340, %v3368
        %v3382 = vcombine.low %v3347, %v3375
        %v3383 = vcombine.high %v3347, %v3375
        %v3384 = vcombine.low %v1005, %v1165
        %v3385 = vcombine.low %v1179, %v1187
        %v3386 = vcombine.low %v1189, %v1172
        %v3387 = vcombine.low %v1186, %v1188
        %v3389 = vunpack.c.l.s4 1966171168
        %v3390 = vunpack.c.0.s8 %v3389
        %v3391 = vlaneseq
        %v3392 = vshrl.u32 %v3391, 7
        %v3393 = vsub.s32 %v3390, %v3392
        %v3394 = vrot.slane %v3384, %v3393
        %v3396 = vunpack.c.l.s4 1966171168
        %v3397 = vunpack.c.0.s8 %v3396
        %v3398 = vlaneseq
        %v3399 = vshrl.u32 %v3398, 7
        %v3400 = vsub.s32 %v3397, %v3399
        %v3401 = vrot.slane %v3385, %v3400
        %v3403 = vunpack.c.l.s4 1966171168
        %v3404 = vunpack.c.0.s8 %v3403
        %v3405 = vlaneseq
        %v3406 = vshrl.u32 %v3405, 7
        %v3407 = vsub.s32 %v3404, %v3406
        %v3408 = vrot.slane %v3386, %v3407
        %v3410 = vunpack.c.l.s4 1966171168
        %v3411 = vunpack.c.0.s8 %v3410
        %v3412 = vlaneseq
        %v3413 = vshrl.u32 %v3412, 7
        %v3414 = vsub.s32 %v3411, %v3413
        %v3415 = vrot.slane %v3387, %v3414
        %v3416 = vcombine.low %v3394, %v3401
        %v3417 = vcombine.low %v3408, %v3415
        %v3419 = vunpack.c.l.s4 1966171168
        %v3420 = vunpack.c.0.s8 %v3419
        %v3421 = vlaneseq
        %v3422 = vshrl.u32 %v3421, 7
        %v3423 = vsub.s32 %v3420, %v3422
        %v3424 = vrot.slane %v3416, %v3423
        %v3426 = vunpack.c.l.s4 1966171168
        %v3427 = vunpack.c.0.s8 %v3426
        %v3428 = vlaneseq
        %v3429 = vshrl.u32 %v3428, 7
        %v3430 = vsub.s32 %v3427, %v3429
        %v3431 = vrot.slane %v3417, %v3430
        %v3432 = vcombine.low %v3424, %v3431
        %v3433 = vcombine.low %v1141, %v1239
        %v3434 = vcombine.high %v1141, %v1239
        %v3435 = vcombine.low %v1366, %v1370
        %v3436 = vcombine.high %v1366, %v1370
        %v3437 = vcombine.low %v1367, %v1371
        %v3438 = vcombine.high %v1367, %v1371
        %v3439 = vcombine.low %v1368, %v1372
        %v3440 = vcombine.high %v1368, %v1372
        %v3442 = vunpack.c.l.s4 1966171168
        %v3443 = vunpack.c.0.s8 %v3442
        %v3444 = vlaneseq
        %v3445 = vshrl.u32 %v3444, 7
        %v3446 = vsub.s32 %v3443, %v3445
        %v3447 = vrot.slane %v3433, %v3446
        %v3449 = vunpack.c.l.s4 1966171168
        %v3450 = vunpack.c.0.s8 %v3449
        %v3451 = vlaneseq
        %v3452 = vshrl.u32 %v3451, 7
        %v3453 = vsub.s32 %v3450, %v3452
        %v3454 = vrot.slane %v3434, %v3453
        %v3456 = vunpack.c.l.s4 1966171168
        %v3457 = vunpack.c.0.s8 %v3456
        %v3458 = vlaneseq
        %v3459 = vshrl.u32 %v3458, 7
        %v3460 = vsub.s32 %v3457, %v3459
        %v3461 = vrot.slane %v3435, %v3460
        %v3463 = vunpack.c.l.s4 1966171168
        %v3464 = vunpack.c.0.s8 %v3463
        %v3465 = vlaneseq
        %v3466 = vshrl.u32 %v3465, 7
        %v3467 = vsub.s32 %v3464, %v3466
        %v3468 = vrot.slane %v3436, %v3467
        %v3470 = vunpack.c.l.s4 1966171168
        %v3471 = vunpack.c.0.s8 %v3470
        %v3472 = vlaneseq
        %v3473 = vshrl.u32 %v3472, 7
        %v3474 = vsub.s32 %v3471, %v3473
        %v3475 = vrot.slane %v3437, %v3474
        %v3477 = vunpack.c.l.s4 1966171168
        %v3478 = vunpack.c.0.s8 %v3477
        %v3479 = vlaneseq
        %v3480 = vshrl.u32 %v3479, 7
        %v3481 = vsub.s32 %v3478, %v3480
        %v3482 = vrot.slane %v3438, %v3481
        %v3484 = vunpack.c.l.s4 1966171168
        %v3485 = vunpack.c.0.s8 %v3484
        %v3486 = vlaneseq
        %v3487 = vshrl.u32 %v3486, 7
        %v3488 = vsub.s32 %v3485, %v3487
        %v3489 = vrot.slane %v3439, %v3488
        %v3491 = vunpack.c.l.s4 1966171168
        %v3492 = vunpack.c.0.s8 %v3491
        %v3493 = vlaneseq
        %v3494 = vshrl.u32 %v3493, 7
        %v3495 = vsub.s32 %v3492, %v3494
        %v3496 = vrot.slane %v3440, %v3495
        %v3497 = vcombine.low %v3447, %v3461
        %v3498 = vcombine.high %v3447, %v3461
        %v3499 = vcombine.low %v3454, %v3468
        %v3500 = vcombine.high %v3454, %v3468
        %v3501 = vcombine.low %v3475, %v3489
        %v3502 = vcombine.high %v3475, %v3489
        %v3503 = vcombine.low %v3482, %v3496
        %v3504 = vcombine.high %v3482, %v3496
        %v3506 = vunpack.c.l.s4 1966171168
        %v3507 = vunpack.c.0.s8 %v3506
        %v3508 = vlaneseq
        %v3509 = vshrl.u32 %v3508, 7
        %v3510 = vsub.s32 %v3507, %v3509
        %v3511 = vrot.slane %v3497, %v3510
        %v3513 = vunpack.c.l.s4 1966171168
        %v3514 = vunpack.c.0.s8 %v3513
        %v3515 = vlaneseq
        %v3516 = vshrl.u32 %v3515, 7
        %v3517 = vsub.s32 %v3514, %v3516
        %v3518 = vrot.slane %v3499, %v3517
        %v3520 = vunpack.c.l.s4 1966171168
        %v3521 = vunpack.c.0.s8 %v3520
        %v3522 = vlaneseq
        %v3523 = vshrl.u32 %v3522, 7
        %v3524 = vsub.s32 %v3521, %v3523
        %v3525 = vrot.slane %v3498, %v3524
        %v3527 = vunpack.c.l.s4 1966171168
        %v3528 = vunpack.c.0.s8 %v3527
        %v3529 = vlaneseq
        %v3530 = vshrl.u32 %v3529, 7
        %v3531 = vsub.s32 %v3528, %v3530
        %v3532 = vrot.slane %v3500, %v3531
        %v3534 = vunpack.c.l.s4 1966171168
        %v3535 = vunpack.c.0.s8 %v3534
        %v3536 = vlaneseq
        %v3537 = vshrl.u32 %v3536, 7
        %v3538 = vsub.s32 %v3535, %v3537
        %v3539 = vrot.slane %v3501, %v3538
        %v3541 = vunpack.c.l.s4 1966171168
        %v3542 = vunpack.c.0.s8 %v3541
        %v3543 = vlaneseq
        %v3544 = vshrl.u32 %v3543, 7
        %v3545 = vsub.s32 %v3542, %v3544
        %v3546 = vrot.slane %v3503, %v3545
        %v3548 = vunpack.c.l.s4 1966171168
        %v3549 = vunpack.c.0.s8 %v3548
        %v3550 = vlaneseq
        %v3551 = vshrl.u32 %v3550, 7
        %v3552 = vsub.s32 %v3549, %v3551
        %v3553 = vrot.slane %v3502, %v3552
        %v3555 = vunpack.c.l.s4 1966171168
        %v3556 = vunpack.c.0.s8 %v3555
        %v3557 = vlaneseq
        %v3558 = vshrl.u32 %v3557, 7
        %v3559 = vsub.s32 %v3556, %v3558
        %v3560 = vrot.slane %v3504, %v3559
        %v3561 = vcombine.low %v3511, %v3539
        %v3562 = vcombine.high %v3511, %v3539
        %v3563 = vcombine.low %v3518, %v3546
        %v3564 = vcombine.high %v3518, %v3546
        %v3565 = vcombine.low %v3525, %v3553
        %v3566 = vcombine.high %v3525, %v3553
        %v3567 = vcombine.low %v3532, %v3560
        %v3568 = vcombine.high %v3532, %v3560
        %v3569 = vcombine.low %v1190, %v1253
        %v3570 = vcombine.low %v1397, %v1411
        %v3571 = vcombine.low %v1419, %v1421
        %v3572 = vcombine.low %v1404, %v1418
        %v3574 = vunpack.c.l.s4 1966171168
        %v3575 = vunpack.c.0.s8 %v3574
        %v3576 = vlaneseq
        %v3577 = vshrl.u32 %v3576, 7
        %v3578 = vsub.s32 %v3575, %v3577
        %v3579 = vrot.slane %v3569, %v3578
        %v3581 = vunpack.c.l.s4 1966171168
        %v3582 = vunpack.c.0.s8 %v3581
        %v3583 = vlaneseq
        %v3584 = vshrl.u32 %v3583, 7
        %v3585 = vsub.s32 %v3582, %v3584
        %v3586 = vrot.slane %v3570, %v3585
        %v3588 = vunpack.c.l.s4 1966171168
        %v3589 = vunpack.c.0.s8 %v3588
        %v3590 = vlaneseq
        %v3591 = vshrl.u32 %v3590, 7
        %v3592 = vsub.s32 %v3589, %v3591
        %v3593 = vrot.slane %v3571, %v3592
        %v3595 = vunpack.c.l.s4 1966171168
        %v3596 = vunpack.c.0.s8 %v3595
        %v3597 = vlaneseq
        %v3598 = vshrl.u32 %v3597, 7
        %v3599 = vsub.s32 %v3596, %v3598
        %v3600 = vrot.slane %v3572, %v3599
        %v3601 = vcombine.low %v3579, %v3586
        %v3602 = vcombine.low %v3593, %v3600
        %v3604 = vunpack.c.l.s4 1966171168
        %v3605 = vunpack.c.0.s8 %v3604
        %v3606 = vlaneseq
        %v3607 = vshrl.u32 %v3606, 7
        %v3608 = vsub.s32 %v3605, %v3607
        %v3609 = vrot.slane %v3601, %v3608
        %v3611 = vunpack.c.l.s4 1966171168
        %v3612 = vunpack.c.0.s8 %v3611
        %v3613 = vlaneseq
        %v3614 = vshrl.u32 %v3613, 7
        %v3615 = vsub.s32 %v3612, %v3614
        %v3616 = vrot.slane %v3602, %v3615
        %v3617 = vcombine.low %v3609, %v3616
        %v3618 = vcombine.low %v1369, %v1373
        %v3619 = vcombine.high %v1369, %v1373
        %v3620 = vcombine.low %v1463, %v1590
        %v3621 = vcombine.high %v1463, %v1590
        %v3622 = vcombine.low %v1594, %v1591
        %v3623 = vcombine.high %v1594, %v1591
        %v3624 = vcombine.low %v1595, %v1592
        %v3625 = vcombine.high %v1595, %v1592
        %v3627 = vunpack.c.l.s4 1966171168
        %v3628 = vunpack.c.0.s8 %v3627
        %v3629 = vlaneseq
        %v3630 = vshrl.u32 %v3629, 7
        %v3631 = vsub.s32 %v3628, %v3630
        %v3632 = vrot.slane %v3618, %v3631
        %v3634 = vunpack.c.l.s4 1966171168
        %v3635 = vunpack.c.0.s8 %v3634
        %v3636 = vlaneseq
        %v3637 = vshrl.u32 %v3636, 7
        %v3638 = vsub.s32 %v3635, %v3637
        %v3639 = vrot.slane %v3619, %v3638
        %v3641 = vunpack.c.l.s4 1966171168
        %v3642 = vunpack.c.0.s8 %v3641
        %v3643 = vlaneseq
        %v3644 = vshrl.u32 %v3643, 7
        %v3645 = vsub.s32 %v3642, %v3644
        %v3646 = vrot.slane %v3620, %v3645
        %v3648 = vunpack.c.l.s4 1966171168
        %v3649 = vunpack.c.0.s8 %v3648
        %v3650 = vlaneseq
        %v3651 = vshrl.u32 %v3650, 7
        %v3652 = vsub.s32 %v3649, %v3651
        %v3653 = vrot.slane %v3621, %v3652
        %v3655 = vunpack.c.l.s4 1966171168
        %v3656 = vunpack.c.0.s8 %v3655
        %v3657 = vlaneseq
        %v3658 = vshrl.u32 %v3657, 7
        %v3659 = vsub.s32 %v3656, %v3658
        %v3660 = vrot.slane %v3622, %v3659
        %v3662 = vunpack.c.l.s4 1966171168
        %v3663 = vunpack.c.0.s8 %v3662
        %v3664 = vlaneseq
        %v3665 = vshrl.u32 %v3664, 7
        %v3666 = vsub.s32 %v3663, %v3665
        %v3667 = vrot.slane %v3623, %v3666
        %v3669 = vunpack.c.l.s4 1966171168
        %v3670 = vunpack.c.0.s8 %v3669
        %v3671 = vlaneseq
        %v3672 = vshrl.u32 %v3671, 7
        %v3673 = vsub.s32 %v3670, %v3672
        %v3674 = vrot.slane %v3624, %v3673
        %v3676 = vunpack.c.l.s4 1966171168
        %v3677 = vunpack.c.0.s8 %v3676
        %v3678 = vlaneseq
        %v3679 = vshrl.u32 %v3678, 7
        %v3680 = vsub.s32 %v3677, %v3679
        %v3681 = vrot.slane %v3625, %v3680
        %v3682 = vcombine.low %v3632, %v3646
        %v3683 = vcombine.high %v3632, %v3646
        %v3684 = vcombine.low %v3639, %v3653
        %v3685 = vcombine.high %v3639, %v3653
        %v3686 = vcombine.low %v3660, %v3674
        %v3687 = vcombine.high %v3660, %v3674
        %v3688 = vcombine.low %v3667, %v3681
        %v3689 = vcombine.high %v3667, %v3681
        %v3691 = vunpack.c.l.s4 1966171168
        %v3692 = vunpack.c.0.s8 %v3691
        %v3693 = vlaneseq
        %v3694 = vshrl.u32 %v3693, 7
        %v3695 = vsub.s32 %v3692, %v3694
        %v3696 = vrot.slane %v3682, %v3695
        %v3698 = vunpack.c.l.s4 1966171168
        %v3699 = vunpack.c.0.s8 %v3698
        %v3700 = vlaneseq
        %v3701 = vshrl.u32 %v3700, 7
        %v3702 = vsub.s32 %v3699, %v3701
        %v3703 = vrot.slane %v3684, %v3702
        %v3705 = vunpack.c.l.s4 1966171168
        %v3706 = vunpack.c.0.s8 %v3705
        %v3707 = vlaneseq
        %v3708 = vshrl.u32 %v3707, 7
        %v3709 = vsub.s32 %v3706, %v3708
        %v3710 = vrot.slane %v3683, %v3709
        %v3712 = vunpack.c.l.s4 1966171168
        %v3713 = vunpack.c.0.s8 %v3712
        %v3714 = vlaneseq
        %v3715 = vshrl.u32 %v3714, 7
        %v3716 = vsub.s32 %v3713, %v3715
        %v3717 = vrot.slane %v3685, %v3716
        %v3719 = vunpack.c.l.s4 1966171168
        %v3720 = vunpack.c.0.s8 %v3719
        %v3721 = vlaneseq
        %v3722 = vshrl.u32 %v3721, 7
        %v3723 = vsub.s32 %v3720, %v3722
        %v3724 = vrot.slane %v3686, %v3723
        %v3726 = vunpack.c.l.s4 1966171168
        %v3727 = vunpack.c.0.s8 %v3726
        %v3728 = vlaneseq
        %v3729 = vshrl.u32 %v3728, 7
        %v3730 = vsub.s32 %v3727, %v3729
        %v3731 = vrot.slane %v3688, %v3730
        %v3733 = vunpack.c.l.s4 1966171168
        %v3734 = vunpack.c.0.s8 %v3733
        %v3735 = vlaneseq
        %v3736 = vshrl.u32 %v3735, 7
        %v3737 = vsub.s32 %v3734, %v3736
        %v3738 = vrot.slane %v3687, %v3737
        %v3740 = vunpack.c.l.s4 1966171168
        %v3741 = vunpack.c.0.s8 %v3740
        %v3742 = vlaneseq
        %v3743 = vshrl.u32 %v3742, 7
        %v3744 = vsub.s32 %v3741, %v3743
        %v3745 = vrot.slane %v3689, %v3744
        %v3746 = vcombine.low %v3696, %v3724
        %v3747 = vcombine.high %v3696, %v3724
        %v3748 = vcombine.low %v3703, %v3731
        %v3749 = vcombine.high %v3703, %v3731
        %v3750 = vcombine.low %v3710, %v3738
        %v3751 = vcombine.high %v3710, %v3738
        %v3752 = vcombine.low %v3717, %v3745
        %v3753 = vcombine.high %v3717, %v3745
        %v3754 = vcombine.low %v1420, %v1422
        %v3755 = vcombine.low %v1477, %v1621
        %v3756 = vcombine.low %v1635, %v1643
        %v3757 = vcombine.low %v1645, %v1628
        %v3759 = vunpack.c.l.s4 1966171168
        %v3760 = vunpack.c.0.s8 %v3759
        %v3761 = vlaneseq
        %v3762 = vshrl.u32 %v3761, 7
        %v3763 = vsub.s32 %v3760, %v3762
        %v3764 = vrot.slane %v3754, %v3763
        %v3766 = vunpack.c.l.s4 1966171168
        %v3767 = vunpack.c.0.s8 %v3766
        %v3768 = vlaneseq
        %v3769 = vshrl.u32 %v3768, 7
        %v3770 = vsub.s32 %v3767, %v3769
        %v3771 = vrot.slane %v3755, %v3770
        %v3773 = vunpack.c.l.s4 1966171168
        %v3774 = vunpack.c.0.s8 %v3773
        %v3775 = vlaneseq
        %v3776 = vshrl.u32 %v3775, 7
        %v3777 = vsub.s32 %v3774, %v3776
        %v3778 = vrot.slane %v3756, %v3777
        %v3780 = vunpack.c.l.s4 1966171168
        %v3781 = vunpack.c.0.s8 %v3780
        %v3782 = vlaneseq
        %v3783 = vshrl.u32 %v3782, 7
        %v3784 = vsub.s32 %v3781, %v3783
        %v3785 = vrot.slane %v3757, %v3784
        %v3786 = vcombine.low %v3764, %v3771
        %v3787 = vcombine.low %v3778, %v3785
        %v3789 = vunpack.c.l.s4 1966171168
        %v3790 = vunpack.c.0.s8 %v3789
        %v3791 = vlaneseq
        %v3792 = vshrl.u32 %v3791, 7
        %v3793 = vsub.s32 %v3790, %v3792
        %v3794 = vrot.slane %v3786, %v3793
        %v3796 = vunpack.c.l.s4 1966171168
        %v3797 = vunpack.c.0.s8 %v3796
        %v3798 = vlaneseq
        %v3799 = vshrl.u32 %v3798, 7
        %v3800 = vsub.s32 %v3797, %v3799
        %v3801 = vrot.slane %v3787, %v3800
        %v3802 = vcombine.low %v3794, %v3801
        %v3803 = vcombine.low %v1596, %v1593
        %v3804 = vcombine.high %v1596, %v1593
        %v3805 = vcombine.low %v1597, %v1687
        %v3806 = vcombine.high %v1597, %v1687
        %v3807 = vcombine.low %v1814, %v1818
        %v3808 = vcombine.high %v1814, %v1818
        %v3809 = vcombine.low %v1815, %v1819
        %v3810 = vcombine.high %v1815, %v1819
        %v3812 = vunpack.c.l.s4 1966171168
        %v3813 = vunpack.c.0.s8 %v3812
        %v3814 = vlaneseq
        %v3815 = vshrl.u32 %v3814, 7
        %v3816 = vsub.s32 %v3813, %v3815
        %v3817 = vrot.slane %v3803, %v3816
        %v3819 = vunpack.c.l.s4 1966171168
        %v3820 = vunpack.c.0.s8 %v3819
        %v3821 = vlaneseq
        %v3822 = vshrl.u32 %v3821, 7
        %v3823 = vsub.s32 %v3820, %v3822
        %v3824 = vrot.slane %v3804, %v3823
        %v3826 = vunpack.c.l.s4 1966171168
        %v3827 = vunpack.c.0.s8 %v3826
        %v3828 = vlaneseq
        %v3829 = vshrl.u32 %v3828, 7
        %v3830 = vsub.s32 %v3827, %v3829
        %v3831 = vrot.slane %v3805, %v3830
        %v3833 = vunpack.c.l.s4 1966171168
        %v3834 = vunpack.c.0.s8 %v3833
        %v3835 = vlaneseq
        %v3836 = vshrl.u32 %v3835, 7
        %v3837 = vsub.s32 %v3834, %v3836
        %v3838 = vrot.slane %v3806, %v3837
        %v3840 = vunpack.c.l.s4 1966171168
        %v3841 = vunpack.c.0.s8 %v3840
        %v3842 = vlaneseq
        %v3843 = vshrl.u32 %v3842, 7
        %v3844 = vsub.s32 %v3841, %v3843
        %v3845 = vrot.slane %v3807, %v3844
        %v3847 = vunpack.c.l.s4 1966171168
        %v3848 = vunpack.c.0.s8 %v3847
        %v3849 = vlaneseq
        %v3850 = vshrl.u32 %v3849, 7
        %v3851 = vsub.s32 %v3848, %v3850
        %v3852 = vrot.slane %v3808, %v3851
        %v3854 = vunpack.c.l.s4 1966171168
        %v3855 = vunpack.c.0.s8 %v3854
        %v3856 = vlaneseq
        %v3857 = vshrl.u32 %v3856, 7
        %v3858 = vsub.s32 %v3855, %v3857
        %v3859 = vrot.slane %v3809, %v3858
        %v3861 = vunpack.c.l.s4 1966171168
        %v3862 = vunpack.c.0.s8 %v3861
        %v3863 = vlaneseq
        %v3864 = vshrl.u32 %v3863, 7
        %v3865 = vsub.s32 %v3862, %v3864
        %v3866 = vrot.slane %v3810, %v3865
        %v3867 = vcombine.low %v3817, %v3831
        %v3868 = vcombine.high %v3817, %v3831
        %v3869 = vcombine.low %v3824, %v3838
        %v3870 = vcombine.high %v3824, %v3838
        %v3871 = vcombine.low %v3845, %v3859
        %v3872 = vcombine.high %v3845, %v3859
        %v3873 = vcombine.low %v3852, %v3866
        %v3874 = vcombine.high %v3852, %v3866
        %v3876 = vunpack.c.l.s4 1966171168
        %v3877 = vunpack.c.0.s8 %v3876
        %v3878 = vlaneseq
        %v3879 = vshrl.u32 %v3878, 7
        %v3880 = vsub.s32 %v3877, %v3879
        %v3881 = vrot.slane %v3867, %v3880
        %v3883 = vunpack.c.l.s4 1966171168
        %v3884 = vunpack.c.0.s8 %v3883
        %v3885 = vlaneseq
        %v3886 = vshrl.u32 %v3885, 7
        %v3887 = vsub.s32 %v3884, %v3886
        %v3888 = vrot.slane %v3869, %v3887
        %v3890 = vunpack.c.l.s4 1966171168
        %v3891 = vunpack.c.0.s8 %v3890
        %v3892 = vlaneseq
        %v3893 = vshrl.u32 %v3892, 7
        %v3894 = vsub.s32 %v3891, %v3893
        %v3895 = vrot.slane %v3868, %v3894
        %v3897 = vunpack.c.l.s4 1966171168
        %v3898 = vunpack.c.0.s8 %v3897
        %v3899 = vlaneseq
        %v3900 = vshrl.u32 %v3899, 7
        %v3901 = vsub.s32 %v3898, %v3900
        %v3902 = vrot.slane %v3870, %v3901
        %v3904 = vunpack.c.l.s4 1966171168
        %v3905 = vunpack.c.0.s8 %v3904
        %v3906 = vlaneseq
        %v3907 = vshrl.u32 %v3906, 7
        %v3908 = vsub.s32 %v3905, %v3907
        %v3909 = vrot.slane %v3871, %v3908
        %v3911 = vunpack.c.l.s4 1966171168
        %v3912 = vunpack.c.0.s8 %v3911
        %v3913 = vlaneseq
        %v3914 = vshrl.u32 %v3913, 7
        %v3915 = vsub.s32 %v3912, %v3914
        %v3916 = vrot.slane %v3873, %v3915
        %v3918 = vunpack.c.l.s4 1966171168
        %v3919 = vunpack.c.0.s8 %v3918
        %v3920 = vlaneseq
        %v3921 = vshrl.u32 %v3920, 7
        %v3922 = vsub.s32 %v3919, %v3921
        %v3923 = vrot.slane %v3872, %v3922
        %v3925 = vunpack.c.l.s4 1966171168
        %v3926 = vunpack.c.0.s8 %v3925
        %v3927 = vlaneseq
        %v3928 = vshrl.u32 %v3927, 7
        %v3929 = vsub.s32 %v3926, %v3928
        %v3930 = vrot.slane %v3874, %v3929
        %v3931 = vcombine.low %v3881, %v3909
        %v3932 = vcombine.high %v3881, %v3909
        %v3933 = vcombine.low %v3888, %v3916
        %v3934 = vcombine.high %v3888, %v3916
        %v3935 = vcombine.low %v3895, %v3923
        %v3936 = vcombine.high %v3895, %v3923
        %v3937 = vcombine.low %v3902, %v3930
        %v3938 = vcombine.high %v3902, %v3930
        %v3939 = vcombine.low %v1642, %v1644
        %v3940 = vcombine.low %v1646, %v1701
        %v3941 = vcombine.low %v1845, %v1859
        %v3942 = vcombine.low %v1867, %v1869
        %v3944 = vunpack.c.l.s4 1966171168
        %v3945 = vunpack.c.0.s8 %v3944
        %v3946 = vlaneseq
        %v3947 = vshrl.u32 %v3946, 7
        %v3948 = vsub.s32 %v3945, %v3947
        %v3949 = vrot.slane %v3939, %v3948
        %v3951 = vunpack.c.l.s4 1966171168
        %v3952 = vunpack.c.0.s8 %v3951
        %v3953 = vlaneseq
        %v3954 = vshrl.u32 %v3953, 7
        %v3955 = vsub.s32 %v3952, %v3954
        %v3956 = vrot.slane %v3940, %v3955
        %v3958 = vunpack.c.l.s4 1966171168
        %v3959 = vunpack.c.0.s8 %v3958
        %v3960 = vlaneseq
        %v3961 = vshrl.u32 %v3960, 7
        %v3962 = vsub.s32 %v3959, %v3961
        %v3963 = vrot.slane %v3941, %v3962
        %v3965 = vunpack.c.l.s4 1966171168
        %v3966 = vunpack.c.0.s8 %v3965
        %v3967 = vlaneseq
        %v3968 = vshrl.u32 %v3967, 7
        %v3969 = vsub.s32 %v3966, %v3968
        %v3970 = vrot.slane %v3942, %v3969
        %v3971 = vcombine.low %v3949, %v3956
        %v3972 = vcombine.low %v3963, %v3970
        %v3974 = vunpack.c.l.s4 1966171168
        %v3975 = vunpack.c.0.s8 %v3974
        %v3976 = vlaneseq
        %v3977 = vshrl.u32 %v3976, 7
        %v3978 = vsub.s32 %v3975, %v3977
        %v3979 = vrot.slane %v3971, %v3978
        %v3981 = vunpack.c.l.s4 1966171168
        %v3982 = vunpack.c.0.s8 %v3981
        %v3983 = vlaneseq
        %v3984 = vshrl.u32 %v3983, 7
        %v3985 = vsub.s32 %v3982, %v3984
        %v3986 = vrot.slane %v3972, %v3985
        %v3987 = vcombine.low %v3979, %v3986
        %v3988 = vcombine.low %v1816, %v1820
        %v3989 = vcombine.high %v1816, %v1820
        %v3990 = vcombine.low %v1817, %v1821
        %v3991 = vcombine.high %v1817, %v1821
        %v3992 = vcombine.low %v1911, %v2038
        %v3993 = vcombine.high %v1911, %v2038
        %v3994 = vcombine.low %v2042, %v2039
        %v3995 = vcombine.high %v2042, %v2039
        %v3997 = vunpack.c.l.s4 1966171168
        %v3998 = vunpack.c.0.s8 %v3997
        %v3999 = vlaneseq
        %v4000 = vshrl.u32 %v3999, 7
        %v4001 = vsub.s32 %v3998, %v4000
        %v4002 = vrot.slane %v3988, %v4001
        %v4004 = vunpack.c.l.s4 1966171168
        %v4005 = vunpack.c.0.s8 %v4004
        %v4006 = vlaneseq
        %v4007 = vshrl.u32 %v4006, 7
        %v4008 = vsub.s32 %v4005, %v4007
        %v4009 = vrot.slane %v3989, %v4008
        %v4011 = vunpack.c.l.s4 1966171168
        %v4012 = vunpack.c.0.s8 %v4011
        %v4013 = vlaneseq
        %v4014 = vshrl.u32 %v4013, 7
        %v4015 = vsub.s32 %v4012, %v4014
        %v4016 = vrot.slane %v3990, %v4015
        %v4018 = vunpack.c.l.s4 1966171168
        %v4019 = vunpack.c.0.s8 %v4018
        %v4020 = vlaneseq
        %v4021 = vshrl.u32 %v4020, 7
        %v4022 = vsub.s32 %v4019, %v4021
        %v4023 = vrot.slane %v3991, %v4022
        %v4025 = vunpack.c.l.s4 1966171168
        %v4026 = vunpack.c.0.s8 %v4025
        %v4027 = vlaneseq
        %v4028 = vshrl.u32 %v4027, 7
        %v4029 = vsub.s32 %v4026, %v4028
        %v4030 = vrot.slane %v3992, %v4029
        %v4032 = vunpack.c.l.s4 1966171168
        %v4033 = vunpack.c.0.s8 %v4032
        %v4034 = vlaneseq
        %v4035 = vshrl.u32 %v4034, 7
        %v4036 = vsub.s32 %v4033, %v4035
        %v4037 = vrot.slane %v3993, %v4036
        %v4039 = vunpack.c.l.s4 1966171168
        %v4040 = vunpack.c.0.s8 %v4039
        %v4041 = vlaneseq
        %v4042 = vshrl.u32 %v4041, 7
        %v4043 = vsub.s32 %v4040, %v4042
        %v4044 = vrot.slane %v3994, %v4043
        %v4046 = vunpack.c.l.s4 1966171168
        %v4047 = vunpack.c.0.s8 %v4046
        %v4048 = vlaneseq
        %v4049 = vshrl.u32 %v4048, 7
        %v4050 = vsub.s32 %v4047, %v4049
        %v4051 = vrot.slane %v3995, %v4050
        %v4052 = vcombine.low %v4002, %v4016
        %v4053 = vcombine.high %v4002, %v4016
        %v4054 = vcombine.low %v4009, %v4023
        %v4055 = vcombine.high %v4009, %v4023
        %v4056 = vcombine.low %v4030, %v4044
        %v4057 = vcombine.high %v4030, %v4044
        %v4058 = vcombine.low %v4037, %v4051
        %v4059 = vcombine.high %v4037, %v4051
        %v4061 = vunpack.c.l.s4 1966171168
        %v4062 = vunpack.c.0.s8 %v4061
        %v4063 = vlaneseq
        %v4064 = vshrl.u32 %v4063, 7
        %v4065 = vsub.s32 %v4062, %v4064
        %v4066 = vrot.slane %v4052, %v4065
        %v4068 = vunpack.c.l.s4 1966171168
        %v4069 = vunpack.c.0.s8 %v4068
        %v4070 = vlaneseq
        %v4071 = vshrl.u32 %v4070, 7
        %v4072 = vsub.s32 %v4069, %v4071
        %v4073 = vrot.slane %v4054, %v4072
        %v4075 = vunpack.c.l.s4 1966171168
        %v4076 = vunpack.c.0.s8 %v4075
        %v4077 = vlaneseq
        %v4078 = vshrl.u32 %v4077, 7
        %v4079 = vsub.s32 %v4076, %v4078
        %v4080 = vrot.slane %v4053, %v4079
        %v4082 = vunpack.c.l.s4 1966171168
        %v4083 = vunpack.c.0.s8 %v4082
        %v4084 = vlaneseq
        %v4085 = vshrl.u32 %v4084, 7
        %v4086 = vsub.s32 %v4083, %v4085
        %v4087 = vrot.slane %v4055, %v4086
        %v4089 = vunpack.c.l.s4 1966171168
        %v4090 = vunpack.c.0.s8 %v4089
        %v4091 = vlaneseq
        %v4092 = vshrl.u32 %v4091, 7
        %v4093 = vsub.s32 %v4090, %v4092
        %v4094 = vrot.slane %v4056, %v4093
        %v4096 = vunpack.c.l.s4 1966171168
        %v4097 = vunpack.c.0.s8 %v4096
        %v4098 = vlaneseq
        %v4099 = vshrl.u32 %v4098, 7
        %v4100 = vsub.s32 %v4097, %v4099
        %v4101 = vrot.slane %v4058, %v4100
        %v4103 = vunpack.c.l.s4 1966171168
        %v4104 = vunpack.c.0.s8 %v4103
        %v4105 = vlaneseq
        %v4106 = vshrl.u32 %v4105, 7
        %v4107 = vsub.s32 %v4104, %v4106
        %v4108 = vrot.slane %v4057, %v4107
        %v4110 = vunpack.c.l.s4 1966171168
        %v4111 = vunpack.c.0.s8 %v4110
        %v4112 = vlaneseq
        %v4113 = vshrl.u32 %v4112, 7
        %v4114 = vsub.s32 %v4111, %v4113
        %v4115 = vrot.slane %v4059, %v4114
        %v4116 = vcombine.low %v4066, %v4094
        %v4117 = vcombine.high %v4066, %v4094
        %v4118 = vcombine.low %v4073, %v4101
        %v4119 = vcombine.high %v4073, %v4101
        %v4120 = vcombine.low %v4080, %v4108
        %v4121 = vcombine.high %v4080, %v4108
        %v4122 = vcombine.low %v4087, %v4115
        %v4123 = vcombine.high %v4087, %v4115
        %v4124 = vcombine.low %v1852, %v1866
        %v4125 = vcombine.low %v1868, %v1870
        %v4126 = vcombine.low %v1925, %v2069
        %v4127 = vcombine.low %v2083, %v2091
        %v4129 = vunpack.c.l.s4 1966171168
        %v4130 = vunpack.c.0.s8 %v4129
        %v4131 = vlaneseq
        %v4132 = vshrl.u32 %v4131, 7
        %v4133 = vsub.s32 %v4130, %v4132
        %v4134 = vrot.slane %v4124, %v4133
        %v4136 = vunpack.c.l.s4 1966171168
        %v4137 = vunpack.c.0.s8 %v4136
        %v4138 = vlaneseq
        %v4139 = vshrl.u32 %v4138, 7
        %v4140 = vsub.s32 %v4137, %v4139
        %v4141 = vrot.slane %v4125, %v4140
        %v4143 = vunpack.c.l.s4 1966171168
        %v4144 = vunpack.c.0.s8 %v4143
        %v4145 = vlaneseq
        %v4146 = vshrl.u32 %v4145, 7
        %v4147 = vsub.s32 %v4144, %v4146
        %v4148 = vrot.slane %v4126, %v4147
        %v4150 = vunpack.c.l.s4 1966171168
        %v4151 = vunpack.c.0.s8 %v4150
        %v4152 = vlaneseq
        %v4153 = vshrl.u32 %v4152, 7
        %v4154 = vsub.s32 %v4151, %v4153
        %v4155 = vrot.slane %v4127, %v4154
        %v4156 = vcombine.low %v4134, %v4141
        %v4157 = vcombine.low %v4148, %v4155
        %v4159 = vunpack.c.l.s4 1966171168
        %v4160 = vunpack.c.0.s8 %v4159
        %v4161 = vlaneseq
        %v4162 = vshrl.u32 %v4161, 7
        %v4163 = vsub.s32 %v4160, %v4162
        %v4164 = vrot.slane %v4156, %v4163
        %v4166 = vunpack.c.l.s4 1966171168
        %v4167 = vunpack.c.0.s8 %v4166
        %v4168 = vlaneseq
        %v4169 = vshrl.u32 %v4168, 7
        %v4170 = vsub.s32 %v4167, %v4169
        %v4171 = vrot.slane %v4157, %v4170
        %v4172 = vcombine.low %v4164, %v4171
        %v4173 = vcombine.low %v2043, %v2040
        %v4174 = vcombine.high %v2043, %v2040
        %v4175 = vcombine.low %v2044, %v2041
        %v4176 = vcombine.high %v2044, %v2041
        %v4177 = vcombine.low %v2045, %v2135
        %v4178 = vcombine.high %v2045, %v2135
        %v4179 = vcombine.low %v2262, %v2266
        %v4180 = vcombine.high %v2262, %v2266
        %v4182 = vunpack.c.l.s4 1966171168
        %v4183 = vunpack.c.0.s8 %v4182
        %v4184 = vlaneseq
        %v4185 = vshrl.u32 %v4184, 7
        %v4186 = vsub.s32 %v4183, %v4185
        %v4187 = vrot.slane %v4173, %v4186
        %v4189 = vunpack.c.l.s4 1966171168
        %v4190 = vunpack.c.0.s8 %v4189
        %v4191 = vlaneseq
        %v4192 = vshrl.u32 %v4191, 7
        %v4193 = vsub.s32 %v4190, %v4192
        %v4194 = vrot.slane %v4174, %v4193
        %v4196 = vunpack.c.l.s4 1966171168
        %v4197 = vunpack.c.0.s8 %v4196
        %v4198 = vlaneseq
        %v4199 = vshrl.u32 %v4198, 7
        %v4200 = vsub.s32 %v4197, %v4199
        %v4201 = vrot.slane %v4175, %v4200
        %v4203 = vunpack.c.l.s4 1966171168
        %v4204 = vunpack.c.0.s8 %v4203
        %v4205 = vlaneseq
        %v4206 = vshrl.u32 %v4205, 7
        %v4207 = vsub.s32 %v4204, %v4206
        %v4208 = vrot.slane %v4176, %v4207
        %v4210 = vunpack.c.l.s4 1966171168
        %v4211 = vunpack.c.0.s8 %v4210
        %v4212 = vlaneseq
        %v4213 = vshrl.u32 %v4212, 7
        %v4214 = vsub.s32 %v4211, %v4213
        %v4215 = vrot.slane %v4177, %v4214
        %v4217 = vunpack.c.l.s4 1966171168
        %v4218 = vunpack.c.0.s8 %v4217
        %v4219 = vlaneseq
        %v4220 = vshrl.u32 %v4219, 7
        %v4221 = vsub.s32 %v4218, %v4220
        %v4222 = vrot.slane %v4178, %v4221
        %v4224 = vunpack.c.l.s4 1966171168
        %v4225 = vunpack.c.0.s8 %v4224
        %v4226 = vlaneseq
        %v4227 = vshrl.u32 %v4226, 7
        %v4228 = vsub.s32 %v4225, %v4227
        %v4229 = vrot.slane %v4179, %v4228
        %v4231 = vunpack.c.l.s4 1966171168
        %v4232 = vunpack.c.0.s8 %v4231
        %v4233 = vlaneseq
        %v4234 = vshrl.u32 %v4233, 7
        %v4235 = vsub.s32 %v4232, %v4234
        %v4236 = vrot.slane %v4180, %v4235
        %v4237 = vcombine.low %v4187, %v4201
        %v4238 = vcombine.high %v4187, %v4201
        %v4239 = vcombine.low %v4194, %v4208
        %v4240 = vcombine.high %v4194, %v4208
        %v4241 = vcombine.low %v4215, %v4229
        %v4242 = vcombine.high %v4215, %v4229
        %v4243 = vcombine.low %v4222, %v4236
        %v4244 = vcombine.high %v4222, %v4236
        %v4246 = vunpack.c.l.s4 1966171168
        %v4247 = vunpack.c.0.s8 %v4246
        %v4248 = vlaneseq
        %v4249 = vshrl.u32 %v4248, 7
        %v4250 = vsub.s32 %v4247, %v4249
        %v4251 = vrot.slane %v4237, %v4250
        %v4253 = vunpack.c.l.s4 1966171168
        %v4254 = vunpack.c.0.s8 %v4253
        %v4255 = vlaneseq
        %v4256 = vshrl.u32 %v4255, 7
        %v4257 = vsub.s32 %v4254, %v4256
        %v4258 = vrot.slane %v4239, %v4257
        %v4260 = vunpack.c.l.s4 1966171168
        %v4261 = vunpack.c.0.s8 %v4260
        %v4262 = vlaneseq
        %v4263 = vshrl.u32 %v4262, 7
        %v4264 = vsub.s32 %v4261, %v4263
        %v4265 = vrot.slane %v4238, %v4264
        %v4267 = vunpack.c.l.s4 1966171168
        %v4268 = vunpack.c.0.s8 %v4267
        %v4269 = vlaneseq
        %v4270 = vshrl.u32 %v4269, 7
        %v4271 = vsub.s32 %v4268, %v4270
        %v4272 = vrot.slane %v4240, %v4271
        %v4274 = vunpack.c.l.s4 1966171168
        %v4275 = vunpack.c.0.s8 %v4274
        %v4276 = vlaneseq
        %v4277 = vshrl.u32 %v4276, 7
        %v4278 = vsub.s32 %v4275, %v4277
        %v4279 = vrot.slane %v4241, %v4278
        %v4281 = vunpack.c.l.s4 1966171168
        %v4282 = vunpack.c.0.s8 %v4281
        %v4283 = vlaneseq
        %v4284 = vshrl.u32 %v4283, 7
        %v4285 = vsub.s32 %v4282, %v4284
        %v4286 = vrot.slane %v4243, %v4285
        %v4288 = vunpack.c.l.s4 1966171168
        %v4289 = vunpack.c.0.s8 %v4288
        %v4290 = vlaneseq
        %v4291 = vshrl.u32 %v4290, 7
        %v4292 = vsub.s32 %v4289, %v4291
        %v4293 = vrot.slane %v4242, %v4292
        %v4295 = vunpack.c.l.s4 1966171168
        %v4296 = vunpack.c.0.s8 %v4295
        %v4297 = vlaneseq
        %v4298 = vshrl.u32 %v4297, 7
        %v4299 = vsub.s32 %v4296, %v4298
        %v4300 = vrot.slane %v4244, %v4299
        %v4301 = vcombine.low %v4251, %v4279
        %v4302 = vcombine.high %v4251, %v4279
        %v4303 = vcombine.low %v4258, %v4286
        %v4304 = vcombine.high %v4258, %v4286
        %v4305 = vcombine.low %v4265, %v4293
        %v4306 = vcombine.high %v4265, %v4293
        %v4307 = vcombine.low %v4272, %v4300
        %v4308 = vcombine.high %v4272, %v4300
        %v4309 = vcombine.low %v2093, %v2076
        %v4310 = vcombine.low %v2090, %v2092
        %v4311 = vcombine.low %v2094, %v2149
        %v4312 = vcombine.low %v2293, %v2307
        %v4314 = vunpack.c.l.s4 1966171168
        %v4315 = vunpack.c.0.s8 %v4314
        %v4316 = vlaneseq
        %v4317 = vshrl.u32 %v4316, 7
        %v4318 = vsub.s32 %v4315, %v4317
        %v4319 = vrot.slane %v4309, %v4318
        %v4321 = vunpack.c.l.s4 1966171168
        %v4322 = vunpack.c.0.s8 %v4321
        %v4323 = vlaneseq
        %v4324 = vshrl.u32 %v4323, 7
        %v4325 = vsub.s32 %v4322, %v4324
        %v4326 = vrot.slane %v4310, %v4325
        %v4328 = vunpack.c.l.s4 1966171168
        %v4329 = vunpack.c.0.s8 %v4328
        %v4330 = vlaneseq
        %v4331 = vshrl.u32 %v4330, 7
        %v4332 = vsub.s32 %v4329, %v4331
        %v4333 = vrot.slane %v4311, %v4332
        %v4335 = vunpack.c.l.s4 1966171168
        %v4336 = vunpack.c.0.s8 %v4335
        %v4337 = vlaneseq
        %v4338 = vshrl.u32 %v4337, 7
        %v4339 = vsub.s32 %v4336, %v4338
        %v4340 = vrot.slane %v4312, %v4339
        %v4341 = vcombine.low %v4319, %v4326
        %v4342 = vcombine.low %v4333, %v4340
        %v4344 = vunpack.c.l.s4 1966171168
        %v4345 = vunpack.c.0.s8 %v4344
        %v4346 = vlaneseq
        %v4347 = vshrl.u32 %v4346, 7
        %v4348 = vsub.s32 %v4345, %v4347
        %v4349 = vrot.slane %v4341, %v4348
        %v4351 = vunpack.c.l.s4 1966171168
        %v4352 = vunpack.c.0.s8 %v4351
        %v4353 = vlaneseq
        %v4354 = vshrl.u32 %v4353, 7
        %v4355 = vsub.s32 %v4352, %v4354
        %v4356 = vrot.slane %v4342, %v4355
        %v4357 = vcombine.low %v4349, %v4356
        %v4358 = vcombine.low %v2263, %v2267
        %v4359 = vcombine.high %v2263, %v2267
        %v4360 = vcombine.low %v2264, %v2268
        %v4361 = vcombine.high %v2264, %v2268
        %v4362 = vcombine.low %v2265, %v2269
        %v4363 = vcombine.high %v2265, %v2269
        %v4364 = vcombine.low %v2359, %v2486
        %v4365 = vcombine.high %v2359, %v2486
        %v4367 = vunpack.c.l.s4 1966171168
        %v4368 = vunpack.c.0.s8 %v4367
        %v4369 = vlaneseq
        %v4370 = vshrl.u32 %v4369, 7
        %v4371 = vsub.s32 %v4368, %v4370
        %v4372 = vrot.slane %v4358, %v4371
        %v4374 = vunpack.c.l.s4 1966171168
        %v4375 = vunpack.c.0.s8 %v4374
        %v4376 = vlaneseq
        %v4377 = vshrl.u32 %v4376, 7
        %v4378 = vsub.s32 %v4375, %v4377
        %v4379 = vrot.slane %v4359, %v4378
        %v4381 = vunpack.c.l.s4 1966171168
        %v4382 = vunpack.c.0.s8 %v4381
        %v4383 = vlaneseq
        %v4384 = vshrl.u32 %v4383, 7
        %v4385 = vsub.s32 %v4382, %v4384
        %v4386 = vrot.slane %v4360, %v4385
        %v4388 = vunpack.c.l.s4 1966171168
        %v4389 = vunpack.c.0.s8 %v4388
        %v4390 = vlaneseq
        %v4391 = vshrl.u32 %v4390, 7
        %v4392 = vsub.s32 %v4389, %v4391
        %v4393 = vrot.slane %v4361, %v4392
        %v4395 = vunpack.c.l.s4 1966171168
        %v4396 = vunpack.c.0.s8 %v4395
        %v4397 = vlaneseq
        %v4398 = vshrl.u32 %v4397, 7
        %v4399 = vsub.s32 %v4396, %v4398
        %v4400 = vrot.slane %v4362, %v4399
        %v4402 = vunpack.c.l.s4 1966171168
        %v4403 = vunpack.c.0.s8 %v4402
        %v4404 = vlaneseq
        %v4405 = vshrl.u32 %v4404, 7
        %v4406 = vsub.s32 %v4403, %v4405
        %v4407 = vrot.slane %v4363, %v4406
        %v4409 = vunpack.c.l.s4 1966171168
        %v4410 = vunpack.c.0.s8 %v4409
        %v4411 = vlaneseq
        %v4412 = vshrl.u32 %v4411, 7
        %v4413 = vsub.s32 %v4410, %v4412
        %v4414 = vrot.slane %v4364, %v4413
        %v4416 = vunpack.c.l.s4 1966171168
        %v4417 = vunpack.c.0.s8 %v4416
        %v4418 = vlaneseq
        %v4419 = vshrl.u32 %v4418, 7
        %v4420 = vsub.s32 %v4417, %v4419
        %v4421 = vrot.slane %v4365, %v4420
        %v4422 = vcombine.low %v4372, %v4386
        %v4423 = vcombine.high %v4372, %v4386
        %v4424 = vcombine.low %v4379, %v4393
        %v4425 = vcombine.high %v4379, %v4393
        %v4426 = vcombine.low %v4400, %v4414
        %v4427 = vcombine.high %v4400, %v4414
        %v4428 = vcombine.low %v4407, %v4421
        %v4429 = vcombine.high %v4407, %v4421
        %v4431 = vunpack.c.l.s4 1966171168
        %v4432 = vunpack.c.0.s8 %v4431
        %v4433 = vlaneseq
        %v4434 = vshrl.u32 %v4433, 7
        %v4435 = vsub.s32 %v4432, %v4434
        %v4436 = vrot.slane %v4422, %v4435
        %v4438 = vunpack.c.l.s4 1966171168
        %v4439 = vunpack.c.0.s8 %v4438
        %v4440 = vlaneseq
        %v4441 = vshrl.u32 %v4440, 7
        %v4442 = vsub.s32 %v4439, %v4441
        %v4443 = vrot.slane %v4424, %v4442
        %v4445 = vunpack.c.l.s4 1966171168
        %v4446 = vunpack.c.0.s8 %v4445
        %v4447 = vlaneseq
        %v4448 = vshrl.u32 %v4447, 7
        %v4449 = vsub.s32 %v4446, %v4448
        %v4450 = vrot.slane %v4423, %v4449
        %v4452 = vunpack.c.l.s4 1966171168
        %v4453 = vunpack.c.0.s8 %v4452
        %v4454 = vlaneseq
        %v4455 = vshrl.u32 %v4454, 7
        %v4456 = vsub.s32 %v4453, %v4455
        %v4457 = vrot.slane %v4425, %v4456
        %v4459 = vunpack.c.l.s4 1966171168
        %v4460 = vunpack.c.0.s8 %v4459
        %v4461 = vlaneseq
        %v4462 = vshrl.u32 %v4461, 7
        %v4463 = vsub.s32 %v4460, %v4462
        %v4464 = vrot.slane %v4426, %v4463
        %v4466 = vunpack.c.l.s4 1966171168
        %v4467 = vunpack.c.0.s8 %v4466
        %v4468 = vlaneseq
        %v4469 = vshrl.u32 %v4468, 7
        %v4470 = vsub.s32 %v4467, %v4469
        %v4471 = vrot.slane %v4428, %v4470
        %v4473 = vunpack.c.l.s4 1966171168
        %v4474 = vunpack.c.0.s8 %v4473
        %v4475 = vlaneseq
        %v4476 = vshrl.u32 %v4475, 7
        %v4477 = vsub.s32 %v4474, %v4476
        %v4478 = vrot.slane %v4427, %v4477
        %v4480 = vunpack.c.l.s4 1966171168
        %v4481 = vunpack.c.0.s8 %v4480
        %v4482 = vlaneseq
        %v4483 = vshrl.u32 %v4482, 7
        %v4484 = vsub.s32 %v4481, %v4483
        %v4485 = vrot.slane %v4429, %v4484
        %v4486 = vcombine.low %v4436, %v4464
        %v4487 = vcombine.high %v4436, %v4464
        %v4488 = vcombine.low %v4443, %v4471
        %v4489 = vcombine.high %v4443, %v4471
        %v4490 = vcombine.low %v4450, %v4478
        %v4491 = vcombine.high %v4450, %v4478
        %v4492 = vcombine.low %v4457, %v4485
        %v4493 = vcombine.high %v4457, %v4485
        %v4494 = vcombine.low %v2315, %v2317
        %v4495 = vcombine.low %v2300, %v2314
        %v4496 = vcombine.low %v2316, %v2318
        %v4497 = vcombine.low %v2373, %v2517
        %v4499 = vunpack.c.l.s4 1966171168
        %v4500 = vunpack.c.0.s8 %v4499
        %v4501 = vlaneseq
        %v4502 = vshrl.u32 %v4501, 7
        %v4503 = vsub.s32 %v4500, %v4502
        %v4504 = vrot.slane %v4494, %v4503
        %v4506 = vunpack.c.l.s4 1966171168
        %v4507 = vunpack.c.0.s8 %v4506
        %v4508 = vlaneseq
        %v4509 = vshrl.u32 %v4508, 7
        %v4510 = vsub.s32 %v4507, %v4509
        %v4511 = vrot.slane %v4495, %v4510
        %v4513 = vunpack.c.l.s4 1966171168
        %v4514 = vunpack.c.0.s8 %v4513
        %v4515 = vlaneseq
        %v4516 = vshrl.u32 %v4515, 7
        %v4517 = vsub.s32 %v4514, %v4516
        %v4518 = vrot.slane %v4496, %v4517
        %v4520 = vunpack.c.l.s4 1966171168
        %v4521 = vunpack.c.0.s8 %v4520
        %v4522 = vlaneseq
        %v4523 = vshrl.u32 %v4522, 7
        %v4524 = vsub.s32 %v4521, %v4523
        %v4525 = vrot.slane %v4497, %v4524
        %v4526 = vcombine.low %v4504, %v4511
        %v4527 = vcombine.low %v4518, %v4525
        %v4529 = vunpack.c.l.s4 1966171168
        %v4530 = vunpack.c.0.s8 %v4529
        %v4531 = vlaneseq
        %v4532 = vshrl.u32 %v4531, 7
        %v4533 = vsub.s32 %v4530, %v4532
        %v4534 = vrot.slane %v4526, %v4533
        %v4536 = vunpack.c.l.s4 1966171168
        %v4537 = vunpack.c.0.s8 %v4536
        %v4538 = vlaneseq
        %v4539 = vshrl.u32 %v4538, 7
        %v4540 = vsub.s32 %v4537, %v4539
        %v4541 = vrot.slane %v4527, %v4540
        %v4542 = vcombine.low %v4534, %v4541
        %v4543 = vcombine.low %v2490, %v2487
        %v4544 = vcombine.high %v2490, %v2487
        %v4545 = vcombine.low %v2491, %v2488
        %v4546 = vcombine.high %v2491, %v2488
        %v4547 = vcombine.low %v2492, %v2489
        %v4548 = vcombine.high %v2492, %v2489
        %v4549 = vcombine.low %v2493, %v2583
        %v4550 = vcombine.high %v2493, %v2583
        %v4552 = vunpack.c.l.s4 1966171168
        %v4553 = vunpack.c.0.s8 %v4552
        %v4554 = vlaneseq
        %v4555 = vshrl.u32 %v4554, 7
        %v4556 = vsub.s32 %v4553, %v4555
        %v4557 = vrot.slane %v4543, %v4556
        %v4559 = vunpack.c.l.s4 1966171168
        %v4560 = vunpack.c.0.s8 %v4559
        %v4561 = vlaneseq
        %v4562 = vshrl.u32 %v4561, 7
        %v4563 = vsub.s32 %v4560, %v4562
        %v4564 = vrot.slane %v4544, %v4563
        %v4566 = vunpack.c.l.s4 1966171168
        %v4567 = vunpack.c.0.s8 %v4566
        %v4568 = vlaneseq
        %v4569 = vshrl.u32 %v4568, 7
        %v4570 = vsub.s32 %v4567, %v4569
        %v4571 = vrot.slane %v4545, %v4570
        %v4573 = vunpack.c.l.s4 1966171168
        %v4574 = vunpack.c.0.s8 %v4573
        %v4575 = vlaneseq
        %v4576 = vshrl.u32 %v4575, 7
        %v4577 = vsub.s32 %v4574, %v4576
        %v4578 = vrot.slane %v4546, %v4577
        %v4580 = vunpack.c.l.s4 1966171168
        %v4581 = vunpack.c.0.s8 %v4580
        %v4582 = vlaneseq
        %v4583 = vshrl.u32 %v4582, 7
        %v4584 = vsub.s32 %v4581, %v4583
        %v4585 = vrot.slane %v4547, %v4584
        %v4587 = vunpack.c.l.s4 1966171168
        %v4588 = vunpack.c.0.s8 %v4587
        %v4589 = vlaneseq
        %v4590 = vshrl.u32 %v4589, 7
        %v4591 = vsub.s32 %v4588, %v4590
        %v4592 = vrot.slane %v4548, %v4591
        %v4594 = vunpack.c.l.s4 1966171168
        %v4595 = vunpack.c.0.s8 %v4594
        %v4596 = vlaneseq
        %v4597 = vshrl.u32 %v4596, 7
        %v4598 = vsub.s32 %v4595, %v4597
        %v4599 = vrot.slane %v4549, %v4598
        %v4601 = vunpack.c.l.s4 1966171168
        %v4602 = vunpack.c.0.s8 %v4601
        %v4603 = vlaneseq
        %v4604 = vshrl.u32 %v4603, 7
        %v4605 = vsub.s32 %v4602, %v4604
        %v4606 = vrot.slane %v4550, %v4605
        %v4607 = vcombine.low %v4557, %v4571
        %v4608 = vcombine.high %v4557, %v4571
        %v4609 = vcombine.low %v4564, %v4578
        %v4610 = vcombine.high %v4564, %v4578
        %v4611 = vcombine.low %v4585, %v4599
        %v4612 = vcombine.high %v4585, %v4599
        %v4613 = vcombine.low %v4592, %v4606
        %v4614 = vcombine.high %v4592, %v4606
        %v4616 = vunpack.c.l.s4 1966171168
        %v4617 = vunpack.c.0.s8 %v4616
        %v4618 = vlaneseq
        %v4619 = vshrl.u32 %v4618, 7
        %v4620 = vsub.s32 %v4617, %v4619
        %v4621 = vrot.slane %v4607, %v4620
        %v4623 = vunpack.c.l.s4 1966171168
        %v4624 = vunpack.c.0.s8 %v4623
        %v4625 = vlaneseq
        %v4626 = vshrl.u32 %v4625, 7
        %v4627 = vsub.s32 %v4624, %v4626
        %v4628 = vrot.slane %v4609, %v4627
        %v4630 = vunpack.c.l.s4 1966171168
        %v4631 = vunpack.c.0.s8 %v4630
        %v4632 = vlaneseq
        %v4633 = vshrl.u32 %v4632, 7
        %v4634 = vsub.s32 %v4631, %v4633
        %v4635 = vrot.slane %v4608, %v4634
        %v4637 = vunpack.c.l.s4 1966171168
        %v4638 = vunpack.c.0.s8 %v4637
        %v4639 = vlaneseq
        %v4640 = vshrl.u32 %v4639, 7
        %v4641 = vsub.s32 %v4638, %v4640
        %v4642 = vrot.slane %v4610, %v4641
        %v4644 = vunpack.c.l.s4 1966171168
        %v4645 = vunpack.c.0.s8 %v4644
        %v4646 = vlaneseq
        %v4647 = vshrl.u32 %v4646, 7
        %v4648 = vsub.s32 %v4645, %v4647
        %v4649 = vrot.slane %v4611, %v4648
        %v4651 = vunpack.c.l.s4 1966171168
        %v4652 = vunpack.c.0.s8 %v4651
        %v4653 = vlaneseq
        %v4654 = vshrl.u32 %v4653, 7
        %v4655 = vsub.s32 %v4652, %v4654
        %v4656 = vrot.slane %v4613, %v4655
        %v4658 = vunpack.c.l.s4 1966171168
        %v4659 = vunpack.c.0.s8 %v4658
        %v4660 = vlaneseq
        %v4661 = vshrl.u32 %v4660, 7
        %v4662 = vsub.s32 %v4659, %v4661
        %v4663 = vrot.slane %v4612, %v4662
        %v4665 = vunpack.c.l.s4 1966171168
        %v4666 = vunpack.c.0.s8 %v4665
        %v4667 = vlaneseq
        %v4668 = vshrl.u32 %v4667, 7
        %v4669 = vsub.s32 %v4666, %v4668
        %v4670 = vrot.slane %v4614, %v4669
        %v4671 = vcombine.low %v4621, %v4649
        %v4672 = vcombine.high %v4621, %v4649
        %v4673 = vcombine.low %v4628, %v4656
        %v4674 = vcombine.high %v4628, %v4656
        %v4675 = vcombine.low %v4635, %v4663
        %v4676 = vcombine.high %v4635, %v4663
        %v4677 = vcombine.low %v4642, %v4670
        %v4678 = vcombine.high %v4642, %v4670
        %v4679 = vcombine.low %v2531, %v2539
        %v4680 = vcombine.low %v2541, %v2524
        %v4681 = vcombine.low %v2538, %v2540
        %v4682 = vcombine.low %v2542, %v2597
        %v4684 = vunpack.c.l.s4 1966171168
        %v4685 = vunpack.c.0.s8 %v4684
        %v4686 = vlaneseq
        %v4687 = vshrl.u32 %v4686, 7
        %v4688 = vsub.s32 %v4685, %v4687
        %v4689 = vrot.slane %v4679, %v4688
        %v4691 = vunpack.c.l.s4 1966171168
        %v4692 = vunpack.c.0.s8 %v4691
        %v4693 = vlaneseq
        %v4694 = vshrl.u32 %v4693, 7
        %v4695 = vsub.s32 %v4692, %v4694
        %v4696 = vrot.slane %v4680, %v4695
        %v4698 = vunpack.c.l.s4 1966171168
        %v4699 = vunpack.c.0.s8 %v4698
        %v4700 = vlaneseq
        %v4701 = vshrl.u32 %v4700, 7
        %v4702 = vsub.s32 %v4699, %v4701
        %v4703 = vrot.slane %v4681, %v4702
        %v4705 = vunpack.c.l.s4 1966171168
        %v4706 = vunpack.c.0.s8 %v4705
        %v4707 = vlaneseq
        %v4708 = vshrl.u32 %v4707, 7
        %v4709 = vsub.s32 %v4706, %v4708
        %v4710 = vrot.slane %v4682, %v4709
        %v4711 = vcombine.low %v4689, %v4696
        %v4712 = vcombine.low %v4703, %v4710
        %v4714 = vunpack.c.l.s4 1966171168
        %v4715 = vunpack.c.0.s8 %v4714
        %v4716 = vlaneseq
        %v4717 = vshrl.u32 %v4716, 7
        %v4718 = vsub.s32 %v4715, %v4717
        %v4719 = vrot.slane %v4711, %v4718
        %v4721 = vunpack.c.l.s4 1966171168
        %v4722 = vunpack.c.0.s8 %v4721
        %v4723 = vlaneseq
        %v4724 = vshrl.u32 %v4723, 7
        %v4725 = vsub.s32 %v4722, %v4724
        %v4726 = vrot.slane %v4712, %v4725
        %v4727 = vcombine.low %v4719, %v4726
        %v4728 = vcombine.low %v2710, %v2714
        %v4729 = vcombine.high %v2710, %v2714
        %v4730 = vcombine.low %v2711, %v2715
        %v4731 = vcombine.high %v2711, %v2715
        %v4732 = vcombine.low %v2712, %v2716
        %v4733 = vcombine.high %v2712, %v2716
        %v4734 = vcombine.low %v2713, %v2717
        %v4735 = vcombine.high %v2713, %v2717
        %v4737 = vunpack.c.l.s4 1966171168
        %v4738 = vunpack.c.0.s8 %v4737
        %v4739 = vlaneseq
        %v4740 = vshrl.u32 %v4739, 7
        %v4741 = vsub.s32 %v4738, %v4740
        %v4742 = vrot.slane %v4728, %v4741
        %v4744 = vunpack.c.l.s4 1966171168
        %v4745 = vunpack.c.0.s8 %v4744
        %v4746 = vlaneseq
        %v4747 = vshrl.u32 %v4746, 7
        %v4748 = vsub.s32 %v4745, %v4747
        %v4749 = vrot.slane %v4729, %v4748
        %v4751 = vunpack.c.l.s4 1966171168
        %v4752 = vunpack.c.0.s8 %v4751
        %v4753 = vlaneseq
        %v4754 = vshrl.u32 %v4753, 7
        %v4755 = vsub.s32 %v4752, %v4754
        %v4756 = vrot.slane %v4730, %v4755
        %v4758 = vunpack.c.l.s4 1966171168
        %v4759 = vunpack.c.0.s8 %v4758
        %v4760 = vlaneseq
        %v4761 = vshrl.u32 %v4760, 7
        %v4762 = vsub.s32 %v4759, %v4761
        %v4763 = vrot.slane %v4731, %v4762
        %v4765 = vunpack.c.l.s4 1966171168
        %v4766 = vunpack.c.0.s8 %v4765
        %v4767 = vlaneseq
        %v4768 = vshrl.u32 %v4767, 7
        %v4769 = vsub.s32 %v4766, %v4768
        %v4770 = vrot.slane %v4732, %v4769
        %v4772 = vunpack.c.l.s4 1966171168
        %v4773 = vunpack.c.0.s8 %v4772
        %v4774 = vlaneseq
        %v4775 = vshrl.u32 %v4774, 7
        %v4776 = vsub.s32 %v4773, %v4775
        %v4777 = vrot.slane %v4733, %v4776
        %v4779 = vunpack.c.l.s4 1966171168
        %v4780 = vunpack.c.0.s8 %v4779
        %v4781 = vlaneseq
        %v4782 = vshrl.u32 %v4781, 7
        %v4783 = vsub.s32 %v4780, %v4782
        %v4784 = vrot.slane %v4734, %v4783
        %v4786 = vunpack.c.l.s4 1966171168
        %v4787 = vunpack.c.0.s8 %v4786
        %v4788 = vlaneseq
        %v4789 = vshrl.u32 %v4788, 7
        %v4790 = vsub.s32 %v4787, %v4789
        %v4791 = vrot.slane %v4735, %v4790
        %v4792 = vcombine.low %v4742, %v4756
        %v4793 = vcombine.high %v4742, %v4756
        %v4794 = vcombine.low %v4749, %v4763
        %v4795 = vcombine.high %v4749, %v4763
        %v4796 = vcombine.low %v4770, %v4784
        %v4797 = vcombine.high %v4770, %v4784
        %v4798 = vcombine.low %v4777, %v4791
        %v4799 = vcombine.high %v4777, %v4791
        %v4801 = vunpack.c.l.s4 1966171168
        %v4802 = vunpack.c.0.s8 %v4801
        %v4803 = vlaneseq
        %v4804 = vshrl.u32 %v4803, 7
        %v4805 = vsub.s32 %v4802, %v4804
        %v4806 = vrot.slane %v4792, %v4805
        %v4808 = vunpack.c.l.s4 1966171168
        %v4809 = vunpack.c.0.s8 %v4808
        %v4810 = vlaneseq
        %v4811 = vshrl.u32 %v4810, 7
        %v4812 = vsub.s32 %v4809, %v4811
        %v4813 = vrot.slane %v4794, %v4812
        %v4815 = vunpack.c.l.s4 1966171168
        %v4816 = vunpack.c.0.s8 %v4815
        %v4817 = vlaneseq
        %v4818 = vshrl.u32 %v4817, 7
        %v4819 = vsub.s32 %v4816, %v4818
        %v4820 = vrot.slane %v4793, %v4819
        %v4822 = vunpack.c.l.s4 1966171168
        %v4823 = vunpack.c.0.s8 %v4822
        %v4824 = vlaneseq
        %v4825 = vshrl.u32 %v4824, 7
        %v4826 = vsub.s32 %v4823, %v4825
        %v4827 = vrot.slane %v4795, %v4826
        %v4829 = vunpack.c.l.s4 1966171168
        %v4830 = vunpack.c.0.s8 %v4829
        %v4831 = vlaneseq
        %v4832 = vshrl.u32 %v4831, 7
        %v4833 = vsub.s32 %v4830, %v4832
        %v4834 = vrot.slane %v4796, %v4833
        %v4836 = vunpack.c.l.s4 1966171168
        %v4837 = vunpack.c.0.s8 %v4836
        %v4838 = vlaneseq
        %v4839 = vshrl.u32 %v4838, 7
        %v4840 = vsub.s32 %v4837, %v4839
        %v4841 = vrot.slane %v4798, %v4840
        %v4843 = vunpack.c.l.s4 1966171168
        %v4844 = vunpack.c.0.s8 %v4843
        %v4845 = vlaneseq
        %v4846 = vshrl.u32 %v4845, 7
        %v4847 = vsub.s32 %v4844, %v4846
        %v4848 = vrot.slane %v4797, %v4847
        %v4850 = vunpack.c.l.s4 1966171168
        %v4851 = vunpack.c.0.s8 %v4850
        %v4852 = vlaneseq
        %v4853 = vshrl.u32 %v4852, 7
        %v4854 = vsub.s32 %v4851, %v4853
        %v4855 = vrot.slane %v4799, %v4854
        %v4856 = vcombine.low %v4806, %v4834
        %v4857 = vcombine.high %v4806, %v4834
        %v4858 = vcombine.low %v4813, %v4841
        %v4859 = vcombine.high %v4813, %v4841
        %v4860 = vcombine.low %v4820, %v4848
        %v4861 = vcombine.high %v4820, %v4848
        %v4862 = vcombine.low %v4827, %v4855
        %v4863 = vcombine.high %v4827, %v4855
        %v4864 = vcombine.low %v2741, %v2755
        %v4865 = vcombine.low %v2763, %v2765
        %v4866 = vcombine.low %v2748, %v2762
        %v4867 = vcombine.low %v2764, %v2766
        %v4869 = vunpack.c.l.s4 1966171168
        %v4870 = vunpack.c.0.s8 %v4869
        %v4871 = vlaneseq
        %v4872 = vshrl.u32 %v4871, 7
        %v4873 = vsub.s32 %v4870, %v4872
        %v4874 = vrot.slane %v4864, %v4873
        %v4876 = vunpack.c.l.s4 1966171168
        %v4877 = vunpack.c.0.s8 %v4876
        %v4878 = vlaneseq
        %v4879 = vshrl.u32 %v4878, 7
        %v4880 = vsub.s32 %v4877, %v4879
        %v4881 = vrot.slane %v4865, %v4880
        %v4883 = vunpack.c.l.s4 1966171168
        %v4884 = vunpack.c.0.s8 %v4883
        %v4885 = vlaneseq
        %v4886 = vshrl.u32 %v4885, 7
        %v4887 = vsub.s32 %v4884, %v4886
        %v4888 = vrot.slane %v4866, %v4887
        %v4890 = vunpack.c.l.s4 1966171168
        %v4891 = vunpack.c.0.s8 %v4890
        %v4892 = vlaneseq
        %v4893 = vshrl.u32 %v4892, 7
        %v4894 = vsub.s32 %v4891, %v4893
        %v4895 = vrot.slane %v4867, %v4894
        %v4896 = vcombine.low %v4874, %v4881
        %v4897 = vcombine.low %v4888, %v4895
        %v4899 = vunpack.c.l.s4 1966171168
        %v4900 = vunpack.c.0.s8 %v4899
        %v4901 = vlaneseq
        %v4902 = vshrl.u32 %v4901, 7
        %v4903 = vsub.s32 %v4900, %v4902
        %v4904 = vrot.slane %v4896, %v4903
        %v4906 = vunpack.c.l.s4 1966171168
        %v4907 = vunpack.c.0.s8 %v4906
        %v4908 = vlaneseq
        %v4909 = vshrl.u32 %v4908, 7
        %v4910 = vsub.s32 %v4907, %v4909
        %v4911 = vrot.slane %v4897, %v4910
        %v4912 = vcombine.low %v4904, %v4911
        %v4913 = vcombine.low %v2807, %v2934
        %v4914 = vcombine.high %v2807, %v2934
        %v4915 = vcombine.low %v2938, %v2935
        %v4916 = vcombine.high %v2938, %v2935
        %v4917 = vcombine.low %v2939, %v2936
        %v4918 = vcombine.high %v2939, %v2936
        %v4919 = vcombine.low %v2940, %v2937
        %v4920 = vcombine.high %v2940, %v2937
        %v4922 = vunpack.c.l.s4 1966171168
        %v4923 = vunpack.c.0.s8 %v4922
        %v4924 = vlaneseq
        %v4925 = vshrl.u32 %v4924, 7
        %v4926 = vsub.s32 %v4923, %v4925
        %v4927 = vrot.slane %v4913, %v4926
        %v4929 = vunpack.c.l.s4 1966171168
        %v4930 = vunpack.c.0.s8 %v4929
        %v4931 = vlaneseq
        %v4932 = vshrl.u32 %v4931, 7
        %v4933 = vsub.s32 %v4930, %v4932
        %v4934 = vrot.slane %v4914, %v4933
        %v4936 = vunpack.c.l.s4 1966171168
        %v4937 = vunpack.c.0.s8 %v4936
        %v4938 = vlaneseq
        %v4939 = vshrl.u32 %v4938, 7
        %v4940 = vsub.s32 %v4937, %v4939
        %v4941 = vrot.slane %v4915, %v4940
        %v4943 = vunpack.c.l.s4 1966171168
        %v4944 = vunpack.c.0.s8 %v4943
        %v4945 = vlaneseq
        %v4946 = vshrl.u32 %v4945, 7
        %v4947 = vsub.s32 %v4944, %v4946
        %v4948 = vrot.slane %v4916, %v4947
        %v4950 = vunpack.c.l.s4 1966171168
        %v4951 = vunpack.c.0.s8 %v4950
        %v4952 = vlaneseq
        %v4953 = vshrl.u32 %v4952, 7
        %v4954 = vsub.s32 %v4951, %v4953
        %v4955 = vrot.slane %v4917, %v4954
        %v4957 = vunpack.c.l.s4 1966171168
        %v4958 = vunpack.c.0.s8 %v4957
        %v4959 = vlaneseq
        %v4960 = vshrl.u32 %v4959, 7
        %v4961 = vsub.s32 %v4958, %v4960
        %v4962 = vrot.slane %v4918, %v4961
        %v4964 = vunpack.c.l.s4 1966171168
        %v4965 = vunpack.c.0.s8 %v4964
        %v4966 = vlaneseq
        %v4967 = vshrl.u32 %v4966, 7
        %v4968 = vsub.s32 %v4965, %v4967
        %v4969 = vrot.slane %v4919, %v4968
        %v4971 = vunpack.c.l.s4 1966171168
        %v4972 = vunpack.c.0.s8 %v4971
        %v4973 = vlaneseq
        %v4974 = vshrl.u32 %v4973, 7
        %v4975 = vsub.s32 %v4972, %v4974
        %v4976 = vrot.slane %v4920, %v4975
        %v4977 = vcombine.low %v4927, %v4941
        %v4978 = vcombine.high %v4927, %v4941
        %v4979 = vcombine.low %v4934, %v4948
        %v4980 = vcombine.high %v4934, %v4948
        %v4981 = vcombine.low %v4955, %v4969
        %v4982 = vcombine.high %v4955, %v4969
        %v4983 = vcombine.low %v4962, %v4976
        %v4984 = vcombine.high %v4962, %v4976
        %v4986 = vunpack.c.l.s4 1966171168
        %v4987 = vunpack.c.0.s8 %v4986
        %v4988 = vlaneseq
        %v4989 = vshrl.u32 %v4988, 7
        %v4990 = vsub.s32 %v4987, %v4989
        %v4991 = vrot.slane %v4977, %v4990
        %v4993 = vunpack.c.l.s4 1966171168
        %v4994 = vunpack.c.0.s8 %v4993
        %v4995 = vlaneseq
        %v4996 = vshrl.u32 %v4995, 7
        %v4997 = vsub.s32 %v4994, %v4996
        %v4998 = vrot.slane %v4979, %v4997
        %v5000 = vunpack.c.l.s4 1966171168
        %v5001 = vunpack.c.0.s8 %v5000
        %v5002 = vlaneseq
        %v5003 = vshrl.u32 %v5002, 7
        %v5004 = vsub.s32 %v5001, %v5003
        %v5005 = vrot.slane %v4978, %v5004
        %v5007 = vunpack.c.l.s4 1966171168
        %v5008 = vunpack.c.0.s8 %v5007
        %v5009 = vlaneseq
        %v5010 = vshrl.u32 %v5009, 7
        %v5011 = vsub.s32 %v5008, %v5010
        %v5012 = vrot.slane %v4980, %v5011
        %v5014 = vunpack.c.l.s4 1966171168
        %v5015 = vunpack.c.0.s8 %v5014
        %v5016 = vlaneseq
        %v5017 = vshrl.u32 %v5016, 7
        %v5018 = vsub.s32 %v5015, %v5017
        %v5019 = vrot.slane %v4981, %v5018
        %v5021 = vunpack.c.l.s4 1966171168
        %v5022 = vunpack.c.0.s8 %v5021
        %v5023 = vlaneseq
        %v5024 = vshrl.u32 %v5023, 7
        %v5025 = vsub.s32 %v5022, %v5024
        %v5026 = vrot.slane %v4983, %v5025
        %v5028 = vunpack.c.l.s4 1966171168
        %v5029 = vunpack.c.0.s8 %v5028
        %v5030 = vlaneseq
        %v5031 = vshrl.u32 %v5030, 7
        %v5032 = vsub.s32 %v5029, %v5031
        %v5033 = vrot.slane %v4982, %v5032
        %v5035 = vunpack.c.l.s4 1966171168
        %v5036 = vunpack.c.0.s8 %v5035
        %v5037 = vlaneseq
        %v5038 = vshrl.u32 %v5037, 7
        %v5039 = vsub.s32 %v5036, %v5038
        %v5040 = vrot.slane %v4984, %v5039
        %v5041 = vcombine.low %v4991, %v5019
        %v5042 = vcombine.high %v4991, %v5019
        %v5043 = vcombine.low %v4998, %v5026
        %v5044 = vcombine.high %v4998, %v5026
        %v5045 = vcombine.low %v5005, %v5033
        %v5046 = vcombine.high %v5005, %v5033
        %v5047 = vcombine.low %v5012, %v5040
        %v5048 = vcombine.high %v5012, %v5040
        %v5049 = vcombine.low %v2821, %v2965
        %v5050 = vcombine.low %v2979, %v2987
        %v5051 = vcombine.low %v2989, %v2972
        %v5052 = vcombine.low %v2986, %v2988
        %v5054 = vunpack.c.l.s4 1966171168
        %v5055 = vunpack.c.0.s8 %v5054
        %v5056 = vlaneseq
        %v5057 = vshrl.u32 %v5056, 7
        %v5058 = vsub.s32 %v5055, %v5057
        %v5059 = vrot.slane %v5049, %v5058
        %v5061 = vunpack.c.l.s4 1966171168
        %v5062 = vunpack.c.0.s8 %v5061
        %v5063 = vlaneseq
        %v5064 = vshrl.u32 %v5063, 7
        %v5065 = vsub.s32 %v5062, %v5064
        %v5066 = vrot.slane %v5050, %v5065
        %v5068 = vunpack.c.l.s4 1966171168
        %v5069 = vunpack.c.0.s8 %v5068
        %v5070 = vlaneseq
        %v5071 = vshrl.u32 %v5070, 7
        %v5072 = vsub.s32 %v5069, %v5071
        %v5073 = vrot.slane %v5051, %v5072
        %v5075 = vunpack.c.l.s4 1966171168
        %v5076 = vunpack.c.0.s8 %v5075
        %v5077 = vlaneseq
        %v5078 = vshrl.u32 %v5077, 7
        %v5079 = vsub.s32 %v5076, %v5078
        %v5080 = vrot.slane %v5052, %v5079
        %v5081 = vcombine.low %v5059, %v5066
        %v5082 = vcombine.low %v5073, %v5080
        %v5084 = vunpack.c.l.s4 1966171168
        %v5085 = vunpack.c.0.s8 %v5084
        %v5086 = vlaneseq
        %v5087 = vshrl.u32 %v5086, 7
        %v5088 = vsub.s32 %v5085, %v5087
        %v5089 = vrot.slane %v5081, %v5088
        %v5091 = vunpack.c.l.s4 1966171168
        %v5092 = vunpack.c.0.s8 %v5091
        %v5093 = vlaneseq
        %v5094 = vshrl.u32 %v5093, 7
        %v5095 = vsub.s32 %v5092, %v5094
        %v5096 = vrot.slane %v5082, %v5095
        %v5097 = vcombine.low %v5089, %v5096
        %v5098 = vcombine.low %v2941, %v3031
        %v5099 = vcombine.high %v2941, %v3031
        %v5101 = vunpack.c.l.s4 1966171168
        %v5102 = vunpack.c.0.s8 %v5101
        %v5103 = vlaneseq
        %v5104 = vshrl.u32 %v5103, 7
        %v5105 = vsub.s32 %v5102, %v5104
        %v5106 = vrot.slane %v5098, %v5105
        %v5108 = vunpack.c.l.s4 1966171168
        %v5109 = vunpack.c.0.s8 %v5108
        %v5110 = vlaneseq
        %v5111 = vshrl.u32 %v5110, 7
        %v5112 = vsub.s32 %v5109, %v5111
        %v5113 = vrot.slane %v5099, %v5112
        %v5114 = vcombine.high %v5106, %v5106
        %v5115 = vcombine.high %v5113, %v5113
        %v5117 = vunpack.c.l.s4 1966171168
        %v5118 = vunpack.c.0.s8 %v5117
        %v5119 = vlaneseq
        %v5120 = vshrl.u32 %v5119, 7
        %v5121 = vsub.s32 %v5118, %v5120
        %v5122 = vrot.slane %v5106, %v5121
        %v5124 = vunpack.c.l.s4 1966171168
        %v5125 = vunpack.c.0.s8 %v5124
        %v5126 = vlaneseq
        %v5127 = vshrl.u32 %v5126, 7
        %v5128 = vsub.s32 %v5125, %v5127
        %v5129 = vrot.slane %v5113, %v5128
        %v5131 = vunpack.c.l.s4 1966171168
        %v5132 = vunpack.c.0.s8 %v5131
        %v5133 = vlaneseq
        %v5134 = vshrl.u32 %v5133, 7
        %v5135 = vsub.s32 %v5132, %v5134
        %v5136 = vrot.slane %v5114, %v5135
        %v5138 = vunpack.c.l.s4 1966171168
        %v5139 = vunpack.c.0.s8 %v5138
        %v5140 = vlaneseq
        %v5141 = vshrl.u32 %v5140, 7
        %v5142 = vsub.s32 %v5139, %v5141
        %v5143 = vrot.slane %v5115, %v5142
        %v5144 = vcombine.high %v5122, %v5122
        %v5145 = vcombine.high %v5129, %v5129
        %v5146 = vcombine.high %v5136, %v5136
        %v5147 = vcombine.high %v5143, %v5143
        %v5148 = vcombine.low %v2990, %v3045
        %v5150 = vunpack.c.l.s4 1966171168
        %v5151 = vunpack.c.0.s8 %v5150
        %v5152 = vlaneseq
        %v5153 = vshrl.u32 %v5152, 7
        %v5154 = vsub.s32 %v5151, %v5153
        %v5155 = vrot.slane %v5148, %v5154
        %v5157 = vunpack.c.l.s4 1966171168
        %v5158 = vunpack.c.0.s8 %v5157
        %v5159 = vlaneseq
        %v5160 = vshrl.u32 %v5159, 7
        %v5161 = vsub.s32 %v5158, %v5160
        %v5162 = vrot.slane %v5155, %v5161
        %v5415 = vunpack.c.l.b16 %v608
        %v5416 = vunpack.c.l.b16 %v609
        %v5417 = vunpack.c.l.b16 %v610
        %v5418 = vunpack.c.l.b16 %v611
        %v5419 = vunpack.c.l.b16 %v612
        %v5420 = vunpack.c.l.b16 %v613
        %v5421 = vunpack.c.l.b16 %v614
        %v5422 = vunpack.c.l.b16 %v615
        %v5423 = vunpack.c.l.b16 %v616
        %v5424 = vunpack.c.l.b16 %v617
        %v5425 = vunpack.c.l.b16 %v618
        %v5426 = vunpack.c.l.b16 %v619
        %v5427 = vunpack.c.l.b16 %v620
        %v5428 = vunpack.c.l.b16 %v621
        %v5429 = vunpack.c.l.b16 %v622
        %v5430 = vunpack.c.l.b16 %v623
        %v5431 = vunpack.c.l.b16 %v624
        %v5432 = vunpack.c.l.b16 %v625
        %v5433 = vunpack.c.l.b16 %v626
        %v5434 = vunpack.c.l.b16 %v627
        %v5435 = vunpack.c.l.b16 %v628
        %v5436 = vunpack.c.l.b16 %v629
        %v5437 = vunpack.c.l.b16 %v630
        %v5438 = vunpack.c.l.b16 %v631
        %v5439 = vunpack.c.l.b16 %v632
        %v5440 = vunpack.c.l.b16 %v633
        %v5441 = vunpack.c.l.b16 %v634
        %v5442 = vunpack.c.l.b16 %v635
        %v5443 = vunpack.c.l.b16 %v636
        %v5444 = vunpack.c.l.b16 %v637
        %v5445 = vunpack.c.l.b16 %v638
        %v5446 = vunpack.c.l.b16 %v639
        %v5447 = vunpack.c.l.b16 %v640
        %v5448 = vunpack.c.l.b16 %v641
        %v5449 = vunpack.c.l.b16 %v642
        %v5450 = vunpack.c.l.b16 %v643
        %v5451 = vunpack.c.l.b16 %v644
        %v5452 = vunpack.c.l.b16 %v645
        %v5453 = vunpack.c.l.b16 %v646
        %v5454 = vunpack.c.l.b16 %v647
        %v5455 = vunpack.c.l.b16 %v648
        %v5456 = vunpack.c.l.b16 %v649
        %v5457 = vunpack.c.l.b16 %v650
        %v5458 = vunpack.c.l.b16 %v651
        %v5459 = vunpack.c.l.b16 %v652
        %v5460 = vunpack.c.l.b16 %v653
        %v5461 = vunpack.c.l.b16 %v654
        %v5462 = vunpack.c.l.b16 %v655
        %v5463 = vunpack.c.l.b16 %v656
        %v5464 = vunpack.c.l.b16 %v657
        %v5465 = vunpack.c.l.b16 %v658
        %v5466 = vunpack.c.l.b16 %v659
        %v5467 = vunpack.c.l.b16 %v660
        %v5468 = vunpack.c.l.b16 %v661
        %v5469 = vunpack.c.l.b16 %v662
        %v5470 = vunpack.c.l.b16 %v663
        %v5471 = vunpack.c.l.b16 %v664
        %v5472 = vunpack.c.l.b16 %v665
        %v5473 = vunpack.c.l.b16 %v666
        %v5474 = vunpack.c.l.b16 %v667
        %v5475 = vunpack.c.l.b16 %v668
        %v5476 = vunpack.c.l.b16 %v669
        %v5477 = vunpack.c.l.b16 %v670
        %v5478 = vunpack.c.l.b16 %v671
        %v5479 = vunpack.c.l.b16 %v672
        %v5480 = vunpack.c.l.b16 %v673
        %v5481 = vunpack.c.l.b16 %v674
        %v5482 = vunpack.c.l.b16 %v675
        %v5483 = vunpack.c.l.b16 %v676
        %v5484 = vunpack.c.l.b16 %v677
        %v5485 = vunpack.c.l.b16 %v678
        %v5486 = vunpack.c.l.b16 %v679
        %v5487 = vunpack.c.l.b16 %v680
        %v5488 = vunpack.c.l.b16 %v681
        %v5489 = vunpack.c.l.b16 %v682
        %v5490 = vunpack.c.l.b16 %v683
        %v5491 = vunpack.c.l.b16 %v684
        %v5492 = vunpack.c.l.b16 %v685
        %v5493 = vunpack.c.l.b16 %v686
        %v5494 = vunpack.c.l.b16 %v687
        %v5495 = vunpack.c.l.b16 %v688
        %v5496 = vunpack.c.l.b16 %v689
        %v5497 = vunpack.c.l.b16 %v690
        %v5498 = vunpack.c.l.b16 %v691
        %v5499 = vunpack.c.l.b16 %v692
        %v5500 = vunpack.c.l.b16 %v693
        %v5501 = vunpack.c.l.b16 %v694
        %v5502 = vunpack.c.l.b16 %v695
        %v5503 = vunpack.c.l.b16 %v696
        %v5504 = vunpack.c.l.b16 %v697
        %v5505 = vunpack.c.l.b16 %v698
        %v5506 = vunpack.c.l.b16 %v699
        %v5507 = vunpack.c.l.b16 %v700
        %v5508 = vunpack.c.l.b16 %v701
        %v5509 = vunpack.c.l.b16 %v702
        %v5510 = vunpack.c.l.b16 %v703
        %v5511 = vunpack.c.l.b16 %v704
        %v5512 = vunpack.c.l.b16 %v705
        %v5513 = vunpack.c.l.b16 %v706
        %v5514 = vunpack.c.l.b16 %v707
        %v5515 = vunpack.c.l.b16 %v708
        %v5516 = vunpack.c.l.b16 %v709
        %v5517 = vunpack.c.l.b16 %v710
        %v5518 = vunpack.c.l.b16 %v711
        %v5519 = vunpack.c.l.b16 %v712
        %v5520 = vunpack.c.l.b16 %v713
        %v5521 = vunpack.c.l.b16 %v714
        %v5522 = vunpack.c.l.b16 %v715
        %v5523 = vunpack.c.l.b16 %v716
        %v5524 = vunpack.c.l.b16 %v717
        %v5525 = vunpack.c.l.b16 %v718
        %v5526 = vunpack.c.l.b16 %v719
        %v5527 = vunpack.c.l.b16 %v720
        %v5528 = vunpack.c.l.b16 %v721
        %v5529 = vunpack.c.l.b16 %v722
        %v5530 = vunpack.c.l.b16 %v723
        %v5531 = vunpack.c.l.b16 %v724
        %v5532 = vunpack.c.l.b16 %v725
        %v5533 = vunpack.c.l.b16 %v726
        %v5534 = vunpack.c.l.b16 %v727
        %v5535 = vunpack.c.l.b16 %v728
        %v5536 = vunpack.c.l.b16 %v729
        %v5537 = vunpack.c.l.b16 %v730
        %v5538 = vunpack.c.l.b16 %v731
        %v5539 = vunpack.c.l.b16 %v732
        %v5540 = vunpack.c.l.b16 %v733
        %v5541 = vunpack.c.l.b16 %v734
        %v5542 = vunpack.c.l.b16 %v735
        %v5543 = vunpack.c.l.b16 %v736
        %v5544 = vunpack.c.l.b16 %v737
        %v5545 = vunpack.c.l.b16 %v738
        %v5546 = vunpack.c.l.b16 %v739
        %v5547 = vunpack.c.l.b16 %v740
        %v5548 = vunpack.c.l.b16 %v741
        %v5549 = vunpack.c.l.b16 %v742
        %v5550 = vunpack.c.l.b16 %v743
        %v5551 = vunpack.c.l.b16 %v744
        %v5552 = vunpack.c.l.b16 %v745
        %v5553 = vunpack.c.l.b16 %v746
        %v5554 = vunpack.c.l.b16 %v747
        %v5555 = vunpack.c.l.b16 %v748
        %v5556 = vunpack.c.l.b16 %v749
        %v5557 = vunpack.c.l.b16 %v750
        %v5558 = vunpack.c.l.b16 %v751
        %v5559 = vpack.c.b16 %v5416, %v5415
        %v5560 = vpack.c.b16 %v5418, %v5417
        %v5561 = vpack.c.b16 %v5420, %v5419
        %v5562 = vpack.c.b16 %v5422, %v5421
        %v5563 = vpack.c.b16 %v5424, %v5423
        %v5564 = vpack.c.b16 %v5426, %v5425
        %v5565 = vpack.c.b16 %v5428, %v5427
        %v5566 = vpack.c.b16 %v5430, %v5429
        %v5567 = vpack.c.b16 %v5432, %v5431
        %v5568 = vpack.c.b16 %v5434, %v5433
        %v5569 = vpack.c.b16 %v5436, %v5435
        %v5570 = vpack.c.b16 %v5438, %v5437
        %v5571 = vpack.c.b16 %v5440, %v5439
        %v5572 = vpack.c.b16 %v5442, %v5441
        %v5573 = vpack.c.b16 %v5444, %v5443
        %v5574 = vpack.c.b16 %v5446, %v5445
        %v5575 = vpack.c.b16 %v5448, %v5447
        %v5576 = vpack.c.b16 %v5450, %v5449
        %v5577 = vpack.c.b16 %v5452, %v5451
        %v5578 = vpack.c.b16 %v5454, %v5453
        %v5579 = vpack.c.b16 %v5456, %v5455
        %v5580 = vpack.c.b16 %v5458, %v5457
        %v5581 = vpack.c.b16 %v5460, %v5459
        %v5582 = vpack.c.b16 %v5462, %v5461
        %v5583 = vpack.c.b16 %v5464, %v5463
        %v5584 = vpack.c.b16 %v5466, %v5465
        %v5585 = vpack.c.b16 %v5468, %v5467
        %v5586 = vpack.c.b16 %v5470, %v5469
        %v5587 = vpack.c.b16 %v5472, %v5471
        %v5588 = vpack.c.b16 %v5474, %v5473
        %v5589 = vpack.c.b16 %v5476, %v5475
        %v5590 = vpack.c.b16 %v5478, %v5477
        %v5591 = vpack.c.b16 %v5480, %v5479
        %v5592 = vpack.c.b16 %v5482, %v5481
        %v5593 = vpack.c.b16 %v5484, %v5483
        %v5594 = vpack.c.b16 %v5486, %v5485
        %v5595 = vpack.c.b16 %v5488, %v5487
        %v5596 = vpack.c.b16 %v5490, %v5489
        %v5597 = vpack.c.b16 %v5492, %v5491
        %v5598 = vpack.c.b16 %v5494, %v5493
        %v5599 = vpack.c.b16 %v5496, %v5495
        %v5600 = vpack.c.b16 %v5498, %v5497
        %v5601 = vpack.c.b16 %v5500, %v5499
        %v5602 = vpack.c.b16 %v5502, %v5501
        %v5603 = vpack.c.b16 %v5504, %v5503
        %v5604 = vpack.c.b16 %v5506, %v5505
        %v5605 = vpack.c.b16 %v5508, %v5507
        %v5606 = vpack.c.b16 %v5510, %v5509
        %v5607 = vpack.c.b16 %v5512, %v5511
        %v5608 = vpack.c.b16 %v5514, %v5513
        %v5609 = vpack.c.b16 %v5516, %v5515
        %v5610 = vpack.c.b16 %v5518, %v5517
        %v5611 = vpack.c.b16 %v5520, %v5519
        %v5612 = vpack.c.b16 %v5522, %v5521
        %v5613 = vpack.c.b16 %v5524, %v5523
        %v5614 = vpack.c.b16 %v5526, %v5525
        %v5615 = vpack.c.b16 %v5528, %v5527
        %v5616 = vpack.c.b16 %v5530, %v5529
        %v5617 = vpack.c.b16 %v5532, %v5531
        %v5618 = vpack.c.b16 %v5534, %v5533
        %v5619 = vpack.c.b16 %v5536, %v5535
        %v5620 = vpack.c.b16 %v5538, %v5537
        %v5621 = vpack.c.b16 %v5540, %v5539
        %v5622 = vpack.c.b16 %v5542, %v5541
        %v5623 = vpack.c.b16 %v5544, %v5543
        %v5624 = vpack.c.b16 %v5546, %v5545
        %v5625 = vpack.c.b16 %v5548, %v5547
        %v5626 = vpack.c.b16 %v5550, %v5549
        %v5627 = vpack.c.b16 %v5552, %v5551
        %v5628 = vpack.c.b16 %v5554, %v5553
        %v5629 = vpack.c.b16 %v5556, %v5555
        %v5630 = vpack.c.b16 %v5558, %v5557
        %v5703 = vcombine.low %v3053, %v3061
        %v5704 = vcombine.low %v3060, %v3062
        %v5706 = vunpack.c.l.s4 1983009808
        %v5707 = vunpack.c.0.s8 %v5706
        %v5708 = vlaneseq
        %v5709 = vshrl.u32 %v5708, 7
        %v5710 = vsub.s32 %v5707, %v5709
        %v5711 = vrot.slane %v5703, %v5710
        %v5713 = vunpack.c.l.s4 1983009808
        %v5714 = vunpack.c.0.s8 %v5713
        %v5715 = vlaneseq
        %v5716 = vshrl.u32 %v5715, 7
        %v5717 = vsub.s32 %v5714, %v5716
        %v5718 = vrot.slane %v5704, %v5717
        %v5719 = vcombine.low %v5711, %v5718
        %v5720 = vcombine.low %v3053, %v3053
        %v5721 = vcombine.low %v3061, %v3060
        %v5723 = vunpack.c.l.s4 1983009808
        %v5724 = vunpack.c.0.s8 %v5723
        %v5725 = vlaneseq
        %v5726 = vshrl.u32 %v5725, 7
        %v5727 = vsub.s32 %v5724, %v5726
        %v5728 = vrot.slane %v5720, %v5727
        %v5730 = vunpack.c.l.s4 1983009808
        %v5731 = vunpack.c.0.s8 %v5730
        %v5732 = vlaneseq
        %v5733 = vshrl.u32 %v5732, 7
        %v5734 = vsub.s32 %v5731, %v5733
        %v5735 = vrot.slane %v5721, %v5734
        %v5736 = vcombine.low %v5728, %v5735
        %v5737 = vcombine.low %v3062, %v3053
        %v5739 = vunpack.c.l.s4 1983009808
        %v5740 = vunpack.c.0.s8 %v5739
        %v5741 = vlaneseq
        %v5742 = vshrl.u32 %v5741, 7
        %v5743 = vsub.s32 %v5740, %v5742
        %v5744 = vrot.slane %v5737, %v5743
        %v5745 = vcombine.low %v5744, %v5735
        %v5746 = vcombine.low %v5744, %v5711
        %v5747 = vcombine.low %v5718, %v5711
        %v5748 = vcombine.low %v5718, %v5728
        %v5749 = vcombine.low %v5735, %v5744
        %5758 = vmatprep.subr.bf16.mxu0 0
        %5759 = vmatpush1.bf16.msra.mxu0 %v5559
        %5760 = vmatprep.subr.bf16.mxu0 0
        %5761 = vmatpush1.bf16.msra.mxu0 %v5560
        %5762 = vmatprep.subr.bf16.mxu0 0
        %5763 = vmatpush1.bf16.msra.mxu0 %v5561
        %5764 = vmatprep.subr.bf16.mxu0 0
        %5765 = vmatpush1.bf16.msra.mxu0 %v5562
        %5766 = vmatprep.subr.bf16.mxu0 0
        %5767 = vmatpush1.bf16.msra.mxu0 %v5563
        %5768 = vmatprep.subr.bf16.mxu0 0
        %5769 = vmatpush1.bf16.msra.mxu0 %v5564
        %5770 = vmatprep.subr.bf16.mxu0 0
        %5771 = vmatpush1.bf16.msra.mxu0 %v5565
        %5772 = vmatprep.subr.bf16.mxu0 0
        %5773 = vmatpush1.bf16.msra.mxu0 %v5566
        %5774 = vmatprep.subr.bf16.mxu0 0
        %5775 = vmatpush1.bf16.msra.mxu0 %v5567
        %5776 = vmatprep.subr.bf16.mxu0 0
        %5777 = vmatpush1.bf16.msra.mxu0 %v5568
        %5778 = vmatprep.subr.bf16.mxu0 0
        %5779 = vmatpush1.bf16.msra.mxu0 %v5569
        %5780 = vmatprep.subr.bf16.mxu0 0
        %5781 = vmatpush1.bf16.msra.mxu0 %v5570
        %5782 = vmatprep.subr.bf16.mxu0 0
        %5783 = vmatpush1.bf16.msra.mxu0 %v5571
        %5784 = vmatprep.subr.bf16.mxu0 0
        %5785 = vmatpush1.bf16.msra.mxu0 %v5572
        %5786 = vmatprep.subr.bf16.mxu0 0
        %5787 = vmatpush1.bf16.msra.mxu0 %v5573
        %5788 = vmatprep.subr.bf16.mxu0 0
        %5789 = vmatpush1.bf16.msra.mxu0 %v5574
        %5790 = vmatprep.mubr.bf16.mxu0 %v3195
        %5791 = vmatmul.mubr.bf16.gmra.mrb[0].mxu0 %v3191
        %v5792 = vpop.f32.mrb[0].mxu0
        %v5793 = vadd.f32 %v5719, %v5792
        %v5794 = vpop.f32.mrb[0].mxu0
        %v5795 = vpop.f32.mrb[0].mxu0
        %v5796 = vadd.f32 %v5719, %v5795
        %v5797 = vpop.f32.mrb[0].mxu0
        %5798 = vmatprep.mubr.bf16.mxu0 %v3380
        %5799 = vmatmul.mubr.bf16.gmra.mrb[0].mxu0 %v3376
        %v5800 = vpop.f32.mrb[0].mxu0
        %v5801 = vadd.f32 %v5736, %v5800
        %v5802 = vpop.f32.mrb[0].mxu0
        %v5803 = vpop.f32.mrb[0].mxu0
        %v5804 = vadd.f32 %v5745, %v5803
        %v5805 = vpop.f32.mrb[0].mxu0
        %5806 = vmatprep.mubr.bf16.mxu0 %v3565
        %5807 = vmatmul.mubr.bf16.gmra.mrb[0].mxu0 %v3561
        %v5808 = vpop.f32.mrb[0].mxu0
        %v5809 = vadd.f32 %v5746, %v5808
        %v5810 = vpop.f32.mrb[0].mxu0
        %v5811 = vpop.f32.mrb[0].mxu0
        %v5812 = vadd.f32 %v5747, %v5811
        %v5813 = vpop.f32.mrb[0].mxu0
        %5814 = vmatprep.mubr.bf16.mxu0 %v3750
        %5815 = vmatmul.mubr.bf16.gmra.mrb[0].mxu0 %v3746
        %v5816 = vpop.f32.mrb[0].mxu0
        %v5817 = vadd.f32 %v5748, %v5816
        %v5818 = vpop.f32.mrb[0].mxu0
        %v5819 = vpop.f32.mrb[0].mxu0
        %v5820 = vadd.f32 %v5749, %v5819
        %v5821 = vpop.f32.mrb[0].mxu0
        %5822 = vmatprep.mubr.bf16.mxu0 %v3935
        %5823 = vmatmul.mubr.bf16.gmra.mrb[0].mxu0 %v3931
        %v5824 = vpop.f32.mrb[0].mxu0
        %v5825 = vadd.f32 %v5749, %v5824
        %v5826 = vpop.f32.mrb[0].mxu0
        %v5827 = vpop.f32.mrb[0].mxu0
        %v5828 = vadd.f32 %v5719, %v5827
        %v5829 = vpop.f32.mrb[0].mxu0
        %5830 = vmatprep.mubr.bf16.mxu0 %v4120
        %5831 = vmatmul.mubr.bf16.gmra.mrb[0].mxu0 %v4116
        %v5832 = vpop.f32.mrb[0].mxu0
        %v5833 = vadd.f32 %v5719, %v5832
        %v5834 = vpop.f32.mrb[0].mxu0
        %v5835 = vpop.f32.mrb[0].mxu0
        %v5836 = vadd.f32 %v5736, %v5835
        %v5837 = vpop.f32.mrb[0].mxu0
        %5838 = vmatprep.mubr.bf16.mxu0 %v4305
        %5839 = vmatmul.mubr.bf16.gmra.mrb[0].mxu0 %v4301
        %v5840 = vpop.f32.mrb[0].mxu0
        %v5841 = vadd.f32 %v5745, %v5840
        %v5842 = vpop.f32.mrb[0].mxu0
        %v5843 = vpop.f32.mrb[0].mxu0
        %v5844 = vadd.f32 %v5746, %v5843
        %v5845 = vpop.f32.mrb[0].mxu0
        %5846 = vmatprep.mubr.bf16.mxu0 %v4490
        %5847 = vmatmul.mubr.bf16.gmra.mrb[0].mxu0 %v4486
        %v5848 = vpop.f32.mrb[0].mxu0
        %v5849 = vadd.f32 %v5747, %v5848
        %v5850 = vpop.f32.mrb[0].mxu0
        %v5851 = vpop.f32.mrb[0].mxu0
        %v5852 = vadd.f32 %v5748, %v5851
        %v5853 = vpop.f32.mrb[0].mxu0
        %5854 = vmatprep.mubr.bf16.mxu0 %v4675
        %5855 = vmatmul.mubr.bf16.gmra.mrb[0].mxu0 %v4671
        %v5856 = vpop.f32.mrb[0].mxu0
        %v5857 = vadd.f32 %v5749, %v5856
        %v5858 = vpop.f32.mrb[0].mxu0
        %v5859 = vpop.f32.mrb[0].mxu0
        %v5860 = vadd.f32 %v5749, %v5859
        %v5861 = vpop.f32.mrb[0].mxu0
        %5862 = vmatprep.mubr.bf16.mxu0 %v4860
        %5863 = vmatmul.mubr.bf16.gmra.mrb[0].mxu0 %v4856
        %v5864 = vpop.f32.mrb[0].mxu0
        %v5865 = vadd.f32 %v5719, %v5864
        %v5866 = vpop.f32.mrb[0].mxu0
        %v5867 = vpop.f32.mrb[0].mxu0
        %v5868 = vadd.f32 %v5719, %v5867
        %v5869 = vpop.f32.mrb[0].mxu0
        %5870 = vmatprep.mubr.bf16.mxu0 %v5045
        %5871 = vmatmul.mubr.bf16.gmra.mrb[0].mxu0 %v5041
        %v5872 = vpop.f32.mrb[0].mxu0
        %v5873 = vadd.f32 %v5736, %v5872
        %v5874 = vpop.f32.mrb[0].mxu0
        %v5875 = vpop.f32.mrb[0].mxu0
        %v5876 = vadd.f32 %v5745, %v5875
        %v5877 = vpop.f32.mrb[0].mxu0
        %5878 = vmatprep.mubr.bf16.mxu0 %v5136
        %5879 = vmatmul.mubr.bf16.gmra.mrb[0].mxu0 %v5122
        %v5880 = vpop.f32.mrb[0].mxu0
        %v5881 = vadd.f32 %v5744, %v5880
        %v5882 = vpop.f32.mrb[0].mxu0
        %v5883 = vpop.f32.mrb[0].mxu0
        %v5884 = vpop.f32.mrb[0].mxu0
        %5885 = vdwg.mxu0
        %5886 = vmatprep.subr.bf16.mxu0 0
        %5887 = vmatpush1.bf16.msra.mxu0 %v5575
        %5888 = vmatprep.subr.bf16.mxu0 0
        %5889 = vmatpush1.bf16.msra.mxu0 %v5576
        %5890 = vmatprep.subr.bf16.mxu0 0
        %5891 = vmatpush1.bf16.msra.mxu0 %v5577
        %5892 = vmatprep.subr.bf16.mxu0 0
        %5893 = vmatpush1.bf16.msra.mxu0 %v5578
        %5894 = vmatprep.subr.bf16.mxu0 0
        %5895 = vmatpush1.bf16.msra.mxu0 %v5579
        %5896 = vmatprep.subr.bf16.mxu0 0
        %5897 = vmatpush1.bf16.msra.mxu0 %v5580
        %5898 = vmatprep.subr.bf16.mxu0 0
        %5899 = vmatpush1.bf16.msra.mxu0 %v5581
        %5900 = vmatprep.subr.bf16.mxu0 0
        %5901 = vmatpush1.bf16.msra.mxu0 %v5582
        %5902 = vmatprep.subr.bf16.mxu0 0
        %5903 = vmatpush1.bf16.msra.mxu0 %v5583
        %5904 = vmatprep.subr.bf16.mxu0 0
        %5905 = vmatpush1.bf16.msra.mxu0 %v5584
        %5906 = vmatprep.subr.bf16.mxu0 0
        %5907 = vmatpush1.bf16.msra.mxu0 %v5585
        %5908 = vmatprep.subr.bf16.mxu0 0
        %5909 = vmatpush1.bf16.msra.mxu0 %v5586
        %5910 = vmatprep.subr.bf16.mxu0 0
        %5911 = vmatpush1.bf16.msra.mxu0 %v5587
        %5912 = vmatprep.subr.bf16.mxu0 0
        %5913 = vmatpush1.bf16.msra.mxu0 %v5588
        %5914 = vmatprep.subr.bf16.mxu0 0
        %5915 = vmatpush1.bf16.msra.mxu0 %v5589
        %5916 = vmatprep.subr.bf16.mxu0 0
        %5917 = vmatpush1.bf16.msra.mxu0 %v5590
        %5918 = vmatprep.mubr.bf16.mxu0 %v3196
        %5919 = vmatmul.mubr.bf16.gmra.mrb[0].mxu0 %v3192
        %v5920 = vpop.f32.mrb[0].mxu0
        %v5921 = vadd.f32 %v5793, %v5920
        %v5922 = vpop.f32.mrb[0].mxu0
        %v5923 = vpop.f32.mrb[0].mxu0
        %v5924 = vadd.f32 %v5796, %v5923
        %v5925 = vpop.f32.mrb[0].mxu0
        %5926 = vmatprep.mubr.bf16.mxu0 %v3381
        %5927 = vmatmul.mubr.bf16.gmra.mrb[0].mxu0 %v3377
        %v5928 = vpop.f32.mrb[0].mxu0
        %v5929 = vadd.f32 %v5801, %v5928
        %v5930 = vpop.f32.mrb[0].mxu0
        %v5931 = vpop.f32.mrb[0].mxu0
        %v5932 = vadd.f32 %v5804, %v5931
        %v5933 = vpop.f32.mrb[0].mxu0
        %5934 = vmatprep.mubr.bf16.mxu0 %v3566
        %5935 = vmatmul.mubr.bf16.gmra.mrb[0].mxu0 %v3562
        %v5936 = vpop.f32.mrb[0].mxu0
        %v5937 = vadd.f32 %v5809, %v5936
        %v5938 = vpop.f32.mrb[0].mxu0
        %v5939 = vpop.f32.mrb[0].mxu0
        %v5940 = vadd.f32 %v5812, %v5939
        %v5941 = vpop.f32.mrb[0].mxu0
        %5942 = vmatprep.mubr.bf16.mxu0 %v3751
        %5943 = vmatmul.mubr.bf16.gmra.mrb[0].mxu0 %v3747
        %v5944 = vpop.f32.mrb[0].mxu0
        %v5945 = vadd.f32 %v5817, %v5944
        %v5946 = vpop.f32.mrb[0].mxu0
        %v5947 = vpop.f32.mrb[0].mxu0
        %v5948 = vadd.f32 %v5820, %v5947
        %v5949 = vpop.f32.mrb[0].mxu0
        %5950 = vmatprep.mubr.bf16.mxu0 %v3936
        %5951 = vmatmul.mubr.bf16.gmra.mrb[0].mxu0 %v3932
        %v5952 = vpop.f32.mrb[0].mxu0
        %v5953 = vadd.f32 %v5825, %v5952
        %v5954 = vpop.f32.mrb[0].mxu0
        %v5955 = vpop.f32.mrb[0].mxu0
        %v5956 = vadd.f32 %v5828, %v5955
        %v5957 = vpop.f32.mrb[0].mxu0
        %5958 = vmatprep.mubr.bf16.mxu0 %v4121
        %5959 = vmatmul.mubr.bf16.gmra.mrb[0].mxu0 %v4117
        %v5960 = vpop.f32.mrb[0].mxu0
        %v5961 = vadd.f32 %v5833, %v5960
        %v5962 = vpop.f32.mrb[0].mxu0
        %v5963 = vpop.f32.mrb[0].mxu0
        %v5964 = vadd.f32 %v5836, %v5963
        %v5965 = vpop.f32.mrb[0].mxu0
        %5966 = vmatprep.mubr.bf16.mxu0 %v4306
        %5967 = vmatmul.mubr.bf16.gmra.mrb[0].mxu0 %v4302
        %v5968 = vpop.f32.mrb[0].mxu0
        %v5969 = vadd.f32 %v5841, %v5968
        %v5970 = vpop.f32.mrb[0].mxu0
        %v5971 = vpop.f32.mrb[0].mxu0
        %v5972 = vadd.f32 %v5844, %v5971
        %v5973 = vpop.f32.mrb[0].mxu0
        %5974 = vmatprep.mubr.bf16.mxu0 %v4491
        %5975 = vmatmul.mubr.bf16.gmra.mrb[0].mxu0 %v4487
        %v5976 = vpop.f32.mrb[0].mxu0
        %v5977 = vadd.f32 %v5849, %v5976
        %v5978 = vpop.f32.mrb[0].mxu0
        %v5979 = vpop.f32.mrb[0].mxu0
        %v5980 = vadd.f32 %v5852, %v5979
        %v5981 = vpop.f32.mrb[0].mxu0
        %5982 = vmatprep.mubr.bf16.mxu0 %v4676
        %5983 = vmatmul.mubr.bf16.gmra.mrb[0].mxu0 %v4672
        %v5984 = vpop.f32.mrb[0].mxu0
        %v5985 = vadd.f32 %v5857, %v5984
        %v5986 = vpop.f32.mrb[0].mxu0
        %v5987 = vpop.f32.mrb[0].mxu0
        %v5988 = vadd.f32 %v5860, %v5987
        %v5989 = vpop.f32.mrb[0].mxu0
        %5990 = vmatprep.mubr.bf16.mxu0 %v4861
        %5991 = vmatmul.mubr.bf16.gmra.mrb[0].mxu0 %v4857
        %v5992 = vpop.f32.mrb[0].mxu0
        %v5993 = vadd.f32 %v5865, %v5992
        %v5994 = vpop.f32.mrb[0].mxu0
        %v5995 = vpop.f32.mrb[0].mxu0
        %v5996 = vadd.f32 %v5868, %v5995
        %v5997 = vpop.f32.mrb[0].mxu0
        %5998 = vmatprep.mubr.bf16.mxu0 %v5046
        %5999 = vmatmul.mubr.bf16.gmra.mrb[0].mxu0 %v5042
        %v6000 = vpop.f32.mrb[0].mxu0
        %v6001 = vadd.f32 %v5873, %v6000
        %v6002 = vpop.f32.mrb[0].mxu0
        %v6003 = vpop.f32.mrb[0].mxu0
        %v6004 = vadd.f32 %v5876, %v6003
        %v6005 = vpop.f32.mrb[0].mxu0
        %6006 = vmatprep.mubr.bf16.mxu0 %v5146
        %6007 = vmatmul.mubr.bf16.gmra.mrb[0].mxu0 %v5144
        %v6008 = vpop.f32.mrb[0].mxu0
        %v6009 = vadd.f32 %v5881, %v6008
        %v6010 = vpop.f32.mrb[0].mxu0
        %v6011 = vpop.f32.mrb[0].mxu0
        %v6012 = vpop.f32.mrb[0].mxu0
        %6013 = vdwg.mxu0
        %6014 = vmatprep.subr.bf16.mxu0 0
        %6015 = vmatpush1.bf16.msra.mxu0 %v5591
        %6016 = vmatprep.subr.bf16.mxu0 0
        %6017 = vmatpush1.bf16.msra.mxu0 %v5592
        %6018 = vmatprep.subr.bf16.mxu0 0
        %6019 = vmatpush1.bf16.msra.mxu0 %v5593
        %6020 = vmatprep.subr.bf16.mxu0 0
        %6021 = vmatpush1.bf16.msra.mxu0 %v5594
        %6022 = vmatprep.subr.bf16.mxu0 0
        %6023 = vmatpush1.bf16.msra.mxu0 %v5595
        %6024 = vmatprep.subr.bf16.mxu0 0
        %6025 = vmatpush1.bf16.msra.mxu0 %v5596
        %6026 = vmatprep.subr.bf16.mxu0 0
        %6027 = vmatpush1.bf16.msra.mxu0 %v5597
        %6028 = vmatprep.subr.bf16.mxu0 0
        %6029 = vmatpush1.bf16.msra.mxu0 %v5598
        %6030 = vmatprep.subr.bf16.mxu0 0
        %6031 = vmatpush1.bf16.msra.mxu0 %v5599
        %6032 = vmatprep.subr.bf16.mxu0 0
        %6033 = vmatpush1.bf16.msra.mxu0 %v5600
        %6034 = vmatprep.subr.bf16.mxu0 0
        %6035 = vmatpush1.bf16.msra.mxu0 %v5601
        %6036 = vmatprep.subr.bf16.mxu0 0
        %6037 = vmatpush1.bf16.msra.mxu0 %v5602
        %6038 = vmatprep.subr.bf16.mxu0 0
        %6039 = vmatpush1.bf16.msra.mxu0 %v5603
        %6040 = vmatprep.subr.bf16.mxu0 0
        %6041 = vmatpush1.bf16.msra.mxu0 %v5604
        %6042 = vmatprep.subr.bf16.mxu0 0
        %6043 = vmatpush1.bf16.msra.mxu0 %v5605
        %6044 = vmatprep.subr.bf16.mxu0 0
        %6045 = vmatpush1.bf16.msra.mxu0 %v5606
        %6046 = vmatprep.mubr.bf16.mxu0 %v3197
        %6047 = vmatmul.mubr.bf16.gmra.mrb[0].mxu0 %v3193
        %v6048 = vpop.f32.mrb[0].mxu0
        %v6049 = vadd.f32 %v5921, %v6048
        %v6050 = vpop.f32.mrb[0].mxu0
        %v6051 = vpop.f32.mrb[0].mxu0
        %v6052 = vadd.f32 %v5924, %v6051
        %v6053 = vpop.f32.mrb[0].mxu0
        %6054 = vmatprep.mubr.bf16.mxu0 %v3382
        %6055 = vmatmul.mubr.bf16.gmra.mrb[0].mxu0 %v3378
        %v6056 = vpop.f32.mrb[0].mxu0
        %v6057 = vadd.f32 %v5929, %v6056
        %v6058 = vpop.f32.mrb[0].mxu0
        %v6059 = vpop.f32.mrb[0].mxu0
        %v6060 = vadd.f32 %v5932, %v6059
        %v6061 = vpop.f32.mrb[0].mxu0
        %6062 = vmatprep.mubr.bf16.mxu0 %v3567
        %6063 = vmatmul.mubr.bf16.gmra.mrb[0].mxu0 %v3563
        %v6064 = vpop.f32.mrb[0].mxu0
        %v6065 = vadd.f32 %v5937, %v6064
        %v6066 = vpop.f32.mrb[0].mxu0
        %v6067 = vpop.f32.mrb[0].mxu0
        %v6068 = vadd.f32 %v5940, %v6067
        %v6069 = vpop.f32.mrb[0].mxu0
        %6070 = vmatprep.mubr.bf16.mxu0 %v3752
        %6071 = vmatmul.mubr.bf16.gmra.mrb[0].mxu0 %v3748
        %v6072 = vpop.f32.mrb[0].mxu0
        %v6073 = vadd.f32 %v5945, %v6072
        %v6074 = vpop.f32.mrb[0].mxu0
        %v6075 = vpop.f32.mrb[0].mxu0
        %v6076 = vadd.f32 %v5948, %v6075
        %v6077 = vpop.f32.mrb[0].mxu0
        %6078 = vmatprep.mubr.bf16.mxu0 %v3937
        %6079 = vmatmul.mubr.bf16.gmra.mrb[0].mxu0 %v3933
        %v6080 = vpop.f32.mrb[0].mxu0
        %v6081 = vadd.f32 %v5953, %v6080
        %v6082 = vpop.f32.mrb[0].mxu0
        %v6083 = vpop.f32.mrb[0].mxu0
        %v6084 = vadd.f32 %v5956, %v6083
        %v6085 = vpop.f32.mrb[0].mxu0
        %6086 = vmatprep.mubr.bf16.mxu0 %v4122
        %6087 = vmatmul.mubr.bf16.gmra.mrb[0].mxu0 %v4118
        %v6088 = vpop.f32.mrb[0].mxu0
        %v6089 = vadd.f32 %v5961, %v6088
        %v6090 = vpop.f32.mrb[0].mxu0
        %v6091 = vpop.f32.mrb[0].mxu0
        %v6092 = vadd.f32 %v5964, %v6091
        %v6093 = vpop.f32.mrb[0].mxu0
        %6094 = vmatprep.mubr.bf16.mxu0 %v4307
        %6095 = vmatmul.mubr.bf16.gmra.mrb[0].mxu0 %v4303
        %v6096 = vpop.f32.mrb[0].mxu0
        %v6097 = vadd.f32 %v5969, %v6096
        %v6098 = vpop.f32.mrb[0].mxu0
        %v6099 = vpop.f32.mrb[0].mxu0
        %v6100 = vadd.f32 %v5972, %v6099
        %v6101 = vpop.f32.mrb[0].mxu0
        %6102 = vmatprep.mubr.bf16.mxu0 %v4492
        %6103 = vmatmul.mubr.bf16.gmra.mrb[0].mxu0 %v4488
        %v6104 = vpop.f32.mrb[0].mxu0
        %v6105 = vadd.f32 %v5977, %v6104
        %v6106 = vpop.f32.mrb[0].mxu0
        %v6107 = vpop.f32.mrb[0].mxu0
        %v6108 = vadd.f32 %v5980, %v6107
        %v6109 = vpop.f32.mrb[0].mxu0
        %6110 = vmatprep.mubr.bf16.mxu0 %v4677
        %6111 = vmatmul.mubr.bf16.gmra.mrb[0].mxu0 %v4673
        %v6112 = vpop.f32.mrb[0].mxu0
        %v6113 = vadd.f32 %v5985, %v6112
        %v6114 = vpop.f32.mrb[0].mxu0
        %v6115 = vpop.f32.mrb[0].mxu0
        %v6116 = vadd.f32 %v5988, %v6115
        %v6117 = vpop.f32.mrb[0].mxu0
        %6118 = vmatprep.mubr.bf16.mxu0 %v4862
        %6119 = vmatmul.mubr.bf16.gmra.mrb[0].mxu0 %v4858
        %v6120 = vpop.f32.mrb[0].mxu0
        %v6121 = vadd.f32 %v5993, %v6120
        %v6122 = vpop.f32.mrb[0].mxu0
        %v6123 = vpop.f32.mrb[0].mxu0
        %v6124 = vadd.f32 %v5996, %v6123
        %v6125 = vpop.f32.mrb[0].mxu0
        %6126 = vmatprep.mubr.bf16.mxu0 %v5047
        %6127 = vmatmul.mubr.bf16.gmra.mrb[0].mxu0 %v5043
        %v6128 = vpop.f32.mrb[0].mxu0
        %v6129 = vadd.f32 %v6001, %v6128
        %v6130 = vpop.f32.mrb[0].mxu0
        %v6131 = vpop.f32.mrb[0].mxu0
        %v6132 = vadd.f32 %v6004, %v6131
        %v6133 = vpop.f32.mrb[0].mxu0
        %6134 = vmatprep.mubr.bf16.mxu0 %v5143
        %6135 = vmatmul.mubr.bf16.gmra.mrb[0].mxu0 %v5129
        %v6136 = vpop.f32.mrb[0].mxu0
        %v6137 = vadd.f32 %v6009, %v6136
        %v6138 = vpop.f32.mrb[0].mxu0
        %v6139 = vpop.f32.mrb[0].mxu0
        %v6140 = vpop.f32.mrb[0].mxu0
        %6141 = vdwg.mxu0
        %6142 = vmatprep.subr.bf16.mxu0 0
        %6143 = vmatpush1.bf16.msra.mxu0 %v5607
        %6144 = vmatprep.subr.bf16.mxu0 0
        %6145 = vmatpush1.bf16.msra.mxu0 %v5608
        %6146 = vmatprep.subr.bf16.mxu0 0
        %6147 = vmatpush1.bf16.msra.mxu0 %v5609
        %6148 = vmatprep.subr.bf16.mxu0 0
        %6149 = vmatpush1.bf16.msra.mxu0 %v5610
        %6150 = vmatprep.subr.bf16.mxu0 0
        %6151 = vmatpush1.bf16.msra.mxu0 %v5611
        %6152 = vmatprep.subr.bf16.mxu0 0
        %6153 = vmatpush1.bf16.msra.mxu0 %v5612
        %6154 = vmatprep.subr.bf16.mxu0 0
        %6155 = vmatpush1.bf16.msra.mxu0 %v5613
        %6156 = vmatprep.subr.bf16.mxu0 0
        %6157 = vmatpush1.bf16.msra.mxu0 %v5614
        %6158 = vmatprep.subr.bf16.mxu0 0
        %6159 = vmatpush1.bf16.msra.mxu0 %v5615
        %6160 = vmatprep.subr.bf16.mxu0 0
        %6161 = vmatpush1.bf16.msra.mxu0 %v5616
        %6162 = vmatprep.subr.bf16.mxu0 0
        %6163 = vmatpush1.bf16.msra.mxu0 %v5617
        %6164 = vmatprep.subr.bf16.mxu0 0
        %6165 = vmatpush1.bf16.msra.mxu0 %v5618
        %6166 = vmatprep.subr.bf16.mxu0 0
        %6167 = vmatpush1.bf16.msra.mxu0 %v5619
        %6168 = vmatprep.subr.bf16.mxu0 0
        %6169 = vmatpush1.bf16.msra.mxu0 %v5620
        %6170 = vmatprep.subr.bf16.mxu0 0
        %6171 = vmatpush1.bf16.msra.mxu0 %v5621
        %6172 = vmatprep.subr.bf16.mxu0 0
        %6173 = vmatpush1.bf16.msra.mxu0 %v5622
        %6174 = vmatprep.mubr.bf16.mxu0 %v3198
        %6175 = vmatmul.mubr.bf16.gmra.mrb[0].mxu0 %v3194
        %v6176 = vpop.f32.mrb[0].mxu0
        %v6177 = vadd.f32 %v6049, %v6176
        %v6178 = vpop.f32.mrb[0].mxu0
        %v6179 = vpop.f32.mrb[0].mxu0
        %v6180 = vadd.f32 %v6052, %v6179
        %v6181 = vpop.f32.mrb[0].mxu0
        %6182 = vmatprep.mubr.bf16.mxu0 %v3383
        %6183 = vmatmul.mubr.bf16.gmra.mrb[0].mxu0 %v3379
        %v6184 = vpop.f32.mrb[0].mxu0
        %v6185 = vadd.f32 %v6057, %v6184
        %v6186 = vpop.f32.mrb[0].mxu0
        %v6187 = vpop.f32.mrb[0].mxu0
        %v6188 = vadd.f32 %v6060, %v6187
        %v6189 = vpop.f32.mrb[0].mxu0
        %6190 = vmatprep.mubr.bf16.mxu0 %v3568
        %6191 = vmatmul.mubr.bf16.gmra.mrb[0].mxu0 %v3564
        %v6192 = vpop.f32.mrb[0].mxu0
        %v6193 = vadd.f32 %v6065, %v6192
        %v6194 = vpop.f32.mrb[0].mxu0
        %v6195 = vpop.f32.mrb[0].mxu0
        %v6196 = vadd.f32 %v6068, %v6195
        %v6197 = vpop.f32.mrb[0].mxu0
        %6198 = vmatprep.mubr.bf16.mxu0 %v3753
        %6199 = vmatmul.mubr.bf16.gmra.mrb[0].mxu0 %v3749
        %v6200 = vpop.f32.mrb[0].mxu0
        %v6201 = vadd.f32 %v6073, %v6200
        %v6202 = vpop.f32.mrb[0].mxu0
        %v6203 = vpop.f32.mrb[0].mxu0
        %v6204 = vadd.f32 %v6076, %v6203
        %v6205 = vpop.f32.mrb[0].mxu0
        %6206 = vmatprep.mubr.bf16.mxu0 %v3938
        %6207 = vmatmul.mubr.bf16.gmra.mrb[0].mxu0 %v3934
        %v6208 = vpop.f32.mrb[0].mxu0
        %v6209 = vadd.f32 %v6081, %v6208
        %v6210 = vpop.f32.mrb[0].mxu0
        %v6211 = vpop.f32.mrb[0].mxu0
        %v6212 = vadd.f32 %v6084, %v6211
        %v6213 = vpop.f32.mrb[0].mxu0
        %6214 = vmatprep.mubr.bf16.mxu0 %v4123
        %6215 = vmatmul.mubr.bf16.gmra.mrb[0].mxu0 %v4119
        %v6216 = vpop.f32.mrb[0].mxu0
        %v6217 = vadd.f32 %v6089, %v6216
        %v6218 = vpop.f32.mrb[0].mxu0
        %v6219 = vpop.f32.mrb[0].mxu0
        %v6220 = vadd.f32 %v6092, %v6219
        %v6221 = vpop.f32.mrb[0].mxu0
        %6222 = vmatprep.mubr.bf16.mxu0 %v4308
        %6223 = vmatmul.mubr.bf16.gmra.mrb[0].mxu0 %v4304
        %v6224 = vpop.f32.mrb[0].mxu0
        %v6225 = vadd.f32 %v6097, %v6224
        %v6226 = vpop.f32.mrb[0].mxu0
        %v6227 = vpop.f32.mrb[0].mxu0
        %v6228 = vadd.f32 %v6100, %v6227
        %v6229 = vpop.f32.mrb[0].mxu0
        %6230 = vmatprep.mubr.bf16.mxu0 %v4493
        %6231 = vmatmul.mubr.bf16.gmra.mrb[0].mxu0 %v4489
        %v6232 = vpop.f32.mrb[0].mxu0
        %v6233 = vadd.f32 %v6105, %v6232
        %v6234 = vpop.f32.mrb[0].mxu0
        %v6235 = vpop.f32.mrb[0].mxu0
        %v6236 = vadd.f32 %v6108, %v6235
        %v6237 = vpop.f32.mrb[0].mxu0
        %6238 = vmatprep.mubr.bf16.mxu0 %v4678
        %6239 = vmatmul.mubr.bf16.gmra.mrb[0].mxu0 %v4674
        %v6240 = vpop.f32.mrb[0].mxu0
        %v6241 = vadd.f32 %v6113, %v6240
        %v6242 = vpop.f32.mrb[0].mxu0
        %v6243 = vpop.f32.mrb[0].mxu0
        %v6244 = vadd.f32 %v6116, %v6243
        %v6245 = vpop.f32.mrb[0].mxu0
        %6246 = vmatprep.mubr.bf16.mxu0 %v4863
        %6247 = vmatmul.mubr.bf16.gmra.mrb[0].mxu0 %v4859
        %v6248 = vpop.f32.mrb[0].mxu0
        %v6249 = vadd.f32 %v6121, %v6248
        %v6250 = vpop.f32.mrb[0].mxu0
        %v6251 = vpop.f32.mrb[0].mxu0
        %v6252 = vadd.f32 %v6124, %v6251
        %v6253 = vpop.f32.mrb[0].mxu0
        %6254 = vmatprep.mubr.bf16.mxu0 %v5048
        %6255 = vmatmul.mubr.bf16.gmra.mrb[0].mxu0 %v5044
        %v6256 = vpop.f32.mrb[0].mxu0
        %v6257 = vadd.f32 %v6129, %v6256
        %v6258 = vpop.f32.mrb[0].mxu0
        %v6259 = vpop.f32.mrb[0].mxu0
        %v6260 = vadd.f32 %v6132, %v6259
        %v6261 = vpop.f32.mrb[0].mxu0
        %6262 = vmatprep.mubr.bf16.mxu0 %v5147
        %6263 = vmatmul.mubr.bf16.gmra.mrb[0].mxu0 %v5145
        %v6264 = vpop.f32.mrb[0].mxu0
        %v6265 = vadd.f32 %v6137, %v6264
        %v6266 = vpop.f32.mrb[0].mxu0
        %v6267 = vpop.f32.mrb[0].mxu0
        %v6268 = vpop.f32.mrb[0].mxu0
        %6269 = vdwg.mxu0
        %6270 = vmatprep.subr.bf16.mxu0 0
        %6271 = vmatpush1.bf16.msra.mxu0 %v5623
        %6272 = vmatprep.subr.bf16.mxu0 0
        %6273 = vmatpush1.bf16.msra.mxu0 %v5624
        %6274 = vmatprep.subr.bf16.mxu0 0
        %6275 = vmatpush1.bf16.msra.mxu0 %v5625
        %6276 = vmatprep.subr.bf16.mxu0 0
        %6277 = vmatpush1.bf16.msra.mxu0 %v5626
        %6278 = vmatprep.subr.bf16.mxu0 0
        %6279 = vmatpush1.bf16.msra.mxu0 %v5627
        %6280 = vmatprep.subr.bf16.mxu0 0
        %6281 = vmatpush1.bf16.msra.mxu0 %v5628
        %6282 = vmatprep.subr.bf16.mxu0 0
        %6283 = vmatpush1.bf16.msra.mxu0 %v5629
        %6284 = vmatprep.subr.bf16.mxu0 0
        %6285 = vmatpush1.bf16.msra.mxu0 %v5630
        %6286 = vmatprep.subr.bf16.mxu0 0
        %6287 = vmatpush1.bf16.msra.mxu0 0
        %6288 = vmatprep.subr.bf16.mxu0 0
        %6289 = vmatpush1.bf16.msra.mxu0 0
        %6290 = vmatprep.subr.bf16.mxu0 0
        %6291 = vmatpush1.bf16.msra.mxu0 0
        %6292 = vmatprep.subr.bf16.mxu0 0
        %6293 = vmatpush1.bf16.msra.mxu0 0
        %6294 = vmatprep.subr.bf16.mxu0 0
        %6295 = vmatpush1.bf16.msra.mxu0 0
        %6296 = vmatprep.subr.bf16.mxu0 0
        %6297 = vmatpush1.bf16.msra.mxu0 0
        %6298 = vmatprep.subr.bf16.mxu0 0
        %6299 = vmatpush1.bf16.msra.mxu0 0
        %6300 = vmatprep.subr.bf16.mxu0 0
        %6301 = vmatpush1.bf16.msra.mxu0 0
        %6302 = vmatprep.mubr.bf16.mxu0 0
        %6303 = vmatmul.mubr.bf16.gmra.mrb[0].mxu0 %v3247
        %v6304 = vpop.f32.mrb[0].mxu0
        %v6305 = vadd.f32 %v6177, %v6304
        %v6306 = vpop.f32.mrb[0].mxu0
        %v6307 = vpop.f32.mrb[0].mxu0
        %v6308 = vadd.f32 %v6180, %v6307
        %v6309 = vpop.f32.mrb[0].mxu0
        %6310 = vmatprep.mubr.bf16.mxu0 0
        %6311 = vmatmul.mubr.bf16.gmra.mrb[0].mxu0 %v3432
        %v6312 = vpop.f32.mrb[0].mxu0
        %v6313 = vadd.f32 %v6185, %v6312
        %v6314 = vpop.f32.mrb[0].mxu0
        %v6315 = vpop.f32.mrb[0].mxu0
        %v6316 = vadd.f32 %v6188, %v6315
        %v6317 = vpop.f32.mrb[0].mxu0
        %6318 = vmatprep.mubr.bf16.mxu0 0
        %6319 = vmatmul.mubr.bf16.gmra.mrb[0].mxu0 %v3617
        %v6320 = vpop.f32.mrb[0].mxu0
        %v6321 = vadd.f32 %v6193, %v6320
        %v6322 = vpop.f32.mrb[0].mxu0
        %v6323 = vpop.f32.mrb[0].mxu0
        %v6324 = vadd.f32 %v6196, %v6323
        %v6325 = vpop.f32.mrb[0].mxu0
        %6326 = vmatprep.mubr.bf16.mxu0 0
        %6327 = vmatmul.mubr.bf16.gmra.mrb[0].mxu0 %v3802
        %v6328 = vpop.f32.mrb[0].mxu0
        %v6329 = vadd.f32 %v6201, %v6328
        %v6330 = vpop.f32.mrb[0].mxu0
        %v6331 = vpop.f32.mrb[0].mxu0
        %v6332 = vadd.f32 %v6204, %v6331
        %v6333 = vpop.f32.mrb[0].mxu0
        %6334 = vmatprep.mubr.bf16.mxu0 0
        %6335 = vmatmul.mubr.bf16.gmra.mrb[0].mxu0 %v3987
        %v6336 = vpop.f32.mrb[0].mxu0
        %v6337 = vadd.f32 %v6209, %v6336
        %v6338 = vpop.f32.mrb[0].mxu0
        %v6339 = vpop.f32.mrb[0].mxu0
        %v6340 = vadd.f32 %v6212, %v6339
        %v6341 = vpop.f32.mrb[0].mxu0
        %6342 = vmatprep.mubr.bf16.mxu0 0
        %6343 = vmatmul.mubr.bf16.gmra.mrb[0].mxu0 %v4172
        %v6344 = vpop.f32.mrb[0].mxu0
        %v6345 = vadd.f32 %v6217, %v6344
        %v6346 = vpop.f32.mrb[0].mxu0
        %v6347 = vpop.f32.mrb[0].mxu0
        %v6348 = vadd.f32 %v6220, %v6347
        %v6349 = vpop.f32.mrb[0].mxu0
        %6350 = vmatprep.mubr.bf16.mxu0 0
        %6351 = vmatmul.mubr.bf16.gmra.mrb[0].mxu0 %v4357
        %v6352 = vpop.f32.mrb[0].mxu0
        %v6353 = vadd.f32 %v6225, %v6352
        %v6354 = vpop.f32.mrb[0].mxu0
        %v6355 = vpop.f32.mrb[0].mxu0
        %v6356 = vadd.f32 %v6228, %v6355
        %v6357 = vpop.f32.mrb[0].mxu0
        %6358 = vmatprep.mubr.bf16.mxu0 0
        %6359 = vmatmul.mubr.bf16.gmra.mrb[0].mxu0 %v4542
        %v6360 = vpop.f32.mrb[0].mxu0
        %v6361 = vadd.f32 %v6233, %v6360
        %v6362 = vpop.f32.mrb[0].mxu0
        %v6363 = vpop.f32.mrb[0].mxu0
        %v6364 = vadd.f32 %v6236, %v6363
        %v6365 = vpop.f32.mrb[0].mxu0
        %6366 = vmatprep.mubr.bf16.mxu0 0
        %6367 = vmatmul.mubr.bf16.gmra.mrb[0].mxu0 %v4727
        %v6368 = vpop.f32.mrb[0].mxu0
        %v6369 = vadd.f32 %v6241, %v6368
        %v6370 = vpop.f32.mrb[0].mxu0
        %v6371 = vpop.f32.mrb[0].mxu0
        %v6372 = vadd.f32 %v6244, %v6371
        %v6373 = vpop.f32.mrb[0].mxu0
        %6374 = vmatprep.mubr.bf16.mxu0 0
        %6375 = vmatmul.mubr.bf16.gmra.mrb[0].mxu0 %v4912
        %v6376 = vpop.f32.mrb[0].mxu0
        %v6377 = vadd.f32 %v6249, %v6376
        %v6378 = vpop.f32.mrb[0].mxu0
        %v6379 = vpop.f32.mrb[0].mxu0
        %v6380 = vadd.f32 %v6252, %v6379
        %v6381 = vpop.f32.mrb[0].mxu0
        %6382 = vmatprep.mubr.bf16.mxu0 0
        %6383 = vmatmul.mubr.bf16.gmra.mrb[0].mxu0 %v5097
        %v6384 = vpop.f32.mrb[0].mxu0
        %v6385 = vadd.f32 %v6257, %v6384
        %v6386 = vpop.f32.mrb[0].mxu0
        %v6387 = vpop.f32.mrb[0].mxu0
        %v6388 = vadd.f32 %v6260, %v6387
        %v6389 = vpop.f32.mrb[0].mxu0
        %6390 = vmatprep.mubr.bf16.mxu0 0
        %6391 = vmatmul.mubr.bf16.gmra.mrb[0].mxu0 %v5162
        %v6392 = vpop.f32.mrb[0].mxu0
        %v6393 = vadd.f32 %v6265, %v6392
        %v6394 = vpop.f32.mrb[0].mxu0
        %v6395 = vpop.f32.mrb[0].mxu0
        %v6396 = vpop.f32.mrb[0].mxu0
        %6397 = vdwg.mxu0
        %v6421 = vcombine.high %v6305, %v6305
        %v6423 = vunpack.c.l.s4 1983009808
        %v6424 = vunpack.c.0.s8 %v6423
        %v6425 = vlaneseq
        %v6426 = vshrl.u32 %v6425, 7
        %v6427 = vsub.s32 %v6424, %v6426
        %v6428 = vrot.slane %v6305, %v6427
        %v6430 = vunpack.c.l.s4 1983009808
        %v6431 = vunpack.c.0.s8 %v6430
        %v6432 = vlaneseq
        %v6433 = vshrl.u32 %v6432, 7
        %v6434 = vsub.s32 %v6431, %v6433
        %v6435 = vrot.slane %v6421, %v6434
        %v6436 = vcombine.high %v6428, %v6428
        %v6437 = vcombine.high %v6435, %v6435
        %v6438 = vcombine.high %v6308, %v6308
        %v6440 = vunpack.c.l.s4 1983009808
        %v6441 = vunpack.c.0.s8 %v6440
        %v6442 = vlaneseq
        %v6443 = vshrl.u32 %v6442, 7
        %v6444 = vsub.s32 %v6441, %v6443
        %v6445 = vrot.slane %v6308, %v6444
        %v6447 = vunpack.c.l.s4 1983009808
        %v6448 = vunpack.c.0.s8 %v6447
        %v6449 = vlaneseq
        %v6450 = vshrl.u32 %v6449, 7
        %v6451 = vsub.s32 %v6448, %v6450
        %v6452 = vrot.slane %v6438, %v6451
        %v6453 = vcombine.high %v6445, %v6445
        %v6454 = vcombine.high %v6452, %v6452
        %v6455 = vcombine.high %v6313, %v6313
        %v6457 = vunpack.c.l.s4 1983009808
        %v6458 = vunpack.c.0.s8 %v6457
        %v6459 = vlaneseq
        %v6460 = vshrl.u32 %v6459, 7
        %v6461 = vsub.s32 %v6458, %v6460
        %v6462 = vrot.slane %v6313, %v6461
        %v6464 = vunpack.c.l.s4 1983009808
        %v6465 = vunpack.c.0.s8 %v6464
        %v6466 = vlaneseq
        %v6467 = vshrl.u32 %v6466, 7
        %v6468 = vsub.s32 %v6465, %v6467
        %v6469 = vrot.slane %v6455, %v6468
        %v6470 = vcombine.high %v6462, %v6462
        %v6471 = vcombine.high %v6469, %v6469
        %v6472 = vcombine.high %v6316, %v6316
        %v6474 = vunpack.c.l.s4 1983009808
        %v6475 = vunpack.c.0.s8 %v6474
        %v6476 = vlaneseq
        %v6477 = vshrl.u32 %v6476, 7
        %v6478 = vsub.s32 %v6475, %v6477
        %v6479 = vrot.slane %v6316, %v6478
        %v6481 = vunpack.c.l.s4 1983009808
        %v6482 = vunpack.c.0.s8 %v6481
        %v6483 = vlaneseq
        %v6484 = vshrl.u32 %v6483, 7
        %v6485 = vsub.s32 %v6482, %v6484
        %v6486 = vrot.slane %v6472, %v6485
        %v6487 = vcombine.high %v6479, %v6479
        %v6488 = vcombine.high %v6486, %v6486
        %v6489 = vcombine.high %v6321, %v6321
        %v6491 = vunpack.c.l.s4 1983009808
        %v6492 = vunpack.c.0.s8 %v6491
        %v6493 = vlaneseq
        %v6494 = vshrl.u32 %v6493, 7
        %v6495 = vsub.s32 %v6492, %v6494
        %v6496 = vrot.slane %v6321, %v6495
        %v6498 = vunpack.c.l.s4 1983009808
        %v6499 = vunpack.c.0.s8 %v6498
        %v6500 = vlaneseq
        %v6501 = vshrl.u32 %v6500, 7
        %v6502 = vsub.s32 %v6499, %v6501
        %v6503 = vrot.slane %v6489, %v6502
        %v6504 = vcombine.high %v6496, %v6496
        %v6505 = vcombine.high %v6503, %v6503
        %v6506 = vcombine.high %v6324, %v6324
        %v6508 = vunpack.c.l.s4 1983009808
        %v6509 = vunpack.c.0.s8 %v6508
        %v6510 = vlaneseq
        %v6511 = vshrl.u32 %v6510, 7
        %v6512 = vsub.s32 %v6509, %v6511
        %v6513 = vrot.slane %v6324, %v6512
        %v6515 = vunpack.c.l.s4 1983009808
        %v6516 = vunpack.c.0.s8 %v6515
        %v6517 = vlaneseq
        %v6518 = vshrl.u32 %v6517, 7
        %v6519 = vsub.s32 %v6516, %v6518
        %v6520 = vrot.slane %v6506, %v6519
        %v6521 = vcombine.high %v6513, %v6513
        %v6522 = vcombine.high %v6520, %v6520
        %v6523 = vcombine.high %v6329, %v6329
        %v6525 = vunpack.c.l.s4 1983009808
        %v6526 = vunpack.c.0.s8 %v6525
        %v6527 = vlaneseq
        %v6528 = vshrl.u32 %v6527, 7
        %v6529 = vsub.s32 %v6526, %v6528
        %v6530 = vrot.slane %v6329, %v6529
        %v6532 = vunpack.c.l.s4 1983009808
        %v6533 = vunpack.c.0.s8 %v6532
        %v6534 = vlaneseq
        %v6535 = vshrl.u32 %v6534, 7
        %v6536 = vsub.s32 %v6533, %v6535
        %v6537 = vrot.slane %v6523, %v6536
        %v6538 = vcombine.high %v6530, %v6530
        %v6539 = vcombine.high %v6537, %v6537
        %v6540 = vcombine.high %v6332, %v6332
        %v6542 = vunpack.c.l.s4 1983009808
        %v6543 = vunpack.c.0.s8 %v6542
        %v6544 = vlaneseq
        %v6545 = vshrl.u32 %v6544, 7
        %v6546 = vsub.s32 %v6543, %v6545
        %v6547 = vrot.slane %v6332, %v6546
        %v6549 = vunpack.c.l.s4 1983009808
        %v6550 = vunpack.c.0.s8 %v6549
        %v6551 = vlaneseq
        %v6552 = vshrl.u32 %v6551, 7
        %v6553 = vsub.s32 %v6550, %v6552
        %v6554 = vrot.slane %v6540, %v6553
        %v6555 = vcombine.high %v6547, %v6547
        %v6556 = vcombine.high %v6554, %v6554
        %v6557 = vcombine.high %v6337, %v6337
        %v6559 = vunpack.c.l.s4 1983009808
        %v6560 = vunpack.c.0.s8 %v6559
        %v6561 = vlaneseq
        %v6562 = vshrl.u32 %v6561, 7
        %v6563 = vsub.s32 %v6560, %v6562
        %v6564 = vrot.slane %v6337, %v6563
        %v6566 = vunpack.c.l.s4 1983009808
        %v6567 = vunpack.c.0.s8 %v6566
        %v6568 = vlaneseq
        %v6569 = vshrl.u32 %v6568, 7
        %v6570 = vsub.s32 %v6567, %v6569
        %v6571 = vrot.slane %v6557, %v6570
        %v6572 = vcombine.high %v6564, %v6564
        %v6573 = vcombine.high %v6571, %v6571
        %v6574 = vcombine.high %v6340, %v6340
        %v6576 = vunpack.c.l.s4 1983009808
        %v6577 = vunpack.c.0.s8 %v6576
        %v6578 = vlaneseq
        %v6579 = vshrl.u32 %v6578, 7
        %v6580 = vsub.s32 %v6577, %v6579
        %v6581 = vrot.slane %v6340, %v6580
        %v6583 = vunpack.c.l.s4 1983009808
        %v6584 = vunpack.c.0.s8 %v6583
        %v6585 = vlaneseq
        %v6586 = vshrl.u32 %v6585, 7
        %v6587 = vsub.s32 %v6584, %v6586
        %v6588 = vrot.slane %v6574, %v6587
        %v6589 = vcombine.high %v6581, %v6581
        %v6590 = vcombine.high %v6588, %v6588
        %v6591 = vcombine.high %v6345, %v6345
        %v6593 = vunpack.c.l.s4 1983009808
        %v6594 = vunpack.c.0.s8 %v6593
        %v6595 = vlaneseq
        %v6596 = vshrl.u32 %v6595, 7
        %v6597 = vsub.s32 %v6594, %v6596
        %v6598 = vrot.slane %v6345, %v6597
        %v6600 = vunpack.c.l.s4 1983009808
        %v6601 = vunpack.c.0.s8 %v6600
        %v6602 = vlaneseq
        %v6603 = vshrl.u32 %v6602, 7
        %v6604 = vsub.s32 %v6601, %v6603
        %v6605 = vrot.slane %v6591, %v6604
        %v6606 = vcombine.high %v6598, %v6598
        %v6607 = vcombine.high %v6605, %v6605
        %v6608 = vcombine.high %v6348, %v6348
        %v6610 = vunpack.c.l.s4 1983009808
        %v6611 = vunpack.c.0.s8 %v6610
        %v6612 = vlaneseq
        %v6613 = vshrl.u32 %v6612, 7
        %v6614 = vsub.s32 %v6611, %v6613
        %v6615 = vrot.slane %v6348, %v6614
        %v6617 = vunpack.c.l.s4 1983009808
        %v6618 = vunpack.c.0.s8 %v6617
        %v6619 = vlaneseq
        %v6620 = vshrl.u32 %v6619, 7
        %v6621 = vsub.s32 %v6618, %v6620
        %v6622 = vrot.slane %v6608, %v6621
        %v6623 = vcombine.high %v6615, %v6615
        %v6624 = vcombine.high %v6622, %v6622
        %v6625 = vcombine.high %v6353, %v6353
        %v6627 = vunpack.c.l.s4 1983009808
        %v6628 = vunpack.c.0.s8 %v6627
        %v6629 = vlaneseq
        %v6630 = vshrl.u32 %v6629, 7
        %v6631 = vsub.s32 %v6628, %v6630
        %v6632 = vrot.slane %v6353, %v6631
        %v6634 = vunpack.c.l.s4 1983009808
        %v6635 = vunpack.c.0.s8 %v6634
        %v6636 = vlaneseq
        %v6637 = vshrl.u32 %v6636, 7
        %v6638 = vsub.s32 %v6635, %v6637
        %v6639 = vrot.slane %v6625, %v6638
        %v6640 = vcombine.high %v6632, %v6632
        %v6641 = vcombine.high %v6639, %v6639
        %v6642 = vcombine.high %v6356, %v6356
        %v6644 = vunpack.c.l.s4 1983009808
        %v6645 = vunpack.c.0.s8 %v6644
        %v6646 = vlaneseq
        %v6647 = vshrl.u32 %v6646, 7
        %v6648 = vsub.s32 %v6645, %v6647
        %v6649 = vrot.slane %v6356, %v6648
        %v6651 = vunpack.c.l.s4 1983009808
        %v6652 = vunpack.c.0.s8 %v6651
        %v6653 = vlaneseq
        %v6654 = vshrl.u32 %v6653, 7
        %v6655 = vsub.s32 %v6652, %v6654
        %v6656 = vrot.slane %v6642, %v6655
        %v6657 = vcombine.high %v6649, %v6649
        %v6658 = vcombine.high %v6656, %v6656
        %v6659 = vcombine.high %v6361, %v6361
        %v6661 = vunpack.c.l.s4 1983009808
        %v6662 = vunpack.c.0.s8 %v6661
        %v6663 = vlaneseq
        %v6664 = vshrl.u32 %v6663, 7
        %v6665 = vsub.s32 %v6662, %v6664
        %v6666 = vrot.slane %v6361, %v6665
        %v6668 = vunpack.c.l.s4 1983009808
        %v6669 = vunpack.c.0.s8 %v6668
        %v6670 = vlaneseq
        %v6671 = vshrl.u32 %v6670, 7
        %v6672 = vsub.s32 %v6669, %v6671
        %v6673 = vrot.slane %v6659, %v6672
        %v6674 = vcombine.high %v6666, %v6666
        %v6675 = vcombine.high %v6673, %v6673
        %v6676 = vcombine.high %v6364, %v6364
        %v6678 = vunpack.c.l.s4 1983009808
        %v6679 = vunpack.c.0.s8 %v6678
        %v6680 = vlaneseq
        %v6681 = vshrl.u32 %v6680, 7
        %v6682 = vsub.s32 %v6679, %v6681
        %v6683 = vrot.slane %v6364, %v6682
        %v6685 = vunpack.c.l.s4 1983009808
        %v6686 = vunpack.c.0.s8 %v6685
        %v6687 = vlaneseq
        %v6688 = vshrl.u32 %v6687, 7
        %v6689 = vsub.s32 %v6686, %v6688
        %v6690 = vrot.slane %v6676, %v6689
        %v6691 = vcombine.high %v6683, %v6683
        %v6692 = vcombine.high %v6690, %v6690
        %v6693 = vcombine.high %v6369, %v6369
        %v6695 = vunpack.c.l.s4 1983009808
        %v6696 = vunpack.c.0.s8 %v6695
        %v6697 = vlaneseq
        %v6698 = vshrl.u32 %v6697, 7
        %v6699 = vsub.s32 %v6696, %v6698
        %v6700 = vrot.slane %v6369, %v6699
        %v6702 = vunpack.c.l.s4 1983009808
        %v6703 = vunpack.c.0.s8 %v6702
        %v6704 = vlaneseq
        %v6705 = vshrl.u32 %v6704, 7
        %v6706 = vsub.s32 %v6703, %v6705
        %v6707 = vrot.slane %v6693, %v6706
        %v6708 = vcombine.high %v6700, %v6700
        %v6709 = vcombine.high %v6707, %v6707
        %v6710 = vcombine.high %v6372, %v6372
        %v6712 = vunpack.c.l.s4 1983009808
        %v6713 = vunpack.c.0.s8 %v6712
        %v6714 = vlaneseq
        %v6715 = vshrl.u32 %v6714, 7
        %v6716 = vsub.s32 %v6713, %v6715
        %v6717 = vrot.slane %v6372, %v6716
        %v6719 = vunpack.c.l.s4 1983009808
        %v6720 = vunpack.c.0.s8 %v6719
        %v6721 = vlaneseq
        %v6722 = vshrl.u32 %v6721, 7
        %v6723 = vsub.s32 %v6720, %v6722
        %v6724 = vrot.slane %v6710, %v6723
        %v6725 = vcombine.high %v6717, %v6717
        %v6726 = vcombine.high %v6724, %v6724
        %v6727 = vcombine.high %v6377, %v6377
        %v6729 = vunpack.c.l.s4 1983009808
        %v6730 = vunpack.c.0.s8 %v6729
        %v6731 = vlaneseq
        %v6732 = vshrl.u32 %v6731, 7
        %v6733 = vsub.s32 %v6730, %v6732
        %v6734 = vrot.slane %v6377, %v6733
        %v6736 = vunpack.c.l.s4 1983009808
        %v6737 = vunpack.c.0.s8 %v6736
        %v6738 = vlaneseq
        %v6739 = vshrl.u32 %v6738, 7
        %v6740 = vsub.s32 %v6737, %v6739
        %v6741 = vrot.slane %v6727, %v6740
        %v6742 = vcombine.high %v6734, %v6734
        %v6743 = vcombine.high %v6741, %v6741
        %v6744 = vcombine.high %v6380, %v6380
        %v6746 = vunpack.c.l.s4 1983009808
        %v6747 = vunpack.c.0.s8 %v6746
        %v6748 = vlaneseq
        %v6749 = vshrl.u32 %v6748, 7
        %v6750 = vsub.s32 %v6747, %v6749
        %v6751 = vrot.slane %v6380, %v6750
        %v6753 = vunpack.c.l.s4 1983009808
        %v6754 = vunpack.c.0.s8 %v6753
        %v6755 = vlaneseq
        %v6756 = vshrl.u32 %v6755, 7
        %v6757 = vsub.s32 %v6754, %v6756
        %v6758 = vrot.slane %v6744, %v6757
        %v6759 = vcombine.high %v6751, %v6751
        %v6760 = vcombine.high %v6758, %v6758
        %v6761 = vcombine.high %v6385, %v6385
        %v6763 = vunpack.c.l.s4 1983009808
        %v6764 = vunpack.c.0.s8 %v6763
        %v6765 = vlaneseq
        %v6766 = vshrl.u32 %v6765, 7
        %v6767 = vsub.s32 %v6764, %v6766
        %v6768 = vrot.slane %v6385, %v6767
        %v6770 = vunpack.c.l.s4 1983009808
        %v6771 = vunpack.c.0.s8 %v6770
        %v6772 = vlaneseq
        %v6773 = vshrl.u32 %v6772, 7
        %v6774 = vsub.s32 %v6771, %v6773
        %v6775 = vrot.slane %v6761, %v6774
        %v6776 = vcombine.high %v6768, %v6768
        %v6777 = vcombine.high %v6775, %v6775
        %v6778 = vcombine.high %v6388, %v6388
        %v6780 = vunpack.c.l.s4 1983009808
        %v6781 = vunpack.c.0.s8 %v6780
        %v6782 = vlaneseq
        %v6783 = vshrl.u32 %v6782, 7
        %v6784 = vsub.s32 %v6781, %v6783
        %v6785 = vrot.slane %v6388, %v6784
        %v6787 = vunpack.c.l.s4 1983009808
        %v6788 = vunpack.c.0.s8 %v6787
        %v6789 = vlaneseq
        %v6790 = vshrl.u32 %v6789, 7
        %v6791 = vsub.s32 %v6788, %v6790
        %v6792 = vrot.slane %v6778, %v6791
        %v6793 = vcombine.high %v6785, %v6785
        %v6794 = vcombine.high %v6792, %v6792
        %v6796 = vunpack.c.l.s4 1983009808
        %v6797 = vunpack.c.0.s8 %v6796
        %v6798 = vlaneseq
        %v6799 = vshrl.u32 %v6798, 7
        %v6800 = vsub.s32 %v6797, %v6799
        %v6801 = vrot.slane %v6393, %v6800
        %v6802 = vcombine.high %v6801, %v6801
        %v6893 = vmax.f32 %v6428, 0.0
        %v6894 = vmax.f32 %v6436, 0.0
        %v6895 = vmax.f32 %v6435, 0.0
        %v6896 = vmax.f32 %v6437, 0.0
        %v6897 = vmax.f32 %v6445, 0.0
        %v6898 = vmax.f32 %v6453, 0.0
        %v6899 = vmax.f32 %v6452, 0.0
        %v6900 = vmax.f32 %v6454, 0.0
        %v6901 = vmax.f32 %v6462, 0.0
        %v6902 = vmax.f32 %v6470, 0.0
        %v6903 = vmax.f32 %v6469, 0.0
        %v6904 = vmax.f32 %v6471, 0.0
        %v6905 = vmax.f32 %v6479, 0.0
        %v6906 = vmax.f32 %v6487, 0.0
        %v6907 = vmax.f32 %v6486, 0.0
        %v6908 = vmax.f32 %v6488, 0.0
        %v6909 = vmax.f32 %v6496, 0.0
        %v6910 = vmax.f32 %v6504, 0.0
        %v6911 = vmax.f32 %v6503, 0.0
        %v6912 = vmax.f32 %v6505, 0.0
        %v6913 = vmax.f32 %v6513, 0.0
        %v6914 = vmax.f32 %v6521, 0.0
        %v6915 = vmax.f32 %v6520, 0.0
        %v6916 = vmax.f32 %v6522, 0.0
        %v6917 = vmax.f32 %v6530, 0.0
        %v6918 = vmax.f32 %v6538, 0.0
        %v6919 = vmax.f32 %v6537, 0.0
        %v6920 = vmax.f32 %v6539, 0.0
        %v6921 = vmax.f32 %v6547, 0.0
        %v6922 = vmax.f32 %v6555, 0.0
        %v6923 = vmax.f32 %v6554, 0.0
        %v6924 = vmax.f32 %v6556, 0.0
        %v6925 = vmax.f32 %v6564, 0.0
        %v6926 = vmax.f32 %v6572, 0.0
        %v6927 = vmax.f32 %v6571, 0.0
        %v6928 = vmax.f32 %v6573, 0.0
        %v6929 = vmax.f32 %v6581, 0.0
        %v6930 = vmax.f32 %v6589, 0.0
        %v6931 = vmax.f32 %v6588, 0.0
        %v6932 = vmax.f32 %v6590, 0.0
        %v6933 = vmax.f32 %v6598, 0.0
        %v6934 = vmax.f32 %v6606, 0.0
        %v6935 = vmax.f32 %v6605, 0.0
        %v6936 = vmax.f32 %v6607, 0.0
        %v6937 = vmax.f32 %v6615, 0.0
        %v6938 = vmax.f32 %v6623, 0.0
        %v6939 = vmax.f32 %v6622, 0.0
        %v6940 = vmax.f32 %v6624, 0.0
        %v6941 = vmax.f32 %v6632, 0.0
        %v6942 = vmax.f32 %v6640, 0.0
        %v6943 = vmax.f32 %v6639, 0.0
        %v6944 = vmax.f32 %v6641, 0.0
        %v6945 = vmax.f32 %v6649, 0.0
        %v6946 = vmax.f32 %v6657, 0.0
        %v6947 = vmax.f32 %v6656, 0.0
        %v6948 = vmax.f32 %v6658, 0.0
        %v6949 = vmax.f32 %v6666, 0.0
        %v6950 = vmax.f32 %v6674, 0.0
        %v6951 = vmax.f32 %v6673, 0.0
        %v6952 = vmax.f32 %v6675, 0.0
        %v6953 = vmax.f32 %v6683, 0.0
        %v6954 = vmax.f32 %v6691, 0.0
        %v6955 = vmax.f32 %v6690, 0.0
        %v6956 = vmax.f32 %v6692, 0.0
        %v6957 = vmax.f32 %v6700, 0.0
        %v6958 = vmax.f32 %v6708, 0.0
        %v6959 = vmax.f32 %v6707, 0.0
        %v6960 = vmax.f32 %v6709, 0.0
        %v6961 = vmax.f32 %v6717, 0.0
        %v6962 = vmax.f32 %v6725, 0.0
        %v6963 = vmax.f32 %v6724, 0.0
        %v6964 = vmax.f32 %v6726, 0.0
        %v6965 = vmax.f32 %v6734, 0.0
        %v6966 = vmax.f32 %v6742, 0.0
        %v6967 = vmax.f32 %v6741, 0.0
        %v6968 = vmax.f32 %v6743, 0.0
        %v6969 = vmax.f32 %v6751, 0.0
        %v6970 = vmax.f32 %v6759, 0.0
        %v6971 = vmax.f32 %v6758, 0.0
        %v6972 = vmax.f32 %v6760, 0.0
        %v6973 = vmax.f32 %v6768, 0.0
        %v6974 = vmax.f32 %v6776, 0.0
        %v6975 = vmax.f32 %v6775, 0.0
        %v6976 = vmax.f32 %v6777, 0.0
        %v6977 = vmax.f32 %v6785, 0.0
        %v6978 = vmax.f32 %v6793, 0.0
        %v6979 = vmax.f32 %v6792, 0.0
        %v6980 = vmax.f32 %v6794, 0.0
        %v6981 = vmax.f32 %v6801, 0.0
        %v6982 = vmax.f32 %v6802, 0.0
        %s6983 = ssub.s32 %s254, 1
        %v6984 = vstv %s6983
        %v6985 = vadd.s32 %v6984, 1
        %v6986 = vadd.s32 %v6984, 2
        %v6987 = vadd.s32 %v6984, 3
        %v6988 = vadd.s32 %v6984, 4
        %v6989 = vadd.s32 %v6984, 5
        %v6990 = vadd.s32 %v6984, 6
        %v6991 = vadd.s32 %v6984, 7
        %v6992 = vadd.s32 %v6984, 8
        %v6993 = vadd.s32 %v6984, 9
        %v6994 = vlaneseq
        %v6995 = vshrl.u32 %v6994, 7
        %v6996 = vadd.s32 %v6995, 8
        %v6997 = vadd.s32 %v6995, 16
        %v6998 = vsub.s32 %v6995, 1
        %v6999 = vsub.s32 %v6996, 1
        %v7000 = vsub.s32 %v6997, 1
        %vm7001 = vcmp.ge.s32.totalorder %v6984, 0
        %vm7002 = vcmp.ge.s32.totalorder %v6985, 0
        %vm7003 = vcmp.ge.s32.totalorder %v6986, 0
        %vm7004 = vcmp.ge.s32.totalorder %v6987, 0
        %vm7005 = vcmp.ge.s32.totalorder %v6988, 0
        %vm7006 = vcmp.ge.s32.totalorder %v6989, 0
        %vm7007 = vcmp.ge.s32.totalorder %v6990, 0
        %vm7008 = vcmp.ge.s32.totalorder %v6991, 0
        %vm7009 = vcmp.ge.s32.totalorder %v6992, 0
        %vm7010 = vcmp.ge.s32.totalorder %v6993, 0
        %vm7011 = vcmp.lt.s32.totalorder %v6984, 16
        %vm7012 = vcmp.lt.s32.totalorder %v6985, 16
        %vm7013 = vcmp.lt.s32.totalorder %v6986, 16
        %vm7014 = vcmp.lt.s32.totalorder %v6987, 16
        %vm7015 = vcmp.lt.s32.totalorder %v6988, 16
        %vm7016 = vcmp.lt.s32.totalorder %v6989, 16
        %vm7017 = vcmp.lt.s32.totalorder %v6990, 16
        %vm7018 = vcmp.lt.s32.totalorder %v6991, 16
        %vm7019 = vcmp.lt.s32.totalorder %v6992, 16
        %vm7020 = vcmp.lt.s32.totalorder %v6993, 16
        %vm7021 = vmand %vm7001, %vm7011
        %vm7022 = vmand %vm7002, %vm7012
        %vm7023 = vmand %vm7003, %vm7013
        %vm7024 = vmand %vm7004, %vm7014
        %vm7025 = vmand %vm7005, %vm7015
        %vm7026 = vmand %vm7006, %vm7016
        %vm7027 = vmand %vm7007, %vm7017
        %vm7028 = vmand %vm7008, %vm7018
        %vm7029 = vmand %vm7009, %vm7019
        %vm7030 = vmand %vm7010, %vm7020
        %vm7031 = vcmp.ge.s32.totalorder %v6998, 0
        %vm7032 = vcmp.ge.s32.totalorder %v6999, 0
        %vm7033 = vcmp.ge.s32.totalorder %v7000, 0
        %vm7034 = vmand %vm7021, %vm7031
        %vm7035 = vmand %vm7021, %vm7032
        %vm7036 = vmand %vm7021, %vm7033
        %vm7037 = vmand %vm7022, %vm7031
        %vm7038 = vmand %vm7022, %vm7032
        %vm7039 = vmand %vm7022, %vm7033
        %vm7040 = vmand %vm7023, %vm7031
        %vm7041 = vmand %vm7023, %vm7032
        %vm7042 = vmand %vm7023, %vm7033
        %vm7043 = vmand %vm7024, %vm7031
        %vm7044 = vmand %vm7024, %vm7032
        %vm7045 = vmand %vm7024, %vm7033
        %vm7046 = vmand %vm7025, %vm7031
        %vm7047 = vmand %vm7025, %vm7032
        %vm7048 = vmand %vm7025, %vm7033
        %vm7049 = vmand %vm7026, %vm7031
        %vm7050 = vmand %vm7026, %vm7032
        %vm7051 = vmand %vm7026, %vm7033
        %vm7052 = vmand %vm7027, %vm7031
        %vm7053 = vmand %vm7027, %vm7032
        %vm7054 = vmand %vm7027, %vm7033
        %vm7055 = vmand %vm7028, %vm7031
        %vm7056 = vmand %vm7028, %vm7032
        %vm7057 = vmand %vm7028, %vm7033
        %vm7058 = vmand %vm7029, %vm7031
        %vm7059 = vmand %vm7029, %vm7032
        %vm7060 = vmand %vm7029, %vm7033
        %vm7061 = vmand %vm7030, %vm7031
        %vm7062 = vmand %vm7030, %vm7032
        %vm7063 = vmand %vm7030, %vm7033
        %vm7064 = vcmp.lt.s32.totalorder %v6998, 16
        %vm7065 = vcmp.lt.s32.totalorder %v6999, 16
        %vm7066 = vcmp.lt.s32.totalorder %v7000, 16
        %vm7067 = vmand %vm7034, %vm7064
        %vm7068 = vmand %vm7035, %vm7065
        %vm7069 = vmand %vm7036, %vm7066
        %vm7070 = vmand %vm7037, %vm7064
        %vm7071 = vmand %vm7038, %vm7065
        %vm7072 = vmand %vm7039, %vm7066
        %vm7073 = vmand %vm7040, %vm7064
        %vm7074 = vmand %vm7041, %vm7065
        %vm7075 = vmand %vm7042, %vm7066
        %vm7076 = vmand %vm7043, %vm7064
        %vm7077 = vmand %vm7044, %vm7065
        %vm7078 = vmand %vm7045, %vm7066
        %vm7079 = vmand %vm7046, %vm7064
        %vm7080 = vmand %vm7047, %vm7065
        %vm7081 = vmand %vm7048, %vm7066
        %vm7082 = vmand %vm7049, %vm7064
        %vm7083 = vmand %vm7050, %vm7065
        %vm7084 = vmand %vm7051, %vm7066
        %vm7085 = vmand %vm7052, %vm7064
        %vm7086 = vmand %vm7053, %vm7065
        %vm7087 = vmand %vm7054, %vm7066
        %vm7088 = vmand %vm7055, %vm7064
        %vm7089 = vmand %vm7056, %vm7065
        %vm7090 = vmand %vm7057, %vm7066
        %vm7091 = vmand %vm7058, %vm7064
        %vm7092 = vmand %vm7059, %vm7065
        %vm7093 = vmand %vm7060, %vm7066
        %vm7094 = vmand %vm7061, %vm7064
        %vm7095 = vmand %vm7062, %vm7065
        %vm7096 = vmand %vm7063, %vm7066
        %v7097 = vsel %vm7067, 1, 0
        %v7098 = vsel %vm7068, 1, 0
        %v7099 = vsel %vm7069, 1, 0
        %v7100 = vsel %vm7070, 1, 0
        %v7101 = vsel %vm7071, 1, 0
        %v7102 = vsel %vm7072, 1, 0
        %v7103 = vsel %vm7073, 1, 0
        %v7104 = vsel %vm7074, 1, 0
        %v7105 = vsel %vm7075, 1, 0
        %v7106 = vsel %vm7076, 1, 0
        %v7107 = vsel %vm7077, 1, 0
        %v7108 = vsel %vm7078, 1, 0
        %v7109 = vsel %vm7079, 1, 0
        %v7110 = vsel %vm7080, 1, 0
        %v7111 = vsel %vm7081, 1, 0
        %v7112 = vsel %vm7082, 1, 0
        %v7113 = vsel %vm7083, 1, 0
        %v7114 = vsel %vm7084, 1, 0
        %v7115 = vsel %vm7085, 1, 0
        %v7116 = vsel %vm7086, 1, 0
        %v7117 = vsel %vm7087, 1, 0
        %v7118 = vsel %vm7088, 1, 0
        %v7119 = vsel %vm7089, 1, 0
        %v7120 = vsel %vm7090, 1, 0
        %v7121 = vsel %vm7091, 1, 0
        %v7122 = vsel %vm7092, 1, 0
        %v7123 = vsel %vm7093, 1, 0
        %v7124 = vsel %vm7094, 1, 0
        %v7125 = vsel %vm7095, 1, 0
        %v7126 = vsel %vm7096, 1, 0
        %vm7127 = vcmp.eq.s32.totalorder %v7097, 1
        %vm7128 = vcmp.eq.s32.totalorder %v7098, 1
        %vm7129 = vcmp.eq.s32.totalorder %v7099, 1
        %vm7130 = vcmp.eq.s32.totalorder %v7100, 1
        %vm7131 = vcmp.eq.s32.totalorder %v7101, 1
        %vm7132 = vcmp.eq.s32.totalorder %v7102, 1
        %vm7133 = vcmp.eq.s32.totalorder %v7103, 1
        %vm7134 = vcmp.eq.s32.totalorder %v7104, 1
        %vm7135 = vcmp.eq.s32.totalorder %v7105, 1
        %vm7136 = vcmp.eq.s32.totalorder %v7106, 1
        %vm7137 = vcmp.eq.s32.totalorder %v7107, 1
        %vm7138 = vcmp.eq.s32.totalorder %v7108, 1
        %vm7139 = vcmp.eq.s32.totalorder %v7109, 1
        %vm7140 = vcmp.eq.s32.totalorder %v7110, 1
        %vm7141 = vcmp.eq.s32.totalorder %v7111, 1
        %vm7142 = vcmp.eq.s32.totalorder %v7112, 1
        %vm7143 = vcmp.eq.s32.totalorder %v7113, 1
        %vm7144 = vcmp.eq.s32.totalorder %v7114, 1
        %vm7145 = vcmp.eq.s32.totalorder %v7115, 1
        %vm7146 = vcmp.eq.s32.totalorder %v7116, 1
        %vm7147 = vcmp.eq.s32.totalorder %v7117, 1
        %vm7148 = vcmp.eq.s32.totalorder %v7118, 1
        %vm7149 = vcmp.eq.s32.totalorder %v7119, 1
        %vm7150 = vcmp.eq.s32.totalorder %v7120, 1
        %vm7151 = vcmp.eq.s32.totalorder %v7121, 1
        %vm7152 = vcmp.eq.s32.totalorder %v7122, 1
        %vm7153 = vcmp.eq.s32.totalorder %v7123, 1
        %vm7154 = vcmp.eq.s32.totalorder %v7124, 1
        %vm7155 = vcmp.eq.s32.totalorder %v7125, 1
        %vm7156 = vcmp.eq.s32.totalorder %v7126, 1
        %v7247 = vcombine.low %v6893, %v6894
        %v7248 = vcombine.low %v6895, %v6896
        %v7250 = vunpack.c.l.s4 1983009808
        %v7251 = vunpack.c.0.s8 %v7250
        %v7252 = vlaneseq
        %v7253 = vshrl.u32 %v7252, 7
        %v7254 = vsub.s32 %v7251, %v7253
        %v7255 = vrot.slane %v7247, %v7254
        %v7257 = vunpack.c.l.s4 1983009808
        %v7258 = vunpack.c.0.s8 %v7257
        %v7259 = vlaneseq
        %v7260 = vshrl.u32 %v7259, 7
        %v7261 = vsub.s32 %v7258, %v7260
        %v7262 = vrot.slane %v7248, %v7261
        %v7263 = vcombine.low %v7255, %v7262
        %v7264 = vcombine.low %v6897, %v6898
        %v7265 = vcombine.low %v6899, %v6900
        %v7267 = vunpack.c.l.s4 1983009808
        %v7268 = vunpack.c.0.s8 %v7267
        %v7269 = vlaneseq
        %v7270 = vshrl.u32 %v7269, 7
        %v7271 = vsub.s32 %v7268, %v7270
        %v7272 = vrot.slane %v7264, %v7271
        %v7274 = vunpack.c.l.s4 1983009808
        %v7275 = vunpack.c.0.s8 %v7274
        %v7276 = vlaneseq
        %v7277 = vshrl.u32 %v7276, 7
        %v7278 = vsub.s32 %v7275, %v7277
        %v7279 = vrot.slane %v7265, %v7278
        %v7280 = vcombine.low %v7272, %v7279
        %v7282 = vunpack.c.l.s4 1983009808
        %v7283 = vunpack.c.0.s8 %v7282
        %v7284 = vlaneseq
        %v7285 = vshrl.u32 %v7284, 7
        %v7286 = vsub.s32 %v7283, %v7285
        %v7287 = vrot.slane %v6901, %v7286
        %v7288 = vcombine.low %v6902, %v6903
        %v7289 = vcombine.low %v6904, %v6905
        %v7291 = vunpack.c.l.s4 1983009808
        %v7292 = vunpack.c.0.s8 %v7291
        %v7293 = vlaneseq
        %v7294 = vshrl.u32 %v7293, 7
        %v7295 = vsub.s32 %v7292, %v7294
        %v7296 = vrot.slane %v7288, %v7295
        %v7298 = vunpack.c.l.s4 1983009808
        %v7299 = vunpack.c.0.s8 %v7298
        %v7300 = vlaneseq
        %v7301 = vshrl.u32 %v7300, 7
        %v7302 = vsub.s32 %v7299, %v7301
        %v7303 = vrot.slane %v7289, %v7302
        %v7304 = vcombine.low %v7296, %v7303
        %v7305 = vcombine.low %v6906, %v6907
        %v7306 = vcombine.low %v6908, %v6909
        %v7308 = vunpack.c.l.s4 1983009808
        %v7309 = vunpack.c.0.s8 %v7308
        %v7310 = vlaneseq
        %v7311 = vshrl.u32 %v7310, 7
        %v7312 = vsub.s32 %v7309, %v7311
        %v7313 = vrot.slane %v7305, %v7312
        %v7315 = vunpack.c.l.s4 1983009808
        %v7316 = vunpack.c.0.s8 %v7315
        %v7317 = vlaneseq
        %v7318 = vshrl.u32 %v7317, 7
        %v7319 = vsub.s32 %v7316, %v7318
        %v7320 = vrot.slane %v7306, %v7319
        %v7321 = vcombine.low %v7313, %v7320
        %v7323 = vunpack.c.l.s4 1983009808
        %v7324 = vunpack.c.0.s8 %v7323
        %v7325 = vlaneseq
        %v7326 = vshrl.u32 %v7325, 7
        %v7327 = vsub.s32 %v7324, %v7326
        %v7328 = vrot.slane %v6910, %v7327
        %v7329 = vcombine.low %v6911, %v6912
        %v7330 = vcombine.low %v6913, %v6914
        %v7332 = vunpack.c.l.s4 1983009808
        %v7333 = vunpack.c.0.s8 %v7332
        %v7334 = vlaneseq
        %v7335 = vshrl.u32 %v7334, 7
        %v7336 = vsub.s32 %v7333, %v7335
        %v7337 = vrot.slane %v7329, %v7336
        %v7339 = vunpack.c.l.s4 1983009808
        %v7340 = vunpack.c.0.s8 %v7339
        %v7341 = vlaneseq
        %v7342 = vshrl.u32 %v7341, 7
        %v7343 = vsub.s32 %v7340, %v7342
        %v7344 = vrot.slane %v7330, %v7343
        %v7345 = vcombine.low %v7337, %v7344
        %v7346 = vcombine.low %v6915, %v6916
        %v7347 = vcombine.low %v6917, %v6918
        %v7349 = vunpack.c.l.s4 1983009808
        %v7350 = vunpack.c.0.s8 %v7349
        %v7351 = vlaneseq
        %v7352 = vshrl.u32 %v7351, 7
        %v7353 = vsub.s32 %v7350, %v7352
        %v7354 = vrot.slane %v7346, %v7353
        %v7356 = vunpack.c.l.s4 1983009808
        %v7357 = vunpack.c.0.s8 %v7356
        %v7358 = vlaneseq
        %v7359 = vshrl.u32 %v7358, 7
        %v7360 = vsub.s32 %v7357, %v7359
        %v7361 = vrot.slane %v7347, %v7360
        %v7362 = vcombine.low %v7354, %v7361
        %v7364 = vunpack.c.l.s4 1983009808
        %v7365 = vunpack.c.0.s8 %v7364
        %v7366 = vlaneseq
        %v7367 = vshrl.u32 %v7366, 7
        %v7368 = vsub.s32 %v7365, %v7367
        %v7369 = vrot.slane %v6919, %v7368
        %v7370 = vcombine.low %v6920, %v6921
        %v7371 = vcombine.low %v6922, %v6923
        %v7373 = vunpack.c.l.s4 1983009808
        %v7374 = vunpack.c.0.s8 %v7373
        %v7375 = vlaneseq
        %v7376 = vshrl.u32 %v7375, 7
        %v7377 = vsub.s32 %v7374, %v7376
        %v7378 = vrot.slane %v7370, %v7377
        %v7380 = vunpack.c.l.s4 1983009808
        %v7381 = vunpack.c.0.s8 %v7380
        %v7382 = vlaneseq
        %v7383 = vshrl.u32 %v7382, 7
        %v7384 = vsub.s32 %v7381, %v7383
        %v7385 = vrot.slane %v7371, %v7384
        %v7386 = vcombine.low %v7378, %v7385
        %v7387 = vcombine.low %v6924, %v6925
        %v7388 = vcombine.low %v6926, %v6927
        %v7390 = vunpack.c.l.s4 1983009808
        %v7391 = vunpack.c.0.s8 %v7390
        %v7392 = vlaneseq
        %v7393 = vshrl.u32 %v7392, 7
        %v7394 = vsub.s32 %v7391, %v7393
        %v7395 = vrot.slane %v7387, %v7394
        %v7397 = vunpack.c.l.s4 1983009808
        %v7398 = vunpack.c.0.s8 %v7397
        %v7399 = vlaneseq
        %v7400 = vshrl.u32 %v7399, 7
        %v7401 = vsub.s32 %v7398, %v7400
        %v7402 = vrot.slane %v7388, %v7401
        %v7403 = vcombine.low %v7395, %v7402
        %v7405 = vunpack.c.l.s4 1983009808
        %v7406 = vunpack.c.0.s8 %v7405
        %v7407 = vlaneseq
        %v7408 = vshrl.u32 %v7407, 7
        %v7409 = vsub.s32 %v7406, %v7408
        %v7410 = vrot.slane %v6928, %v7409
        %v7411 = vcombine.low %v6929, %v6930
        %v7412 = vcombine.low %v6931, %v6932
        %v7414 = vunpack.c.l.s4 1983009808
        %v7415 = vunpack.c.0.s8 %v7414
        %v7416 = vlaneseq
        %v7417 = vshrl.u32 %v7416, 7
        %v7418 = vsub.s32 %v7415, %v7417
        %v7419 = vrot.slane %v7411, %v7418
        %v7421 = vunpack.c.l.s4 1983009808
        %v7422 = vunpack.c.0.s8 %v7421
        %v7423 = vlaneseq
        %v7424 = vshrl.u32 %v7423, 7
        %v7425 = vsub.s32 %v7422, %v7424
        %v7426 = vrot.slane %v7412, %v7425
        %v7427 = vcombine.low %v7419, %v7426
        %v7428 = vcombine.low %v6933, %v6934
        %v7429 = vcombine.low %v6935, %v6936
        %v7431 = vunpack.c.l.s4 1983009808
        %v7432 = vunpack.c.0.s8 %v7431
        %v7433 = vlaneseq
        %v7434 = vshrl.u32 %v7433, 7
        %v7435 = vsub.s32 %v7432, %v7434
        %v7436 = vrot.slane %v7428, %v7435
        %v7438 = vunpack.c.l.s4 1983009808
        %v7439 = vunpack.c.0.s8 %v7438
        %v7440 = vlaneseq
        %v7441 = vshrl.u32 %v7440, 7
        %v7442 = vsub.s32 %v7439, %v7441
        %v7443 = vrot.slane %v7429, %v7442
        %v7444 = vcombine.low %v7436, %v7443
        %v7446 = vunpack.c.l.s4 1983009808
        %v7447 = vunpack.c.0.s8 %v7446
        %v7448 = vlaneseq
        %v7449 = vshrl.u32 %v7448, 7
        %v7450 = vsub.s32 %v7447, %v7449
        %v7451 = vrot.slane %v6937, %v7450
        %v7452 = vcombine.low %v6938, %v6939
        %v7453 = vcombine.low %v6940, %v6941
        %v7455 = vunpack.c.l.s4 1983009808
        %v7456 = vunpack.c.0.s8 %v7455
        %v7457 = vlaneseq
        %v7458 = vshrl.u32 %v7457, 7
        %v7459 = vsub.s32 %v7456, %v7458
        %v7460 = vrot.slane %v7452, %v7459
        %v7462 = vunpack.c.l.s4 1983009808
        %v7463 = vunpack.c.0.s8 %v7462
        %v7464 = vlaneseq
        %v7465 = vshrl.u32 %v7464, 7
        %v7466 = vsub.s32 %v7463, %v7465
        %v7467 = vrot.slane %v7453, %v7466
        %v7468 = vcombine.low %v7460, %v7467
        %v7469 = vcombine.low %v6942, %v6943
        %v7470 = vcombine.low %v6944, %v6945
        %v7472 = vunpack.c.l.s4 1983009808
        %v7473 = vunpack.c.0.s8 %v7472
        %v7474 = vlaneseq
        %v7475 = vshrl.u32 %v7474, 7
        %v7476 = vsub.s32 %v7473, %v7475
        %v7477 = vrot.slane %v7469, %v7476
        %v7479 = vunpack.c.l.s4 1983009808
        %v7480 = vunpack.c.0.s8 %v7479
        %v7481 = vlaneseq
        %v7482 = vshrl.u32 %v7481, 7
        %v7483 = vsub.s32 %v7480, %v7482
        %v7484 = vrot.slane %v7470, %v7483
        %v7485 = vcombine.low %v7477, %v7484
        %v7487 = vunpack.c.l.s4 1983009808
        %v7488 = vunpack.c.0.s8 %v7487
        %v7489 = vlaneseq
        %v7490 = vshrl.u32 %v7489, 7
        %v7491 = vsub.s32 %v7488, %v7490
        %v7492 = vrot.slane %v6946, %v7491
        %v7493 = vcombine.low %v6947, %v6948
        %v7494 = vcombine.low %v6949, %v6950
        %v7496 = vunpack.c.l.s4 1983009808
        %v7497 = vunpack.c.0.s8 %v7496
        %v7498 = vlaneseq
        %v7499 = vshrl.u32 %v7498, 7
        %v7500 = vsub.s32 %v7497, %v7499
        %v7501 = vrot.slane %v7493, %v7500
        %v7503 = vunpack.c.l.s4 1983009808
        %v7504 = vunpack.c.0.s8 %v7503
        %v7505 = vlaneseq
        %v7506 = vshrl.u32 %v7505, 7
        %v7507 = vsub.s32 %v7504, %v7506
        %v7508 = vrot.slane %v7494, %v7507
        %v7509 = vcombine.low %v7501, %v7508
        %v7510 = vcombine.low %v6951, %v6952
        %v7511 = vcombine.low %v6953, %v6954
        %v7513 = vunpack.c.l.s4 1983009808
        %v7514 = vunpack.c.0.s8 %v7513
        %v7515 = vlaneseq
        %v7516 = vshrl.u32 %v7515, 7
        %v7517 = vsub.s32 %v7514, %v7516
        %v7518 = vrot.slane %v7510, %v7517
        %v7520 = vunpack.c.l.s4 1983009808
        %v7521 = vunpack.c.0.s8 %v7520
        %v7522 = vlaneseq
        %v7523 = vshrl.u32 %v7522, 7
        %v7524 = vsub.s32 %v7521, %v7523
        %v7525 = vrot.slane %v7511, %v7524
        %v7526 = vcombine.low %v7518, %v7525
        %v7528 = vunpack.c.l.s4 1983009808
        %v7529 = vunpack.c.0.s8 %v7528
        %v7530 = vlaneseq
        %v7531 = vshrl.u32 %v7530, 7
        %v7532 = vsub.s32 %v7529, %v7531
        %v7533 = vrot.slane %v6955, %v7532
        %v7534 = vcombine.low %v6956, %v6957
        %v7535 = vcombine.low %v6958, %v6959
        %v7537 = vunpack.c.l.s4 1983009808
        %v7538 = vunpack.c.0.s8 %v7537
        %v7539 = vlaneseq
        %v7540 = vshrl.u32 %v7539, 7
        %v7541 = vsub.s32 %v7538, %v7540
        %v7542 = vrot.slane %v7534, %v7541
        %v7544 = vunpack.c.l.s4 1983009808
        %v7545 = vunpack.c.0.s8 %v7544
        %v7546 = vlaneseq
        %v7547 = vshrl.u32 %v7546, 7
        %v7548 = vsub.s32 %v7545, %v7547
        %v7549 = vrot.slane %v7535, %v7548
        %v7550 = vcombine.low %v7542, %v7549
        %v7551 = vcombine.low %v6960, %v6961
        %v7552 = vcombine.low %v6962, %v6963
        %v7554 = vunpack.c.l.s4 1983009808
        %v7555 = vunpack.c.0.s8 %v7554
        %v7556 = vlaneseq
        %v7557 = vshrl.u32 %v7556, 7
        %v7558 = vsub.s32 %v7555, %v7557
        %v7559 = vrot.slane %v7551, %v7558
        %v7561 = vunpack.c.l.s4 1983009808
        %v7562 = vunpack.c.0.s8 %v7561
        %v7563 = vlaneseq
        %v7564 = vshrl.u32 %v7563, 7
        %v7565 = vsub.s32 %v7562, %v7564
        %v7566 = vrot.slane %v7552, %v7565
        %v7567 = vcombine.low %v7559, %v7566
        %v7569 = vunpack.c.l.s4 1983009808
        %v7570 = vunpack.c.0.s8 %v7569
        %v7571 = vlaneseq
        %v7572 = vshrl.u32 %v7571, 7
        %v7573 = vsub.s32 %v7570, %v7572
        %v7574 = vrot.slane %v6964, %v7573
        %v7575 = vcombine.low %v6965, %v6966
        %v7576 = vcombine.low %v6967, %v6968
        %v7578 = vunpack.c.l.s4 1983009808
        %v7579 = vunpack.c.0.s8 %v7578
        %v7580 = vlaneseq
        %v7581 = vshrl.u32 %v7580, 7
        %v7582 = vsub.s32 %v7579, %v7581
        %v7583 = vrot.slane %v7575, %v7582
        %v7585 = vunpack.c.l.s4 1983009808
        %v7586 = vunpack.c.0.s8 %v7585
        %v7587 = vlaneseq
        %v7588 = vshrl.u32 %v7587, 7
        %v7589 = vsub.s32 %v7586, %v7588
        %v7590 = vrot.slane %v7576, %v7589
        %v7591 = vcombine.low %v7583, %v7590
        %v7592 = vcombine.low %v6969, %v6970
        %v7593 = vcombine.low %v6971, %v6972
        %v7595 = vunpack.c.l.s4 1983009808
        %v7596 = vunpack.c.0.s8 %v7595
        %v7597 = vlaneseq
        %v7598 = vshrl.u32 %v7597, 7
        %v7599 = vsub.s32 %v7596, %v7598
        %v7600 = vrot.slane %v7592, %v7599
        %v7602 = vunpack.c.l.s4 1983009808
        %v7603 = vunpack.c.0.s8 %v7602
        %v7604 = vlaneseq
        %v7605 = vshrl.u32 %v7604, 7
        %v7606 = vsub.s32 %v7603, %v7605
        %v7607 = vrot.slane %v7593, %v7606
        %v7608 = vcombine.low %v7600, %v7607
        %v7610 = vunpack.c.l.s4 1983009808
        %v7611 = vunpack.c.0.s8 %v7610
        %v7612 = vlaneseq
        %v7613 = vshrl.u32 %v7612, 7
        %v7614 = vsub.s32 %v7611, %v7613
        %v7615 = vrot.slane %v6973, %v7614
        %v7616 = vcombine.low %v6974, %v6975
        %v7617 = vcombine.low %v6976, %v6977
        %v7619 = vunpack.c.l.s4 1983009808
        %v7620 = vunpack.c.0.s8 %v7619
        %v7621 = vlaneseq
        %v7622 = vshrl.u32 %v7621, 7
        %v7623 = vsub.s32 %v7620, %v7622
        %v7624 = vrot.slane %v7616, %v7623
        %v7626 = vunpack.c.l.s4 1983009808
        %v7627 = vunpack.c.0.s8 %v7626
        %v7628 = vlaneseq
        %v7629 = vshrl.u32 %v7628, 7
        %v7630 = vsub.s32 %v7627, %v7629
        %v7631 = vrot.slane %v7617, %v7630
        %v7632 = vcombine.low %v7624, %v7631
        %v7633 = vcombine.low %v6978, %v6979
        %v7634 = vcombine.low %v6980, %v6981
        %v7636 = vunpack.c.l.s4 1983009808
        %v7637 = vunpack.c.0.s8 %v7636
        %v7638 = vlaneseq
        %v7639 = vshrl.u32 %v7638, 7
        %v7640 = vsub.s32 %v7637, %v7639
        %v7641 = vrot.slane %v7633, %v7640
        %v7643 = vunpack.c.l.s4 1983009808
        %v7644 = vunpack.c.0.s8 %v7643
        %v7645 = vlaneseq
        %v7646 = vshrl.u32 %v7645, 7
        %v7647 = vsub.s32 %v7644, %v7646
        %v7648 = vrot.slane %v7634, %v7647
        %v7649 = vcombine.low %v7641, %v7648
        %v7651 = vunpack.c.l.s4 1983009808
        %v7652 = vunpack.c.0.s8 %v7651
        %v7653 = vlaneseq
        %v7654 = vshrl.u32 %v7653, 7
        %v7655 = vsub.s32 %v7652, %v7654
        %v7656 = vrot.slane %v6982, %v7655
        %v7687 = vsel %vm7127, %v7263, 0.0
        %v7688 = vsel %vm7128, %v7280, 0.0
        %v7689 = vsel %vm7129, %v7287, 0.0
        %v7690 = vsel %vm7130, %v7304, 0.0
        %v7691 = vsel %vm7131, %v7321, 0.0
        %v7692 = vsel %vm7132, %v7328, 0.0
        %v7693 = vsel %vm7133, %v7345, 0.0
        %v7694 = vsel %vm7134, %v7362, 0.0
        %v7695 = vsel %vm7135, %v7369, 0.0
        %v7696 = vsel %vm7136, %v7386, 0.0
        %v7697 = vsel %vm7137, %v7403, 0.0
        %v7698 = vsel %vm7138, %v7410, 0.0
        %v7699 = vsel %vm7139, %v7427, 0.0
        %v7700 = vsel %vm7140, %v7444, 0.0
        %v7701 = vsel %vm7141, %v7451, 0.0
        %v7702 = vsel %vm7142, %v7468, 0.0
        %v7703 = vsel %vm7143, %v7485, 0.0
        %v7704 = vsel %vm7144, %v7492, 0.0
        %v7705 = vsel %vm7145, %v7509, 0.0
        %v7706 = vsel %vm7146, %v7526, 0.0
        %v7707 = vsel %vm7147, %v7533, 0.0
        %v7708 = vsel %vm7148, %v7550, 0.0
        %v7709 = vsel %vm7149, %v7567, 0.0
        %v7710 = vsel %vm7150, %v7574, 0.0
        %v7711 = vsel %vm7151, %v7591, 0.0
        %v7712 = vsel %vm7152, %v7608, 0.0
        %v7713 = vsel %vm7153, %v7615, 0.0
        %v7714 = vsel %vm7154, %v7632, 0.0
        %v7715 = vsel %vm7155, %v7649, 0.0
        %v7716 = vsel %vm7156, %v7656, 0.0
        %v7717 = vpack.c.bf16 %v7688, %v7687
        %v7718 = vpack.c.bf16 %v7689, %v7689
        %v7719 = vpack.c.bf16 %v7691, %v7690
        %v7720 = vpack.c.bf16 %v7692, %v7692
        %v7721 = vpack.c.bf16 %v7694, %v7693
        %v7722 = vpack.c.bf16 %v7695, %v7695
        %v7723 = vpack.c.bf16 %v7697, %v7696
        %v7724 = vpack.c.bf16 %v7698, %v7698
        %v7725 = vpack.c.bf16 %v7700, %v7699
        %v7726 = vpack.c.bf16 %v7701, %v7701
        %v7727 = vpack.c.bf16 %v7703, %v7702
        %v7728 = vpack.c.bf16 %v7704, %v7704
        %v7729 = vpack.c.bf16 %v7706, %v7705
        %v7730 = vpack.c.bf16 %v7707, %v7707
        %v7731 = vpack.c.bf16 %v7709, %v7708
        %v7732 = vpack.c.bf16 %v7710, %v7710
        %v7733 = vpack.c.bf16 %v7712, %v7711
        %v7734 = vpack.c.bf16 %v7713, %v7713
        %v7735 = vpack.c.bf16 %v7715, %v7714
        %v7736 = vpack.c.bf16 %v7716, %v7716
        %v7738 = vshrl.u32 %v7717, 16
        %v7740 = vshll.u32 %v7717, 16
        %v7742 = vrot.slane %v7740, 1
        %v7743 = vor.u32 %v7738, %v7742
        %v7745 = vshll.u32 %v7718, 16
        %v7747 = vrot.slane %v7745, 1
        %v7748 = vsel %vm374, %v7743, %v7747
        %v7750 = vshrl.u32 %v7719, 16
        %v7752 = vshll.u32 %v7719, 16
        %v7754 = vrot.slane %v7752, 1
        %v7755 = vor.u32 %v7750, %v7754
        %v7757 = vshll.u32 %v7720, 16
        %v7759 = vrot.slane %v7757, 1
        %v7760 = vsel %vm374, %v7755, %v7759
        %v7762 = vshrl.u32 %v7721, 16
        %v7764 = vshll.u32 %v7721, 16
        %v7766 = vrot.slane %v7764, 1
        %v7767 = vor.u32 %v7762, %v7766
        %v7769 = vshll.u32 %v7722, 16
        %v7771 = vrot.slane %v7769, 1
        %v7772 = vsel %vm374, %v7767, %v7771
        %v7774 = vshrl.u32 %v7723, 16
        %v7776 = vshll.u32 %v7723, 16
        %v7778 = vrot.slane %v7776, 1
        %v7779 = vor.u32 %v7774, %v7778
        %v7781 = vshll.u32 %v7724, 16
        %v7783 = vrot.slane %v7781, 1
        %v7784 = vsel %vm374, %v7779, %v7783
        %v7786 = vshrl.u32 %v7725, 16
        %v7788 = vshll.u32 %v7725, 16
        %v7790 = vrot.slane %v7788, 1
        %v7791 = vor.u32 %v7786, %v7790
        %v7793 = vshll.u32 %v7726, 16
        %v7795 = vrot.slane %v7793, 1
        %v7796 = vsel %vm374, %v7791, %v7795
        %v7798 = vshrl.u32 %v7727, 16
        %v7800 = vshll.u32 %v7727, 16
        %v7802 = vrot.slane %v7800, 1
        %v7803 = vor.u32 %v7798, %v7802
        %v7805 = vshll.u32 %v7728, 16
        %v7807 = vrot.slane %v7805, 1
        %v7808 = vsel %vm374, %v7803, %v7807
        %v7810 = vshrl.u32 %v7729, 16
        %v7812 = vshll.u32 %v7729, 16
        %v7814 = vrot.slane %v7812, 1
        %v7815 = vor.u32 %v7810, %v7814
        %v7817 = vshll.u32 %v7730, 16
        %v7819 = vrot.slane %v7817, 1
        %v7820 = vsel %vm374, %v7815, %v7819
        %v7822 = vshrl.u32 %v7731, 16
        %v7824 = vshll.u32 %v7731, 16
        %v7826 = vrot.slane %v7824, 1
        %v7827 = vor.u32 %v7822, %v7826
        %v7829 = vshll.u32 %v7732, 16
        %v7831 = vrot.slane %v7829, 1
        %v7832 = vsel %vm374, %v7827, %v7831
        %v7857 = vrot.slane %v7717, 1
        %v7858 = vrot.slane %v7718, 1
        %v7859 = vsel %vm525, %v7857, %v7858
        %v7860 = vrot.slane %v7719, 1
        %v7861 = vrot.slane %v7720, 1
        %v7862 = vsel %vm525, %v7860, %v7861
        %v7863 = vrot.slane %v7721, 1
        %v7864 = vrot.slane %v7722, 1
        %v7865 = vsel %vm525, %v7863, %v7864
        %v7866 = vrot.slane %v7723, 1
        %v7867 = vrot.slane %v7724, 1
        %v7868 = vsel %vm525, %v7866, %v7867
        %v7869 = vrot.slane %v7725, 1
        %v7870 = vrot.slane %v7726, 1
        %v7871 = vsel %vm525, %v7869, %v7870
        %v7872 = vrot.slane %v7727, 1
        %v7873 = vrot.slane %v7728, 1
        %v7874 = vsel %vm525, %v7872, %v7873
        %v7875 = vrot.slane %v7729, 1
        %v7876 = vrot.slane %v7730, 1
        %v7877 = vsel %vm525, %v7875, %v7876
        %v7878 = vrot.slane %v7731, 1
        %v7879 = vrot.slane %v7732, 1
        %v7880 = vsel %vm525, %v7878, %v7879
        %v7890 = vshrl.u32 %v7733, 16
        %v7892 = vshll.u32 %v7733, 16
        %v7894 = vrot.slane %v7892, 1
        %v7895 = vor.u32 %v7890, %v7894
        %v7897 = vshll.u32 %v7734, 16
        %v7899 = vrot.slane %v7897, 1
        %v7900 = vsel %vm374, %v7895, %v7899
        %v7904 = vrot.slane %v7733, 1
        %v7905 = vrot.slane %v7734, 1
        %v7906 = vsel %vm525, %v7904, %v7905
        %v7909 = vshrl.u32 %v7735, 16
        %v7911 = vshll.u32 %v7735, 16
        %v7913 = vrot.slane %v7911, 1
        %v7914 = vor.u32 %v7909, %v7913
        %v7916 = vshll.u32 %v7736, 16
        %v7918 = vrot.slane %v7916, 1
        %v7919 = vsel %vm374, %v7914, %v7918
        %v7923 = vrot.slane %v7735, 1
        %v7924 = vrot.slane %v7736, 1
        %v7925 = vsel %vm525, %v7923, %v7924
        %v7927 = vld [vmem:[#allocation2] sm:$0xf]
        %v7928 = vld [vmem:[#allocation2 + $0x4] sm:$0xf]
        %v7929 = vld [vmem:[#allocation2 + $0x8] sm:$0xf]
        %v7930 = vld [vmem:[#allocation2 + $0xc] sm:$0xf]
        %v7931 = vld [vmem:[#allocation2 + $0x10] sm:$0xf]
        %v7932 = vld [vmem:[#allocation2 + $0x14] sm:$0xf]
        %v7933 = vld [vmem:[#allocation2 + $0x18] sm:$0xf]
        %v7934 = vld [vmem:[#allocation2 + $0x1c] sm:$0xf]
        %v7935 = vld [vmem:[#allocation2 + $0x20] sm:$0xf]
        %v7936 = vld [vmem:[#allocation2 + $0x24] sm:$0xf]
        %v7937 = vld [vmem:[#allocation2 + $0x28] sm:$0xf]
        %v7938 = vld [vmem:[#allocation2 + $0x2c] sm:$0xf]
        %v7939 = vld [vmem:[#allocation2 + $0x30] sm:$0xf]
        %v7940 = vld [vmem:[#allocation2 + $0x34] sm:$0xf]
        %v7941 = vld [vmem:[#allocation2 + $0x38] sm:$0xf]
        %v7942 = vld [vmem:[#allocation2 + $0x3c] sm:$0xf]
        %v7943 = vld [vmem:[#allocation2 + $0x40] sm:$0xf]
        %v7944 = vld [vmem:[#allocation2 + $0x44] sm:$0xf]
        %v7945 = vld [vmem:[#allocation2 + $0x48] sm:$0xf]
        %v7946 = vld [vmem:[#allocation2 + $0x4c] sm:$0xf]
        %v7947 = vld [vmem:[#allocation2 + $0x50] sm:$0xf]
        %v7948 = vld [vmem:[#allocation2 + $0x54] sm:$0xf]
        %v7949 = vld [vmem:[#allocation2 + $0x58] sm:$0xf]
        %v7950 = vld [vmem:[#allocation2 + $0x5c] sm:$0xf]
        %v7951 = vld [vmem:[#allocation2 + $0x60] sm:$0xf]
        %v7952 = vld [vmem:[#allocation2 + $0x64] sm:$0xf]
        %v7953 = vld [vmem:[#allocation2 + $0x68] sm:$0xf]
        %v7954 = vld [vmem:[#allocation2 + $0x6c] sm:$0xf]
        %v7955 = vld [vmem:[#allocation2 + $0x70] sm:$0xf]
        %v7956 = vld [vmem:[#allocation2 + $0x74] sm:$0xf]
        %v7957 = vld [vmem:[#allocation2 + $0x78] sm:$0xf]
        %v7958 = vld [vmem:[#allocation2 + $0x7c] sm:$0xf]
        %v7959 = vld [vmem:[#allocation2 + $0x80] sm:$0xf]
        %v7960 = vld [vmem:[#allocation2 + $0x84] sm:$0xf]
        %v7961 = vld [vmem:[#allocation2 + $0x88] sm:$0xf]
        %v7962 = vld [vmem:[#allocation2 + $0x8c] sm:$0xf]
        %v7963 = vld [vmem:[#allocation2 + $0x90] sm:$0xf]
        %v7964 = vld [vmem:[#allocation2 + $0x94] sm:$0xf]
        %v7965 = vld [vmem:[#allocation2 + $0x98] sm:$0xf]
        %v7966 = vld [vmem:[#allocation2 + $0x9c] sm:$0xf]
        %v7967 = vld [vmem:[#allocation2 + $0xa0] sm:$0xf]
        %v7968 = vld [vmem:[#allocation2 + $0xa4] sm:$0xf]
        %v7969 = vld [vmem:[#allocation2 + $0xa8] sm:$0xf]
        %v7970 = vld [vmem:[#allocation2 + $0xac] sm:$0xf]
        %v7971 = vld [vmem:[#allocation2 + $0xb0] sm:$0xf]
        %v7972 = vld [vmem:[#allocation2 + $0xb4] sm:$0xf]
        %v7973 = vld [vmem:[#allocation2 + $0xb8] sm:$0xf]
        %v7974 = vld [vmem:[#allocation2 + $0xbc] sm:$0xf]
        %v7975 = vld [vmem:[#allocation2 + $0xc0] sm:$0xf]
        %v7976 = vld [vmem:[#allocation2 + $0xc4] sm:$0xf]
        %v7977 = vld [vmem:[#allocation2 + $0xc8] sm:$0xf]
        %v7978 = vld [vmem:[#allocation2 + $0xcc] sm:$0xf]
        %v7979 = vld [vmem:[#allocation2 + $0xd0] sm:$0xf]
        %v7980 = vld [vmem:[#allocation2 + $0xd4] sm:$0xf]
        %v7981 = vld [vmem:[#allocation2 + $0xd8] sm:$0xf]
        %v7982 = vld [vmem:[#allocation2 + $0xdc] sm:$0xf]
        %v7983 = vld [vmem:[#allocation2 + $0xe0] sm:$0xf]
        %v7984 = vld [vmem:[#allocation2 + $0xe4] sm:$0xf]
        %v7985 = vld [vmem:[#allocation2 + $0xe8] sm:$0xf]
        %v7986 = vld [vmem:[#allocation2 + $0xec] sm:$0xf]
        %v7987 = vld [vmem:[#allocation2 + $0xf0] sm:$0xf]
        %v7988 = vld [vmem:[#allocation2 + $0xf4] sm:$0xf]
        %v7989 = vld [vmem:[#allocation2 + $0xf8] sm:$0xf]
        %v7990 = vld [vmem:[#allocation2 + $0xfc] sm:$0xf]
        %v7991 = vld [vmem:[#allocation2 + $0x100] sm:$0xf]
        %v7992 = vld [vmem:[#allocation2 + $0x104] sm:$0xf]
        %v7993 = vld [vmem:[#allocation2 + $0x108] sm:$0xf]
        %v7994 = vld [vmem:[#allocation2 + $0x10c] sm:$0xf]
        %v7995 = vld [vmem:[#allocation2 + $0x110] sm:$0xf]
        %v7996 = vld [vmem:[#allocation2 + $0x114] sm:$0xf]
        %v7997 = vld [vmem:[#allocation2 + $0x118] sm:$0xf]
        %v7998 = vld [vmem:[#allocation2 + $0x11c] sm:$0xf]
        %v7999 = vld [vmem:[#allocation2 + $0x120] sm:$0xf]
        %v8000 = vld [vmem:[#allocation2 + $0x124] sm:$0xf]
        %v8001 = vld [vmem:[#allocation2 + $0x128] sm:$0xf]
        %v8002 = vld [vmem:[#allocation2 + $0x12c] sm:$0xf]
        %v8003 = vld [vmem:[#allocation2 + $0x130] sm:$0xf]
        %v8004 = vld [vmem:[#allocation2 + $0x134] sm:$0xf]
        %v8005 = vld [vmem:[#allocation2 + $0x138] sm:$0xf]
        %v8006 = vld [vmem:[#allocation2 + $0x13c] sm:$0xf]
        %v8007 = vld [vmem:[#allocation2 + $0x140] sm:$0xf]
        %v8008 = vld [vmem:[#allocation2 + $0x144] sm:$0xf]
        %v8009 = vld [vmem:[#allocation2 + $0x148] sm:$0xf]
        %v8010 = vld [vmem:[#allocation2 + $0x14c] sm:$0xf]
        %v8011 = vld [vmem:[#allocation2 + $0x150] sm:$0xf]
        %v8012 = vld [vmem:[#allocation2 + $0x154] sm:$0xf]
        %v8013 = vld [vmem:[#allocation2 + $0x158] sm:$0xf]
        %v8014 = vld [vmem:[#allocation2 + $0x15c] sm:$0xf]
        %v8015 = vld [vmem:[#allocation2 + $0x160] sm:$0xf]
        %v8016 = vld [vmem:[#allocation2 + $0x164] sm:$0xf]
        %v8017 = vld [vmem:[#allocation2 + $0x168] sm:$0xf]
        %v8018 = vld [vmem:[#allocation2 + $0x16c] sm:$0xf]
        %v8019 = vld [vmem:[#allocation2 + $0x170] sm:$0xf]
        %v8020 = vld [vmem:[#allocation2 + $0x174] sm:$0xf]
        %v8021 = vld [vmem:[#allocation2 + $0x178] sm:$0xf]
        %v8022 = vld [vmem:[#allocation2 + $0x17c] sm:$0xf]
        %v8023 = vld [vmem:[#allocation2 + $0x180] sm:$0xf]
        %v8024 = vld [vmem:[#allocation2 + $0x184] sm:$0xf]
        %v8025 = vld [vmem:[#allocation2 + $0x188] sm:$0xf]
        %v8026 = vld [vmem:[#allocation2 + $0x18c] sm:$0xf]
        %v8027 = vld [vmem:[#allocation2 + $0x190] sm:$0xf]
        %v8028 = vld [vmem:[#allocation2 + $0x194] sm:$0xf]
        %v8029 = vld [vmem:[#allocation2 + $0x198] sm:$0xf]
        %v8030 = vld [vmem:[#allocation2 + $0x19c] sm:$0xf]
        %v8031 = vld [vmem:[#allocation2 + $0x1a0] sm:$0xf]
        %v8032 = vld [vmem:[#allocation2 + $0x1a4] sm:$0xf]
        %v8033 = vld [vmem:[#allocation2 + $0x1a8] sm:$0xf]
        %v8034 = vld [vmem:[#allocation2 + $0x1ac] sm:$0xf]
        %v8035 = vld [vmem:[#allocation2 + $0x1b0] sm:$0xf]
        %v8036 = vld [vmem:[#allocation2 + $0x1b4] sm:$0xf]
        %v8037 = vld [vmem:[#allocation2 + $0x1b8] sm:$0xf]
        %v8038 = vld [vmem:[#allocation2 + $0x1bc] sm:$0xf]
        %v8039 = vld [vmem:[#allocation2 + $0x1c0] sm:$0xf]
        %v8040 = vld [vmem:[#allocation2 + $0x1c4] sm:$0xf]
        %v8041 = vld [vmem:[#allocation2 + $0x1c8] sm:$0xf]
        %v8042 = vld [vmem:[#allocation2 + $0x1cc] sm:$0xf]
        %v8043 = vld [vmem:[#allocation2 + $0x1d0] sm:$0xf]
        %v8044 = vld [vmem:[#allocation2 + $0x1d4] sm:$0xf]
        %v8045 = vld [vmem:[#allocation2 + $0x1d8] sm:$0xf]
        %v8046 = vld [vmem:[#allocation2 + $0x1dc] sm:$0xf]
        %v8047 = vld [vmem:[#allocation2 + $0x1e0] sm:$0xf]
        %v8048 = vld [vmem:[#allocation2 + $0x1e4] sm:$0xf]
        %v8049 = vld [vmem:[#allocation2 + $0x1e8] sm:$0xf]
        %v8050 = vld [vmem:[#allocation2 + $0x1ec] sm:$0xf]
        %v8051 = vld [vmem:[#allocation2 + $0x1f0] sm:$0xf]
        %v8052 = vld [vmem:[#allocation2 + $0x1f4] sm:$0xf]
        %v8053 = vld [vmem:[#allocation2 + $0x1f8] sm:$0xf]
        %v8054 = vld [vmem:[#allocation2 + $0x1fc] sm:$0xf]
        %v8055 = vld [vmem:[#allocation2 + $0x200] sm:$0xf]
        %v8056 = vld [vmem:[#allocation2 + $0x204] sm:$0xf]
        %v8057 = vld [vmem:[#allocation2 + $0x208] sm:$0xf]
        %v8058 = vld [vmem:[#allocation2 + $0x20c] sm:$0xf]
        %v8059 = vld [vmem:[#allocation2 + $0x210] sm:$0xf]
        %v8060 = vld [vmem:[#allocation2 + $0x214] sm:$0xf]
        %v8061 = vld [vmem:[#allocation2 + $0x218] sm:$0xf]
        %v8062 = vld [vmem:[#allocation2 + $0x21c] sm:$0xf]
        %v8063 = vld [vmem:[#allocation2 + $0x220] sm:$0xf]
        %v8064 = vld [vmem:[#allocation2 + $0x224] sm:$0xf]
        %v8065 = vld [vmem:[#allocation2 + $0x228] sm:$0xf]
        %v8066 = vld [vmem:[#allocation2 + $0x22c] sm:$0xf]
        %v8067 = vld [vmem:[#allocation2 + $0x230] sm:$0xf]
        %v8068 = vld [vmem:[#allocation2 + $0x234] sm:$0xf]
        %v8069 = vld [vmem:[#allocation2 + $0x238] sm:$0xf]
        %v8070 = vld [vmem:[#allocation2 + $0x23c] sm:$0xf]
        %v8071 = vld [vmem:[%s4] sm:$0x1]
        %v8073 = vlaneseq
        %v8074 = vshrl.u32 %v8073, 7
        %v8075 = vsub.s32 0, %v8074
        %v8076 = vrot.slane %v8071, %v8075
        %v8222 = vunpack.c.l.b16 %v7927
        %v8223 = vunpack.c.l.b16 %v7928
        %v8224 = vunpack.c.l.b16 %v7929
        %v8225 = vunpack.c.l.b16 %v7930
        %v8226 = vunpack.c.l.b16 %v7931
        %v8227 = vunpack.c.l.b16 %v7932
        %v8228 = vunpack.c.l.b16 %v7933
        %v8229 = vunpack.c.l.b16 %v7934
        %v8230 = vunpack.c.l.b16 %v7935
        %v8231 = vunpack.c.l.b16 %v7936
        %v8232 = vunpack.c.l.b16 %v7937
        %v8233 = vunpack.c.l.b16 %v7938
        %v8234 = vunpack.c.l.b16 %v7939
        %v8235 = vunpack.c.l.b16 %v7940
        %v8236 = vunpack.c.l.b16 %v7941
        %v8237 = vunpack.c.l.b16 %v7942
        %v8238 = vunpack.c.l.b16 %v7943
        %v8239 = vunpack.c.l.b16 %v7944
        %v8240 = vunpack.c.l.b16 %v7945
        %v8241 = vunpack.c.l.b16 %v7946
        %v8242 = vunpack.c.l.b16 %v7947
        %v8243 = vunpack.c.l.b16 %v7948
        %v8244 = vunpack.c.l.b16 %v7949
        %v8245 = vunpack.c.l.b16 %v7950
        %v8246 = vunpack.c.l.b16 %v7951
        %v8247 = vunpack.c.l.b16 %v7952
        %v8248 = vunpack.c.l.b16 %v7953
        %v8249 = vunpack.c.l.b16 %v7954
        %v8250 = vunpack.c.l.b16 %v7955
        %v8251 = vunpack.c.l.b16 %v7956
        %v8252 = vunpack.c.l.b16 %v7957
        %v8253 = vunpack.c.l.b16 %v7958
        %v8254 = vunpack.c.l.b16 %v7959
        %v8255 = vunpack.c.l.b16 %v7960
        %v8256 = vunpack.c.l.b16 %v7961
        %v8257 = vunpack.c.l.b16 %v7962
        %v8258 = vunpack.c.l.b16 %v7963
        %v8259 = vunpack.c.l.b16 %v7964
        %v8260 = vunpack.c.l.b16 %v7965
        %v8261 = vunpack.c.l.b16 %v7966
        %v8262 = vunpack.c.l.b16 %v7967
        %v8263 = vunpack.c.l.b16 %v7968
        %v8264 = vunpack.c.l.b16 %v7969
        %v8265 = vunpack.c.l.b16 %v7970
        %v8266 = vunpack.c.l.b16 %v7971
        %v8267 = vunpack.c.l.b16 %v7972
        %v8268 = vunpack.c.l.b16 %v7973
        %v8269 = vunpack.c.l.b16 %v7974
        %v8270 = vunpack.c.l.b16 %v7975
        %v8271 = vunpack.c.l.b16 %v7976
        %v8272 = vunpack.c.l.b16 %v7977
        %v8273 = vunpack.c.l.b16 %v7978
        %v8274 = vunpack.c.l.b16 %v7979
        %v8275 = vunpack.c.l.b16 %v7980
        %v8276 = vunpack.c.l.b16 %v7981
        %v8277 = vunpack.c.l.b16 %v7982
        %v8278 = vunpack.c.l.b16 %v7983
        %v8279 = vunpack.c.l.b16 %v7984
        %v8280 = vunpack.c.l.b16 %v7985
        %v8281 = vunpack.c.l.b16 %v7986
        %v8282 = vunpack.c.l.b16 %v7987
        %v8283 = vunpack.c.l.b16 %v7988
        %v8284 = vunpack.c.l.b16 %v7989
        %v8285 = vunpack.c.l.b16 %v7990
        %v8286 = vunpack.c.l.b16 %v7991
        %v8287 = vunpack.c.l.b16 %v7992
        %v8288 = vunpack.c.l.b16 %v7993
        %v8289 = vunpack.c.l.b16 %v7994
        %v8290 = vunpack.c.l.b16 %v7995
        %v8291 = vunpack.c.l.b16 %v7996
        %v8292 = vunpack.c.l.b16 %v7997
        %v8293 = vunpack.c.l.b16 %v7998
        %v8294 = vunpack.c.l.b16 %v7999
        %v8295 = vunpack.c.l.b16 %v8000
        %v8296 = vunpack.c.l.b16 %v8001
        %v8297 = vunpack.c.l.b16 %v8002
        %v8298 = vunpack.c.l.b16 %v8003
        %v8299 = vunpack.c.l.b16 %v8004
        %v8300 = vunpack.c.l.b16 %v8005
        %v8301 = vunpack.c.l.b16 %v8006
        %v8302 = vunpack.c.l.b16 %v8007
        %v8303 = vunpack.c.l.b16 %v8008
        %v8304 = vunpack.c.l.b16 %v8009
        %v8305 = vunpack.c.l.b16 %v8010
        %v8306 = vunpack.c.l.b16 %v8011
        %v8307 = vunpack.c.l.b16 %v8012
        %v8308 = vunpack.c.l.b16 %v8013
        %v8309 = vunpack.c.l.b16 %v8014
        %v8310 = vunpack.c.l.b16 %v8015
        %v8311 = vunpack.c.l.b16 %v8016
        %v8312 = vunpack.c.l.b16 %v8017
        %v8313 = vunpack.c.l.b16 %v8018
        %v8314 = vunpack.c.l.b16 %v8019
        %v8315 = vunpack.c.l.b16 %v8020
        %v8316 = vunpack.c.l.b16 %v8021
        %v8317 = vunpack.c.l.b16 %v8022
        %v8318 = vunpack.c.l.b16 %v8023
        %v8319 = vunpack.c.l.b16 %v8024
        %v8320 = vunpack.c.l.b16 %v8025
        %v8321 = vunpack.c.l.b16 %v8026
        %v8322 = vunpack.c.l.b16 %v8027
        %v8323 = vunpack.c.l.b16 %v8028
        %v8324 = vunpack.c.l.b16 %v8029
        %v8325 = vunpack.c.l.b16 %v8030
        %v8326 = vunpack.c.l.b16 %v8031
        %v8327 = vunpack.c.l.b16 %v8032
        %v8328 = vunpack.c.l.b16 %v8033
        %v8329 = vunpack.c.l.b16 %v8034
        %v8330 = vunpack.c.l.b16 %v8035
        %v8331 = vunpack.c.l.b16 %v8036
        %v8332 = vunpack.c.l.b16 %v8037
        %v8333 = vunpack.c.l.b16 %v8038
        %v8334 = vunpack.c.l.b16 %v8039
        %v8335 = vunpack.c.l.b16 %v8040
        %v8336 = vunpack.c.l.b16 %v8041
        %v8337 = vunpack.c.l.b16 %v8042
        %v8338 = vunpack.c.l.b16 %v8043
        %v8339 = vunpack.c.l.b16 %v8044
        %v8340 = vunpack.c.l.b16 %v8045
        %v8341 = vunpack.c.l.b16 %v8046
        %v8342 = vunpack.c.l.b16 %v8047
        %v8343 = vunpack.c.l.b16 %v8048
        %v8344 = vunpack.c.l.b16 %v8049
        %v8345 = vunpack.c.l.b16 %v8050
        %v8346 = vunpack.c.l.b16 %v8051
        %v8347 = vunpack.c.l.b16 %v8052
        %v8348 = vunpack.c.l.b16 %v8053
        %v8349 = vunpack.c.l.b16 %v8054
        %v8350 = vunpack.c.l.b16 %v8055
        %v8351 = vunpack.c.l.b16 %v8056
        %v8352 = vunpack.c.l.b16 %v8057
        %v8353 = vunpack.c.l.b16 %v8058
        %v8354 = vunpack.c.l.b16 %v8059
        %v8355 = vunpack.c.l.b16 %v8060
        %v8356 = vunpack.c.l.b16 %v8061
        %v8357 = vunpack.c.l.b16 %v8062
        %v8358 = vunpack.c.l.b16 %v8063
        %v8359 = vunpack.c.l.b16 %v8064
        %v8360 = vunpack.c.l.b16 %v8065
        %v8361 = vunpack.c.l.b16 %v8066
        %v8362 = vunpack.c.l.b16 %v8067
        %v8363 = vunpack.c.l.b16 %v8068
        %v8364 = vunpack.c.l.b16 %v8069
        %v8365 = vunpack.c.l.b16 %v8070
        %v8366 = vpack.c.b16 %v8223, %v8222
        %v8367 = vpack.c.b16 %v8225, %v8224
        %v8368 = vpack.c.b16 %v8227, %v8226
        %v8369 = vpack.c.b16 %v8229, %v8228
        %v8370 = vpack.c.b16 %v8231, %v8230
        %v8371 = vpack.c.b16 %v8233, %v8232
        %v8372 = vpack.c.b16 %v8235, %v8234
        %v8373 = vpack.c.b16 %v8237, %v8236
        %v8374 = vpack.c.b16 %v8239, %v8238
        %v8375 = vpack.c.b16 %v8241, %v8240
        %v8376 = vpack.c.b16 %v8243, %v8242
        %v8377 = vpack.c.b16 %v8245, %v8244
        %v8378 = vpack.c.b16 %v8247, %v8246
        %v8379 = vpack.c.b16 %v8249, %v8248
        %v8380 = vpack.c.b16 %v8251, %v8250
        %v8381 = vpack.c.b16 %v8253, %v8252
        %v8382 = vpack.c.b16 %v8255, %v8254
        %v8383 = vpack.c.b16 %v8257, %v8256
        %v8384 = vpack.c.b16 %v8259, %v8258
        %v8385 = vpack.c.b16 %v8261, %v8260
        %v8386 = vpack.c.b16 %v8263, %v8262
        %v8387 = vpack.c.b16 %v8265, %v8264
        %v8388 = vpack.c.b16 %v8267, %v8266
        %v8389 = vpack.c.b16 %v8269, %v8268
        %v8390 = vpack.c.b16 %v8271, %v8270
        %v8391 = vpack.c.b16 %v8273, %v8272
        %v8392 = vpack.c.b16 %v8275, %v8274
        %v8393 = vpack.c.b16 %v8277, %v8276
        %v8394 = vpack.c.b16 %v8279, %v8278
        %v8395 = vpack.c.b16 %v8281, %v8280
        %v8396 = vpack.c.b16 %v8283, %v8282
        %v8397 = vpack.c.b16 %v8285, %v8284
        %v8398 = vpack.c.b16 %v8287, %v8286
        %v8399 = vpack.c.b16 %v8289, %v8288
        %v8400 = vpack.c.b16 %v8291, %v8290
        %v8401 = vpack.c.b16 %v8293, %v8292
        %v8402 = vpack.c.b16 %v8295, %v8294
        %v8403 = vpack.c.b16 %v8297, %v8296
        %v8404 = vpack.c.b16 %v8299, %v8298
        %v8405 = vpack.c.b16 %v8301, %v8300
        %v8406 = vpack.c.b16 %v8303, %v8302
        %v8407 = vpack.c.b16 %v8305, %v8304
        %v8408 = vpack.c.b16 %v8307, %v8306
        %v8409 = vpack.c.b16 %v8309, %v8308
        %v8410 = vpack.c.b16 %v8311, %v8310
        %v8411 = vpack.c.b16 %v8313, %v8312
        %v8412 = vpack.c.b16 %v8315, %v8314
        %v8413 = vpack.c.b16 %v8317, %v8316
        %v8414 = vpack.c.b16 %v8319, %v8318
        %v8415 = vpack.c.b16 %v8321, %v8320
        %v8416 = vpack.c.b16 %v8323, %v8322
        %v8417 = vpack.c.b16 %v8325, %v8324
        %v8418 = vpack.c.b16 %v8327, %v8326
        %v8419 = vpack.c.b16 %v8329, %v8328
        %v8420 = vpack.c.b16 %v8331, %v8330
        %v8421 = vpack.c.b16 %v8333, %v8332
        %v8422 = vpack.c.b16 %v8335, %v8334
        %v8423 = vpack.c.b16 %v8337, %v8336
        %v8424 = vpack.c.b16 %v8339, %v8338
        %v8425 = vpack.c.b16 %v8341, %v8340
        %v8426 = vpack.c.b16 %v8343, %v8342
        %v8427 = vpack.c.b16 %v8345, %v8344
        %v8428 = vpack.c.b16 %v8347, %v8346
        %v8429 = vpack.c.b16 %v8349, %v8348
        %v8430 = vpack.c.b16 %v8351, %v8350
        %v8431 = vpack.c.b16 %v8353, %v8352
        %v8432 = vpack.c.b16 %v8355, %v8354
        %v8433 = vpack.c.b16 %v8357, %v8356
        %v8434 = vpack.c.b16 %v8359, %v8358
        %v8435 = vpack.c.b16 %v8361, %v8360
        %v8436 = vpack.c.b16 %v8363, %v8362
        %v8437 = vpack.c.b16 %v8365, %v8364
        %8510 = vmatprep.subr.bf16.mxu0 0
        %8511 = vmatpush1.bf16.msra.mxu0 %v8366
        %8512 = vmatprep.subr.bf16.mxu0 0
        %8513 = vmatpush1.bf16.msra.mxu0 %v8367
        %8514 = vmatprep.subr.bf16.mxu0 0
        %8515 = vmatpush1.bf16.msra.mxu0 %v8368
        %8516 = vmatprep.subr.bf16.mxu0 0
        %8517 = vmatpush1.bf16.msra.mxu0 %v8369
        %8518 = vmatprep.subr.bf16.mxu0 0
        %8519 = vmatpush1.bf16.msra.mxu0 %v8370
        %8520 = vmatprep.subr.bf16.mxu0 0
        %8521 = vmatpush1.bf16.msra.mxu0 %v8371
        %8522 = vmatprep.subr.bf16.mxu0 0
        %8523 = vmatpush1.bf16.msra.mxu0 %v8372
        %8524 = vmatprep.subr.bf16.mxu0 0
        %8525 = vmatpush1.bf16.msra.mxu0 %v8373
        %8526 = vmatprep.subr.bf16.mxu0 0
        %8527 = vmatpush1.bf16.msra.mxu0 %v8374
        %8528 = vmatprep.subr.bf16.mxu0 0
        %8529 = vmatpush1.bf16.msra.mxu0 %v8375
        %8530 = vmatprep.subr.bf16.mxu0 0
        %8531 = vmatpush1.bf16.msra.mxu0 %v8376
        %8532 = vmatprep.subr.bf16.mxu0 0
        %8533 = vmatpush1.bf16.msra.mxu0 %v8377
        %8534 = vmatprep.subr.bf16.mxu0 0
        %8535 = vmatpush1.bf16.msra.mxu0 %v8378
        %8536 = vmatprep.subr.bf16.mxu0 0
        %8537 = vmatpush1.bf16.msra.mxu0 %v8379
        %8538 = vmatprep.subr.bf16.mxu0 0
        %8539 = vmatpush1.bf16.msra.mxu0 %v8380
        %8540 = vmatprep.subr.bf16.mxu0 0
        %8541 = vmatpush1.bf16.msra.mxu0 %v8381
        %8542 = vmatprep.mubr.bf16.mxu0 %v7748
        %8543 = vmatmul.mubr.bf16.gmra.mrb[0].mxu0 %v7717
        %v8544 = vpop.f32.mrb[0].mxu0
        %v8545 = vadd.f32 %v8076, %v8544
        %v8546 = vpop.f32.mrb[0].mxu0
        %v8547 = vpop.f32.mrb[0].mxu0
        %v8548 = vadd.f32 %v8076, %v8547
        %v8549 = vpop.f32.mrb[0].mxu0
        %8550 = vmatprep.mubr.bf16.mxu0 %v7760
        %8551 = vmatmul.mubr.bf16.gmra.mrb[0].mxu0 %v7719
        %v8552 = vpop.f32.mrb[0].mxu0
        %v8553 = vadd.f32 %v8076, %v8552
        %v8554 = vpop.f32.mrb[0].mxu0
        %v8555 = vpop.f32.mrb[0].mxu0
        %v8556 = vadd.f32 %v8076, %v8555
        %v8557 = vpop.f32.mrb[0].mxu0
        %8558 = vmatprep.mubr.bf16.mxu0 %v7772
        %8559 = vmatmul.mubr.bf16.gmra.mrb[0].mxu0 %v7721
        %v8560 = vpop.f32.mrb[0].mxu0
        %v8561 = vadd.f32 %v8076, %v8560
        %v8562 = vpop.f32.mrb[0].mxu0
        %v8563 = vpop.f32.mrb[0].mxu0
        %v8564 = vadd.f32 %v8076, %v8563
        %v8565 = vpop.f32.mrb[0].mxu0
        %8566 = vmatprep.mubr.bf16.mxu0 %v7784
        %8567 = vmatmul.mubr.bf16.gmra.mrb[0].mxu0 %v7723
        %v8568 = vpop.f32.mrb[0].mxu0
        %v8569 = vadd.f32 %v8076, %v8568
        %v8570 = vpop.f32.mrb[0].mxu0
        %v8571 = vpop.f32.mrb[0].mxu0
        %v8572 = vadd.f32 %v8076, %v8571
        %v8573 = vpop.f32.mrb[0].mxu0
        %8574 = vmatprep.mubr.bf16.mxu0 %v7796
        %8575 = vmatmul.mubr.bf16.gmra.mrb[0].mxu0 %v7725
        %v8576 = vpop.f32.mrb[0].mxu0
        %v8577 = vadd.f32 %v8076, %v8576
        %v8578 = vpop.f32.mrb[0].mxu0
        %v8579 = vpop.f32.mrb[0].mxu0
        %v8580 = vadd.f32 %v8076, %v8579
        %v8581 = vpop.f32.mrb[0].mxu0
        %8582 = vmatprep.mubr.bf16.mxu0 %v7808
        %8583 = vmatmul.mubr.bf16.gmra.mrb[0].mxu0 %v7727
        %v8584 = vpop.f32.mrb[0].mxu0
        %v8585 = vadd.f32 %v8076, %v8584
        %v8586 = vpop.f32.mrb[0].mxu0
        %v8587 = vpop.f32.mrb[0].mxu0
        %v8588 = vadd.f32 %v8076, %v8587
        %v8589 = vpop.f32.mrb[0].mxu0
        %8590 = vmatprep.mubr.bf16.mxu0 %v7820
        %8591 = vmatmul.mubr.bf16.gmra.mrb[0].mxu0 %v7729
        %v8592 = vpop.f32.mrb[0].mxu0
        %v8593 = vadd.f32 %v8076, %v8592
        %v8594 = vpop.f32.mrb[0].mxu0
        %v8595 = vpop.f32.mrb[0].mxu0
        %v8596 = vadd.f32 %v8076, %v8595
        %v8597 = vpop.f32.mrb[0].mxu0
        %8598 = vmatprep.mubr.bf16.mxu0 %v7832
        %8599 = vmatmul.mubr.bf16.gmra.mrb[0].mxu0 %v7731
        %v8600 = vpop.f32.mrb[0].mxu0
        %v8601 = vadd.f32 %v8076, %v8600
        %v8602 = vpop.f32.mrb[0].mxu0
        %v8603 = vpop.f32.mrb[0].mxu0
        %v8604 = vadd.f32 %v8076, %v8603
        %v8605 = vpop.f32.mrb[0].mxu0
        %8606 = vdwg.mxu0
        %8607 = vmatprep.subr.bf16.mxu0 0
        %8608 = vmatpush1.bf16.msra.mxu0 %v8382
        %8609 = vmatprep.subr.bf16.mxu0 0
        %8610 = vmatpush1.bf16.msra.mxu0 %v8383
        %8611 = vmatprep.subr.bf16.mxu0 0
        %8612 = vmatpush1.bf16.msra.mxu0 %v8384
        %8613 = vmatprep.subr.bf16.mxu0 0
        %8614 = vmatpush1.bf16.msra.mxu0 %v8385
        %8615 = vmatprep.subr.bf16.mxu0 0
        %8616 = vmatpush1.bf16.msra.mxu0 %v8386
        %8617 = vmatprep.subr.bf16.mxu0 0
        %8618 = vmatpush1.bf16.msra.mxu0 %v8387
        %8619 = vmatprep.subr.bf16.mxu0 0
        %8620 = vmatpush1.bf16.msra.mxu0 %v8388
        %8621 = vmatprep.subr.bf16.mxu0 0
        %8622 = vmatpush1.bf16.msra.mxu0 %v8389
        %8623 = vmatprep.subr.bf16.mxu0 0
        %8624 = vmatpush1.bf16.msra.mxu0 %v8390
        %8625 = vmatprep.subr.bf16.mxu0 0
        %8626 = vmatpush1.bf16.msra.mxu0 %v8391
        %8627 = vmatprep.subr.bf16.mxu0 0
        %8628 = vmatpush1.bf16.msra.mxu0 %v8392
        %8629 = vmatprep.subr.bf16.mxu0 0
        %8630 = vmatpush1.bf16.msra.mxu0 %v8393
        %8631 = vmatprep.subr.bf16.mxu0 0
        %8632 = vmatpush1.bf16.msra.mxu0 %v8394
        %8633 = vmatprep.subr.bf16.mxu0 0
        %8634 = vmatpush1.bf16.msra.mxu0 %v8395
        %8635 = vmatprep.subr.bf16.mxu0 0
        %8636 = vmatpush1.bf16.msra.mxu0 %v8396
        %8637 = vmatprep.subr.bf16.mxu0 0
        %8638 = vmatpush1.bf16.msra.mxu0 %v8397
        %8639 = vmatprep.mubr.bf16.mxu0 %v7719
        %8640 = vmatmul.mubr.bf16.gmra.mrb[0].mxu0 %v7859
        %v8641 = vpop.f32.mrb[0].mxu0
        %v8642 = vadd.f32 %v8545, %v8641
        %v8643 = vpop.f32.mrb[0].mxu0
        %v8644 = vpop.f32.mrb[0].mxu0
        %v8645 = vadd.f32 %v8548, %v8644
        %v8646 = vpop.f32.mrb[0].mxu0
        %8647 = vmatprep.mubr.bf16.mxu0 %v7721
        %8648 = vmatmul.mubr.bf16.gmra.mrb[0].mxu0 %v7862
        %v8649 = vpop.f32.mrb[0].mxu0
        %v8650 = vadd.f32 %v8553, %v8649
        %v8651 = vpop.f32.mrb[0].mxu0
        %v8652 = vpop.f32.mrb[0].mxu0
        %v8653 = vadd.f32 %v8556, %v8652
        %v8654 = vpop.f32.mrb[0].mxu0
        %8655 = vmatprep.mubr.bf16.mxu0 %v7723
        %8656 = vmatmul.mubr.bf16.gmra.mrb[0].mxu0 %v7865
        %v8657 = vpop.f32.mrb[0].mxu0
        %v8658 = vadd.f32 %v8561, %v8657
        %v8659 = vpop.f32.mrb[0].mxu0
        %v8660 = vpop.f32.mrb[0].mxu0
        %v8661 = vadd.f32 %v8564, %v8660
        %v8662 = vpop.f32.mrb[0].mxu0
        %8663 = vmatprep.mubr.bf16.mxu0 %v7725
        %8664 = vmatmul.mubr.bf16.gmra.mrb[0].mxu0 %v7868
        %v8665 = vpop.f32.mrb[0].mxu0
        %v8666 = vadd.f32 %v8569, %v8665
        %v8667 = vpop.f32.mrb[0].mxu0
        %v8668 = vpop.f32.mrb[0].mxu0
        %v8669 = vadd.f32 %v8572, %v8668
        %v8670 = vpop.f32.mrb[0].mxu0
        %8671 = vmatprep.mubr.bf16.mxu0 %v7727
        %8672 = vmatmul.mubr.bf16.gmra.mrb[0].mxu0 %v7871
        %v8673 = vpop.f32.mrb[0].mxu0
        %v8674 = vadd.f32 %v8577, %v8673
        %v8675 = vpop.f32.mrb[0].mxu0
        %v8676 = vpop.f32.mrb[0].mxu0
        %v8677 = vadd.f32 %v8580, %v8676
        %v8678 = vpop.f32.mrb[0].mxu0
        %8679 = vmatprep.mubr.bf16.mxu0 %v7729
        %8680 = vmatmul.mubr.bf16.gmra.mrb[0].mxu0 %v7874
        %v8681 = vpop.f32.mrb[0].mxu0
        %v8682 = vadd.f32 %v8585, %v8681
        %v8683 = vpop.f32.mrb[0].mxu0
        %v8684 = vpop.f32.mrb[0].mxu0
        %v8685 = vadd.f32 %v8588, %v8684
        %v8686 = vpop.f32.mrb[0].mxu0
        %8687 = vmatprep.mubr.bf16.mxu0 %v7731
        %8688 = vmatmul.mubr.bf16.gmra.mrb[0].mxu0 %v7877
        %v8689 = vpop.f32.mrb[0].mxu0
        %v8690 = vadd.f32 %v8593, %v8689
        %v8691 = vpop.f32.mrb[0].mxu0
        %v8692 = vpop.f32.mrb[0].mxu0
        %v8693 = vadd.f32 %v8596, %v8692
        %v8694 = vpop.f32.mrb[0].mxu0
        %8695 = vmatprep.mubr.bf16.mxu0 %v7733
        %8696 = vmatmul.mubr.bf16.gmra.mrb[0].mxu0 %v7880
        %v8697 = vpop.f32.mrb[0].mxu0
        %v8698 = vadd.f32 %v8601, %v8697
        %v8699 = vpop.f32.mrb[0].mxu0
        %v8700 = vpop.f32.mrb[0].mxu0
        %v8701 = vadd.f32 %v8604, %v8700
        %v8702 = vpop.f32.mrb[0].mxu0
        %8703 = vdwg.mxu0
        %8704 = vmatprep.subr.bf16.mxu0 0
        %8705 = vmatpush1.bf16.msra.mxu0 %v8398
        %8706 = vmatprep.subr.bf16.mxu0 0
        %8707 = vmatpush1.bf16.msra.mxu0 %v8399
        %8708 = vmatprep.subr.bf16.mxu0 0
        %8709 = vmatpush1.bf16.msra.mxu0 %v8400
        %8710 = vmatprep.subr.bf16.mxu0 0
        %8711 = vmatpush1.bf16.msra.mxu0 %v8401
        %8712 = vmatprep.subr.bf16.mxu0 0
        %8713 = vmatpush1.bf16.msra.mxu0 %v8402
        %8714 = vmatprep.subr.bf16.mxu0 0
        %8715 = vmatpush1.bf16.msra.mxu0 %v8403
        %8716 = vmatprep.subr.bf16.mxu0 0
        %8717 = vmatpush1.bf16.msra.mxu0 %v8404
        %8718 = vmatprep.subr.bf16.mxu0 0
        %8719 = vmatpush1.bf16.msra.mxu0 %v8405
        %8720 = vmatprep.subr.bf16.mxu0 0
        %8721 = vmatpush1.bf16.msra.mxu0 %v8406
        %8722 = vmatprep.subr.bf16.mxu0 0
        %8723 = vmatpush1.bf16.msra.mxu0 %v8407
        %8724 = vmatprep.subr.bf16.mxu0 0
        %8725 = vmatpush1.bf16.msra.mxu0 %v8408
        %8726 = vmatprep.subr.bf16.mxu0 0
        %8727 = vmatpush1.bf16.msra.mxu0 %v8409
        %8728 = vmatprep.subr.bf16.mxu0 0
        %8729 = vmatpush1.bf16.msra.mxu0 %v8410
        %8730 = vmatprep.subr.bf16.mxu0 0
        %8731 = vmatpush1.bf16.msra.mxu0 %v8411
        %8732 = vmatprep.subr.bf16.mxu0 0
        %8733 = vmatpush1.bf16.msra.mxu0 %v8412
        %8734 = vmatprep.subr.bf16.mxu0 0
        %8735 = vmatpush1.bf16.msra.mxu0 %v8413
        %8736 = vmatprep.mubr.bf16.mxu0 %v7862
        %8737 = vmatmul.mubr.bf16.gmra.mrb[0].mxu0 %v7760
        %v8738 = vpop.f32.mrb[0].mxu0
        %v8739 = vadd.f32 %v8642, %v8738
        %v8740 = vpop.f32.mrb[0].mxu0
        %v8741 = vpop.f32.mrb[0].mxu0
        %v8742 = vadd.f32 %v8645, %v8741
        %v8743 = vpop.f32.mrb[0].mxu0
        %8744 = vmatprep.mubr.bf16.mxu0 %v7865
        %8745 = vmatmul.mubr.bf16.gmra.mrb[0].mxu0 %v7772
        %v8746 = vpop.f32.mrb[0].mxu0
        %v8747 = vadd.f32 %v8650, %v8746
        %v8748 = vpop.f32.mrb[0].mxu0
        %v8749 = vpop.f32.mrb[0].mxu0
        %v8750 = vadd.f32 %v8653, %v8749
        %v8751 = vpop.f32.mrb[0].mxu0
        %8752 = vmatprep.mubr.bf16.mxu0 %v7868
        %8753 = vmatmul.mubr.bf16.gmra.mrb[0].mxu0 %v7784
        %v8754 = vpop.f32.mrb[0].mxu0
        %v8755 = vadd.f32 %v8658, %v8754
        %v8756 = vpop.f32.mrb[0].mxu0
        %v8757 = vpop.f32.mrb[0].mxu0
        %v8758 = vadd.f32 %v8661, %v8757
        %v8759 = vpop.f32.mrb[0].mxu0
        %8760 = vmatprep.mubr.bf16.mxu0 %v7871
        %8761 = vmatmul.mubr.bf16.gmra.mrb[0].mxu0 %v7796
        %v8762 = vpop.f32.mrb[0].mxu0
        %v8763 = vadd.f32 %v8666, %v8762
        %v8764 = vpop.f32.mrb[0].mxu0
        %v8765 = vpop.f32.mrb[0].mxu0
        %v8766 = vadd.f32 %v8669, %v8765
        %v8767 = vpop.f32.mrb[0].mxu0
        %8768 = vmatprep.mubr.bf16.mxu0 %v7874
        %8769 = vmatmul.mubr.bf16.gmra.mrb[0].mxu0 %v7808
        %v8770 = vpop.f32.mrb[0].mxu0
        %v8771 = vadd.f32 %v8674, %v8770
        %v8772 = vpop.f32.mrb[0].mxu0
        %v8773 = vpop.f32.mrb[0].mxu0
        %v8774 = vadd.f32 %v8677, %v8773
        %v8775 = vpop.f32.mrb[0].mxu0
        %8776 = vmatprep.mubr.bf16.mxu0 %v7877
        %8777 = vmatmul.mubr.bf16.gmra.mrb[0].mxu0 %v7820
        %v8778 = vpop.f32.mrb[0].mxu0
        %v8779 = vadd.f32 %v8682, %v8778
        %v8780 = vpop.f32.mrb[0].mxu0
        %v8781 = vpop.f32.mrb[0].mxu0
        %v8782 = vadd.f32 %v8685, %v8781
        %v8783 = vpop.f32.mrb[0].mxu0
        %8784 = vmatprep.mubr.bf16.mxu0 %v7880
        %8785 = vmatmul.mubr.bf16.gmra.mrb[0].mxu0 %v7832
        %v8786 = vpop.f32.mrb[0].mxu0
        %v8787 = vadd.f32 %v8690, %v8786
        %v8788 = vpop.f32.mrb[0].mxu0
        %v8789 = vpop.f32.mrb[0].mxu0
        %v8790 = vadd.f32 %v8693, %v8789
        %v8791 = vpop.f32.mrb[0].mxu0
        %8792 = vmatprep.mubr.bf16.mxu0 %v7906
        %8793 = vmatmul.mubr.bf16.gmra.mrb[0].mxu0 %v7900
        %v8794 = vpop.f32.mrb[0].mxu0
        %v8795 = vadd.f32 %v8698, %v8794
        %v8796 = vpop.f32.mrb[0].mxu0
        %v8797 = vpop.f32.mrb[0].mxu0
        %v8798 = vadd.f32 %v8701, %v8797
        %v8799 = vpop.f32.mrb[0].mxu0
        %8800 = vdwg.mxu0
        %8801 = vmatprep.subr.bf16.mxu0 0
        %8802 = vmatpush1.bf16.msra.mxu0 %v8414
        %8803 = vmatprep.subr.bf16.mxu0 0
        %8804 = vmatpush1.bf16.msra.mxu0 %v8415
        %8805 = vmatprep.subr.bf16.mxu0 0
        %8806 = vmatpush1.bf16.msra.mxu0 %v8416
        %8807 = vmatprep.subr.bf16.mxu0 0
        %8808 = vmatpush1.bf16.msra.mxu0 %v8417
        %8809 = vmatprep.subr.bf16.mxu0 0
        %8810 = vmatpush1.bf16.msra.mxu0 %v8418
        %8811 = vmatprep.subr.bf16.mxu0 0
        %8812 = vmatpush1.bf16.msra.mxu0 %v8419
        %8813 = vmatprep.subr.bf16.mxu0 0
        %8814 = vmatpush1.bf16.msra.mxu0 %v8420
        %8815 = vmatprep.subr.bf16.mxu0 0
        %8816 = vmatpush1.bf16.msra.mxu0 %v8421
        %8817 = vmatprep.subr.bf16.mxu0 0
        %8818 = vmatpush1.bf16.msra.mxu0 %v8422
        %8819 = vmatprep.subr.bf16.mxu0 0
        %8820 = vmatpush1.bf16.msra.mxu0 %v8423
        %8821 = vmatprep.subr.bf16.mxu0 0
        %8822 = vmatpush1.bf16.msra.mxu0 %v8424
        %8823 = vmatprep.subr.bf16.mxu0 0
        %8824 = vmatpush1.bf16.msra.mxu0 %v8425
        %8825 = vmatprep.subr.bf16.mxu0 0
        %8826 = vmatpush1.bf16.msra.mxu0 %v8426
        %8827 = vmatprep.subr.bf16.mxu0 0
        %8828 = vmatpush1.bf16.msra.mxu0 %v8427
        %8829 = vmatprep.subr.bf16.mxu0 0
        %8830 = vmatpush1.bf16.msra.mxu0 %v8428
        %8831 = vmatprep.subr.bf16.mxu0 0
        %8832 = vmatpush1.bf16.msra.mxu0 %v8429
        %8833 = vmatprep.mubr.bf16.mxu0 %v7772
        %8834 = vmatmul.mubr.bf16.gmra.mrb[0].mxu0 %v7721
        %v8835 = vpop.f32.mrb[0].mxu0
        %v8836 = vadd.f32 %v8739, %v8835
        %v8837 = vpop.f32.mrb[0].mxu0
        %v8838 = vpop.f32.mrb[0].mxu0
        %v8839 = vadd.f32 %v8742, %v8838
        %v8840 = vpop.f32.mrb[0].mxu0
        %8841 = vmatprep.mubr.bf16.mxu0 %v7784
        %8842 = vmatmul.mubr.bf16.gmra.mrb[0].mxu0 %v7723
        %v8843 = vpop.f32.mrb[0].mxu0
        %v8844 = vadd.f32 %v8747, %v8843
        %v8845 = vpop.f32.mrb[0].mxu0
        %v8846 = vpop.f32.mrb[0].mxu0
        %v8847 = vadd.f32 %v8750, %v8846
        %v8848 = vpop.f32.mrb[0].mxu0
        %8849 = vmatprep.mubr.bf16.mxu0 %v7796
        %8850 = vmatmul.mubr.bf16.gmra.mrb[0].mxu0 %v7725
        %v8851 = vpop.f32.mrb[0].mxu0
        %v8852 = vadd.f32 %v8755, %v8851
        %v8853 = vpop.f32.mrb[0].mxu0
        %v8854 = vpop.f32.mrb[0].mxu0
        %v8855 = vadd.f32 %v8758, %v8854
        %v8856 = vpop.f32.mrb[0].mxu0
        %8857 = vmatprep.mubr.bf16.mxu0 %v7808
        %8858 = vmatmul.mubr.bf16.gmra.mrb[0].mxu0 %v7727
        %v8859 = vpop.f32.mrb[0].mxu0
        %v8860 = vadd.f32 %v8763, %v8859
        %v8861 = vpop.f32.mrb[0].mxu0
        %v8862 = vpop.f32.mrb[0].mxu0
        %v8863 = vadd.f32 %v8766, %v8862
        %v8864 = vpop.f32.mrb[0].mxu0
        %8865 = vmatprep.mubr.bf16.mxu0 %v7820
        %8866 = vmatmul.mubr.bf16.gmra.mrb[0].mxu0 %v7729
        %v8867 = vpop.f32.mrb[0].mxu0
        %v8868 = vadd.f32 %v8771, %v8867
        %v8869 = vpop.f32.mrb[0].mxu0
        %v8870 = vpop.f32.mrb[0].mxu0
        %v8871 = vadd.f32 %v8774, %v8870
        %v8872 = vpop.f32.mrb[0].mxu0
        %8873 = vmatprep.mubr.bf16.mxu0 %v7832
        %8874 = vmatmul.mubr.bf16.gmra.mrb[0].mxu0 %v7731
        %v8875 = vpop.f32.mrb[0].mxu0
        %v8876 = vadd.f32 %v8779, %v8875
        %v8877 = vpop.f32.mrb[0].mxu0
        %v8878 = vpop.f32.mrb[0].mxu0
        %v8879 = vadd.f32 %v8782, %v8878
        %v8880 = vpop.f32.mrb[0].mxu0
        %8881 = vmatprep.mubr.bf16.mxu0 %v7900
        %8882 = vmatmul.mubr.bf16.gmra.mrb[0].mxu0 %v7733
        %v8883 = vpop.f32.mrb[0].mxu0
        %v8884 = vadd.f32 %v8787, %v8883
        %v8885 = vpop.f32.mrb[0].mxu0
        %v8886 = vpop.f32.mrb[0].mxu0
        %v8887 = vadd.f32 %v8790, %v8886
        %v8888 = vpop.f32.mrb[0].mxu0
        %8889 = vmatprep.mubr.bf16.mxu0 %v7919
        %8890 = vmatmul.mubr.bf16.gmra.mrb[0].mxu0 %v7735
        %v8891 = vpop.f32.mrb[0].mxu0
        %v8892 = vadd.f32 %v8795, %v8891
        %v8893 = vpop.f32.mrb[0].mxu0
        %v8894 = vpop.f32.mrb[0].mxu0
        %v8895 = vadd.f32 %v8798, %v8894
        %v8896 = vpop.f32.mrb[0].mxu0
        %8897 = vdwg.mxu0
        %8898 = vmatprep.subr.bf16.mxu0 0
        %8899 = vmatpush1.bf16.msra.mxu0 %v8430
        %8900 = vmatprep.subr.bf16.mxu0 0
        %8901 = vmatpush1.bf16.msra.mxu0 %v8431
        %8902 = vmatprep.subr.bf16.mxu0 0
        %8903 = vmatpush1.bf16.msra.mxu0 %v8432
        %8904 = vmatprep.subr.bf16.mxu0 0
        %8905 = vmatpush1.bf16.msra.mxu0 %v8433
        %8906 = vmatprep.subr.bf16.mxu0 0
        %8907 = vmatpush1.bf16.msra.mxu0 %v8434
        %8908 = vmatprep.subr.bf16.mxu0 0
        %8909 = vmatpush1.bf16.msra.mxu0 %v8435
        %8910 = vmatprep.subr.bf16.mxu0 0
        %8911 = vmatpush1.bf16.msra.mxu0 %v8436
        %8912 = vmatprep.subr.bf16.mxu0 0
        %8913 = vmatpush1.bf16.msra.mxu0 %v8437
        %8914 = vmatprep.subr.bf16.mxu0 0
        %8915 = vmatpush1.bf16.msra.mxu0 0
        %8916 = vmatprep.subr.bf16.mxu0 0
        %8917 = vmatpush1.bf16.msra.mxu0 0
        %8918 = vmatprep.subr.bf16.mxu0 0
        %8919 = vmatpush1.bf16.msra.mxu0 0
        %8920 = vmatprep.subr.bf16.mxu0 0
        %8921 = vmatpush1.bf16.msra.mxu0 0
        %8922 = vmatprep.subr.bf16.mxu0 0
        %8923 = vmatpush1.bf16.msra.mxu0 0
        %8924 = vmatprep.subr.bf16.mxu0 0
        %8925 = vmatpush1.bf16.msra.mxu0 0
        %8926 = vmatprep.subr.bf16.mxu0 0
        %8927 = vmatpush1.bf16.msra.mxu0 0
        %8928 = vmatprep.subr.bf16.mxu0 0
        %8929 = vmatpush1.bf16.msra.mxu0 0
        %8930 = vmatprep.mubr.bf16.mxu0 0
        %8931 = vmatmul.mubr.bf16.gmra.mrb[0].mxu0 %v7865
        %v8932 = vpop.f32.mrb[0].mxu0
        %v8933 = vadd.f32 %v8836, %v8932
        %v8934 = vpop.f32.mrb[0].mxu0
        %v8935 = vpop.f32.mrb[0].mxu0
        %v8936 = vadd.f32 %v8839, %v8935
        %v8937 = vpop.f32.mrb[0].mxu0
        %8938 = vmatprep.mubr.bf16.mxu0 0
        %8939 = vmatmul.mubr.bf16.gmra.mrb[0].mxu0 %v7868
        %v8940 = vpop.f32.mrb[0].mxu0
        %v8941 = vadd.f32 %v8844, %v8940
        %v8942 = vpop.f32.mrb[0].mxu0
        %v8943 = vpop.f32.mrb[0].mxu0
        %v8944 = vadd.f32 %v8847, %v8943
        %v8945 = vpop.f32.mrb[0].mxu0
        %8946 = vmatprep.mubr.bf16.mxu0 0
        %8947 = vmatmul.mubr.bf16.gmra.mrb[0].mxu0 %v7871
        %v8948 = vpop.f32.mrb[0].mxu0
        %v8949 = vadd.f32 %v8852, %v8948
        %v8950 = vpop.f32.mrb[0].mxu0
        %v8951 = vpop.f32.mrb[0].mxu0
        %v8952 = vadd.f32 %v8855, %v8951
        %v8953 = vpop.f32.mrb[0].mxu0
        %8954 = vmatprep.mubr.bf16.mxu0 0
        %8955 = vmatmul.mubr.bf16.gmra.mrb[0].mxu0 %v7874
        %v8956 = vpop.f32.mrb[0].mxu0
        %v8957 = vadd.f32 %v8860, %v8956
        %v8958 = vpop.f32.mrb[0].mxu0
        %v8959 = vpop.f32.mrb[0].mxu0
        %v8960 = vadd.f32 %v8863, %v8959
        %v8961 = vpop.f32.mrb[0].mxu0
        %8962 = vmatprep.mubr.bf16.mxu0 0
        %8963 = vmatmul.mubr.bf16.gmra.mrb[0].mxu0 %v7877
        %v8964 = vpop.f32.mrb[0].mxu0
        %v8965 = vadd.f32 %v8868, %v8964
        %v8966 = vpop.f32.mrb[0].mxu0
        %v8967 = vpop.f32.mrb[0].mxu0
        %v8968 = vadd.f32 %v8871, %v8967
        %v8969 = vpop.f32.mrb[0].mxu0
        %8970 = vmatprep.mubr.bf16.mxu0 0
        %8971 = vmatmul.mubr.bf16.gmra.mrb[0].mxu0 %v7880
        %v8972 = vpop.f32.mrb[0].mxu0
        %v8973 = vadd.f32 %v8876, %v8972
        %v8974 = vpop.f32.mrb[0].mxu0
        %v8975 = vpop.f32.mrb[0].mxu0
        %v8976 = vadd.f32 %v8879, %v8975
        %v8977 = vpop.f32.mrb[0].mxu0
        %8978 = vmatprep.mubr.bf16.mxu0 0
        %8979 = vmatmul.mubr.bf16.gmra.mrb[0].mxu0 %v7906
        %v8980 = vpop.f32.mrb[0].mxu0
        %v8981 = vadd.f32 %v8884, %v8980
        %v8982 = vpop.f32.mrb[0].mxu0
        %v8983 = vpop.f32.mrb[0].mxu0
        %v8984 = vadd.f32 %v8887, %v8983
        %v8985 = vpop.f32.mrb[0].mxu0
        %8986 = vmatprep.mubr.bf16.mxu0 0
        %8987 = vmatmul.mubr.bf16.gmra.mrb[0].mxu0 %v7925
        %v8988 = vpop.f32.mrb[0].mxu0
        %v8989 = vadd.f32 %v8892, %v8988
        %v8990 = vpop.f32.mrb[0].mxu0
        %v8991 = vpop.f32.mrb[0].mxu0
        %v8992 = vadd.f32 %v8895, %v8991
        %v8993 = vpop.f32.mrb[0].mxu0
        %8994 = vdwg.mxu0
        %v8995 = vunpack.c.l.bf16 %v264
        %v8996 = vunpack.c.l.bf16 %v265
        %v8997 = vunpack.c.l.bf16 %v266
        %v8998 = vunpack.c.l.bf16 %v267
        %v8999 = vunpack.c.l.bf16 %v268
        %v9000 = vunpack.c.l.bf16 %v269
        %v9001 = vunpack.c.l.bf16 %v270
        %v9002 = vunpack.c.l.bf16 %v271
        %v9003 = vunpack.c.l.bf16 %v272
        %v9004 = vunpack.c.l.bf16 %v273
        %v9005 = vunpack.c.l.bf16 %v274
        %v9006 = vunpack.c.l.bf16 %v275
        %v9007 = vunpack.c.l.bf16 %v276
        %v9008 = vunpack.c.l.bf16 %v277
        %v9009 = vunpack.c.l.bf16 %v278
        %v9010 = vunpack.c.l.bf16 %v279
        %v9011 = vunpack.c.l.bf16 %v280
        %v9012 = vunpack.c.l.bf16 %v281
        %v9013 = vunpack.c.l.bf16 %v282
        %v9014 = vunpack.c.l.bf16 %v283
        %v9015 = vunpack.c.l.bf16 %v284
        %v9016 = vunpack.c.l.bf16 %v285
        %v9017 = vunpack.c.l.bf16 %v286
        %v9018 = vunpack.c.l.bf16 %v287
        %vm9043 = vcmask 1045504
        %v9044 = vrot.slane %v8995, 2
        %v9045 = vrot.slane %v8996, 2
        %v9046 = vsel %vm9043, %v9044, %v9045
        %v9047 = vrot.slane %v8997, 2
        %v9048 = vsel %vm9043, %v9045, %v9047
        %v9049 = vrot.slane %v8998, 2
        %v9050 = vrot.slane %v8999, 2
        %v9051 = vsel %vm9043, %v9049, %v9050
        %v9052 = vrot.slane %v9000, 2
        %v9053 = vsel %vm9043, %v9050, %v9052
        %v9054 = vrot.slane %v9001, 2
        %v9055 = vrot.slane %v9002, 2
        %v9056 = vsel %vm9043, %v9054, %v9055
        %v9057 = vrot.slane %v9003, 2
        %v9058 = vsel %vm9043, %v9055, %v9057
        %v9059 = vrot.slane %v9004, 2
        %v9060 = vrot.slane %v9005, 2
        %v9061 = vsel %vm9043, %v9059, %v9060
        %v9062 = vrot.slane %v9006, 2
        %v9063 = vsel %vm9043, %v9060, %v9062
        %v9064 = vrot.slane %v9007, 2
        %v9065 = vrot.slane %v9008, 2
        %v9066 = vsel %vm9043, %v9064, %v9065
        %v9067 = vrot.slane %v9009, 2
        %v9068 = vsel %vm9043, %v9065, %v9067
        %v9069 = vrot.slane %v9010, 2
        %v9070 = vrot.slane %v9011, 2
        %v9071 = vsel %vm9043, %v9069, %v9070
        %v9072 = vrot.slane %v9012, 2
        %v9073 = vsel %vm9043, %v9070, %v9072
        %v9074 = vrot.slane %v9013, 2
        %v9075 = vrot.slane %v9014, 2
        %v9076 = vsel %vm9043, %v9074, %v9075
        %v9077 = vrot.slane %v9015, 2
        %v9078 = vsel %vm9043, %v9075, %v9077
        %v9079 = vrot.slane %v9016, 2
        %v9080 = vrot.slane %v9017, 2
        %v9081 = vsel %vm9043, %v9079, %v9080
        %v9082 = vrot.slane %v9018, 2
        %v9083 = vsel %vm9043, %v9080, %v9082
        %v9100 = vadd.f32 %v8933, %v9046
        %v9101 = vadd.f32 %v8936, %v9048
        %v9102 = vadd.f32 %v8941, %v9051
        %v9103 = vadd.f32 %v8944, %v9053
        %v9104 = vadd.f32 %v8949, %v9056
        %v9105 = vadd.f32 %v8952, %v9058
        %v9106 = vadd.f32 %v8957, %v9061
        %v9107 = vadd.f32 %v8960, %v9063
        %v9108 = vadd.f32 %v8965, %v9066
        %v9109 = vadd.f32 %v8968, %v9068
        %v9110 = vadd.f32 %v8973, %v9071
        %v9111 = vadd.f32 %v8976, %v9073
        %v9112 = vadd.f32 %v8981, %v9076
        %v9113 = vadd.f32 %v8984, %v9078
        %v9114 = vadd.f32 %v8989, %v9081
        %v9115 = vadd.f32 %v8992, %v9083
        %v9116 = vmax.f32 %v9100, 0.0
        %v9117 = vmax.f32 %v9101, 0.0
        %v9118 = vmax.f32 %v9102, 0.0
        %v9119 = vmax.f32 %v9103, 0.0
        %v9120 = vmax.f32 %v9104, 0.0
        %v9121 = vmax.f32 %v9105, 0.0
        %v9122 = vmax.f32 %v9106, 0.0
        %v9123 = vmax.f32 %v9107, 0.0
        %v9124 = vmax.f32 %v9108, 0.0
        %v9125 = vmax.f32 %v9109, 0.0
        %v9126 = vmax.f32 %v9110, 0.0
        %v9127 = vmax.f32 %v9111, 0.0
        %v9128 = vmax.f32 %v9112, 0.0
        %v9129 = vmax.f32 %v9113, 0.0
        %v9130 = vmax.f32 %v9114, 0.0
        %v9131 = vmax.f32 %v9115, 0.0
        %9132 = vst [vmem:[%s246] sm:$0xff] %v9116
        %9133 = vst [vmem:[%s246 + $0x8] sm:$0xff] %v9117
        %9134 = vst [vmem:[%s246 + $0x10] sm:$0xff] %v9118
        %9135 = vst [vmem:[%s246 + $0x18] sm:$0xff] %v9119
        %9136 = vst [vmem:[%s246 + $0x20] sm:$0xff] %v9120
        %9137 = vst [vmem:[%s246 + $0x28] sm:$0xff] %v9121
        %9138 = vst [vmem:[%s246 + $0x30] sm:$0xff] %v9122
        %9139 = vst [vmem:[%s246 + $0x38] sm:$0xff] %v9123
        %9140 = vst [vmem:[%s246 + $0x40] sm:$0xff] %v9124
        %9141 = vst [vmem:[%s246 + $0x48] sm:$0xff] %v9125
        %9142 = vst [vmem:[%s246 + $0x50] sm:$0xff] %v9126
        %9143 = vst [vmem:[%s246 + $0x58] sm:$0xff] %v9127
        %9144 = vst [vmem:[%s246 + $0x60] sm:$0xff] %v9128
        %9145 = vst [vmem:[%s246 + $0x68] sm:$0xff] %v9129
        %9146 = vst [vmem:[%s246 + $0x70] sm:$0xff] %v9130
        %9147 = vst [vmem:[%s246 + $0x78] sm:$0xff] %v9131
        %s9148 = sand.u32 %s152, 1
        %s9149 = scalar_lea.sflag [#allocation4], %s9148
        %s9150 = sand.u32 %s152, 1
        %s9151 = smul.addr %s9150, 128
        %s9152 = scalar_lea.vmem [#allocation5], %s9151
        // Predicated region
        $region45: #{tpu_custom_call.1} parent=39 // pred_check
          %p9153 = pneg %p162
        $region46: #{tpu_custom_call.1} parent=39 // pred_check_branch
          %9155 = sbr.rel (%p9153) target = $region48
        $region47: #{tpu_custom_call.1} parent=39 // pred_region
          %s9156 = smul.u32 8, %s25
          %s9158 = ssub.s32 2048, 2048
          %9159 = vsyncadd %s9149, %s9158
          %s9160 = smul.addr %s9156, 2
          %s9161 = smul.addr %s24, 32
          %s9162 = sadd.s32 %s9160, %s9161
          %s9163 = smul.addr %s9162, 128
          %s9164 = scalar_lea.hbm %s5, %s9163
          %s9165 = sshll.u32 %s9152, 4
          %s9166 = int_to_ptr.vmem [resolvable:$true] %s9165
          %9171 = dma.vmem_to_hbm [thread:$0]  %s9166, 2048, %s9164, %s9149, 128, 128, 8
        $region48: #{tpu_custom_call.1} parent=39 // pred_fallthru
          _
      $region40: #{tpu_custom_call.1} parent=5 // pred_fallthru
        _
      %p9172 = scmp.le.s32.totalorder 2, %s15
      // Predicated region
      $region49: #{tpu_custom_call.1} parent=5 // pred_check
        %p9173 = pneg %p9172
      $region50: #{tpu_custom_call.1} parent=5 // pred_check_branch
        %9175 = sbr.rel (%p9173) target = $region52
      $region51: #{tpu_custom_call.1} parent=5 // pred_region
        %s9176 = ssub.s32 %s15, 2
        // Predicated region
        $region53: #{tpu_custom_call.1} parent=51 // pred_check
          %p9177 = pneg %p168
        $region54: #{tpu_custom_call.1} parent=51 // pred_check_branch
          %9179 = sbr.rel (%p9177) target = $region56
        $region55: #{tpu_custom_call.1} parent=51 // pred_region
          %s9180 = sand.u32 %s153, 1
          %s9181 = scalar_lea.sflag [#allocation4], %s9180
          %s9182 = sand.u32 %s153, 1
          %s9183 = smul.addr %s9182, 128
          %s9184 = scalar_lea.vmem [#allocation5], %s9183
          %9185 = dma.done %s9181, 2048
        $region56: #{tpu_custom_call.1} parent=51 // pred_fallthru
          _
      $region52: #{tpu_custom_call.1} parent=5 // pred_fallthru
        _
    $region6: #{tpu_custom_call.1} parent=1 // loop_footer
      %s19 = sadd.s32 1, %s15
    $region7: #{tpu_custom_call.1} parent=1 // loop_footer_branch
      %14 = sbr.rel target = $region3
    $region8: #{tpu_custom_call.1} parent=1 // loop_exit
      _
    %9186 = vsyncpa [#allocation3], 1
    %s9187 = scalar_lea.sflag [#allocation3], 1
    %9188 = vsyncpa %s9187, 1
    %9189 = vsyncpa [#allocation4], 1
    %s9190 = scalar_lea.sflag [#allocation4], 1
    %9191 = vsyncpa %s9190, 1

</llo_original>
